<compile_context>
chip_gen: v7x
topology: tpu7x:2x2x1
jax: 0.10.0
libtpu: 0.0.40
codegen_flags: <defaults>
</compile_context>

<pallas_src>
import jax
import jax.numpy as jnp
from jax.experimental import pallas as pl
from jax.experimental.pallas import tpu as pltpu

_L = 32 * 32  # 1024 spatial positions per 2x2 phase, laid out along lanes


# ----------------------------- fused Pallas kernel --------------------------

def _net_fused_kernel(xph_ref, w1_ref, b1_ref, w2_ref, b2_ref,
                      wfc_ref, bfc_ref, o_ref):
    f32 = jnp.float32

    def rot_left(m, s):
        # out[:, c] = m[:, (c + s) % _L].  Valid output columns never read the
        # wrapped tail, so rotation (pure data reuse, no zero constants) is safe.
        if s == 0:
            return m
        return jnp.concatenate([m[:, s:], m[:, :s]], axis=1)

    # Input phase slabs: phase (p, q) at index 2*p + q, each [3, 1024]; column
    # 32*i + j holds input pixel (h, w) = (2*i + p, 2*j + q), channels on sublanes.
    phases = [xph_ref[0, i] for i in range(4)]

    # ---- conv1 (3 -> 10, k=3, stride 2) + bias + ReLU -----------------------
    acc = jnp.zeros((10, _L), f32)
    for kh in range(3):
        for kw in range(3):
            ph = phases[2 * (kh % 2) + (kw % 2)]
            sl = rot_left(ph, (kh // 2) * 32 + (kw // 2))
            acc = acc + jnp.dot(w1_ref[3 * kh + kw], sl,
                                preferred_element_type=f32)
    a1 = jnp.maximum(acc + b1_ref[...], 0.0)

    # ---- maxpool1 2x2/2: pooled (a, b) lands in column 64*a + 2*b -----------
    m = jnp.maximum(a1, rot_left(a1, 32))
    e1 = jnp.maximum(m, rot_left(m, 1))

    # ---- conv2 (10 -> 10, k=3, stride 2) + bias + ReLU ----------------------
    acc = jnp.zeros((10, _L), f32)
    for kh in range(3):
        for kw in range(3):
            acc = acc + jnp.dot(w2_ref[3 * kh + kw],
                                rot_left(e1, 64 * kh + 2 * kw),
                                preferred_element_type=f32)
    a2 = jnp.maximum(acc + b2_ref[...], 0.0)

    # ---- maxpool2 2x2/2: pooled (p, q) lands in column 256*p + 8*q ----------
    m = jnp.maximum(a2, rot_left(a2, 128))
    e2 = jnp.maximum(m, rot_left(m, 4))

    # ---- fc (90 -> 2): same rotate+matmul structure as the convs ------------
    # After the per-tap rotations, column 0 of the accumulated map is the logit.
    fmap = jnp.zeros((2, _L), f32)
    for p in range(3):
        for q in range(3):
            fmap = fmap + jnp.dot(wfc_ref[3 * p + q],
                                  rot_left(e2, 256 * p + 8 * q),
                                  preferred_element_type=f32)
    o_ref[0] = fmap[:, 0:1] + bfc_ref[...]


# ------------------------------ wrappers ------------------------------------

def prepare_params(params):
    """One-time weight repacking (call OUTSIDE jit)."""
    w1, b1 = params["w1"], params["b1"]       # [10,3,3,3], [10]
    w2, b2 = params["w2"], params["b2"]       # [10,10,3,3], [10]
    wfc, bfc = params["wfc"], params["bfc"]   # [2,90], [2]
    # per-tap [3*kh+kw, cout, cin]
    w1p = jnp.transpose(w1, (2, 3, 0, 1)).reshape(9, 10, 3)
    w2p = jnp.transpose(w2, (2, 3, 0, 1)).reshape(9, 10, 10)
    # torch flatten feature index = c*9 + 3*p + q  ->  per-tap [3*p+q, out, c]
    wfcp = jnp.transpose(wfc.reshape(2, 10, 3, 3), (2, 3, 0, 1)).reshape(9, 2, 10)
    return {
        "w1p": w1p, "b1": b1.reshape(10, 1),
        "w2p": w2p, "b2": b2.reshape(10, 1),
        "wfcp": wfcp, "bfc": bfc.reshape(2, 1),
    }


def net_forward(x, prep):
    """Forward pass of Net on NCHW x=[B,3,64,64] using one fused Pallas kernel."""
    B, C, H, W = x.shape
    assert (C, H, W) == (3, 64, 64), "Net's fc(90,2) implies 3x64x64 inputs"

    # 2x2 phase decomposition, channels-first per phase, spatial flattened on lanes:
    # xph[b, 2p+q, c, 32i+j] = x[b, c, 2i+p, 2j+q]   (pure permutation of the input).
    xph = x.reshape(B, 3, 32, 2, 32, 2)
    xph = jnp.transpose(xph, (0, 3, 5, 1, 2, 4))
    xph = xph.reshape(B, 4, 3, _L)

    flops = 2 * B * (9 * _L * 3 * 10 + 9 * _L * 10 * 10 + 9 * _L * 10 * 2)
    bytes_accessed = 4 * (xph.size + sum(int(v.size) for v in prep.values()) + B * 2)

    out = pl.pallas_call(
        _net_fused_kernel,
        out_shape=jax.ShapeDtypeStruct((B, 2, 1), jnp.float32),
        grid=(B,),
        in_specs=[
            pl.BlockSpec((1, 4, 3, _L), lambda b: (b, 0, 0, 0)),
            pl.BlockSpec((9, 10, 3), lambda b: (0, 0, 0)),
            pl.BlockSpec((10, 1), lambda b: (0, 0)),
            pl.BlockSpec((9, 10, 10), lambda b: (0, 0, 0)),
            pl.BlockSpec((10, 1), lambda b: (0, 0)),
            pl.BlockSpec((9, 2, 10), lambda b: (0, 0, 0)),
            pl.BlockSpec((2, 1), lambda b: (0, 0)),
        ],
        out_specs=pl.BlockSpec((1, 2, 1), lambda b: (b, 0, 0)),
        compiler_params=pltpu.CompilerParams(
            dimension_semantics=("parallel",)),
        cost_estimate=pl.CostEstimate(
            flops=flops, transcendentals=0, bytes_accessed=bytes_accessed),
    )(xph, prep["w1p"], prep["b1"], prep["w2p"], prep["b2"],
      prep["wfcp"], prep["bfc"])
    return out.reshape(B, 2)


# ------------------------- pure-JAX reference (check) ------------------------

def net_reference(x, params):
    hi = jax.lax.Precision.HIGHEST
    dn = ("NCHW", "OIHW", "NCHW")
    y = jax.lax.conv_general_dilated(x, params["w1"], (2, 2), "VALID",
                                     dimension_numbers=dn, precision=hi)
    y = jax.nn.relu(y + params["b1"][None, :, None, None])
    y = jax.lax.reduce_window(y, -jnp.inf, jax.lax.max,
                              (1, 1, 2, 2), (1, 1, 2, 2), "VALID")
    y = jax.lax.conv_general_dilated(y, params["w2"], (2, 2), "VALID",
                                     dimension_numbers=dn, precision=hi)
    y = jax.nn.relu(y + params["b2"][None, :, None, None])
    y = jax.lax.reduce_window(y, -jnp.inf, jax.lax.max,
                              (1, 1, 2, 2), (1, 1, 2, 2), "VALID")
    y = y.reshape(y.shape[0], -1)
    return jnp.dot(y, params["wfc"].T, precision=hi) + params["bfc"]


if __name__ == "__main__":
    key = jax.random.PRNGKey(0)
    ks = jax.random.split(key, 7)
    params = {
        "w1": jax.random.normal(ks[0], (10, 3, 3, 3), jnp.float32) * 0.1,   # conv1.weight
        "b1": jax.random.normal(ks[1], (10,), jnp.float32) * 0.1,           # conv1.bias
        "w2": jax.random.normal(ks[2], (10, 10, 3, 3), jnp.float32) * 0.1,  # conv2.weight
        "b2": jax.random.normal(ks[3], (10,), jnp.float32) * 0.1,           # conv2.bias
        "wfc": jax.random.normal(ks[4], (2, 90), jnp.float32) * 0.1,        # fc.weight
        "bfc": jax.random.normal(ks[5], (2,), jnp.float32) * 0.1,           # fc.bias
    }
    x = jax.random.normal(ks[6], (2, 3, 64, 64), jnp.float32)  # NCHW, batch=2

    prep = prepare_params(params)            # weight packing, outside jit
    out = jax.jit(net_forward)(x, prep)
    jax.block_until_ready(out)

    ref = net_reference(x, params)
    assert out.shape == (2, 2) and out.dtype == jnp.float32
    err = float(jnp.max(jnp.abs(out - ref)))
    assert jnp.allclose(out, ref, atol=1e-2, rtol=1e-2), err
    print("KERNEL_OK")
</pallas_src>

<mosaic_0001>
module attributes {stable_mosaic.version = 11 : i64} {
  func.func @_net_fused_kernel(%arg0: i32, %arg1: memref<1x4x3x1024xf32, #tpu.memory_space<vmem>>, %arg2: memref<9x10x3xf32, #tpu.memory_space<vmem>>, %arg3: memref<10x1xf32, #tpu.memory_space<vmem>>, %arg4: memref<9x10x10xf32, #tpu.memory_space<vmem>>, %arg5: memref<10x1xf32, #tpu.memory_space<vmem>>, %arg6: memref<9x2x10xf32, #tpu.memory_space<vmem>>, %arg7: memref<2x1xf32, #tpu.memory_space<vmem>>, %arg8: memref<1x2x1xf32, #tpu.memory_space<vmem>>) attributes {dimension_semantics = [#tpu.dimension_semantics<parallel>], iteration_bounds = array<i64: 2>, scalar_prefetch = 0 : i64, scratch_operands = 0 : i64, tpu.core_type = #tpu.core_type<tc>, window_params = [{transform_indices = @transform_0, window_bounds = array<i64: 1, 4, 3, 1024>}, {pipeline_mode = #tpu.pipeline_mode<synchronous>, transform_indices = @transform_1, window_bounds = array<i64: 9, 10, 3>}, {pipeline_mode = #tpu.pipeline_mode<synchronous>, transform_indices = @transform_2, window_bounds = array<i64: 10, 1>}, {pipeline_mode = #tpu.pipeline_mode<synchronous>, transform_indices = @transform_3, window_bounds = array<i64: 9, 10, 10>}, {pipeline_mode = #tpu.pipeline_mode<synchronous>, transform_indices = @transform_4, window_bounds = array<i64: 10, 1>}, {pipeline_mode = #tpu.pipeline_mode<synchronous>, transform_indices = @transform_5, window_bounds = array<i64: 9, 2, 10>}, {pipeline_mode = #tpu.pipeline_mode<synchronous>, transform_indices = @transform_6, window_bounds = array<i64: 2, 1>}, {transform_indices = @transform_7, window_bounds = array<i64: 1, 2, 1>}]} {
    %c0 = arith.constant 0 : index
    %c0_0 = arith.constant 0 : index
    %c0_1 = arith.constant 0 : index
    %c0_2 = arith.constant 0 : index
    %0 = vector.load %arg1[%c0, %c0_0, %c0_1, %c0_2] : memref<1x4x3x1024xf32, #tpu.memory_space<vmem>>, vector<1x1x3x1024xf32>
    %1 = vector.shape_cast %0 : vector<1x1x3x1024xf32> to vector<3x1024xf32>
    %c0_3 = arith.constant 0 : index
    %c1 = arith.constant 1 : index
    %c0_4 = arith.constant 0 : index
    %c0_5 = arith.constant 0 : index
    %2 = vector.load %arg1[%c0_3, %c1, %c0_4, %c0_5] : memref<1x4x3x1024xf32, #tpu.memory_space<vmem>>, vector<1x1x3x1024xf32>
    %3 = vector.shape_cast %2 : vector<1x1x3x1024xf32> to vector<3x1024xf32>
    %c0_6 = arith.constant 0 : index
    %c2 = arith.constant 2 : index
    %c0_7 = arith.constant 0 : index
    %c0_8 = arith.constant 0 : index
    %4 = vector.load %arg1[%c0_6, %c2, %c0_7, %c0_8] : memref<1x4x3x1024xf32, #tpu.memory_space<vmem>>, vector<1x1x3x1024xf32>
    %5 = vector.shape_cast %4 : vector<1x1x3x1024xf32> to vector<3x1024xf32>
    %c0_9 = arith.constant 0 : index
    %c3 = arith.constant 3 : index
    %c0_10 = arith.constant 0 : index
    %c0_11 = arith.constant 0 : index
    %6 = vector.load %arg1[%c0_9, %c3, %c0_10, %c0_11] : memref<1x4x3x1024xf32, #tpu.memory_space<vmem>>, vector<1x1x3x1024xf32>
    %7 = vector.shape_cast %6 : vector<1x1x3x1024xf32> to vector<3x1024xf32>
    %cst = arith.constant 0.000000e+00 : f32
    %8 = vector.broadcast %cst : f32 to vector<10x1024xf32>
    %c0_12 = arith.constant 0 : index
    %c0_13 = arith.constant 0 : index
    %c0_14 = arith.constant 0 : index
    %9 = vector.load %arg2[%c0_12, %c0_13, %c0_14] : memref<9x10x3xf32, #tpu.memory_space<vmem>>, vector<1x10x3xf32>
    %10 = vector.shape_cast %9 : vector<1x10x3xf32> to vector<10x3xf32>
    %cst_15 = arith.constant dense<0.000000e+00> : vector<10x1024xf32>
    %11 = tpu.matmul %10, %1, %cst_15 {dimension_numbers = #tpu.dot_dimension_numbers<[1], [0], [0], [1], [0, 0, 1, 1], [], []>} : vector<10x3xf32>, vector<3x1024xf32>, vector<10x1024xf32> -> vector<10x1024xf32>
    %12 = arith.addf %8, %11 : vector<10x1024xf32>
    %c1_16 = arith.constant 1 : index
    %c0_17 = arith.constant 0 : index
    %c0_18 = arith.constant 0 : index
    %13 = vector.load %arg2[%c1_16, %c0_17, %c0_18] : memref<9x10x3xf32, #tpu.memory_space<vmem>>, vector<1x10x3xf32>
    %14 = vector.shape_cast %13 : vector<1x10x3xf32> to vector<10x3xf32>
    %cst_19 = arith.constant dense<0.000000e+00> : vector<10x1024xf32>
    %15 = tpu.matmul %14, %3, %cst_19 {dimension_numbers = #tpu.dot_dimension_numbers<[1], [0], [0], [1], [0, 0, 1, 1], [], []>} : vector<10x3xf32>, vector<3x1024xf32>, vector<10x1024xf32> -> vector<10x1024xf32>
    %16 = arith.addf %12, %15 : vector<10x1024xf32>
    %17 = vector.extract_strided_slice %1 {offsets = [0, 1], sizes = [3, 1023], strides = [1, 1]} : vector<3x1024xf32> to vector<3x1023xf32>
    %18 = vector.extract_strided_slice %1 {offsets = [0, 0], sizes = [3, 1], strides = [1, 1]} : vector<3x1024xf32> to vector<3x1xf32>
    %19 = tpu.concatenate %17, %18 in 1 : vector<3x1023xf32>, vector<3x1xf32> -> vector<3x1024xf32>
    %c2_20 = arith.constant 2 : index
    %c0_21 = arith.constant 0 : index
    %c0_22 = arith.constant 0 : index
    %20 = vector.load %arg2[%c2_20, %c0_21, %c0_22] : memref<9x10x3xf32, #tpu.memory_space<vmem>>, vector<1x10x3xf32>
    %21 = vector.shape_cast %20 : vector<1x10x3xf32> to vector<10x3xf32>
    %cst_23 = arith.constant dense<0.000000e+00> : vector<10x1024xf32>
    %22 = tpu.matmul %21, %19, %cst_23 {dimension_numbers = #tpu.dot_dimension_numbers<[1], [0], [0], [1], [0, 0, 1, 1], [], []>} : vector<10x3xf32>, vector<3x1024xf32>, vector<10x1024xf32> -> vector<10x1024xf32>
    %23 = arith.addf %16, %22 : vector<10x1024xf32>
    %c3_24 = arith.constant 3 : index
    %c0_25 = arith.constant 0 : index
    %c0_26 = arith.constant 0 : index
    %24 = vector.load %arg2[%c3_24, %c0_25, %c0_26] : memref<9x10x3xf32, #tpu.memory_space<vmem>>, vector<1x10x3xf32>
    %25 = vector.shape_cast %24 : vector<1x10x3xf32> to vector<10x3xf32>
    %cst_27 = arith.constant dense<0.000000e+00> : vector<10x1024xf32>
    %26 = tpu.matmul %25, %5, %cst_27 {dimension_numbers = #tpu.dot_dimension_numbers<[1], [0], [0], [1], [0, 0, 1, 1], [], []>} : vector<10x3xf32>, vector<3x1024xf32>, vector<10x1024xf32> -> vector<10x1024xf32>
    %27 = arith.addf %23, %26 : vector<10x1024xf32>
    %c4 = arith.constant 4 : index
    %c0_28 = arith.constant 0 : index
    %c0_29 = arith.constant 0 : index
    %28 = vector.load %arg2[%c4, %c0_28, %c0_29] : memref<9x10x3xf32, #tpu.memory_space<vmem>>, vector<1x10x3xf32>
    %29 = vector.shape_cast %28 : vector<1x10x3xf32> to vector<10x3xf32>
    %cst_30 = arith.constant dense<0.000000e+00> : vector<10x1024xf32>
    %30 = tpu.matmul %29, %7, %cst_30 {dimension_numbers = #tpu.dot_dimension_numbers<[1], [0], [0], [1], [0, 0, 1, 1], [], []>} : vector<10x3xf32>, vector<3x1024xf32>, vector<10x1024xf32> -> vector<10x1024xf32>
    %31 = arith.addf %27, %30 : vector<10x1024xf32>
    %32 = vector.extract_strided_slice %5 {offsets = [0, 1], sizes = [3, 1023], strides = [1, 1]} : vector<3x1024xf32> to vector<3x1023xf32>
    %33 = vector.extract_strided_slice %5 {offsets = [0, 0], sizes = [3, 1], strides = [1, 1]} : vector<3x1024xf32> to vector<3x1xf32>
    %34 = tpu.concatenate %32, %33 in 1 : vector<3x1023xf32>, vector<3x1xf32> -> vector<3x1024xf32>
    %c5 = arith.constant 5 : index
    %c0_31 = arith.constant 0 : index
    %c0_32 = arith.constant 0 : index
    %35 = vector.load %arg2[%c5, %c0_31, %c0_32] : memref<9x10x3xf32, #tpu.memory_space<vmem>>, vector<1x10x3xf32>
    %36 = vector.shape_cast %35 : vector<1x10x3xf32> to vector<10x3xf32>
    %cst_33 = arith.constant dense<0.000000e+00> : vector<10x1024xf32>
    %37 = tpu.matmul %36, %34, %cst_33 {dimension_numbers = #tpu.dot_dimension_numbers<[1], [0], [0], [1], [0, 0, 1, 1], [], []>} : vector<10x3xf32>, vector<3x1024xf32>, vector<10x1024xf32> -> vector<10x1024xf32>
    %38 = arith.addf %31, %37 : vector<10x1024xf32>
    %39 = vector.extract_strided_slice %1 {offsets = [0, 32], sizes = [3, 992], strides = [1, 1]} : vector<3x1024xf32> to vector<3x992xf32>
    %40 = vector.extract_strided_slice %1 {offsets = [0, 0], sizes = [3, 32], strides = [1, 1]} : vector<3x1024xf32> to vector<3x32xf32>
    %41 = tpu.concatenate %39, %40 in 1 : vector<3x992xf32>, vector<3x32xf32> -> vector<3x1024xf32>
    %c6 = arith.constant 6 : index
    %c0_34 = arith.constant 0 : index
    %c0_35 = arith.constant 0 : index
    %42 = vector.load %arg2[%c6, %c0_34, %c0_35] : memref<9x10x3xf32, #tpu.memory_space<vmem>>, vector<1x10x3xf32>
    %43 = vector.shape_cast %42 : vector<1x10x3xf32> to vector<10x3xf32>
    %cst_36 = arith.constant dense<0.000000e+00> : vector<10x1024xf32>
    %44 = tpu.matmul %43, %41, %cst_36 {dimension_numbers = #tpu.dot_dimension_numbers<[1], [0], [0], [1], [0, 0, 1, 1], [], []>} : vector<10x3xf32>, vector<3x1024xf32>, vector<10x1024xf32> -> vector<10x1024xf32>
    %45 = arith.addf %38, %44 : vector<10x1024xf32>
    %46 = vector.extract_strided_slice %3 {offsets = [0, 32], sizes = [3, 992], strides = [1, 1]} : vector<3x1024xf32> to vector<3x992xf32>
    %47 = vector.extract_strided_slice %3 {offsets = [0, 0], sizes = [3, 32], strides = [1, 1]} : vector<3x1024xf32> to vector<3x32xf32>
    %48 = tpu.concatenate %46, %47 in 1 : vector<3x992xf32>, vector<3x32xf32> -> vector<3x1024xf32>
    %c7 = arith.constant 7 : index
    %c0_37 = arith.constant 0 : index
    %c0_38 = arith.constant 0 : index
    %49 = vector.load %arg2[%c7, %c0_37, %c0_38] : memref<9x10x3xf32, #tpu.memory_space<vmem>>, vector<1x10x3xf32>
    %50 = vector.shape_cast %49 : vector<1x10x3xf32> to vector<10x3xf32>
    %cst_39 = arith.constant dense<0.000000e+00> : vector<10x1024xf32>
    %51 = tpu.matmul %50, %48, %cst_39 {dimension_numbers = #tpu.dot_dimension_numbers<[1], [0], [0], [1], [0, 0, 1, 1], [], []>} : vector<10x3xf32>, vector<3x1024xf32>, vector<10x1024xf32> -> vector<10x1024xf32>
    %52 = arith.addf %45, %51 : vector<10x1024xf32>
    %53 = vector.extract_strided_slice %1 {offsets = [0, 33], sizes = [3, 991], strides = [1, 1]} : vector<3x1024xf32> to vector<3x991xf32>
    %54 = vector.extract_strided_slice %1 {offsets = [0, 0], sizes = [3, 33], strides = [1, 1]} : vector<3x1024xf32> to vector<3x33xf32>
    %55 = tpu.concatenate %53, %54 in 1 : vector<3x991xf32>, vector<3x33xf32> -> vector<3x1024xf32>
    %c8 = arith.constant 8 : index
    %c0_40 = arith.constant 0 : index
    %c0_41 = arith.constant 0 : index
    %56 = vector.load %arg2[%c8, %c0_40, %c0_41] : memref<9x10x3xf32, #tpu.memory_space<vmem>>, vector<1x10x3xf32>
    %57 = vector.shape_cast %56 : vector<1x10x3xf32> to vector<10x3xf32>
    %cst_42 = arith.constant dense<0.000000e+00> : vector<10x1024xf32>
    %58 = tpu.matmul %57, %55, %cst_42 {dimension_numbers = #tpu.dot_dimension_numbers<[1], [0], [0], [1], [0, 0, 1, 1], [], []>} : vector<10x3xf32>, vector<3x1024xf32>, vector<10x1024xf32> -> vector<10x1024xf32>
    %59 = arith.addf %52, %58 : vector<10x1024xf32>
    %c0_43 = arith.constant 0 : index
    %c0_44 = arith.constant 0 : index
    %60 = vector.load %arg3[%c0_43, %c0_44] : memref<10x1xf32, #tpu.memory_space<vmem>>, vector<10x1xf32>
    %61 = vector.broadcast %60 : vector<10x1xf32> to vector<10x1024xf32>
    %62 = arith.addf %59, %61 : vector<10x1024xf32>
    %cst_45 = arith.constant 0.000000e+00 : f32
    %63 = vector.broadcast %cst_45 : f32 to vector<10x1024xf32>
    %64 = arith.maximumf %62, %63 : vector<10x1024xf32>
    %65 = vector.extract_strided_slice %64 {offsets = [0, 32], sizes = [10, 992], strides = [1, 1]} : vector<10x1024xf32> to vector<10x992xf32>
    %66 = vector.extract_strided_slice %64 {offsets = [0, 0], sizes = [10, 32], strides = [1, 1]} : vector<10x1024xf32> to vector<10x32xf32>
    %67 = tpu.concatenate %65, %66 in 1 : vector<10x992xf32>, vector<10x32xf32> -> vector<10x1024xf32>
    %68 = arith.maximumf %64, %67 : vector<10x1024xf32>
    %69 = vector.extract_strided_slice %68 {offsets = [0, 1], sizes = [10, 1023], strides = [1, 1]} : vector<10x1024xf32> to vector<10x1023xf32>
    %70 = vector.extract_strided_slice %68 {offsets = [0, 0], sizes = [10, 1], strides = [1, 1]} : vector<10x1024xf32> to vector<10x1xf32>
    %71 = tpu.concatenate %69, %70 in 1 : vector<10x1023xf32>, vector<10x1xf32> -> vector<10x1024xf32>
    %72 = arith.maximumf %68, %71 : vector<10x1024xf32>
    %cst_46 = arith.constant 0.000000e+00 : f32
    %73 = vector.broadcast %cst_46 : f32 to vector<10x1024xf32>
    %c0_47 = arith.constant 0 : index
    %c0_48 = arith.constant 0 : index
    %c0_49 = arith.constant 0 : index
    %74 = vector.load %arg4[%c0_47, %c0_48, %c0_49] : memref<9x10x10xf32, #tpu.memory_space<vmem>>, vector<1x10x10xf32>
    %75 = vector.shape_cast %74 : vector<1x10x10xf32> to vector<10x10xf32>
    %cst_50 = arith.constant dense<0.000000e+00> : vector<10x1024xf32>
    %76 = tpu.matmul %75, %72, %cst_50 {dimension_numbers = #tpu.dot_dimension_numbers<[1], [0], [0], [1], [0, 0, 1, 1], [], []>} : vector<10x10xf32>, vector<10x1024xf32>, vector<10x1024xf32> -> vector<10x1024xf32>
    %77 = arith.addf %73, %76 : vector<10x1024xf32>
    %c1_51 = arith.constant 1 : index
    %c0_52 = arith.constant 0 : index
    %c0_53 = arith.constant 0 : index
    %78 = vector.load %arg4[%c1_51, %c0_52, %c0_53] : memref<9x10x10xf32, #tpu.memory_space<vmem>>, vector<1x10x10xf32>
    %79 = vector.shape_cast %78 : vector<1x10x10xf32> to vector<10x10xf32>
    %80 = vector.extract_strided_slice %72 {offsets = [0, 2], sizes = [10, 1022], strides = [1, 1]} : vector<10x1024xf32> to vector<10x1022xf32>
    %81 = vector.extract_strided_slice %72 {offsets = [0, 0], sizes = [10, 2], strides = [1, 1]} : vector<10x1024xf32> to vector<10x2xf32>
    %82 = tpu.concatenate %80, %81 in 1 : vector<10x1022xf32>, vector<10x2xf32> -> vector<10x1024xf32>
    %cst_54 = arith.constant dense<0.000000e+00> : vector<10x1024xf32>
    %83 = tpu.matmul %79, %82, %cst_54 {dimension_numbers = #tpu.dot_dimension_numbers<[1], [0], [0], [1], [0, 0, 1, 1], [], []>} : vector<10x10xf32>, vector<10x1024xf32>, vector<10x1024xf32> -> vector<10x1024xf32>
    %84 = arith.addf %77, %83 : vector<10x1024xf32>
    %c2_55 = arith.constant 2 : index
    %c0_56 = arith.constant 0 : index
    %c0_57 = arith.constant 0 : index
    %85 = vector.load %arg4[%c2_55, %c0_56, %c0_57] : memref<9x10x10xf32, #tpu.memory_space<vmem>>, vector<1x10x10xf32>
    %86 = vector.shape_cast %85 : vector<1x10x10xf32> to vector<10x10xf32>
    %87 = vector.extract_strided_slice %72 {offsets = [0, 4], sizes = [10, 1020], strides = [1, 1]} : vector<10x1024xf32> to vector<10x1020xf32>
    %88 = vector.extract_strided_slice %72 {offsets = [0, 0], sizes = [10, 4], strides = [1, 1]} : vector<10x1024xf32> to vector<10x4xf32>
    %89 = tpu.concatenate %87, %88 in 1 : vector<10x1020xf32>, vector<10x4xf32> -> vector<10x1024xf32>
    %cst_58 = arith.constant dense<0.000000e+00> : vector<10x1024xf32>
    %90 = tpu.matmul %86, %89, %cst_58 {dimension_numbers = #tpu.dot_dimension_numbers<[1], [0], [0], [1], [0, 0, 1, 1], [], []>} : vector<10x10xf32>, vector<10x1024xf32>, vector<10x1024xf32> -> vector<10x1024xf32>
    %91 = arith.addf %84, %90 : vector<10x1024xf32>
    %c3_59 = arith.constant 3 : index
    %c0_60 = arith.constant 0 : index
    %c0_61 = arith.constant 0 : index
    %92 = vector.load %arg4[%c3_59, %c0_60, %c0_61] : memref<9x10x10xf32, #tpu.memory_space<vmem>>, vector<1x10x10xf32>
    %93 = vector.shape_cast %92 : vector<1x10x10xf32> to vector<10x10xf32>
    %94 = vector.extract_strided_slice %72 {offsets = [0, 64], sizes = [10, 960], strides = [1, 1]} : vector<10x1024xf32> to vector<10x960xf32>
    %95 = vector.extract_strided_slice %72 {offsets = [0, 0], sizes = [10, 64], strides = [1, 1]} : vector<10x1024xf32> to vector<10x64xf32>
    %96 = tpu.concatenate %94, %95 in 1 : vector<10x960xf32>, vector<10x64xf32> -> vector<10x1024xf32>
    %cst_62 = arith.constant dense<0.000000e+00> : vector<10x1024xf32>
    %97 = tpu.matmul %93, %96, %cst_62 {dimension_numbers = #tpu.dot_dimension_numbers<[1], [0], [0], [1], [0, 0, 1, 1], [], []>} : vector<10x10xf32>, vector<10x1024xf32>, vector<10x1024xf32> -> vector<10x1024xf32>
    %98 = arith.addf %91, %97 : vector<10x1024xf32>
    %c4_63 = arith.constant 4 : index
    %c0_64 = arith.constant 0 : index
    %c0_65 = arith.constant 0 : index
    %99 = vector.load %arg4[%c4_63, %c0_64, %c0_65] : memref<9x10x10xf32, #tpu.memory_space<vmem>>, vector<1x10x10xf32>
    %100 = vector.shape_cast %99 : vector<1x10x10xf32> to vector<10x10xf32>
    %101 = vector.extract_strided_slice %72 {offsets = [0, 66], sizes = [10, 958], strides = [1, 1]} : vector<10x1024xf32> to vector<10x958xf32>
    %102 = vector.extract_strided_slice %72 {offsets = [0, 0], sizes = [10, 66], strides = [1, 1]} : vector<10x1024xf32> to vector<10x66xf32>
    %103 = tpu.concatenate %101, %102 in 1 : vector<10x958xf32>, vector<10x66xf32> -> vector<10x1024xf32>
    %cst_66 = arith.constant dense<0.000000e+00> : vector<10x1024xf32>
    %104 = tpu.matmul %100, %103, %cst_66 {dimension_numbers = #tpu.dot_dimension_numbers<[1], [0], [0], [1], [0, 0, 1, 1], [], []>} : vector<10x10xf32>, vector<10x1024xf32>, vector<10x1024xf32> -> vector<10x1024xf32>
    %105 = arith.addf %98, %104 : vector<10x1024xf32>
    %c5_67 = arith.constant 5 : index
    %c0_68 = arith.constant 0 : index
    %c0_69 = arith.constant 0 : index
    %106 = vector.load %arg4[%c5_67, %c0_68, %c0_69] : memref<9x10x10xf32, #tpu.memory_space<vmem>>, vector<1x10x10xf32>
    %107 = vector.shape_cast %106 : vector<1x10x10xf32> to vector<10x10xf32>
    %108 = vector.extract_strided_slice %72 {offsets = [0, 68], sizes = [10, 956], strides = [1, 1]} : vector<10x1024xf32> to vector<10x956xf32>
    %109 = vector.extract_strided_slice %72 {offsets = [0, 0], sizes = [10, 68], strides = [1, 1]} : vector<10x1024xf32> to vector<10x68xf32>
    %110 = tpu.concatenate %108, %109 in 1 : vector<10x956xf32>, vector<10x68xf32> -> vector<10x1024xf32>
    %cst_70 = arith.constant dense<0.000000e+00> : vector<10x1024xf32>
    %111 = tpu.matmul %107, %110, %cst_70 {dimension_numbers = #tpu.dot_dimension_numbers<[1], [0], [0], [1], [0, 0, 1, 1], [], []>} : vector<10x10xf32>, vector<10x1024xf32>, vector<10x1024xf32> -> vector<10x1024xf32>
    %112 = arith.addf %105, %111 : vector<10x1024xf32>
    %c6_71 = arith.constant 6 : index
    %c0_72 = arith.constant 0 : index
    %c0_73 = arith.constant 0 : index
    %113 = vector.load %arg4[%c6_71, %c0_72, %c0_73] : memref<9x10x10xf32, #tpu.memory_space<vmem>>, vector<1x10x10xf32>
    %114 = vector.shape_cast %113 : vector<1x10x10xf32> to vector<10x10xf32>
    %115 = vector.extract_strided_slice %72 {offsets = [0, 128], sizes = [10, 896], strides = [1, 1]} : vector<10x1024xf32> to vector<10x896xf32>
    %116 = vector.extract_strided_slice %72 {offsets = [0, 0], sizes = [10, 128], strides = [1, 1]} : vector<10x1024xf32> to vector<10x128xf32>
    %117 = tpu.concatenate %115, %116 in 1 : vector<10x896xf32>, vector<10x128xf32> -> vector<10x1024xf32>
    %cst_74 = arith.constant dense<0.000000e+00> : vector<10x1024xf32>
    %118 = tpu.matmul %114, %117, %cst_74 {dimension_numbers = #tpu.dot_dimension_numbers<[1], [0], [0], [1], [0, 0, 1, 1], [], []>} : vector<10x10xf32>, vector<10x1024xf32>, vector<10x1024xf32> -> vector<10x1024xf32>
    %119 = arith.addf %112, %118 : vector<10x1024xf32>
    %c7_75 = arith.constant 7 : index
    %c0_76 = arith.constant 0 : index
    %c0_77 = arith.constant 0 : index
    %120 = vector.load %arg4[%c7_75, %c0_76, %c0_77] : memref<9x10x10xf32, #tpu.memory_space<vmem>>, vector<1x10x10xf32>
    %121 = vector.shape_cast %120 : vector<1x10x10xf32> to vector<10x10xf32>
    %122 = vector.extract_strided_slice %72 {offsets = [0, 130], sizes = [10, 894], strides = [1, 1]} : vector<10x1024xf32> to vector<10x894xf32>
    %123 = vector.extract_strided_slice %72 {offsets = [0, 0], sizes = [10, 130], strides = [1, 1]} : vector<10x1024xf32> to vector<10x130xf32>
    %124 = tpu.concatenate %122, %123 in 1 : vector<10x894xf32>, vector<10x130xf32> -> vector<10x1024xf32>
    %cst_78 = arith.constant dense<0.000000e+00> : vector<10x1024xf32>
    %125 = tpu.matmul %121, %124, %cst_78 {dimension_numbers = #tpu.dot_dimension_numbers<[1], [0], [0], [1], [0, 0, 1, 1], [], []>} : vector<10x10xf32>, vector<10x1024xf32>, vector<10x1024xf32> -> vector<10x1024xf32>
    %126 = arith.addf %119, %125 : vector<10x1024xf32>
    %c8_79 = arith.constant 8 : index
    %c0_80 = arith.constant 0 : index
    %c0_81 = arith.constant 0 : index
    %127 = vector.load %arg4[%c8_79, %c0_80, %c0_81] : memref<9x10x10xf32, #tpu.memory_space<vmem>>, vector<1x10x10xf32>
    %128 = vector.shape_cast %127 : vector<1x10x10xf32> to vector<10x10xf32>
    %129 = vector.extract_strided_slice %72 {offsets = [0, 132], sizes = [10, 892], strides = [1, 1]} : vector<10x1024xf32> to vector<10x892xf32>
    %130 = vector.extract_strided_slice %72 {offsets = [0, 0], sizes = [10, 132], strides = [1, 1]} : vector<10x1024xf32> to vector<10x132xf32>
    %131 = tpu.concatenate %129, %130 in 1 : vector<10x892xf32>, vector<10x132xf32> -> vector<10x1024xf32>
    %cst_82 = arith.constant dense<0.000000e+00> : vector<10x1024xf32>
    %132 = tpu.matmul %128, %131, %cst_82 {dimension_numbers = #tpu.dot_dimension_numbers<[1], [0], [0], [1], [0, 0, 1, 1], [], []>} : vector<10x10xf32>, vector<10x1024xf32>, vector<10x1024xf32> -> vector<10x1024xf32>
    %133 = arith.addf %126, %132 : vector<10x1024xf32>
    %c0_83 = arith.constant 0 : index
    %c0_84 = arith.constant 0 : index
    %134 = vector.load %arg5[%c0_83, %c0_84] : memref<10x1xf32, #tpu.memory_space<vmem>>, vector<10x1xf32>
    %135 = vector.broadcast %134 : vector<10x1xf32> to vector<10x1024xf32>
    %136 = arith.addf %133, %135 : vector<10x1024xf32>
    %cst_85 = arith.constant 0.000000e+00 : f32
    %137 = vector.broadcast %cst_85 : f32 to vector<10x1024xf32>
    %138 = arith.maximumf %136, %137 : vector<10x1024xf32>
    %139 = vector.extract_strided_slice %138 {offsets = [0, 128], sizes = [10, 896], strides = [1, 1]} : vector<10x1024xf32> to vector<10x896xf32>
    %140 = vector.extract_strided_slice %138 {offsets = [0, 0], sizes = [10, 128], strides = [1, 1]} : vector<10x1024xf32> to vector<10x128xf32>
    %141 = tpu.concatenate %139, %140 in 1 : vector<10x896xf32>, vector<10x128xf32> -> vector<10x1024xf32>
    %142 = arith.maximumf %138, %141 : vector<10x1024xf32>
    %143 = vector.extract_strided_slice %142 {offsets = [0, 4], sizes = [10, 1020], strides = [1, 1]} : vector<10x1024xf32> to vector<10x1020xf32>
    %144 = vector.extract_strided_slice %142 {offsets = [0, 0], sizes = [10, 4], strides = [1, 1]} : vector<10x1024xf32> to vector<10x4xf32>
    %145 = tpu.concatenate %143, %144 in 1 : vector<10x1020xf32>, vector<10x4xf32> -> vector<10x1024xf32>
    %146 = arith.maximumf %142, %145 : vector<10x1024xf32>
    %cst_86 = arith.constant 0.000000e+00 : f32
    %147 = vector.broadcast %cst_86 : f32 to vector<2x1024xf32>
    %c0_87 = arith.constant 0 : index
    %c0_88 = arith.constant 0 : index
    %c0_89 = arith.constant 0 : index
    %148 = vector.load %arg6[%c0_87, %c0_88, %c0_89] : memref<9x2x10xf32, #tpu.memory_space<vmem>>, vector<1x2x10xf32>
    %149 = vector.shape_cast %148 : vector<1x2x10xf32> to vector<2x10xf32>
    %cst_90 = arith.constant dense<0.000000e+00> : vector<2x1024xf32>
    %150 = tpu.matmul %149, %146, %cst_90 {dimension_numbers = #tpu.dot_dimension_numbers<[1], [0], [0], [1], [0, 0, 1, 1], [], []>} : vector<2x10xf32>, vector<10x1024xf32>, vector<2x1024xf32> -> vector<2x1024xf32>
    %151 = arith.addf %147, %150 : vector<2x1024xf32>
    %c1_91 = arith.constant 1 : index
    %c0_92 = arith.constant 0 : index
    %c0_93 = arith.constant 0 : index
    %152 = vector.load %arg6[%c1_91, %c0_92, %c0_93] : memref<9x2x10xf32, #tpu.memory_space<vmem>>, vector<1x2x10xf32>
    %153 = vector.shape_cast %152 : vector<1x2x10xf32> to vector<2x10xf32>
    %154 = vector.extract_strided_slice %146 {offsets = [0, 8], sizes = [10, 1016], strides = [1, 1]} : vector<10x1024xf32> to vector<10x1016xf32>
    %155 = vector.extract_strided_slice %146 {offsets = [0, 0], sizes = [10, 8], strides = [1, 1]} : vector<10x1024xf32> to vector<10x8xf32>
    %156 = tpu.concatenate %154, %155 in 1 : vector<10x1016xf32>, vector<10x8xf32> -> vector<10x1024xf32>
    %cst_94 = arith.constant dense<0.000000e+00> : vector<2x1024xf32>
    %157 = tpu.matmul %153, %156, %cst_94 {dimension_numbers = #tpu.dot_dimension_numbers<[1], [0], [0], [1], [0, 0, 1, 1], [], []>} : vector<2x10xf32>, vector<10x1024xf32>, vector<2x1024xf32> -> vector<2x1024xf32>
    %158 = arith.addf %151, %157 : vector<2x1024xf32>
    %c2_95 = arith.constant 2 : index
    %c0_96 = arith.constant 0 : index
    %c0_97 = arith.constant 0 : index
    %159 = vector.load %arg6[%c2_95, %c0_96, %c0_97] : memref<9x2x10xf32, #tpu.memory_space<vmem>>, vector<1x2x10xf32>
    %160 = vector.shape_cast %159 : vector<1x2x10xf32> to vector<2x10xf32>
    %161 = vector.extract_strided_slice %146 {offsets = [0, 16], sizes = [10, 1008], strides = [1, 1]} : vector<10x1024xf32> to vector<10x1008xf32>
    %162 = vector.extract_strided_slice %146 {offsets = [0, 0], sizes = [10, 16], strides = [1, 1]} : vector<10x1024xf32> to vector<10x16xf32>
    %163 = tpu.concatenate %161, %162 in 1 : vector<10x1008xf32>, vector<10x16xf32> -> vector<10x1024xf32>
    %cst_98 = arith.constant dense<0.000000e+00> : vector<2x1024xf32>
    %164 = tpu.matmul %160, %163, %cst_98 {dimension_numbers = #tpu.dot_dimension_numbers<[1], [0], [0], [1], [0, 0, 1, 1], [], []>} : vector<2x10xf32>, vector<10x1024xf32>, vector<2x1024xf32> -> vector<2x1024xf32>
    %165 = arith.addf %158, %164 : vector<2x1024xf32>
    %c3_99 = arith.constant 3 : index
    %c0_100 = arith.constant 0 : index
    %c0_101 = arith.constant 0 : index
    %166 = vector.load %arg6[%c3_99, %c0_100, %c0_101] : memref<9x2x10xf32, #tpu.memory_space<vmem>>, vector<1x2x10xf32>
    %167 = vector.shape_cast %166 : vector<1x2x10xf32> to vector<2x10xf32>
    %168 = vector.extract_strided_slice %146 {offsets = [0, 256], sizes = [10, 768], strides = [1, 1]} : vector<10x1024xf32> to vector<10x768xf32>
    %169 = vector.extract_strided_slice %146 {offsets = [0, 0], sizes = [10, 256], strides = [1, 1]} : vector<10x1024xf32> to vector<10x256xf32>
    %170 = tpu.concatenate %168, %169 in 1 : vector<10x768xf32>, vector<10x256xf32> -> vector<10x1024xf32>
    %cst_102 = arith.constant dense<0.000000e+00> : vector<2x1024xf32>
    %171 = tpu.matmul %167, %170, %cst_102 {dimension_numbers = #tpu.dot_dimension_numbers<[1], [0], [0], [1], [0, 0, 1, 1], [], []>} : vector<2x10xf32>, vector<10x1024xf32>, vector<2x1024xf32> -> vector<2x1024xf32>
    %172 = arith.addf %165, %171 : vector<2x1024xf32>
    %c4_103 = arith.constant 4 : index
    %c0_104 = arith.constant 0 : index
    %c0_105 = arith.constant 0 : index
    %173 = vector.load %arg6[%c4_103, %c0_104, %c0_105] : memref<9x2x10xf32, #tpu.memory_space<vmem>>, vector<1x2x10xf32>
    %174 = vector.shape_cast %173 : vector<1x2x10xf32> to vector<2x10xf32>
    %175 = vector.extract_strided_slice %146 {offsets = [0, 264], sizes = [10, 760], strides = [1, 1]} : vector<10x1024xf32> to vector<10x760xf32>
    %176 = vector.extract_strided_slice %146 {offsets = [0, 0], sizes = [10, 264], strides = [1, 1]} : vector<10x1024xf32> to vector<10x264xf32>
    %177 = tpu.concatenate %175, %176 in 1 : vector<10x760xf32>, vector<10x264xf32> -> vector<10x1024xf32>
    %cst_106 = arith.constant dense<0.000000e+00> : vector<2x1024xf32>
    %178 = tpu.matmul %174, %177, %cst_106 {dimension_numbers = #tpu.dot_dimension_numbers<[1], [0], [0], [1], [0, 0, 1, 1], [], []>} : vector<2x10xf32>, vector<10x1024xf32>, vector<2x1024xf32> -> vector<2x1024xf32>
    %179 = arith.addf %172, %178 : vector<2x1024xf32>
    %c5_107 = arith.constant 5 : index
    %c0_108 = arith.constant 0 : index
    %c0_109 = arith.constant 0 : index
    %180 = vector.load %arg6[%c5_107, %c0_108, %c0_109] : memref<9x2x10xf32, #tpu.memory_space<vmem>>, vector<1x2x10xf32>
    %181 = vector.shape_cast %180 : vector<1x2x10xf32> to vector<2x10xf32>
    %182 = vector.extract_strided_slice %146 {offsets = [0, 272], sizes = [10, 752], strides = [1, 1]} : vector<10x1024xf32> to vector<10x752xf32>
    %183 = vector.extract_strided_slice %146 {offsets = [0, 0], sizes = [10, 272], strides = [1, 1]} : vector<10x1024xf32> to vector<10x272xf32>
    %184 = tpu.concatenate %182, %183 in 1 : vector<10x752xf32>, vector<10x272xf32> -> vector<10x1024xf32>
    %cst_110 = arith.constant dense<0.000000e+00> : vector<2x1024xf32>
    %185 = tpu.matmul %181, %184, %cst_110 {dimension_numbers = #tpu.dot_dimension_numbers<[1], [0], [0], [1], [0, 0, 1, 1], [], []>} : vector<2x10xf32>, vector<10x1024xf32>, vector<2x1024xf32> -> vector<2x1024xf32>
    %186 = arith.addf %179, %185 : vector<2x1024xf32>
    %c6_111 = arith.constant 6 : index
    %c0_112 = arith.constant 0 : index
    %c0_113 = arith.constant 0 : index
    %187 = vector.load %arg6[%c6_111, %c0_112, %c0_113] : memref<9x2x10xf32, #tpu.memory_space<vmem>>, vector<1x2x10xf32>
    %188 = vector.shape_cast %187 : vector<1x2x10xf32> to vector<2x10xf32>
    %189 = vector.extract_strided_slice %146 {offsets = [0, 512], sizes = [10, 512], strides = [1, 1]} : vector<10x1024xf32> to vector<10x512xf32>
    %190 = vector.extract_strided_slice %146 {offsets = [0, 0], sizes = [10, 512], strides = [1, 1]} : vector<10x1024xf32> to vector<10x512xf32>
    %191 = tpu.concatenate %189, %190 in 1 : vector<10x512xf32>, vector<10x512xf32> -> vector<10x1024xf32>
    %cst_114 = arith.constant dense<0.000000e+00> : vector<2x1024xf32>
    %192 = tpu.matmul %188, %191, %cst_114 {dimension_numbers = #tpu.dot_dimension_numbers<[1], [0], [0], [1], [0, 0, 1, 1], [], []>} : vector<2x10xf32>, vector<10x1024xf32>, vector<2x1024xf32> -> vector<2x1024xf32>
    %193 = arith.addf %186, %192 : vector<2x1024xf32>
    %c7_115 = arith.constant 7 : index
    %c0_116 = arith.constant 0 : index
    %c0_117 = arith.constant 0 : index
    %194 = vector.load %arg6[%c7_115, %c0_116, %c0_117] : memref<9x2x10xf32, #tpu.memory_space<vmem>>, vector<1x2x10xf32>
    %195 = vector.shape_cast %194 : vector<1x2x10xf32> to vector<2x10xf32>
    %196 = vector.extract_strided_slice %146 {offsets = [0, 520], sizes = [10, 504], strides = [1, 1]} : vector<10x1024xf32> to vector<10x504xf32>
    %197 = vector.extract_strided_slice %146 {offsets = [0, 0], sizes = [10, 520], strides = [1, 1]} : vector<10x1024xf32> to vector<10x520xf32>
    %198 = tpu.concatenate %196, %197 in 1 : vector<10x504xf32>, vector<10x520xf32> -> vector<10x1024xf32>
    %cst_118 = arith.constant dense<0.000000e+00> : vector<2x1024xf32>
    %199 = tpu.matmul %195, %198, %cst_118 {dimension_numbers = #tpu.dot_dimension_numbers<[1], [0], [0], [1], [0, 0, 1, 1], [], []>} : vector<2x10xf32>, vector<10x1024xf32>, vector<2x1024xf32> -> vector<2x1024xf32>
    %200 = arith.addf %193, %199 : vector<2x1024xf32>
    %c8_119 = arith.constant 8 : index
    %c0_120 = arith.constant 0 : index
    %c0_121 = arith.constant 0 : index
    %201 = vector.load %arg6[%c8_119, %c0_120, %c0_121] : memref<9x2x10xf32, #tpu.memory_space<vmem>>, vector<1x2x10xf32>
    %202 = vector.shape_cast %201 : vector<1x2x10xf32> to vector<2x10xf32>
    %203 = vector.extract_strided_slice %146 {offsets = [0, 528], sizes = [10, 496], strides = [1, 1]} : vector<10x1024xf32> to vector<10x496xf32>
    %204 = vector.extract_strided_slice %146 {offsets = [0, 0], sizes = [10, 528], strides = [1, 1]} : vector<10x1024xf32> to vector<10x528xf32>
    %205 = tpu.concatenate %203, %204 in 1 : vector<10x496xf32>, vector<10x528xf32> -> vector<10x1024xf32>
    %cst_122 = arith.constant dense<0.000000e+00> : vector<2x1024xf32>
    %206 = tpu.matmul %202, %205, %cst_122 {dimension_numbers = #tpu.dot_dimension_numbers<[1], [0], [0], [1], [0, 0, 1, 1], [], []>} : vector<2x10xf32>, vector<10x1024xf32>, vector<2x1024xf32> -> vector<2x1024xf32>
    %207 = arith.addf %200, %206 : vector<2x1024xf32>
    %208 = vector.extract_strided_slice %207 {offsets = [0, 0], sizes = [2, 1], strides = [1, 1]} : vector<2x1024xf32> to vector<2x1xf32>
    %c0_123 = arith.constant 0 : index
    %c0_124 = arith.constant 0 : index
    %209 = vector.load %arg7[%c0_123, %c0_124] : memref<2x1xf32, #tpu.memory_space<vmem>>, vector<2x1xf32>
    %210 = arith.addf %208, %209 : vector<2x1xf32>
    %c0_125 = arith.constant 0 : index
    %c0_126 = arith.constant 0 : index
    %c0_127 = arith.constant 0 : index
    %211 = vector.load %arg8[%c0_125, %c0_126, %c0_127] : memref<1x2x1xf32, #tpu.memory_space<vmem>>, vector<1x2x1xf32>
    %212 = vector.shape_cast %211 : vector<1x2x1xf32> to vector<2x1xf32>
    %213 = vector.shape_cast %210 : vector<2x1xf32> to vector<1x2x1xf32>
    tpu.vector_store %arg8[%c0_125, %c0_126, %c0_127], %213 {strides = array<i32>} : memref<1x2x1xf32, #tpu.memory_space<vmem>>, vector<1x2x1xf32>,
    return
  }
  func.func @transform_0(%arg0: i32) -> (i32, i32, i32, i32) {
    %c0_i32 = arith.constant 0 : i32
    %c0_i32_0 = arith.constant 0 : i32
    %c0_i32_1 = arith.constant 0 : i32
    %c0_i32_2 = arith.constant 0 : i32
    return %arg0, %c0_i32, %c0_i32_0, %c0_i32_1 : i32, i32, i32, i32
  }
  func.func @transform_1(%arg0: i32) -> (i32, i32, i32) {
    %c0_i32 = arith.constant 0 : i32
    %c0_i32_0 = arith.constant 0 : i32
    %c0_i32_1 = arith.constant 0 : i32
    %c0_i32_2 = arith.constant 0 : i32
    return %c0_i32, %c0_i32_0, %c0_i32_1 : i32, i32, i32
  }
  func.func @transform_2(%arg0: i32) -> (i32, i32) {
    %c0_i32 = arith.constant 0 : i32
    %c0_i32_0 = arith.constant 0 : i32
    %c0_i32_1 = arith.constant 0 : i32
    return %c0_i32, %c0_i32_0 : i32, i32
  }
  func.func @transform_3(%arg0: i32) -> (i32, i32, i32) {
    %c0_i32 = arith.constant 0 : i32
    %c0_i32_0 = arith.constant 0 : i32
    %c0_i32_1 = arith.constant 0 : i32
    %c0_i32_2 = arith.constant 0 : i32
    return %c0_i32, %c0_i32_0, %c0_i32_1 : i32, i32, i32
  }
  func.func @transform_4(%arg0: i32) -> (i32, i32) {
    %c0_i32 = arith.constant 0 : i32
    %c0_i32_0 = arith.constant 0 : i32
    %c0_i32_1 = arith.constant 0 : i32
    return %c0_i32, %c0_i32_0 : i32, i32
  }
  func.func @transform_5(%arg0: i32) -> (i32, i32, i32) {
    %c0_i32 = arith.constant 0 : i32
    %c0_i32_0 = arith.constant 0 : i32
    %c0_i32_1 = arith.constant 0 : i32
    %c0_i32_2 = arith.constant 0 : i32
    return %c0_i32, %c0_i32_0, %c0_i32_1 : i32, i32, i32
  }
  func.func @transform_6(%arg0: i32) -> (i32, i32) {
    %c0_i32 = arith.constant 0 : i32
    %c0_i32_0 = arith.constant 0 : i32
    %c0_i32_1 = arith.constant 0 : i32
    return %c0_i32, %c0_i32_0 : i32, i32
  }
  func.func @transform_7(%arg0: i32) -> (i32, i32, i32) {
    %c0_i32 = arith.constant 0 : i32
    %c0_i32_0 = arith.constant 0 : i32
    %c0_i32_1 = arith.constant 0 : i32
    return %arg0, %c0_i32, %c0_i32_0 : i32, i32, i32
  }
}

</mosaic_0001>

<llo_original>
// kernel: net_forward.1
$region0: #{net_forward.1}
  #allocation0 [shape = 'u32[]', space=smem, size = 0x4, offset = 0x4, fixed_abs, tag = 'smem constant byte address 0x4 - core index']
  #allocation1 [shape = 'u32[144,128]{1,0:T(1,128)}', space=vmem, size = 0x12000, scoped, tag = 'internal scratch']
  %s0 = inlined_call_operand.vmem [shape: f32[2,4,3,1024], index: 0, kind: input, shape index: {}]
  %s1 = inlined_call_operand.vmem [shape: f32[9,10,3], index: 1, kind: input, shape index: {}]
  %s2 = inlined_call_operand.vmem [shape: f32[10,1], index: 2, kind: input, shape index: {}]
  %s3 = inlined_call_operand.vmem [shape: f32[9,10,10], index: 3, kind: input, shape index: {}]
  %s4 = inlined_call_operand.vmem [shape: f32[10,1], index: 4, kind: input, shape index: {}]
  %s5 = inlined_call_operand.vmem [shape: f32[9,2,10], index: 5, kind: input, shape index: {}]
  %s6 = inlined_call_operand.vmem [shape: f32[2,1], index: 6, kind: input, shape index: {}]
  %s7 = inlined_call_operand.vmem [shape: f32[2,2,1], index: 7, kind: output, shape index: {}]
  %s8 = sld [smem:[#allocation0]]
  $region61: #{net_forward.1} parent=0
    _
  %s10 = ssub.s32 1, %s8
  %s11 = scalar_select 0, %s10, %s8
  loop: start=0, step=1, limit=4
  $region2: #{net_forward.1} parent=0 // loop_pre_header
    _
  $region3: #{net_forward.1} parent=0 // loop_header
    %s13 = sphi 0, %s17
    %p14 = scmp.ge.s32.totalorder %s13, 4
    %s23 = sphi 0, %s25
    %s26 = sphi 0, %s23
    %s27 = sphi 0, %s26
    %s43 = sphi 0, %s27
    %s47 = sphi 0, %s47
    %s49 = sphi 0, %s47
    %s50 = sphi 0, %s49
    %s64 = sphi 0, %s50
    %s68 = sphi 0, %s68
    %s70 = sphi 0, %s68
    %s71 = sphi 0, %s70
    %s85 = sphi 0, %s71
    %s89 = sphi 0, %s89
    %s91 = sphi 0, %s89
    %s92 = sphi 0, %s91
    %s106 = sphi 0, %s92
    %s110 = sphi 0, %s110
    %s112 = sphi 0, %s110
    %s113 = sphi 0, %s112
    %s127 = sphi 0, %s113
    %s131 = sphi 0, %s131
    %s133 = sphi 0, %s131
    %s134 = sphi 0, %s133
    %s148 = sphi 0, %s134
    %s152 = sphi 0, %s152
    %s154 = sphi 0, %s152
    %s155 = sphi 0, %s154
    %s169 = sphi 0, %s155
    %s175 = sphi 0, %s177
    %s178 = sphi 0, %s175
    %s179 = sphi 0, %s178
    %s195 = sphi 0, %s179
  $region4: #{net_forward.1} parent=0 // loop_header_branch
    %16 = sbr.rel (%p14) target = $region8
  $region5: #{net_forward.1} parent=0 // loop_body
    %s18 = ssub.s32 %s13, 1
    %s19 = ssub.s32 %s13, 2
    %s20 = sadd.s32 %s13, 1
    %s21 = ssub.s32 %s13, %s20
    %p22 = scmp.eq.s32.totalorder %s21, 0
    %s24 = sadd.s32 %s23, 1
    %s25 = scalar_select %p22, %s23, %s24
    %p28 = pneg %p22
    %p29 = scmp.eq.s32.totalorder %s13, 1
    %p30 = por %p28, %p29
    %p31 = scmp.ne.s32.totalorder %s23, %s26
    %p32 = scmp.eq.s32.totalorder %s13, 0
    %p33 = por %p31, %p32
    %p34 = scmp.ne.s32.totalorder %s23, %s26
    %p35 = scmp.eq.s32.totalorder %s18, 1
    %p36 = por %p34, %p35
    %p37 = scmp.ne.s32.totalorder %s26, %s27
    %p38 = scmp.eq.s32.totalorder %s18, 0
    %p39 = por %p37, %p38
    %p40 = scmp.ne.s32.totalorder %s26, %s27
    %p41 = scmp.eq.s32.totalorder %s19, 1
    %p42 = por %p40, %p41
    %p44 = scmp.ne.s32.totalorder %s27, %s43
    %p45 = scmp.eq.s32.totalorder %s19, 0
    %p46 = por %p44, %p45
    %s48 = sadd.s32 %s47, 1
    %p51 = scmp.eq.s32.totalorder %s13, 1
    %p52 = scmp.ne.s32.totalorder %s47, %s49
    %p53 = scmp.eq.s32.totalorder %s13, 0
    %p54 = por %p52, %p53
    %p55 = scmp.ne.s32.totalorder %s47, %s49
    %p56 = scmp.eq.s32.totalorder %s18, 1
    %p57 = por %p55, %p56
    %p58 = scmp.ne.s32.totalorder %s49, %s50
    %p59 = scmp.eq.s32.totalorder %s18, 0
    %p60 = por %p58, %p59
    %p61 = scmp.ne.s32.totalorder %s49, %s50
    %p62 = scmp.eq.s32.totalorder %s19, 1
    %p63 = por %p61, %p62
    %p65 = scmp.ne.s32.totalorder %s50, %s64
    %p66 = scmp.eq.s32.totalorder %s19, 0
    %p67 = por %p65, %p66
    %s69 = sadd.s32 %s68, 1
    %p72 = scmp.eq.s32.totalorder %s13, 1
    %p73 = scmp.ne.s32.totalorder %s68, %s70
    %p74 = scmp.eq.s32.totalorder %s13, 0
    %p75 = por %p73, %p74
    %p76 = scmp.ne.s32.totalorder %s68, %s70
    %p77 = scmp.eq.s32.totalorder %s18, 1
    %p78 = por %p76, %p77
    %p79 = scmp.ne.s32.totalorder %s70, %s71
    %p80 = scmp.eq.s32.totalorder %s18, 0
    %p81 = por %p79, %p80
    %p82 = scmp.ne.s32.totalorder %s70, %s71
    %p83 = scmp.eq.s32.totalorder %s19, 1
    %p84 = por %p82, %p83
    %p86 = scmp.ne.s32.totalorder %s71, %s85
    %p87 = scmp.eq.s32.totalorder %s19, 0
    %p88 = por %p86, %p87
    %s90 = sadd.s32 %s89, 1
    %p93 = scmp.eq.s32.totalorder %s13, 1
    %p94 = scmp.ne.s32.totalorder %s89, %s91
    %p95 = scmp.eq.s32.totalorder %s13, 0
    %p96 = por %p94, %p95
    %p97 = scmp.ne.s32.totalorder %s89, %s91
    %p98 = scmp.eq.s32.totalorder %s18, 1
    %p99 = por %p97, %p98
    %p100 = scmp.ne.s32.totalorder %s91, %s92
    %p101 = scmp.eq.s32.totalorder %s18, 0
    %p102 = por %p100, %p101
    %p103 = scmp.ne.s32.totalorder %s91, %s92
    %p104 = scmp.eq.s32.totalorder %s19, 1
    %p105 = por %p103, %p104
    %p107 = scmp.ne.s32.totalorder %s92, %s106
    %p108 = scmp.eq.s32.totalorder %s19, 0
    %p109 = por %p107, %p108
    %s111 = sadd.s32 %s110, 1
    %p114 = scmp.eq.s32.totalorder %s13, 1
    %p115 = scmp.ne.s32.totalorder %s110, %s112
    %p116 = scmp.eq.s32.totalorder %s13, 0
    %p117 = por %p115, %p116
    %p118 = scmp.ne.s32.totalorder %s110, %s112
    %p119 = scmp.eq.s32.totalorder %s18, 1
    %p120 = por %p118, %p119
    %p121 = scmp.ne.s32.totalorder %s112, %s113
    %p122 = scmp.eq.s32.totalorder %s18, 0
    %p123 = por %p121, %p122
    %p124 = scmp.ne.s32.totalorder %s112, %s113
    %p125 = scmp.eq.s32.totalorder %s19, 1
    %p126 = por %p124, %p125
    %p128 = scmp.ne.s32.totalorder %s113, %s127
    %p129 = scmp.eq.s32.totalorder %s19, 0
    %p130 = por %p128, %p129
    %s132 = sadd.s32 %s131, 1
    %p135 = scmp.eq.s32.totalorder %s13, 1
    %p136 = scmp.ne.s32.totalorder %s131, %s133
    %p137 = scmp.eq.s32.totalorder %s13, 0
    %p138 = por %p136, %p137
    %p139 = scmp.ne.s32.totalorder %s131, %s133
    %p140 = scmp.eq.s32.totalorder %s18, 1
    %p141 = por %p139, %p140
    %p142 = scmp.ne.s32.totalorder %s133, %s134
    %p143 = scmp.eq.s32.totalorder %s18, 0
    %p144 = por %p142, %p143
    %p145 = scmp.ne.s32.totalorder %s133, %s134
    %p146 = scmp.eq.s32.totalorder %s19, 1
    %p147 = por %p145, %p146
    %p149 = scmp.ne.s32.totalorder %s134, %s148
    %p150 = scmp.eq.s32.totalorder %s19, 0
    %p151 = por %p149, %p150
    %s153 = sadd.s32 %s152, 1
    %p156 = scmp.eq.s32.totalorder %s13, 1
    %p157 = scmp.ne.s32.totalorder %s152, %s154
    %p158 = scmp.eq.s32.totalorder %s13, 0
    %p159 = por %p157, %p158
    %p160 = scmp.ne.s32.totalorder %s152, %s154
    %p161 = scmp.eq.s32.totalorder %s18, 1
    %p162 = por %p160, %p161
    %p163 = scmp.ne.s32.totalorder %s154, %s155
    %p164 = scmp.eq.s32.totalorder %s18, 0
    %p165 = por %p163, %p164
    %p166 = scmp.ne.s32.totalorder %s154, %s155
    %p167 = scmp.eq.s32.totalorder %s19, 1
    %p168 = por %p166, %p167
    %p170 = scmp.ne.s32.totalorder %s155, %s169
    %p171 = scmp.eq.s32.totalorder %s19, 0
    %p172 = por %p170, %p171
    %s173 = ssub.s32 %s13, %s20
    %p174 = scmp.eq.s32.totalorder %s173, 0
    %s176 = sadd.s32 %s175, 1
    %s177 = scalar_select %p174, %s175, %s176
    %p180 = pneg %p174
    %p181 = scmp.eq.s32.totalorder %s13, 1
    %p182 = por %p180, %p181
    %p183 = scmp.ne.s32.totalorder %s175, %s178
    %p184 = scmp.eq.s32.totalorder %s13, 0
    %p185 = por %p183, %p184
    %p186 = scmp.ne.s32.totalorder %s175, %s178
    %p187 = scmp.eq.s32.totalorder %s18, 1
    %p188 = por %p186, %p187
    %p189 = scmp.ne.s32.totalorder %s178, %s179
    %p190 = scmp.eq.s32.totalorder %s18, 0
    %p191 = por %p189, %p190
    %p192 = scmp.ne.s32.totalorder %s178, %s179
    %p193 = scmp.eq.s32.totalorder %s19, 1
    %p194 = por %p192, %p193
    %p196 = scmp.ne.s32.totalorder %s179, %s195
    %p197 = scmp.eq.s32.totalorder %s19, 0
    %p198 = por %p196, %p197
    %p199 = scmp.le.s32.totalorder 1, %s13
    %p200 = scmp.lt.s32.totalorder %s13, 3
    %p201 = pnand %p199, %p200
    %p202 = pneg %p201
    // Predicated region
    $region9: #{net_forward.1} parent=5 // pred_check
      _
    $region10: #{net_forward.1} parent=5 // pred_check_branch
      %204 = sbr.rel (%p201) target = $region12
    $region11: #{net_forward.1} parent=5 // pred_region
      %s205 = ssub.s32 %s13, 1
      // Predicated region
      $region13: #{net_forward.1} parent=11 // pred_check
        %p206 = pneg %p60
      $region14: #{net_forward.1} parent=11 // pred_check_branch
        %208 = sbr.rel (%p206) target = $region16
      $region15: #{net_forward.1} parent=11 // pred_region
        _
      $region16: #{net_forward.1} parent=11 // pred_fallthru
        _
      // Predicated region
      $region17: #{net_forward.1} parent=11 // pred_check
        %p209 = pneg %p81
      $region18: #{net_forward.1} parent=11 // pred_check_branch
        %211 = sbr.rel (%p209) target = $region20
      $region19: #{net_forward.1} parent=11 // pred_region
        _
      $region20: #{net_forward.1} parent=11 // pred_fallthru
        _
      // Predicated region
      $region21: #{net_forward.1} parent=11 // pred_check
        %p212 = pneg %p102
      $region22: #{net_forward.1} parent=11 // pred_check_branch
        %214 = sbr.rel (%p212) target = $region24
      $region23: #{net_forward.1} parent=11 // pred_region
        _
      $region24: #{net_forward.1} parent=11 // pred_fallthru
        _
      // Predicated region
      $region25: #{net_forward.1} parent=11 // pred_check
        %p215 = pneg %p123
      $region26: #{net_forward.1} parent=11 // pred_check_branch
        %217 = sbr.rel (%p215) target = $region28
      $region27: #{net_forward.1} parent=11 // pred_region
        _
      $region28: #{net_forward.1} parent=11 // pred_fallthru
        _
      // Predicated region
      $region29: #{net_forward.1} parent=11 // pred_check
        %p218 = pneg %p144
      $region30: #{net_forward.1} parent=11 // pred_check_branch
        %220 = sbr.rel (%p218) target = $region32
      $region31: #{net_forward.1} parent=11 // pred_region
        _
      $region32: #{net_forward.1} parent=11 // pred_fallthru
        _
      // Predicated region
      $region33: #{net_forward.1} parent=11 // pred_check
        %p221 = pneg %p165
      $region34: #{net_forward.1} parent=11 // pred_check_branch
        %223 = sbr.rel (%p221) target = $region36
      $region35: #{net_forward.1} parent=11 // pred_region
        _
      $region36: #{net_forward.1} parent=11 // pred_fallthru
        _
    $region12: #{net_forward.1} parent=5 // pred_fallthru
      _
    %p224 = scmp.lt.s32.totalorder %s13, 2
    // Predicated region
    $region37: #{net_forward.1} parent=5 // pred_check
      %p225 = pneg %p224
    $region38: #{net_forward.1} parent=5 // pred_check_branch
      %227 = sbr.rel (%p225) target = $region40
    $region39: #{net_forward.1} parent=5 // pred_region
      // Predicated region
      $region41: #{net_forward.1} parent=39 // pred_check
        %p228 = pneg %p33
      $region42: #{net_forward.1} parent=39 // pred_check_branch
        %230 = sbr.rel (%p228) target = $region44
      $region43: #{net_forward.1} parent=39 // pred_region
        %p231 = scmp.lt.s32.totalorder %s13, 1
        %s232 = scalar_select %p231, %s13, 1
        %s233 = smul.addr %s232, 32
        %s234 = smul.addr %s233, 4
        %s235 = scalar_lea.vmem %s0, %s234
      $region44: #{net_forward.1} parent=39 // pred_fallthru
        _
    $region40: #{net_forward.1} parent=5 // pred_fallthru
      _
    %p236 = scmp.le.s32.totalorder 1, %s13
    %p237 = scmp.lt.s32.totalorder %s13, 3
    %p238 = pnand %p236, %p237
    %p239 = pneg %p238
    // Predicated region
    $region45: #{net_forward.1} parent=5 // pred_check
      _
    $region46: #{net_forward.1} parent=5 // pred_check_branch
      %241 = sbr.rel (%p238) target = $region48
    $region47: #{net_forward.1} parent=5 // pred_region
      %s242 = ssub.s32 %s13, 1
      %p243 = scmp.lt.s32.totalorder %s18, 1
      %s244 = scalar_select %p243, %s18, 1
      %s245 = smul.addr %s244, 32
      %s246 = smul.addr %s245, 4
      %s247 = scalar_lea.vmem %s0, %s246
      %p248 = pneg %p39
      %p249 = pneg %p36
      %p250 = pneg %p60
      %p251 = pneg %p57
      %p252 = pneg %p81
      %p253 = pneg %p78
      %p254 = pneg %p102
      %p255 = pneg %p99
      %p256 = pneg %p123
      %p257 = pneg %p120
      %p258 = pneg %p144
      %p259 = pneg %p141
      %p260 = pneg %p165
      %p261 = pneg %p162
      %p262 = pneg %p191
      %p263 = pneg %p188
      %p264 = scmp.lt.s32.totalorder %s18, 1
      %s265 = scalar_select %p264, %s18, 1
      %s266 = smul.addr %s265, 2
      %s267 = scalar_lea.vmem %s7, %s266
      %p268 = scmp.lt.s32.totalorder %s18, 1
      %s269 = scalar_select %p268, %s18, 1
      %s270 = smul.addr %s269, 32
      %s271 = smul.addr %s270, 4
      %s272 = scalar_lea.vmem %s0, %s271
      %p273 = scmp.lt.s32.totalorder %s18, 1
      %s274 = scalar_select %p273, %s18, 1
      %s275 = smul.addr %s274, 2
      %s276 = scalar_lea.vmem %s7, %s275
      %v277 = vld [vmem:[%s272] sm:$0x77]
      %v278 = vld [vmem:[%s272 + $0x8] sm:$0x77]
      %v279 = vld [vmem:[%s272 + $0x10] sm:$0x77]
      %v280 = vld [vmem:[%s272 + $0x18] sm:$0x77]
      %s281 = scalar_lea.vmem %s272, 32
      %v282 = vld [vmem:[%s281] sm:$0x77]
      %v283 = vld [vmem:[%s281 + $0x8] sm:$0x77]
      %v284 = vld [vmem:[%s281 + $0x10] sm:$0x77]
      %v285 = vld [vmem:[%s281 + $0x18] sm:$0x77]
      %s286 = scalar_lea.vmem %s272, 64
      %v287 = vld [vmem:[%s286] sm:$0x77]
      %v288 = vld [vmem:[%s286 + $0x8] sm:$0x77]
      %v289 = vld [vmem:[%s286 + $0x10] sm:$0x77]
      %v290 = vld [vmem:[%s286 + $0x18] sm:$0x77]
      %s291 = scalar_lea.vmem %s272, 96
      %v292 = vld [vmem:[%s291] sm:$0x77]
      %v293 = vld [vmem:[%s291 + $0x8] sm:$0x77]
      %v294 = vld [vmem:[%s291 + $0x10] sm:$0x77]
      %v295 = vld [vmem:[%s291 + $0x18] sm:$0x77]
      %v296 = vld [vmem:[%s1] sm:$0xff]
      %v297 = vld [vmem:[%s1 + $0x8] sm:$0x3]
      %s298 = scalar_lea.vmem %s1, 16
      %v299 = vld [vmem:[%s298] sm:$0xff]
      %v300 = vld [vmem:[%s298 + $0x8] sm:$0x3]
      %v305 = vcombine.high %v282, %v282
      %v306 = vcombine.high %v283, %v283
      %v307 = vcombine.high %v284, %v284
      %v308 = vcombine.high %v285, %v285
      %vm309 = vcmask 23552
      %v311 = vsel %vm309, %v299, 0
      %v314 = vsel %vm309, %v300, 0
      %vm316 = vcmask 1042432
      %v317 = vsel %vm316, %v282, 0
      %v319 = vsel %vm316, %v305, 0
      %v321 = vsel %vm316, %v283, 0
      %v323 = vsel %vm316, %v306, 0
      %v325 = vsel %vm316, %v284, 0
      %v327 = vsel %vm316, %v307, 0
      %v329 = vsel %vm316, %v285, 0
      %v331 = vsel %vm316, %v308, 0
      %333 = vmatprep.subr.mxu0 %v319
      %334 = vmatpush1.msra.mxu0 %v317
      %335 = vmatprep.subr.mxu0 0.0
      %336 = vmatpush1.msra.mxu0 0.0
      %337 = vmatprep.subr.mxu0 0.0
      %338 = vmatpush1.msra.mxu0 0.0
      %339 = vmatprep.subr.mxu0 0.0
      %340 = vmatpush1.msra.mxu0 0.0
      %341 = vmatprep.subr.mxu0 0.0
      %342 = vmatpush1.msra.mxu0 0.0
      %343 = vmatprep.subr.mxu0 0.0
      %344 = vmatpush1.msra.mxu0 0.0
      %345 = vmatprep.subr.mxu0 0.0
      %346 = vmatpush1.msra.mxu0 0.0
      %347 = vmatprep.subr.mxu0 0.0
      %348 = vmatpush1.msra.mxu0 0.0
      %349 = vmatprep.subr.mxu0 0.0
      %350 = vmatpush1.msra.mxu0 0.0
      %351 = vmatprep.subr.mxu0 0.0
      %352 = vmatpush1.msra.mxu0 0.0
      %353 = vmatprep.subr.mxu0 0.0
      %354 = vmatpush1.msra.mxu0 0.0
      %355 = vmatprep.subr.mxu0 0.0
      %356 = vmatpush1.msra.mxu0 0.0
      %357 = vmatprep.subr.mxu0 0.0
      %358 = vmatpush1.msra.mxu0 0.0
      %359 = vmatprep.subr.mxu0 0.0
      %360 = vmatpush1.msra.mxu0 0.0
      %361 = vmatprep.subr.mxu0 0.0
      %362 = vmatpush1.msra.mxu0 0.0
      %363 = vmatprep.subr.mxu0 0.0
      %364 = vmatpush1.msra.mxu0 0.0
      %365 = vmatprep.subr.mxu0 0.0
      %366 = vmatpush1.msra.mxu0 0.0
      %367 = vmatprep.subr.mxu0 0.0
      %368 = vmatpush1.msra.mxu0 0.0
      %369 = vmatprep.subr.mxu0 0.0
      %370 = vmatpush1.msra.mxu0 0.0
      %371 = vmatprep.subr.mxu0 0.0
      %372 = vmatpush1.msra.mxu0 0.0
      %373 = vmatprep.subr.mxu0 0.0
      %374 = vmatpush1.msra.mxu0 0.0
      %375 = vmatprep.subr.mxu0 0.0
      %376 = vmatpush1.msra.mxu0 0.0
      %377 = vmatprep.subr.mxu0 0.0
      %378 = vmatpush1.msra.mxu0 0.0
      %379 = vmatprep.subr.mxu0 0.0
      %380 = vmatpush1.msra.mxu0 0.0
      %381 = vmatprep.subr.mxu0 0.0
      %382 = vmatpush1.msra.mxu0 0.0
      %383 = vmatprep.subr.mxu0 0.0
      %384 = vmatpush1.msra.mxu0 0.0
      %385 = vmatprep.subr.mxu0 0.0
      %386 = vmatpush1.msra.mxu0 0.0
      %387 = vmatprep.subr.mxu0 0.0
      %388 = vmatpush1.msra.mxu0 0.0
      %389 = vmatprep.subr.mxu0 0.0
      %390 = vmatpush1.msra.mxu0 0.0
      %391 = vmatprep.subr.mxu0 0.0
      %392 = vmatpush1.msra.mxu0 0.0
      %393 = vmatprep.subr.mxu0 0.0
      %394 = vmatpush1.msra.mxu0 0.0
      %395 = vmatprep.subr.mxu0 0.0
      %396 = vmatpush1.msra.mxu0 0.0
      %397 = vmatprep.mubr.f32.mxu0 0.0
      %398 = vmatmul.mubr.f32.gmra.mrb[0].mxu0 %v311
      %v399 = vpop.f32.mrb[0].mxu0
      %v400 = vadd.f32 0.0, %v399
      %v401 = vpop.f32.mrb[0].mxu0
      %v402 = vadd.f32 0.0, %v401
      %403 = vmatprep.mubr.f32.mxu0 0.0
      %404 = vmatmul.mubr.f32.gmra.mrb[0].mxu0 %v314
      %v405 = vpop.f32.mrb[0].mxu0
      %v406 = vadd.f32 0.0, %v405
      %v407 = vpop.f32.mrb[0].mxu0
      %v408 = vadd.f32 0.0, %v407
      %409 = vdwg.mxu0
      %410 = vmatprep.subr.mxu0 %v323
      %411 = vmatpush1.msra.mxu0 %v321
      %412 = vmatprep.subr.mxu0 0.0
      %413 = vmatpush1.msra.mxu0 0.0
      %414 = vmatprep.subr.mxu0 0.0
      %415 = vmatpush1.msra.mxu0 0.0
      %416 = vmatprep.subr.mxu0 0.0
      %417 = vmatpush1.msra.mxu0 0.0
      %418 = vmatprep.subr.mxu0 0.0
      %419 = vmatpush1.msra.mxu0 0.0
      %420 = vmatprep.subr.mxu0 0.0
      %421 = vmatpush1.msra.mxu0 0.0
      %422 = vmatprep.subr.mxu0 0.0
      %423 = vmatpush1.msra.mxu0 0.0
      %424 = vmatprep.subr.mxu0 0.0
      %425 = vmatpush1.msra.mxu0 0.0
      %426 = vmatprep.subr.mxu0 0.0
      %427 = vmatpush1.msra.mxu0 0.0
      %428 = vmatprep.subr.mxu0 0.0
      %429 = vmatpush1.msra.mxu0 0.0
      %430 = vmatprep.subr.mxu0 0.0
      %431 = vmatpush1.msra.mxu0 0.0
      %432 = vmatprep.subr.mxu0 0.0
      %433 = vmatpush1.msra.mxu0 0.0
      %434 = vmatprep.subr.mxu0 0.0
      %435 = vmatpush1.msra.mxu0 0.0
      %436 = vmatprep.subr.mxu0 0.0
      %437 = vmatpush1.msra.mxu0 0.0
      %438 = vmatprep.subr.mxu0 0.0
      %439 = vmatpush1.msra.mxu0 0.0
      %440 = vmatprep.subr.mxu0 0.0
      %441 = vmatpush1.msra.mxu0 0.0
      %442 = vmatprep.subr.mxu0 0.0
      %443 = vmatpush1.msra.mxu0 0.0
      %444 = vmatprep.subr.mxu0 0.0
      %445 = vmatpush1.msra.mxu0 0.0
      %446 = vmatprep.subr.mxu0 0.0
      %447 = vmatpush1.msra.mxu0 0.0
      %448 = vmatprep.subr.mxu0 0.0
      %449 = vmatpush1.msra.mxu0 0.0
      %450 = vmatprep.subr.mxu0 0.0
      %451 = vmatpush1.msra.mxu0 0.0
      %452 = vmatprep.subr.mxu0 0.0
      %453 = vmatpush1.msra.mxu0 0.0
      %454 = vmatprep.subr.mxu0 0.0
      %455 = vmatpush1.msra.mxu0 0.0
      %456 = vmatprep.subr.mxu0 0.0
      %457 = vmatpush1.msra.mxu0 0.0
      %458 = vmatprep.subr.mxu0 0.0
      %459 = vmatpush1.msra.mxu0 0.0
      %460 = vmatprep.subr.mxu0 0.0
      %461 = vmatpush1.msra.mxu0 0.0
      %462 = vmatprep.subr.mxu0 0.0
      %463 = vmatpush1.msra.mxu0 0.0
      %464 = vmatprep.subr.mxu0 0.0
      %465 = vmatpush1.msra.mxu0 0.0
      %466 = vmatprep.subr.mxu0 0.0
      %467 = vmatpush1.msra.mxu0 0.0
      %468 = vmatprep.subr.mxu0 0.0
      %469 = vmatpush1.msra.mxu0 0.0
      %470 = vmatprep.subr.mxu0 0.0
      %471 = vmatpush1.msra.mxu0 0.0
      %472 = vmatprep.subr.mxu0 0.0
      %473 = vmatpush1.msra.mxu0 0.0
      %474 = vmatprep.mubr.f32.mxu0 0.0
      %475 = vmatmul.mubr.f32.gmra.mrb[0].mxu0 %v311
      %v476 = vpop.f32.mrb[0].mxu0
      %v477 = vadd.f32 0.0, %v476
      %v478 = vpop.f32.mrb[0].mxu0
      %v479 = vadd.f32 0.0, %v478
      %480 = vmatprep.mubr.f32.mxu0 0.0
      %481 = vmatmul.mubr.f32.gmra.mrb[0].mxu0 %v314
      %v482 = vpop.f32.mrb[0].mxu0
      %v483 = vadd.f32 0.0, %v482
      %v484 = vpop.f32.mrb[0].mxu0
      %v485 = vadd.f32 0.0, %v484
      %486 = vdwg.mxu0
      %487 = vmatprep.subr.mxu0 %v327
      %488 = vmatpush1.msra.mxu0 %v325
      %489 = vmatprep.subr.mxu0 0.0
      %490 = vmatpush1.msra.mxu0 0.0
      %491 = vmatprep.subr.mxu0 0.0
      %492 = vmatpush1.msra.mxu0 0.0
      %493 = vmatprep.subr.mxu0 0.0
      %494 = vmatpush1.msra.mxu0 0.0
      %495 = vmatprep.subr.mxu0 0.0
      %496 = vmatpush1.msra.mxu0 0.0
      %497 = vmatprep.subr.mxu0 0.0
      %498 = vmatpush1.msra.mxu0 0.0
      %499 = vmatprep.subr.mxu0 0.0
      %500 = vmatpush1.msra.mxu0 0.0
      %501 = vmatprep.subr.mxu0 0.0
      %502 = vmatpush1.msra.mxu0 0.0
      %503 = vmatprep.subr.mxu0 0.0
      %504 = vmatpush1.msra.mxu0 0.0
      %505 = vmatprep.subr.mxu0 0.0
      %506 = vmatpush1.msra.mxu0 0.0
      %507 = vmatprep.subr.mxu0 0.0
      %508 = vmatpush1.msra.mxu0 0.0
      %509 = vmatprep.subr.mxu0 0.0
      %510 = vmatpush1.msra.mxu0 0.0
      %511 = vmatprep.subr.mxu0 0.0
      %512 = vmatpush1.msra.mxu0 0.0
      %513 = vmatprep.subr.mxu0 0.0
      %514 = vmatpush1.msra.mxu0 0.0
      %515 = vmatprep.subr.mxu0 0.0
      %516 = vmatpush1.msra.mxu0 0.0
      %517 = vmatprep.subr.mxu0 0.0
      %518 = vmatpush1.msra.mxu0 0.0
      %519 = vmatprep.subr.mxu0 0.0
      %520 = vmatpush1.msra.mxu0 0.0
      %521 = vmatprep.subr.mxu0 0.0
      %522 = vmatpush1.msra.mxu0 0.0
      %523 = vmatprep.subr.mxu0 0.0
      %524 = vmatpush1.msra.mxu0 0.0
      %525 = vmatprep.subr.mxu0 0.0
      %526 = vmatpush1.msra.mxu0 0.0
      %527 = vmatprep.subr.mxu0 0.0
      %528 = vmatpush1.msra.mxu0 0.0
      %529 = vmatprep.subr.mxu0 0.0
      %530 = vmatpush1.msra.mxu0 0.0
      %531 = vmatprep.subr.mxu0 0.0
      %532 = vmatpush1.msra.mxu0 0.0
      %533 = vmatprep.subr.mxu0 0.0
      %534 = vmatpush1.msra.mxu0 0.0
      %535 = vmatprep.subr.mxu0 0.0
      %536 = vmatpush1.msra.mxu0 0.0
      %537 = vmatprep.subr.mxu0 0.0
      %538 = vmatpush1.msra.mxu0 0.0
      %539 = vmatprep.subr.mxu0 0.0
      %540 = vmatpush1.msra.mxu0 0.0
      %541 = vmatprep.subr.mxu0 0.0
      %542 = vmatpush1.msra.mxu0 0.0
      %543 = vmatprep.subr.mxu0 0.0
      %544 = vmatpush1.msra.mxu0 0.0
      %545 = vmatprep.subr.mxu0 0.0
      %546 = vmatpush1.msra.mxu0 0.0
      %547 = vmatprep.subr.mxu0 0.0
      %548 = vmatpush1.msra.mxu0 0.0
      %549 = vmatprep.subr.mxu0 0.0
      %550 = vmatpush1.msra.mxu0 0.0
      %551 = vmatprep.mubr.f32.mxu0 0.0
      %552 = vmatmul.mubr.f32.gmra.mrb[0].mxu0 %v311
      %v553 = vpop.f32.mrb[0].mxu0
      %v554 = vadd.f32 0.0, %v553
      %v555 = vpop.f32.mrb[0].mxu0
      %v556 = vadd.f32 0.0, %v555
      %557 = vmatprep.mubr.f32.mxu0 0.0
      %558 = vmatmul.mubr.f32.gmra.mrb[0].mxu0 %v314
      %v559 = vpop.f32.mrb[0].mxu0
      %v560 = vadd.f32 0.0, %v559
      %v561 = vpop.f32.mrb[0].mxu0
      %v562 = vadd.f32 0.0, %v561
      %563 = vdwg.mxu0
      %564 = vmatprep.subr.mxu0 %v331
      %565 = vmatpush1.msra.mxu0 %v329
      %566 = vmatprep.subr.mxu0 0.0
      %567 = vmatpush1.msra.mxu0 0.0
      %568 = vmatprep.subr.mxu0 0.0
      %569 = vmatpush1.msra.mxu0 0.0
      %570 = vmatprep.subr.mxu0 0.0
      %571 = vmatpush1.msra.mxu0 0.0
      %572 = vmatprep.subr.mxu0 0.0
      %573 = vmatpush1.msra.mxu0 0.0
      %574 = vmatprep.subr.mxu0 0.0
      %575 = vmatpush1.msra.mxu0 0.0
      %576 = vmatprep.subr.mxu0 0.0
      %577 = vmatpush1.msra.mxu0 0.0
      %578 = vmatprep.subr.mxu0 0.0
      %579 = vmatpush1.msra.mxu0 0.0
      %580 = vmatprep.subr.mxu0 0.0
      %581 = vmatpush1.msra.mxu0 0.0
      %582 = vmatprep.subr.mxu0 0.0
      %583 = vmatpush1.msra.mxu0 0.0
      %584 = vmatprep.subr.mxu0 0.0
      %585 = vmatpush1.msra.mxu0 0.0
      %586 = vmatprep.subr.mxu0 0.0
      %587 = vmatpush1.msra.mxu0 0.0
      %588 = vmatprep.subr.mxu0 0.0
      %589 = vmatpush1.msra.mxu0 0.0
      %590 = vmatprep.subr.mxu0 0.0
      %591 = vmatpush1.msra.mxu0 0.0
      %592 = vmatprep.subr.mxu0 0.0
      %593 = vmatpush1.msra.mxu0 0.0
      %594 = vmatprep.subr.mxu0 0.0
      %595 = vmatpush1.msra.mxu0 0.0
      %596 = vmatprep.subr.mxu0 0.0
      %597 = vmatpush1.msra.mxu0 0.0
      %598 = vmatprep.subr.mxu0 0.0
      %599 = vmatpush1.msra.mxu0 0.0
      %600 = vmatprep.subr.mxu0 0.0
      %601 = vmatpush1.msra.mxu0 0.0
      %602 = vmatprep.subr.mxu0 0.0
      %603 = vmatpush1.msra.mxu0 0.0
      %604 = vmatprep.subr.mxu0 0.0
      %605 = vmatpush1.msra.mxu0 0.0
      %606 = vmatprep.subr.mxu0 0.0
      %607 = vmatpush1.msra.mxu0 0.0
      %608 = vmatprep.subr.mxu0 0.0
      %609 = vmatpush1.msra.mxu0 0.0
      %610 = vmatprep.subr.mxu0 0.0
      %611 = vmatpush1.msra.mxu0 0.0
      %612 = vmatprep.subr.mxu0 0.0
      %613 = vmatpush1.msra.mxu0 0.0
      %614 = vmatprep.subr.mxu0 0.0
      %615 = vmatpush1.msra.mxu0 0.0
      %616 = vmatprep.subr.mxu0 0.0
      %617 = vmatpush1.msra.mxu0 0.0
      %618 = vmatprep.subr.mxu0 0.0
      %619 = vmatpush1.msra.mxu0 0.0
      %620 = vmatprep.subr.mxu0 0.0
      %621 = vmatpush1.msra.mxu0 0.0
      %622 = vmatprep.subr.mxu0 0.0
      %623 = vmatpush1.msra.mxu0 0.0
      %624 = vmatprep.subr.mxu0 0.0
      %625 = vmatpush1.msra.mxu0 0.0
      %626 = vmatprep.subr.mxu0 0.0
      %627 = vmatpush1.msra.mxu0 0.0
      %628 = vmatprep.mubr.f32.mxu0 0.0
      %629 = vmatmul.mubr.f32.gmra.mrb[0].mxu0 %v311
      %v630 = vpop.f32.mrb[0].mxu0
      %v631 = vadd.f32 0.0, %v630
      %v632 = vpop.f32.mrb[0].mxu0
      %v633 = vadd.f32 0.0, %v632
      %634 = vmatprep.mubr.f32.mxu0 0.0
      %635 = vmatmul.mubr.f32.gmra.mrb[0].mxu0 %v314
      %v636 = vpop.f32.mrb[0].mxu0
      %v637 = vadd.f32 0.0, %v636
      %v638 = vpop.f32.mrb[0].mxu0
      %v639 = vadd.f32 0.0, %v638
      %640 = vdwg.mxu0
      %v645 = vcombine.high %v277, %v277
      %v646 = vcombine.high %v278, %v278
      %v647 = vcombine.high %v279, %v279
      %v648 = vcombine.high %v280, %v280
      %v650 = vsel %vm309, %v296, 0
      %v653 = vsel %vm309, %v297, 0
      %v655 = vsel %vm316, %v277, 0
      %v657 = vsel %vm316, %v645, 0
      %v659 = vsel %vm316, %v278, 0
      %v661 = vsel %vm316, %v646, 0
      %v663 = vsel %vm316, %v279, 0
      %v665 = vsel %vm316, %v647, 0
      %v667 = vsel %vm316, %v280, 0
      %v669 = vsel %vm316, %v648, 0
      %671 = vmatprep.subr.mxu0 %v657
      %672 = vmatpush1.msra.mxu0 %v655
      %673 = vmatprep.subr.mxu0 0.0
      %674 = vmatpush1.msra.mxu0 0.0
      %675 = vmatprep.subr.mxu0 0.0
      %676 = vmatpush1.msra.mxu0 0.0
      %677 = vmatprep.subr.mxu0 0.0
      %678 = vmatpush1.msra.mxu0 0.0
      %679 = vmatprep.subr.mxu0 0.0
      %680 = vmatpush1.msra.mxu0 0.0
      %681 = vmatprep.subr.mxu0 0.0
      %682 = vmatpush1.msra.mxu0 0.0
      %683 = vmatprep.subr.mxu0 0.0
      %684 = vmatpush1.msra.mxu0 0.0
      %685 = vmatprep.subr.mxu0 0.0
      %686 = vmatpush1.msra.mxu0 0.0
      %687 = vmatprep.subr.mxu0 0.0
      %688 = vmatpush1.msra.mxu0 0.0
      %689 = vmatprep.subr.mxu0 0.0
      %690 = vmatpush1.msra.mxu0 0.0
      %691 = vmatprep.subr.mxu0 0.0
      %692 = vmatpush1.msra.mxu0 0.0
      %693 = vmatprep.subr.mxu0 0.0
      %694 = vmatpush1.msra.mxu0 0.0
      %695 = vmatprep.subr.mxu0 0.0
      %696 = vmatpush1.msra.mxu0 0.0
      %697 = vmatprep.subr.mxu0 0.0
      %698 = vmatpush1.msra.mxu0 0.0
      %699 = vmatprep.subr.mxu0 0.0
      %700 = vmatpush1.msra.mxu0 0.0
      %701 = vmatprep.subr.mxu0 0.0
      %702 = vmatpush1.msra.mxu0 0.0
      %703 = vmatprep.subr.mxu0 0.0
      %704 = vmatpush1.msra.mxu0 0.0
      %705 = vmatprep.subr.mxu0 0.0
      %706 = vmatpush1.msra.mxu0 0.0
      %707 = vmatprep.subr.mxu0 0.0
      %708 = vmatpush1.msra.mxu0 0.0
      %709 = vmatprep.subr.mxu0 0.0
      %710 = vmatpush1.msra.mxu0 0.0
      %711 = vmatprep.subr.mxu0 0.0
      %712 = vmatpush1.msra.mxu0 0.0
      %713 = vmatprep.subr.mxu0 0.0
      %714 = vmatpush1.msra.mxu0 0.0
      %715 = vmatprep.subr.mxu0 0.0
      %716 = vmatpush1.msra.mxu0 0.0
      %717 = vmatprep.subr.mxu0 0.0
      %718 = vmatpush1.msra.mxu0 0.0
      %719 = vmatprep.subr.mxu0 0.0
      %720 = vmatpush1.msra.mxu0 0.0
      %721 = vmatprep.subr.mxu0 0.0
      %722 = vmatpush1.msra.mxu0 0.0
      %723 = vmatprep.subr.mxu0 0.0
      %724 = vmatpush1.msra.mxu0 0.0
      %725 = vmatprep.subr.mxu0 0.0
      %726 = vmatpush1.msra.mxu0 0.0
      %727 = vmatprep.subr.mxu0 0.0
      %728 = vmatpush1.msra.mxu0 0.0
      %729 = vmatprep.subr.mxu0 0.0
      %730 = vmatpush1.msra.mxu0 0.0
      %731 = vmatprep.subr.mxu0 0.0
      %732 = vmatpush1.msra.mxu0 0.0
      %733 = vmatprep.subr.mxu0 0.0
      %734 = vmatpush1.msra.mxu0 0.0
      %735 = vmatprep.mubr.f32.mxu0 0.0
      %736 = vmatmul.mubr.f32.gmra.mrb[0].mxu0 %v650
      %v737 = vpop.f32.mrb[0].mxu0
      %v738 = vadd.f32 %v400, %v737
      %v739 = vpop.f32.mrb[0].mxu0
      %v740 = vadd.f32 %v402, %v739
      %741 = vmatprep.mubr.f32.mxu0 0.0
      %742 = vmatmul.mubr.f32.gmra.mrb[0].mxu0 %v653
      %v743 = vpop.f32.mrb[0].mxu0
      %v744 = vadd.f32 %v406, %v743
      %v745 = vpop.f32.mrb[0].mxu0
      %v746 = vadd.f32 %v408, %v745
      %747 = vdwg.mxu0
      %748 = vmatprep.subr.mxu0 %v661
      %749 = vmatpush1.msra.mxu0 %v659
      %750 = vmatprep.subr.mxu0 0.0
      %751 = vmatpush1.msra.mxu0 0.0
      %752 = vmatprep.subr.mxu0 0.0
      %753 = vmatpush1.msra.mxu0 0.0
      %754 = vmatprep.subr.mxu0 0.0
      %755 = vmatpush1.msra.mxu0 0.0
      %756 = vmatprep.subr.mxu0 0.0
      %757 = vmatpush1.msra.mxu0 0.0
      %758 = vmatprep.subr.mxu0 0.0
      %759 = vmatpush1.msra.mxu0 0.0
      %760 = vmatprep.subr.mxu0 0.0
      %761 = vmatpush1.msra.mxu0 0.0
      %762 = vmatprep.subr.mxu0 0.0
      %763 = vmatpush1.msra.mxu0 0.0
      %764 = vmatprep.subr.mxu0 0.0
      %765 = vmatpush1.msra.mxu0 0.0
      %766 = vmatprep.subr.mxu0 0.0
      %767 = vmatpush1.msra.mxu0 0.0
      %768 = vmatprep.subr.mxu0 0.0
      %769 = vmatpush1.msra.mxu0 0.0
      %770 = vmatprep.subr.mxu0 0.0
      %771 = vmatpush1.msra.mxu0 0.0
      %772 = vmatprep.subr.mxu0 0.0
      %773 = vmatpush1.msra.mxu0 0.0
      %774 = vmatprep.subr.mxu0 0.0
      %775 = vmatpush1.msra.mxu0 0.0
      %776 = vmatprep.subr.mxu0 0.0
      %777 = vmatpush1.msra.mxu0 0.0
      %778 = vmatprep.subr.mxu0 0.0
      %779 = vmatpush1.msra.mxu0 0.0
      %780 = vmatprep.subr.mxu0 0.0
      %781 = vmatpush1.msra.mxu0 0.0
      %782 = vmatprep.subr.mxu0 0.0
      %783 = vmatpush1.msra.mxu0 0.0
      %784 = vmatprep.subr.mxu0 0.0
      %785 = vmatpush1.msra.mxu0 0.0
      %786 = vmatprep.subr.mxu0 0.0
      %787 = vmatpush1.msra.mxu0 0.0
      %788 = vmatprep.subr.mxu0 0.0
      %789 = vmatpush1.msra.mxu0 0.0
      %790 = vmatprep.subr.mxu0 0.0
      %791 = vmatpush1.msra.mxu0 0.0
      %792 = vmatprep.subr.mxu0 0.0
      %793 = vmatpush1.msra.mxu0 0.0
      %794 = vmatprep.subr.mxu0 0.0
      %795 = vmatpush1.msra.mxu0 0.0
      %796 = vmatprep.subr.mxu0 0.0
      %797 = vmatpush1.msra.mxu0 0.0
      %798 = vmatprep.subr.mxu0 0.0
      %799 = vmatpush1.msra.mxu0 0.0
      %800 = vmatprep.subr.mxu0 0.0
      %801 = vmatpush1.msra.mxu0 0.0
      %802 = vmatprep.subr.mxu0 0.0
      %803 = vmatpush1.msra.mxu0 0.0
      %804 = vmatprep.subr.mxu0 0.0
      %805 = vmatpush1.msra.mxu0 0.0
      %806 = vmatprep.subr.mxu0 0.0
      %807 = vmatpush1.msra.mxu0 0.0
      %808 = vmatprep.subr.mxu0 0.0
      %809 = vmatpush1.msra.mxu0 0.0
      %810 = vmatprep.subr.mxu0 0.0
      %811 = vmatpush1.msra.mxu0 0.0
      %812 = vmatprep.mubr.f32.mxu0 0.0
      %813 = vmatmul.mubr.f32.gmra.mrb[0].mxu0 %v650
      %v814 = vpop.f32.mrb[0].mxu0
      %v815 = vadd.f32 %v477, %v814
      %v816 = vpop.f32.mrb[0].mxu0
      %v817 = vadd.f32 %v479, %v816
      %818 = vmatprep.mubr.f32.mxu0 0.0
      %819 = vmatmul.mubr.f32.gmra.mrb[0].mxu0 %v653
      %v820 = vpop.f32.mrb[0].mxu0
      %v821 = vadd.f32 %v483, %v820
      %v822 = vpop.f32.mrb[0].mxu0
      %v823 = vadd.f32 %v485, %v822
      %824 = vdwg.mxu0
      %825 = vmatprep.subr.mxu0 %v665
      %826 = vmatpush1.msra.mxu0 %v663
      %827 = vmatprep.subr.mxu0 0.0
      %828 = vmatpush1.msra.mxu0 0.0
      %829 = vmatprep.subr.mxu0 0.0
      %830 = vmatpush1.msra.mxu0 0.0
      %831 = vmatprep.subr.mxu0 0.0
      %832 = vmatpush1.msra.mxu0 0.0
      %833 = vmatprep.subr.mxu0 0.0
      %834 = vmatpush1.msra.mxu0 0.0
      %835 = vmatprep.subr.mxu0 0.0
      %836 = vmatpush1.msra.mxu0 0.0
      %837 = vmatprep.subr.mxu0 0.0
      %838 = vmatpush1.msra.mxu0 0.0
      %839 = vmatprep.subr.mxu0 0.0
      %840 = vmatpush1.msra.mxu0 0.0
      %841 = vmatprep.subr.mxu0 0.0
      %842 = vmatpush1.msra.mxu0 0.0
      %843 = vmatprep.subr.mxu0 0.0
      %844 = vmatpush1.msra.mxu0 0.0
      %845 = vmatprep.subr.mxu0 0.0
      %846 = vmatpush1.msra.mxu0 0.0
      %847 = vmatprep.subr.mxu0 0.0
      %848 = vmatpush1.msra.mxu0 0.0
      %849 = vmatprep.subr.mxu0 0.0
      %850 = vmatpush1.msra.mxu0 0.0
      %851 = vmatprep.subr.mxu0 0.0
      %852 = vmatpush1.msra.mxu0 0.0
      %853 = vmatprep.subr.mxu0 0.0
      %854 = vmatpush1.msra.mxu0 0.0
      %855 = vmatprep.subr.mxu0 0.0
      %856 = vmatpush1.msra.mxu0 0.0
      %857 = vmatprep.subr.mxu0 0.0
      %858 = vmatpush1.msra.mxu0 0.0
      %859 = vmatprep.subr.mxu0 0.0
      %860 = vmatpush1.msra.mxu0 0.0
      %861 = vmatprep.subr.mxu0 0.0
      %862 = vmatpush1.msra.mxu0 0.0
      %863 = vmatprep.subr.mxu0 0.0
      %864 = vmatpush1.msra.mxu0 0.0
      %865 = vmatprep.subr.mxu0 0.0
      %866 = vmatpush1.msra.mxu0 0.0
      %867 = vmatprep.subr.mxu0 0.0
      %868 = vmatpush1.msra.mxu0 0.0
      %869 = vmatprep.subr.mxu0 0.0
      %870 = vmatpush1.msra.mxu0 0.0
      %871 = vmatprep.subr.mxu0 0.0
      %872 = vmatpush1.msra.mxu0 0.0
      %873 = vmatprep.subr.mxu0 0.0
      %874 = vmatpush1.msra.mxu0 0.0
      %875 = vmatprep.subr.mxu0 0.0
      %876 = vmatpush1.msra.mxu0 0.0
      %877 = vmatprep.subr.mxu0 0.0
      %878 = vmatpush1.msra.mxu0 0.0
      %879 = vmatprep.subr.mxu0 0.0
      %880 = vmatpush1.msra.mxu0 0.0
      %881 = vmatprep.subr.mxu0 0.0
      %882 = vmatpush1.msra.mxu0 0.0
      %883 = vmatprep.subr.mxu0 0.0
      %884 = vmatpush1.msra.mxu0 0.0
      %885 = vmatprep.subr.mxu0 0.0
      %886 = vmatpush1.msra.mxu0 0.0
      %887 = vmatprep.subr.mxu0 0.0
      %888 = vmatpush1.msra.mxu0 0.0
      %889 = vmatprep.mubr.f32.mxu0 0.0
      %890 = vmatmul.mubr.f32.gmra.mrb[0].mxu0 %v650
      %v891 = vpop.f32.mrb[0].mxu0
      %v892 = vadd.f32 %v554, %v891
      %v893 = vpop.f32.mrb[0].mxu0
      %v894 = vadd.f32 %v556, %v893
      %895 = vmatprep.mubr.f32.mxu0 0.0
      %896 = vmatmul.mubr.f32.gmra.mrb[0].mxu0 %v653
      %v897 = vpop.f32.mrb[0].mxu0
      %v898 = vadd.f32 %v560, %v897
      %v899 = vpop.f32.mrb[0].mxu0
      %v900 = vadd.f32 %v562, %v899
      %901 = vdwg.mxu0
      %902 = vmatprep.subr.mxu0 %v669
      %903 = vmatpush1.msra.mxu0 %v667
      %904 = vmatprep.subr.mxu0 0.0
      %905 = vmatpush1.msra.mxu0 0.0
      %906 = vmatprep.subr.mxu0 0.0
      %907 = vmatpush1.msra.mxu0 0.0
      %908 = vmatprep.subr.mxu0 0.0
      %909 = vmatpush1.msra.mxu0 0.0
      %910 = vmatprep.subr.mxu0 0.0
      %911 = vmatpush1.msra.mxu0 0.0
      %912 = vmatprep.subr.mxu0 0.0
      %913 = vmatpush1.msra.mxu0 0.0
      %914 = vmatprep.subr.mxu0 0.0
      %915 = vmatpush1.msra.mxu0 0.0
      %916 = vmatprep.subr.mxu0 0.0
      %917 = vmatpush1.msra.mxu0 0.0
      %918 = vmatprep.subr.mxu0 0.0
      %919 = vmatpush1.msra.mxu0 0.0
      %920 = vmatprep.subr.mxu0 0.0
      %921 = vmatpush1.msra.mxu0 0.0
      %922 = vmatprep.subr.mxu0 0.0
      %923 = vmatpush1.msra.mxu0 0.0
      %924 = vmatprep.subr.mxu0 0.0
      %925 = vmatpush1.msra.mxu0 0.0
      %926 = vmatprep.subr.mxu0 0.0
      %927 = vmatpush1.msra.mxu0 0.0
      %928 = vmatprep.subr.mxu0 0.0
      %929 = vmatpush1.msra.mxu0 0.0
      %930 = vmatprep.subr.mxu0 0.0
      %931 = vmatpush1.msra.mxu0 0.0
      %932 = vmatprep.subr.mxu0 0.0
      %933 = vmatpush1.msra.mxu0 0.0
      %934 = vmatprep.subr.mxu0 0.0
      %935 = vmatpush1.msra.mxu0 0.0
      %936 = vmatprep.subr.mxu0 0.0
      %937 = vmatpush1.msra.mxu0 0.0
      %938 = vmatprep.subr.mxu0 0.0
      %939 = vmatpush1.msra.mxu0 0.0
      %940 = vmatprep.subr.mxu0 0.0
      %941 = vmatpush1.msra.mxu0 0.0
      %942 = vmatprep.subr.mxu0 0.0
      %943 = vmatpush1.msra.mxu0 0.0
      %944 = vmatprep.subr.mxu0 0.0
      %945 = vmatpush1.msra.mxu0 0.0
      %946 = vmatprep.subr.mxu0 0.0
      %947 = vmatpush1.msra.mxu0 0.0
      %948 = vmatprep.subr.mxu0 0.0
      %949 = vmatpush1.msra.mxu0 0.0
      %950 = vmatprep.subr.mxu0 0.0
      %951 = vmatpush1.msra.mxu0 0.0
      %952 = vmatprep.subr.mxu0 0.0
      %953 = vmatpush1.msra.mxu0 0.0
      %954 = vmatprep.subr.mxu0 0.0
      %955 = vmatpush1.msra.mxu0 0.0
      %956 = vmatprep.subr.mxu0 0.0
      %957 = vmatpush1.msra.mxu0 0.0
      %958 = vmatprep.subr.mxu0 0.0
      %959 = vmatpush1.msra.mxu0 0.0
      %960 = vmatprep.subr.mxu0 0.0
      %961 = vmatpush1.msra.mxu0 0.0
      %962 = vmatprep.subr.mxu0 0.0
      %963 = vmatpush1.msra.mxu0 0.0
      %964 = vmatprep.subr.mxu0 0.0
      %965 = vmatpush1.msra.mxu0 0.0
      %966 = vmatprep.mubr.f32.mxu0 0.0
      %967 = vmatmul.mubr.f32.gmra.mrb[0].mxu0 %v650
      %v968 = vpop.f32.mrb[0].mxu0
      %v969 = vadd.f32 %v631, %v968
      %v970 = vpop.f32.mrb[0].mxu0
      %v971 = vadd.f32 %v633, %v970
      %972 = vmatprep.mubr.f32.mxu0 0.0
      %973 = vmatmul.mubr.f32.gmra.mrb[0].mxu0 %v653
      %v974 = vpop.f32.mrb[0].mxu0
      %v975 = vadd.f32 %v637, %v974
      %v976 = vpop.f32.mrb[0].mxu0
      %v977 = vadd.f32 %v639, %v976
      %978 = vdwg.mxu0
      %979 = vrot.lane.b32.xlu0 %v277, 127
      %v980 = vpop.permute.xlu0 %979
      %981 = vrot.lane.b32.xlu0 %v645, 127
      %v982 = vpop.permute.xlu0 %981
      %983 = vrot.lane.b32.xlu0 %v278, 127
      %v984 = vpop.permute.xlu0 %983
      %985 = vrot.lane.b32.xlu0 %v646, 127
      %v986 = vpop.permute.xlu0 %985
      %987 = vrot.lane.b32.xlu0 %v279, 127
      %v988 = vpop.permute.xlu0 %987
      %989 = vrot.lane.b32.xlu0 %v647, 127
      %v990 = vpop.permute.xlu0 %989
      %991 = vrot.lane.b32.xlu0 %v280, 127
      %v992 = vpop.permute.xlu0 %991
      %993 = vrot.lane.b32.xlu0 %v648, 127
      %v994 = vpop.permute.xlu0 %993
      %vm995 = vcmask 1039360
      %v996 = vsel %vm995, %v980, %v982
      %v997 = vsel %vm995, %v982, %v984
      %v998 = vsel %vm995, %v984, %v986
      %v999 = vsel %vm995, %v986, %v988
      %v1000 = vsel %vm995, %v988, %v990
      %v1001 = vsel %vm995, %v990, %v992
      %v1002 = vsel %vm995, %v992, %v994
      %v1005 = vsel %vm995, %v994, %v980
      %s1006 = scalar_lea.vmem %s1, 32
      %v1007 = vld [vmem:[%s1006] sm:$0xff]
      %v1008 = vld [vmem:[%s1006 + $0x8] sm:$0x3]
      %v1010 = vsel %vm309, %v1007, 0
      %v1013 = vsel %vm309, %v1008, 0
      %v1015 = vsel %vm316, %v996, 0
      %v1017 = vsel %vm316, %v997, 0
      %v1019 = vsel %vm316, %v998, 0
      %v1021 = vsel %vm316, %v999, 0
      %v1023 = vsel %vm316, %v1000, 0
      %v1025 = vsel %vm316, %v1001, 0
      %v1027 = vsel %vm316, %v1002, 0
      %v1030 = vsel %vm316, %v1005, 0
      %1032 = vmatprep.subr.mxu0 %v1017
      %1033 = vmatpush1.msra.mxu0 %v1015
      %1034 = vmatprep.subr.mxu0 0.0
      %1035 = vmatpush1.msra.mxu0 0.0
      %1036 = vmatprep.subr.mxu0 0.0
      %1037 = vmatpush1.msra.mxu0 0.0
      %1038 = vmatprep.subr.mxu0 0.0
      %1039 = vmatpush1.msra.mxu0 0.0
      %1040 = vmatprep.subr.mxu0 0.0
      %1041 = vmatpush1.msra.mxu0 0.0
      %1042 = vmatprep.subr.mxu0 0.0
      %1043 = vmatpush1.msra.mxu0 0.0
      %1044 = vmatprep.subr.mxu0 0.0
      %1045 = vmatpush1.msra.mxu0 0.0
      %1046 = vmatprep.subr.mxu0 0.0
      %1047 = vmatpush1.msra.mxu0 0.0
      %1048 = vmatprep.subr.mxu0 0.0
      %1049 = vmatpush1.msra.mxu0 0.0
      %1050 = vmatprep.subr.mxu0 0.0
      %1051 = vmatpush1.msra.mxu0 0.0
      %1052 = vmatprep.subr.mxu0 0.0
      %1053 = vmatpush1.msra.mxu0 0.0
      %1054 = vmatprep.subr.mxu0 0.0
      %1055 = vmatpush1.msra.mxu0 0.0
      %1056 = vmatprep.subr.mxu0 0.0
      %1057 = vmatpush1.msra.mxu0 0.0
      %1058 = vmatprep.subr.mxu0 0.0
      %1059 = vmatpush1.msra.mxu0 0.0
      %1060 = vmatprep.subr.mxu0 0.0
      %1061 = vmatpush1.msra.mxu0 0.0
      %1062 = vmatprep.subr.mxu0 0.0
      %1063 = vmatpush1.msra.mxu0 0.0
      %1064 = vmatprep.subr.mxu0 0.0
      %1065 = vmatpush1.msra.mxu0 0.0
      %1066 = vmatprep.subr.mxu0 0.0
      %1067 = vmatpush1.msra.mxu0 0.0
      %1068 = vmatprep.subr.mxu0 0.0
      %1069 = vmatpush1.msra.mxu0 0.0
      %1070 = vmatprep.subr.mxu0 0.0
      %1071 = vmatpush1.msra.mxu0 0.0
      %1072 = vmatprep.subr.mxu0 0.0
      %1073 = vmatpush1.msra.mxu0 0.0
      %1074 = vmatprep.subr.mxu0 0.0
      %1075 = vmatpush1.msra.mxu0 0.0
      %1076 = vmatprep.subr.mxu0 0.0
      %1077 = vmatpush1.msra.mxu0 0.0
      %1078 = vmatprep.subr.mxu0 0.0
      %1079 = vmatpush1.msra.mxu0 0.0
      %1080 = vmatprep.subr.mxu0 0.0
      %1081 = vmatpush1.msra.mxu0 0.0
      %1082 = vmatprep.subr.mxu0 0.0
      %1083 = vmatpush1.msra.mxu0 0.0
      %1084 = vmatprep.subr.mxu0 0.0
      %1085 = vmatpush1.msra.mxu0 0.0
      %1086 = vmatprep.subr.mxu0 0.0
      %1087 = vmatpush1.msra.mxu0 0.0
      %1088 = vmatprep.subr.mxu0 0.0
      %1089 = vmatpush1.msra.mxu0 0.0
      %1090 = vmatprep.subr.mxu0 0.0
      %1091 = vmatpush1.msra.mxu0 0.0
      %1092 = vmatprep.subr.mxu0 0.0
      %1093 = vmatpush1.msra.mxu0 0.0
      %1094 = vmatprep.subr.mxu0 0.0
      %1095 = vmatpush1.msra.mxu0 0.0
      %1096 = vmatprep.mubr.f32.mxu0 0.0
      %1097 = vmatmul.mubr.f32.gmra.mrb[0].mxu0 %v1010
      %v1098 = vpop.f32.mrb[0].mxu0
      %v1099 = vadd.f32 0.0, %v1098
      %v1100 = vpop.f32.mrb[0].mxu0
      %v1101 = vadd.f32 0.0, %v1100
      %1102 = vmatprep.mubr.f32.mxu0 0.0
      %1103 = vmatmul.mubr.f32.gmra.mrb[0].mxu0 %v1013
      %v1104 = vpop.f32.mrb[0].mxu0
      %v1105 = vadd.f32 0.0, %v1104
      %v1106 = vpop.f32.mrb[0].mxu0
      %v1107 = vadd.f32 0.0, %v1106
      %1108 = vdwg.mxu0
      %1109 = vmatprep.subr.mxu0 %v1021
      %1110 = vmatpush1.msra.mxu0 %v1019
      %1111 = vmatprep.subr.mxu0 0.0
      %1112 = vmatpush1.msra.mxu0 0.0
      %1113 = vmatprep.subr.mxu0 0.0
      %1114 = vmatpush1.msra.mxu0 0.0
      %1115 = vmatprep.subr.mxu0 0.0
      %1116 = vmatpush1.msra.mxu0 0.0
      %1117 = vmatprep.subr.mxu0 0.0
      %1118 = vmatpush1.msra.mxu0 0.0
      %1119 = vmatprep.subr.mxu0 0.0
      %1120 = vmatpush1.msra.mxu0 0.0
      %1121 = vmatprep.subr.mxu0 0.0
      %1122 = vmatpush1.msra.mxu0 0.0
      %1123 = vmatprep.subr.mxu0 0.0
      %1124 = vmatpush1.msra.mxu0 0.0
      %1125 = vmatprep.subr.mxu0 0.0
      %1126 = vmatpush1.msra.mxu0 0.0
      %1127 = vmatprep.subr.mxu0 0.0
      %1128 = vmatpush1.msra.mxu0 0.0
      %1129 = vmatprep.subr.mxu0 0.0
      %1130 = vmatpush1.msra.mxu0 0.0
      %1131 = vmatprep.subr.mxu0 0.0
      %1132 = vmatpush1.msra.mxu0 0.0
      %1133 = vmatprep.subr.mxu0 0.0
      %1134 = vmatpush1.msra.mxu0 0.0
      %1135 = vmatprep.subr.mxu0 0.0
      %1136 = vmatpush1.msra.mxu0 0.0
      %1137 = vmatprep.subr.mxu0 0.0
      %1138 = vmatpush1.msra.mxu0 0.0
      %1139 = vmatprep.subr.mxu0 0.0
      %1140 = vmatpush1.msra.mxu0 0.0
      %1141 = vmatprep.subr.mxu0 0.0
      %1142 = vmatpush1.msra.mxu0 0.0
      %1143 = vmatprep.subr.mxu0 0.0
      %1144 = vmatpush1.msra.mxu0 0.0
      %1145 = vmatprep.subr.mxu0 0.0
      %1146 = vmatpush1.msra.mxu0 0.0
      %1147 = vmatprep.subr.mxu0 0.0
      %1148 = vmatpush1.msra.mxu0 0.0
      %1149 = vmatprep.subr.mxu0 0.0
      %1150 = vmatpush1.msra.mxu0 0.0
      %1151 = vmatprep.subr.mxu0 0.0
      %1152 = vmatpush1.msra.mxu0 0.0
      %1153 = vmatprep.subr.mxu0 0.0
      %1154 = vmatpush1.msra.mxu0 0.0
      %1155 = vmatprep.subr.mxu0 0.0
      %1156 = vmatpush1.msra.mxu0 0.0
      %1157 = vmatprep.subr.mxu0 0.0
      %1158 = vmatpush1.msra.mxu0 0.0
      %1159 = vmatprep.subr.mxu0 0.0
      %1160 = vmatpush1.msra.mxu0 0.0
      %1161 = vmatprep.subr.mxu0 0.0
      %1162 = vmatpush1.msra.mxu0 0.0
      %1163 = vmatprep.subr.mxu0 0.0
      %1164 = vmatpush1.msra.mxu0 0.0
      %1165 = vmatprep.subr.mxu0 0.0
      %1166 = vmatpush1.msra.mxu0 0.0
      %1167 = vmatprep.subr.mxu0 0.0
      %1168 = vmatpush1.msra.mxu0 0.0
      %1169 = vmatprep.subr.mxu0 0.0
      %1170 = vmatpush1.msra.mxu0 0.0
      %1171 = vmatprep.subr.mxu0 0.0
      %1172 = vmatpush1.msra.mxu0 0.0
      %1173 = vmatprep.mubr.f32.mxu0 0.0
      %1174 = vmatmul.mubr.f32.gmra.mrb[0].mxu0 %v1010
      %v1175 = vpop.f32.mrb[0].mxu0
      %v1176 = vadd.f32 0.0, %v1175
      %v1177 = vpop.f32.mrb[0].mxu0
      %v1178 = vadd.f32 0.0, %v1177
      %1179 = vmatprep.mubr.f32.mxu0 0.0
      %1180 = vmatmul.mubr.f32.gmra.mrb[0].mxu0 %v1013
      %v1181 = vpop.f32.mrb[0].mxu0
      %v1182 = vadd.f32 0.0, %v1181
      %v1183 = vpop.f32.mrb[0].mxu0
      %v1184 = vadd.f32 0.0, %v1183
      %1185 = vdwg.mxu0
      %1186 = vmatprep.subr.mxu0 %v1025
      %1187 = vmatpush1.msra.mxu0 %v1023
      %1188 = vmatprep.subr.mxu0 0.0
      %1189 = vmatpush1.msra.mxu0 0.0
      %1190 = vmatprep.subr.mxu0 0.0
      %1191 = vmatpush1.msra.mxu0 0.0
      %1192 = vmatprep.subr.mxu0 0.0
      %1193 = vmatpush1.msra.mxu0 0.0
      %1194 = vmatprep.subr.mxu0 0.0
      %1195 = vmatpush1.msra.mxu0 0.0
      %1196 = vmatprep.subr.mxu0 0.0
      %1197 = vmatpush1.msra.mxu0 0.0
      %1198 = vmatprep.subr.mxu0 0.0
      %1199 = vmatpush1.msra.mxu0 0.0
      %1200 = vmatprep.subr.mxu0 0.0
      %1201 = vmatpush1.msra.mxu0 0.0
      %1202 = vmatprep.subr.mxu0 0.0
      %1203 = vmatpush1.msra.mxu0 0.0
      %1204 = vmatprep.subr.mxu0 0.0
      %1205 = vmatpush1.msra.mxu0 0.0
      %1206 = vmatprep.subr.mxu0 0.0
      %1207 = vmatpush1.msra.mxu0 0.0
      %1208 = vmatprep.subr.mxu0 0.0
      %1209 = vmatpush1.msra.mxu0 0.0
      %1210 = vmatprep.subr.mxu0 0.0
      %1211 = vmatpush1.msra.mxu0 0.0
      %1212 = vmatprep.subr.mxu0 0.0
      %1213 = vmatpush1.msra.mxu0 0.0
      %1214 = vmatprep.subr.mxu0 0.0
      %1215 = vmatpush1.msra.mxu0 0.0
      %1216 = vmatprep.subr.mxu0 0.0
      %1217 = vmatpush1.msra.mxu0 0.0
      %1218 = vmatprep.subr.mxu0 0.0
      %1219 = vmatpush1.msra.mxu0 0.0
      %1220 = vmatprep.subr.mxu0 0.0
      %1221 = vmatpush1.msra.mxu0 0.0
      %1222 = vmatprep.subr.mxu0 0.0
      %1223 = vmatpush1.msra.mxu0 0.0
      %1224 = vmatprep.subr.mxu0 0.0
      %1225 = vmatpush1.msra.mxu0 0.0
      %1226 = vmatprep.subr.mxu0 0.0
      %1227 = vmatpush1.msra.mxu0 0.0
      %1228 = vmatprep.subr.mxu0 0.0
      %1229 = vmatpush1.msra.mxu0 0.0
      %1230 = vmatprep.subr.mxu0 0.0
      %1231 = vmatpush1.msra.mxu0 0.0
      %1232 = vmatprep.subr.mxu0 0.0
      %1233 = vmatpush1.msra.mxu0 0.0
      %1234 = vmatprep.subr.mxu0 0.0
      %1235 = vmatpush1.msra.mxu0 0.0
      %1236 = vmatprep.subr.mxu0 0.0
      %1237 = vmatpush1.msra.mxu0 0.0
      %1238 = vmatprep.subr.mxu0 0.0
      %1239 = vmatpush1.msra.mxu0 0.0
      %1240 = vmatprep.subr.mxu0 0.0
      %1241 = vmatpush1.msra.mxu0 0.0
      %1242 = vmatprep.subr.mxu0 0.0
      %1243 = vmatpush1.msra.mxu0 0.0
      %1244 = vmatprep.subr.mxu0 0.0
      %1245 = vmatpush1.msra.mxu0 0.0
      %1246 = vmatprep.subr.mxu0 0.0
      %1247 = vmatpush1.msra.mxu0 0.0
      %1248 = vmatprep.subr.mxu0 0.0
      %1249 = vmatpush1.msra.mxu0 0.0
      %1250 = vmatprep.mubr.f32.mxu0 0.0
      %1251 = vmatmul.mubr.f32.gmra.mrb[0].mxu0 %v1010
      %v1252 = vpop.f32.mrb[0].mxu0
      %v1253 = vadd.f32 0.0, %v1252
      %v1254 = vpop.f32.mrb[0].mxu0
      %v1255 = vadd.f32 0.0, %v1254
      %1256 = vmatprep.mubr.f32.mxu0 0.0
      %1257 = vmatmul.mubr.f32.gmra.mrb[0].mxu0 %v1013
      %v1258 = vpop.f32.mrb[0].mxu0
      %v1259 = vadd.f32 0.0, %v1258
      %v1260 = vpop.f32.mrb[0].mxu0
      %v1261 = vadd.f32 0.0, %v1260
      %1262 = vdwg.mxu0
      %1263 = vmatprep.subr.mxu0 %v1030
      %1264 = vmatpush1.msra.mxu0 %v1027
      %1265 = vmatprep.subr.mxu0 0.0
      %1266 = vmatpush1.msra.mxu0 0.0
      %1267 = vmatprep.subr.mxu0 0.0
      %1268 = vmatpush1.msra.mxu0 0.0
      %1269 = vmatprep.subr.mxu0 0.0
      %1270 = vmatpush1.msra.mxu0 0.0
      %1271 = vmatprep.subr.mxu0 0.0
      %1272 = vmatpush1.msra.mxu0 0.0
      %1273 = vmatprep.subr.mxu0 0.0
      %1274 = vmatpush1.msra.mxu0 0.0
      %1275 = vmatprep.subr.mxu0 0.0
      %1276 = vmatpush1.msra.mxu0 0.0
      %1277 = vmatprep.subr.mxu0 0.0
      %1278 = vmatpush1.msra.mxu0 0.0
      %1279 = vmatprep.subr.mxu0 0.0
      %1280 = vmatpush1.msra.mxu0 0.0
      %1281 = vmatprep.subr.mxu0 0.0
      %1282 = vmatpush1.msra.mxu0 0.0
      %1283 = vmatprep.subr.mxu0 0.0
      %1284 = vmatpush1.msra.mxu0 0.0
      %1285 = vmatprep.subr.mxu0 0.0
      %1286 = vmatpush1.msra.mxu0 0.0
      %1287 = vmatprep.subr.mxu0 0.0
      %1288 = vmatpush1.msra.mxu0 0.0
      %1289 = vmatprep.subr.mxu0 0.0
      %1290 = vmatpush1.msra.mxu0 0.0
      %1291 = vmatprep.subr.mxu0 0.0
      %1292 = vmatpush1.msra.mxu0 0.0
      %1293 = vmatprep.subr.mxu0 0.0
      %1294 = vmatpush1.msra.mxu0 0.0
      %1295 = vmatprep.subr.mxu0 0.0
      %1296 = vmatpush1.msra.mxu0 0.0
      %1297 = vmatprep.subr.mxu0 0.0
      %1298 = vmatpush1.msra.mxu0 0.0
      %1299 = vmatprep.subr.mxu0 0.0
      %1300 = vmatpush1.msra.mxu0 0.0
      %1301 = vmatprep.subr.mxu0 0.0
      %1302 = vmatpush1.msra.mxu0 0.0
      %1303 = vmatprep.subr.mxu0 0.0
      %1304 = vmatpush1.msra.mxu0 0.0
      %1305 = vmatprep.subr.mxu0 0.0
      %1306 = vmatpush1.msra.mxu0 0.0
      %1307 = vmatprep.subr.mxu0 0.0
      %1308 = vmatpush1.msra.mxu0 0.0
      %1309 = vmatprep.subr.mxu0 0.0
      %1310 = vmatpush1.msra.mxu0 0.0
      %1311 = vmatprep.subr.mxu0 0.0
      %1312 = vmatpush1.msra.mxu0 0.0
      %1313 = vmatprep.subr.mxu0 0.0
      %1314 = vmatpush1.msra.mxu0 0.0
      %1315 = vmatprep.subr.mxu0 0.0
      %1316 = vmatpush1.msra.mxu0 0.0
      %1317 = vmatprep.subr.mxu0 0.0
      %1318 = vmatpush1.msra.mxu0 0.0
      %1319 = vmatprep.subr.mxu0 0.0
      %1320 = vmatpush1.msra.mxu0 0.0
      %1321 = vmatprep.subr.mxu0 0.0
      %1322 = vmatpush1.msra.mxu0 0.0
      %1323 = vmatprep.subr.mxu0 0.0
      %1324 = vmatpush1.msra.mxu0 0.0
      %1325 = vmatprep.subr.mxu0 0.0
      %1326 = vmatpush1.msra.mxu0 0.0
      %1327 = vmatprep.mubr.f32.mxu0 0.0
      %1328 = vmatmul.mubr.f32.gmra.mrb[0].mxu0 %v1010
      %v1329 = vpop.f32.mrb[0].mxu0
      %v1330 = vadd.f32 0.0, %v1329
      %v1331 = vpop.f32.mrb[0].mxu0
      %v1332 = vadd.f32 0.0, %v1331
      %1333 = vmatprep.mubr.f32.mxu0 0.0
      %1334 = vmatmul.mubr.f32.gmra.mrb[0].mxu0 %v1013
      %v1335 = vpop.f32.mrb[0].mxu0
      %v1336 = vadd.f32 0.0, %v1335
      %v1337 = vpop.f32.mrb[0].mxu0
      %v1338 = vadd.f32 0.0, %v1337
      %1339 = vdwg.mxu0
      %v1340 = vadd.f32 %v738, %v1099
      %v1341 = vadd.f32 %v740, %v1101
      %v1342 = vadd.f32 %v815, %v1176
      %v1343 = vadd.f32 %v817, %v1178
      %v1344 = vadd.f32 %v892, %v1253
      %v1345 = vadd.f32 %v894, %v1255
      %v1346 = vadd.f32 %v969, %v1330
      %v1347 = vadd.f32 %v971, %v1332
      %v1348 = vadd.f32 %v744, %v1105
      %v1349 = vadd.f32 %v746, %v1107
      %v1350 = vadd.f32 %v821, %v1182
      %v1351 = vadd.f32 %v823, %v1184
      %v1352 = vadd.f32 %v898, %v1259
      %v1353 = vadd.f32 %v900, %v1261
      %v1354 = vadd.f32 %v975, %v1336
      %v1355 = vadd.f32 %v977, %v1338
      %s1356 = scalar_lea.vmem %s1, 48
      %v1357 = vld [vmem:[%s1356] sm:$0xff]
      %v1358 = vld [vmem:[%s1356 + $0x8] sm:$0x3]
      %v1363 = vcombine.high %v287, %v287
      %v1364 = vcombine.high %v288, %v288
      %v1365 = vcombine.high %v289, %v289
      %v1366 = vcombine.high %v290, %v290
      %v1368 = vsel %vm309, %v1357, 0
      %v1371 = vsel %vm309, %v1358, 0
      %v1373 = vsel %vm316, %v287, 0
      %v1375 = vsel %vm316, %v1363, 0
      %v1377 = vsel %vm316, %v288, 0
      %v1379 = vsel %vm316, %v1364, 0
      %v1381 = vsel %vm316, %v289, 0
      %v1383 = vsel %vm316, %v1365, 0
      %v1385 = vsel %vm316, %v290, 0
      %v1387 = vsel %vm316, %v1366, 0
      %1389 = vmatprep.subr.mxu0 %v1375
      %1390 = vmatpush1.msra.mxu0 %v1373
      %1391 = vmatprep.subr.mxu0 0.0
      %1392 = vmatpush1.msra.mxu0 0.0
      %1393 = vmatprep.subr.mxu0 0.0
      %1394 = vmatpush1.msra.mxu0 0.0
      %1395 = vmatprep.subr.mxu0 0.0
      %1396 = vmatpush1.msra.mxu0 0.0
      %1397 = vmatprep.subr.mxu0 0.0
      %1398 = vmatpush1.msra.mxu0 0.0
      %1399 = vmatprep.subr.mxu0 0.0
      %1400 = vmatpush1.msra.mxu0 0.0
      %1401 = vmatprep.subr.mxu0 0.0
      %1402 = vmatpush1.msra.mxu0 0.0
      %1403 = vmatprep.subr.mxu0 0.0
      %1404 = vmatpush1.msra.mxu0 0.0
      %1405 = vmatprep.subr.mxu0 0.0
      %1406 = vmatpush1.msra.mxu0 0.0
      %1407 = vmatprep.subr.mxu0 0.0
      %1408 = vmatpush1.msra.mxu0 0.0
      %1409 = vmatprep.subr.mxu0 0.0
      %1410 = vmatpush1.msra.mxu0 0.0
      %1411 = vmatprep.subr.mxu0 0.0
      %1412 = vmatpush1.msra.mxu0 0.0
      %1413 = vmatprep.subr.mxu0 0.0
      %1414 = vmatpush1.msra.mxu0 0.0
      %1415 = vmatprep.subr.mxu0 0.0
      %1416 = vmatpush1.msra.mxu0 0.0
      %1417 = vmatprep.subr.mxu0 0.0
      %1418 = vmatpush1.msra.mxu0 0.0
      %1419 = vmatprep.subr.mxu0 0.0
      %1420 = vmatpush1.msra.mxu0 0.0
      %1421 = vmatprep.subr.mxu0 0.0
      %1422 = vmatpush1.msra.mxu0 0.0
      %1423 = vmatprep.subr.mxu0 0.0
      %1424 = vmatpush1.msra.mxu0 0.0
      %1425 = vmatprep.subr.mxu0 0.0
      %1426 = vmatpush1.msra.mxu0 0.0
      %1427 = vmatprep.subr.mxu0 0.0
      %1428 = vmatpush1.msra.mxu0 0.0
      %1429 = vmatprep.subr.mxu0 0.0
      %1430 = vmatpush1.msra.mxu0 0.0
      %1431 = vmatprep.subr.mxu0 0.0
      %1432 = vmatpush1.msra.mxu0 0.0
      %1433 = vmatprep.subr.mxu0 0.0
      %1434 = vmatpush1.msra.mxu0 0.0
      %1435 = vmatprep.subr.mxu0 0.0
      %1436 = vmatpush1.msra.mxu0 0.0
      %1437 = vmatprep.subr.mxu0 0.0
      %1438 = vmatpush1.msra.mxu0 0.0
      %1439 = vmatprep.subr.mxu0 0.0
      %1440 = vmatpush1.msra.mxu0 0.0
      %1441 = vmatprep.subr.mxu0 0.0
      %1442 = vmatpush1.msra.mxu0 0.0
      %1443 = vmatprep.subr.mxu0 0.0
      %1444 = vmatpush1.msra.mxu0 0.0
      %1445 = vmatprep.subr.mxu0 0.0
      %1446 = vmatpush1.msra.mxu0 0.0
      %1447 = vmatprep.subr.mxu0 0.0
      %1448 = vmatpush1.msra.mxu0 0.0
      %1449 = vmatprep.subr.mxu0 0.0
      %1450 = vmatpush1.msra.mxu0 0.0
      %1451 = vmatprep.subr.mxu0 0.0
      %1452 = vmatpush1.msra.mxu0 0.0
      %1453 = vmatprep.mubr.f32.mxu0 0.0
      %1454 = vmatmul.mubr.f32.gmra.mrb[0].mxu0 %v1368
      %v1455 = vpop.f32.mrb[0].mxu0
      %v1456 = vadd.f32 0.0, %v1455
      %v1457 = vpop.f32.mrb[0].mxu0
      %v1458 = vadd.f32 0.0, %v1457
      %1459 = vmatprep.mubr.f32.mxu0 0.0
      %1460 = vmatmul.mubr.f32.gmra.mrb[0].mxu0 %v1371
      %v1461 = vpop.f32.mrb[0].mxu0
      %v1462 = vadd.f32 0.0, %v1461
      %v1463 = vpop.f32.mrb[0].mxu0
      %v1464 = vadd.f32 0.0, %v1463
      %1465 = vdwg.mxu0
      %1466 = vmatprep.subr.mxu0 %v1379
      %1467 = vmatpush1.msra.mxu0 %v1377
      %1468 = vmatprep.subr.mxu0 0.0
      %1469 = vmatpush1.msra.mxu0 0.0
      %1470 = vmatprep.subr.mxu0 0.0
      %1471 = vmatpush1.msra.mxu0 0.0
      %1472 = vmatprep.subr.mxu0 0.0
      %1473 = vmatpush1.msra.mxu0 0.0
      %1474 = vmatprep.subr.mxu0 0.0
      %1475 = vmatpush1.msra.mxu0 0.0
      %1476 = vmatprep.subr.mxu0 0.0
      %1477 = vmatpush1.msra.mxu0 0.0
      %1478 = vmatprep.subr.mxu0 0.0
      %1479 = vmatpush1.msra.mxu0 0.0
      %1480 = vmatprep.subr.mxu0 0.0
      %1481 = vmatpush1.msra.mxu0 0.0
      %1482 = vmatprep.subr.mxu0 0.0
      %1483 = vmatpush1.msra.mxu0 0.0
      %1484 = vmatprep.subr.mxu0 0.0
      %1485 = vmatpush1.msra.mxu0 0.0
      %1486 = vmatprep.subr.mxu0 0.0
      %1487 = vmatpush1.msra.mxu0 0.0
      %1488 = vmatprep.subr.mxu0 0.0
      %1489 = vmatpush1.msra.mxu0 0.0
      %1490 = vmatprep.subr.mxu0 0.0
      %1491 = vmatpush1.msra.mxu0 0.0
      %1492 = vmatprep.subr.mxu0 0.0
      %1493 = vmatpush1.msra.mxu0 0.0
      %1494 = vmatprep.subr.mxu0 0.0
      %1495 = vmatpush1.msra.mxu0 0.0
      %1496 = vmatprep.subr.mxu0 0.0
      %1497 = vmatpush1.msra.mxu0 0.0
      %1498 = vmatprep.subr.mxu0 0.0
      %1499 = vmatpush1.msra.mxu0 0.0
      %1500 = vmatprep.subr.mxu0 0.0
      %1501 = vmatpush1.msra.mxu0 0.0
      %1502 = vmatprep.subr.mxu0 0.0
      %1503 = vmatpush1.msra.mxu0 0.0
      %1504 = vmatprep.subr.mxu0 0.0
      %1505 = vmatpush1.msra.mxu0 0.0
      %1506 = vmatprep.subr.mxu0 0.0
      %1507 = vmatpush1.msra.mxu0 0.0
      %1508 = vmatprep.subr.mxu0 0.0
      %1509 = vmatpush1.msra.mxu0 0.0
      %1510 = vmatprep.subr.mxu0 0.0
      %1511 = vmatpush1.msra.mxu0 0.0
      %1512 = vmatprep.subr.mxu0 0.0
      %1513 = vmatpush1.msra.mxu0 0.0
      %1514 = vmatprep.subr.mxu0 0.0
      %1515 = vmatpush1.msra.mxu0 0.0
      %1516 = vmatprep.subr.mxu0 0.0
      %1517 = vmatpush1.msra.mxu0 0.0
      %1518 = vmatprep.subr.mxu0 0.0
      %1519 = vmatpush1.msra.mxu0 0.0
      %1520 = vmatprep.subr.mxu0 0.0
      %1521 = vmatpush1.msra.mxu0 0.0
      %1522 = vmatprep.subr.mxu0 0.0
      %1523 = vmatpush1.msra.mxu0 0.0
      %1524 = vmatprep.subr.mxu0 0.0
      %1525 = vmatpush1.msra.mxu0 0.0
      %1526 = vmatprep.subr.mxu0 0.0
      %1527 = vmatpush1.msra.mxu0 0.0
      %1528 = vmatprep.subr.mxu0 0.0
      %1529 = vmatpush1.msra.mxu0 0.0
      %1530 = vmatprep.mubr.f32.mxu0 0.0
      %1531 = vmatmul.mubr.f32.gmra.mrb[0].mxu0 %v1368
      %v1532 = vpop.f32.mrb[0].mxu0
      %v1533 = vadd.f32 0.0, %v1532
      %v1534 = vpop.f32.mrb[0].mxu0
      %v1535 = vadd.f32 0.0, %v1534
      %1536 = vmatprep.mubr.f32.mxu0 0.0
      %1537 = vmatmul.mubr.f32.gmra.mrb[0].mxu0 %v1371
      %v1538 = vpop.f32.mrb[0].mxu0
      %v1539 = vadd.f32 0.0, %v1538
      %v1540 = vpop.f32.mrb[0].mxu0
      %v1541 = vadd.f32 0.0, %v1540
      %1542 = vdwg.mxu0
      %1543 = vmatprep.subr.mxu0 %v1383
      %1544 = vmatpush1.msra.mxu0 %v1381
      %1545 = vmatprep.subr.mxu0 0.0
      %1546 = vmatpush1.msra.mxu0 0.0
      %1547 = vmatprep.subr.mxu0 0.0
      %1548 = vmatpush1.msra.mxu0 0.0
      %1549 = vmatprep.subr.mxu0 0.0
      %1550 = vmatpush1.msra.mxu0 0.0
      %1551 = vmatprep.subr.mxu0 0.0
      %1552 = vmatpush1.msra.mxu0 0.0
      %1553 = vmatprep.subr.mxu0 0.0
      %1554 = vmatpush1.msra.mxu0 0.0
      %1555 = vmatprep.subr.mxu0 0.0
      %1556 = vmatpush1.msra.mxu0 0.0
      %1557 = vmatprep.subr.mxu0 0.0
      %1558 = vmatpush1.msra.mxu0 0.0
      %1559 = vmatprep.subr.mxu0 0.0
      %1560 = vmatpush1.msra.mxu0 0.0
      %1561 = vmatprep.subr.mxu0 0.0
      %1562 = vmatpush1.msra.mxu0 0.0
      %1563 = vmatprep.subr.mxu0 0.0
      %1564 = vmatpush1.msra.mxu0 0.0
      %1565 = vmatprep.subr.mxu0 0.0
      %1566 = vmatpush1.msra.mxu0 0.0
      %1567 = vmatprep.subr.mxu0 0.0
      %1568 = vmatpush1.msra.mxu0 0.0
      %1569 = vmatprep.subr.mxu0 0.0
      %1570 = vmatpush1.msra.mxu0 0.0
      %1571 = vmatprep.subr.mxu0 0.0
      %1572 = vmatpush1.msra.mxu0 0.0
      %1573 = vmatprep.subr.mxu0 0.0
      %1574 = vmatpush1.msra.mxu0 0.0
      %1575 = vmatprep.subr.mxu0 0.0
      %1576 = vmatpush1.msra.mxu0 0.0
      %1577 = vmatprep.subr.mxu0 0.0
      %1578 = vmatpush1.msra.mxu0 0.0
      %1579 = vmatprep.subr.mxu0 0.0
      %1580 = vmatpush1.msra.mxu0 0.0
      %1581 = vmatprep.subr.mxu0 0.0
      %1582 = vmatpush1.msra.mxu0 0.0
      %1583 = vmatprep.subr.mxu0 0.0
      %1584 = vmatpush1.msra.mxu0 0.0
      %1585 = vmatprep.subr.mxu0 0.0
      %1586 = vmatpush1.msra.mxu0 0.0
      %1587 = vmatprep.subr.mxu0 0.0
      %1588 = vmatpush1.msra.mxu0 0.0
      %1589 = vmatprep.subr.mxu0 0.0
      %1590 = vmatpush1.msra.mxu0 0.0
      %1591 = vmatprep.subr.mxu0 0.0
      %1592 = vmatpush1.msra.mxu0 0.0
      %1593 = vmatprep.subr.mxu0 0.0
      %1594 = vmatpush1.msra.mxu0 0.0
      %1595 = vmatprep.subr.mxu0 0.0
      %1596 = vmatpush1.msra.mxu0 0.0
      %1597 = vmatprep.subr.mxu0 0.0
      %1598 = vmatpush1.msra.mxu0 0.0
      %1599 = vmatprep.subr.mxu0 0.0
      %1600 = vmatpush1.msra.mxu0 0.0
      %1601 = vmatprep.subr.mxu0 0.0
      %1602 = vmatpush1.msra.mxu0 0.0
      %1603 = vmatprep.subr.mxu0 0.0
      %1604 = vmatpush1.msra.mxu0 0.0
      %1605 = vmatprep.subr.mxu0 0.0
      %1606 = vmatpush1.msra.mxu0 0.0
      %1607 = vmatprep.mubr.f32.mxu0 0.0
      %1608 = vmatmul.mubr.f32.gmra.mrb[0].mxu0 %v1368
      %v1609 = vpop.f32.mrb[0].mxu0
      %v1610 = vadd.f32 0.0, %v1609
      %v1611 = vpop.f32.mrb[0].mxu0
      %v1612 = vadd.f32 0.0, %v1611
      %1613 = vmatprep.mubr.f32.mxu0 0.0
      %1614 = vmatmul.mubr.f32.gmra.mrb[0].mxu0 %v1371
      %v1615 = vpop.f32.mrb[0].mxu0
      %v1616 = vadd.f32 0.0, %v1615
      %v1617 = vpop.f32.mrb[0].mxu0
      %v1618 = vadd.f32 0.0, %v1617
      %1619 = vdwg.mxu0
      %1620 = vmatprep.subr.mxu0 %v1387
      %1621 = vmatpush1.msra.mxu0 %v1385
      %1622 = vmatprep.subr.mxu0 0.0
      %1623 = vmatpush1.msra.mxu0 0.0
      %1624 = vmatprep.subr.mxu0 0.0
      %1625 = vmatpush1.msra.mxu0 0.0
      %1626 = vmatprep.subr.mxu0 0.0
      %1627 = vmatpush1.msra.mxu0 0.0
      %1628 = vmatprep.subr.mxu0 0.0
      %1629 = vmatpush1.msra.mxu0 0.0
      %1630 = vmatprep.subr.mxu0 0.0
      %1631 = vmatpush1.msra.mxu0 0.0
      %1632 = vmatprep.subr.mxu0 0.0
      %1633 = vmatpush1.msra.mxu0 0.0
      %1634 = vmatprep.subr.mxu0 0.0
      %1635 = vmatpush1.msra.mxu0 0.0
      %1636 = vmatprep.subr.mxu0 0.0
      %1637 = vmatpush1.msra.mxu0 0.0
      %1638 = vmatprep.subr.mxu0 0.0
      %1639 = vmatpush1.msra.mxu0 0.0
      %1640 = vmatprep.subr.mxu0 0.0
      %1641 = vmatpush1.msra.mxu0 0.0
      %1642 = vmatprep.subr.mxu0 0.0
      %1643 = vmatpush1.msra.mxu0 0.0
      %1644 = vmatprep.subr.mxu0 0.0
      %1645 = vmatpush1.msra.mxu0 0.0
      %1646 = vmatprep.subr.mxu0 0.0
      %1647 = vmatpush1.msra.mxu0 0.0
      %1648 = vmatprep.subr.mxu0 0.0
      %1649 = vmatpush1.msra.mxu0 0.0
      %1650 = vmatprep.subr.mxu0 0.0
      %1651 = vmatpush1.msra.mxu0 0.0
      %1652 = vmatprep.subr.mxu0 0.0
      %1653 = vmatpush1.msra.mxu0 0.0
      %1654 = vmatprep.subr.mxu0 0.0
      %1655 = vmatpush1.msra.mxu0 0.0
      %1656 = vmatprep.subr.mxu0 0.0
      %1657 = vmatpush1.msra.mxu0 0.0
      %1658 = vmatprep.subr.mxu0 0.0
      %1659 = vmatpush1.msra.mxu0 0.0
      %1660 = vmatprep.subr.mxu0 0.0
      %1661 = vmatpush1.msra.mxu0 0.0
      %1662 = vmatprep.subr.mxu0 0.0
      %1663 = vmatpush1.msra.mxu0 0.0
      %1664 = vmatprep.subr.mxu0 0.0
      %1665 = vmatpush1.msra.mxu0 0.0
      %1666 = vmatprep.subr.mxu0 0.0
      %1667 = vmatpush1.msra.mxu0 0.0
      %1668 = vmatprep.subr.mxu0 0.0
      %1669 = vmatpush1.msra.mxu0 0.0
      %1670 = vmatprep.subr.mxu0 0.0
      %1671 = vmatpush1.msra.mxu0 0.0
      %1672 = vmatprep.subr.mxu0 0.0
      %1673 = vmatpush1.msra.mxu0 0.0
      %1674 = vmatprep.subr.mxu0 0.0
      %1675 = vmatpush1.msra.mxu0 0.0
      %1676 = vmatprep.subr.mxu0 0.0
      %1677 = vmatpush1.msra.mxu0 0.0
      %1678 = vmatprep.subr.mxu0 0.0
      %1679 = vmatpush1.msra.mxu0 0.0
      %1680 = vmatprep.subr.mxu0 0.0
      %1681 = vmatpush1.msra.mxu0 0.0
      %1682 = vmatprep.subr.mxu0 0.0
      %1683 = vmatpush1.msra.mxu0 0.0
      %1684 = vmatprep.mubr.f32.mxu0 0.0
      %1685 = vmatmul.mubr.f32.gmra.mrb[0].mxu0 %v1368
      %v1686 = vpop.f32.mrb[0].mxu0
      %v1687 = vadd.f32 0.0, %v1686
      %v1688 = vpop.f32.mrb[0].mxu0
      %v1689 = vadd.f32 0.0, %v1688
      %1690 = vmatprep.mubr.f32.mxu0 0.0
      %1691 = vmatmul.mubr.f32.gmra.mrb[0].mxu0 %v1371
      %v1692 = vpop.f32.mrb[0].mxu0
      %v1693 = vadd.f32 0.0, %v1692
      %v1694 = vpop.f32.mrb[0].mxu0
      %v1695 = vadd.f32 0.0, %v1694
      %1696 = vdwg.mxu0
      %v1697 = vadd.f32 %v1340, %v1456
      %v1698 = vadd.f32 %v1341, %v1458
      %v1699 = vadd.f32 %v1342, %v1533
      %v1700 = vadd.f32 %v1343, %v1535
      %v1701 = vadd.f32 %v1344, %v1610
      %v1702 = vadd.f32 %v1345, %v1612
      %v1703 = vadd.f32 %v1346, %v1687
      %v1704 = vadd.f32 %v1347, %v1689
      %v1705 = vadd.f32 %v1348, %v1462
      %v1706 = vadd.f32 %v1349, %v1464
      %v1707 = vadd.f32 %v1350, %v1539
      %v1708 = vadd.f32 %v1351, %v1541
      %v1709 = vadd.f32 %v1352, %v1616
      %v1710 = vadd.f32 %v1353, %v1618
      %v1711 = vadd.f32 %v1354, %v1693
      %v1712 = vadd.f32 %v1355, %v1695
      %s1713 = scalar_lea.vmem %s1, 64
      %v1714 = vld [vmem:[%s1713] sm:$0xff]
      %v1715 = vld [vmem:[%s1713 + $0x8] sm:$0x3]
      %v1720 = vcombine.high %v292, %v292
      %v1721 = vcombine.high %v293, %v293
      %v1722 = vcombine.high %v294, %v294
      %v1723 = vcombine.high %v295, %v295
      %v1725 = vsel %vm309, %v1714, 0
      %v1728 = vsel %vm309, %v1715, 0
      %v1730 = vsel %vm316, %v292, 0
      %v1732 = vsel %vm316, %v1720, 0
      %v1734 = vsel %vm316, %v293, 0
      %v1736 = vsel %vm316, %v1721, 0
      %v1738 = vsel %vm316, %v294, 0
      %v1740 = vsel %vm316, %v1722, 0
      %v1742 = vsel %vm316, %v295, 0
      %v1744 = vsel %vm316, %v1723, 0
      %1746 = vmatprep.subr.mxu0 %v1732
      %1747 = vmatpush1.msra.mxu0 %v1730
      %1748 = vmatprep.subr.mxu0 0.0
      %1749 = vmatpush1.msra.mxu0 0.0
      %1750 = vmatprep.subr.mxu0 0.0
      %1751 = vmatpush1.msra.mxu0 0.0
      %1752 = vmatprep.subr.mxu0 0.0
      %1753 = vmatpush1.msra.mxu0 0.0
      %1754 = vmatprep.subr.mxu0 0.0
      %1755 = vmatpush1.msra.mxu0 0.0
      %1756 = vmatprep.subr.mxu0 0.0
      %1757 = vmatpush1.msra.mxu0 0.0
      %1758 = vmatprep.subr.mxu0 0.0
      %1759 = vmatpush1.msra.mxu0 0.0
      %1760 = vmatprep.subr.mxu0 0.0
      %1761 = vmatpush1.msra.mxu0 0.0
      %1762 = vmatprep.subr.mxu0 0.0
      %1763 = vmatpush1.msra.mxu0 0.0
      %1764 = vmatprep.subr.mxu0 0.0
      %1765 = vmatpush1.msra.mxu0 0.0
      %1766 = vmatprep.subr.mxu0 0.0
      %1767 = vmatpush1.msra.mxu0 0.0
      %1768 = vmatprep.subr.mxu0 0.0
      %1769 = vmatpush1.msra.mxu0 0.0
      %1770 = vmatprep.subr.mxu0 0.0
      %1771 = vmatpush1.msra.mxu0 0.0
      %1772 = vmatprep.subr.mxu0 0.0
      %1773 = vmatpush1.msra.mxu0 0.0
      %1774 = vmatprep.subr.mxu0 0.0
      %1775 = vmatpush1.msra.mxu0 0.0
      %1776 = vmatprep.subr.mxu0 0.0
      %1777 = vmatpush1.msra.mxu0 0.0
      %1778 = vmatprep.subr.mxu0 0.0
      %1779 = vmatpush1.msra.mxu0 0.0
      %1780 = vmatprep.subr.mxu0 0.0
      %1781 = vmatpush1.msra.mxu0 0.0
      %1782 = vmatprep.subr.mxu0 0.0
      %1783 = vmatpush1.msra.mxu0 0.0
      %1784 = vmatprep.subr.mxu0 0.0
      %1785 = vmatpush1.msra.mxu0 0.0
      %1786 = vmatprep.subr.mxu0 0.0
      %1787 = vmatpush1.msra.mxu0 0.0
      %1788 = vmatprep.subr.mxu0 0.0
      %1789 = vmatpush1.msra.mxu0 0.0
      %1790 = vmatprep.subr.mxu0 0.0
      %1791 = vmatpush1.msra.mxu0 0.0
      %1792 = vmatprep.subr.mxu0 0.0
      %1793 = vmatpush1.msra.mxu0 0.0
      %1794 = vmatprep.subr.mxu0 0.0
      %1795 = vmatpush1.msra.mxu0 0.0
      %1796 = vmatprep.subr.mxu0 0.0
      %1797 = vmatpush1.msra.mxu0 0.0
      %1798 = vmatprep.subr.mxu0 0.0
      %1799 = vmatpush1.msra.mxu0 0.0
      %1800 = vmatprep.subr.mxu0 0.0
      %1801 = vmatpush1.msra.mxu0 0.0
      %1802 = vmatprep.subr.mxu0 0.0
      %1803 = vmatpush1.msra.mxu0 0.0
      %1804 = vmatprep.subr.mxu0 0.0
      %1805 = vmatpush1.msra.mxu0 0.0
      %1806 = vmatprep.subr.mxu0 0.0
      %1807 = vmatpush1.msra.mxu0 0.0
      %1808 = vmatprep.subr.mxu0 0.0
      %1809 = vmatpush1.msra.mxu0 0.0
      %1810 = vmatprep.mubr.f32.mxu0 0.0
      %1811 = vmatmul.mubr.f32.gmra.mrb[0].mxu0 %v1725
      %v1812 = vpop.f32.mrb[0].mxu0
      %v1813 = vadd.f32 0.0, %v1812
      %v1814 = vpop.f32.mrb[0].mxu0
      %v1815 = vadd.f32 0.0, %v1814
      %1816 = vmatprep.mubr.f32.mxu0 0.0
      %1817 = vmatmul.mubr.f32.gmra.mrb[0].mxu0 %v1728
      %v1818 = vpop.f32.mrb[0].mxu0
      %v1819 = vadd.f32 0.0, %v1818
      %v1820 = vpop.f32.mrb[0].mxu0
      %v1821 = vadd.f32 0.0, %v1820
      %1822 = vdwg.mxu0
      %1823 = vmatprep.subr.mxu0 %v1736
      %1824 = vmatpush1.msra.mxu0 %v1734
      %1825 = vmatprep.subr.mxu0 0.0
      %1826 = vmatpush1.msra.mxu0 0.0
      %1827 = vmatprep.subr.mxu0 0.0
      %1828 = vmatpush1.msra.mxu0 0.0
      %1829 = vmatprep.subr.mxu0 0.0
      %1830 = vmatpush1.msra.mxu0 0.0
      %1831 = vmatprep.subr.mxu0 0.0
      %1832 = vmatpush1.msra.mxu0 0.0
      %1833 = vmatprep.subr.mxu0 0.0
      %1834 = vmatpush1.msra.mxu0 0.0
      %1835 = vmatprep.subr.mxu0 0.0
      %1836 = vmatpush1.msra.mxu0 0.0
      %1837 = vmatprep.subr.mxu0 0.0
      %1838 = vmatpush1.msra.mxu0 0.0
      %1839 = vmatprep.subr.mxu0 0.0
      %1840 = vmatpush1.msra.mxu0 0.0
      %1841 = vmatprep.subr.mxu0 0.0
      %1842 = vmatpush1.msra.mxu0 0.0
      %1843 = vmatprep.subr.mxu0 0.0
      %1844 = vmatpush1.msra.mxu0 0.0
      %1845 = vmatprep.subr.mxu0 0.0
      %1846 = vmatpush1.msra.mxu0 0.0
      %1847 = vmatprep.subr.mxu0 0.0
      %1848 = vmatpush1.msra.mxu0 0.0
      %1849 = vmatprep.subr.mxu0 0.0
      %1850 = vmatpush1.msra.mxu0 0.0
      %1851 = vmatprep.subr.mxu0 0.0
      %1852 = vmatpush1.msra.mxu0 0.0
      %1853 = vmatprep.subr.mxu0 0.0
      %1854 = vmatpush1.msra.mxu0 0.0
      %1855 = vmatprep.subr.mxu0 0.0
      %1856 = vmatpush1.msra.mxu0 0.0
      %1857 = vmatprep.subr.mxu0 0.0
      %1858 = vmatpush1.msra.mxu0 0.0
      %1859 = vmatprep.subr.mxu0 0.0
      %1860 = vmatpush1.msra.mxu0 0.0
      %1861 = vmatprep.subr.mxu0 0.0
      %1862 = vmatpush1.msra.mxu0 0.0
      %1863 = vmatprep.subr.mxu0 0.0
      %1864 = vmatpush1.msra.mxu0 0.0
      %1865 = vmatprep.subr.mxu0 0.0
      %1866 = vmatpush1.msra.mxu0 0.0
      %1867 = vmatprep.subr.mxu0 0.0
      %1868 = vmatpush1.msra.mxu0 0.0
      %1869 = vmatprep.subr.mxu0 0.0
      %1870 = vmatpush1.msra.mxu0 0.0
      %1871 = vmatprep.subr.mxu0 0.0
      %1872 = vmatpush1.msra.mxu0 0.0
      %1873 = vmatprep.subr.mxu0 0.0
      %1874 = vmatpush1.msra.mxu0 0.0
      %1875 = vmatprep.subr.mxu0 0.0
      %1876 = vmatpush1.msra.mxu0 0.0
      %1877 = vmatprep.subr.mxu0 0.0
      %1878 = vmatpush1.msra.mxu0 0.0
      %1879 = vmatprep.subr.mxu0 0.0
      %1880 = vmatpush1.msra.mxu0 0.0
      %1881 = vmatprep.subr.mxu0 0.0
      %1882 = vmatpush1.msra.mxu0 0.0
      %1883 = vmatprep.subr.mxu0 0.0
      %1884 = vmatpush1.msra.mxu0 0.0
      %1885 = vmatprep.subr.mxu0 0.0
      %1886 = vmatpush1.msra.mxu0 0.0
      %1887 = vmatprep.mubr.f32.mxu0 0.0
      %1888 = vmatmul.mubr.f32.gmra.mrb[0].mxu0 %v1725
      %v1889 = vpop.f32.mrb[0].mxu0
      %v1890 = vadd.f32 0.0, %v1889
      %v1891 = vpop.f32.mrb[0].mxu0
      %v1892 = vadd.f32 0.0, %v1891
      %1893 = vmatprep.mubr.f32.mxu0 0.0
      %1894 = vmatmul.mubr.f32.gmra.mrb[0].mxu0 %v1728
      %v1895 = vpop.f32.mrb[0].mxu0
      %v1896 = vadd.f32 0.0, %v1895
      %v1897 = vpop.f32.mrb[0].mxu0
      %v1898 = vadd.f32 0.0, %v1897
      %1899 = vdwg.mxu0
      %1900 = vmatprep.subr.mxu0 %v1740
      %1901 = vmatpush1.msra.mxu0 %v1738
      %1902 = vmatprep.subr.mxu0 0.0
      %1903 = vmatpush1.msra.mxu0 0.0
      %1904 = vmatprep.subr.mxu0 0.0
      %1905 = vmatpush1.msra.mxu0 0.0
      %1906 = vmatprep.subr.mxu0 0.0
      %1907 = vmatpush1.msra.mxu0 0.0
      %1908 = vmatprep.subr.mxu0 0.0
      %1909 = vmatpush1.msra.mxu0 0.0
      %1910 = vmatprep.subr.mxu0 0.0
      %1911 = vmatpush1.msra.mxu0 0.0
      %1912 = vmatprep.subr.mxu0 0.0
      %1913 = vmatpush1.msra.mxu0 0.0
      %1914 = vmatprep.subr.mxu0 0.0
      %1915 = vmatpush1.msra.mxu0 0.0
      %1916 = vmatprep.subr.mxu0 0.0
      %1917 = vmatpush1.msra.mxu0 0.0
      %1918 = vmatprep.subr.mxu0 0.0
      %1919 = vmatpush1.msra.mxu0 0.0
      %1920 = vmatprep.subr.mxu0 0.0
      %1921 = vmatpush1.msra.mxu0 0.0
      %1922 = vmatprep.subr.mxu0 0.0
      %1923 = vmatpush1.msra.mxu0 0.0
      %1924 = vmatprep.subr.mxu0 0.0
      %1925 = vmatpush1.msra.mxu0 0.0
      %1926 = vmatprep.subr.mxu0 0.0
      %1927 = vmatpush1.msra.mxu0 0.0
      %1928 = vmatprep.subr.mxu0 0.0
      %1929 = vmatpush1.msra.mxu0 0.0
      %1930 = vmatprep.subr.mxu0 0.0
      %1931 = vmatpush1.msra.mxu0 0.0
      %1932 = vmatprep.subr.mxu0 0.0
      %1933 = vmatpush1.msra.mxu0 0.0
      %1934 = vmatprep.subr.mxu0 0.0
      %1935 = vmatpush1.msra.mxu0 0.0
      %1936 = vmatprep.subr.mxu0 0.0
      %1937 = vmatpush1.msra.mxu0 0.0
      %1938 = vmatprep.subr.mxu0 0.0
      %1939 = vmatpush1.msra.mxu0 0.0
      %1940 = vmatprep.subr.mxu0 0.0
      %1941 = vmatpush1.msra.mxu0 0.0
      %1942 = vmatprep.subr.mxu0 0.0
      %1943 = vmatpush1.msra.mxu0 0.0
      %1944 = vmatprep.subr.mxu0 0.0
      %1945 = vmatpush1.msra.mxu0 0.0
      %1946 = vmatprep.subr.mxu0 0.0
      %1947 = vmatpush1.msra.mxu0 0.0
      %1948 = vmatprep.subr.mxu0 0.0
      %1949 = vmatpush1.msra.mxu0 0.0
      %1950 = vmatprep.subr.mxu0 0.0
      %1951 = vmatpush1.msra.mxu0 0.0
      %1952 = vmatprep.subr.mxu0 0.0
      %1953 = vmatpush1.msra.mxu0 0.0
      %1954 = vmatprep.subr.mxu0 0.0
      %1955 = vmatpush1.msra.mxu0 0.0
      %1956 = vmatprep.subr.mxu0 0.0
      %1957 = vmatpush1.msra.mxu0 0.0
      %1958 = vmatprep.subr.mxu0 0.0
      %1959 = vmatpush1.msra.mxu0 0.0
      %1960 = vmatprep.subr.mxu0 0.0
      %1961 = vmatpush1.msra.mxu0 0.0
      %1962 = vmatprep.subr.mxu0 0.0
      %1963 = vmatpush1.msra.mxu0 0.0
      %1964 = vmatprep.mubr.f32.mxu0 0.0
      %1965 = vmatmul.mubr.f32.gmra.mrb[0].mxu0 %v1725
      %v1966 = vpop.f32.mrb[0].mxu0
      %v1967 = vadd.f32 0.0, %v1966
      %v1968 = vpop.f32.mrb[0].mxu0
      %v1969 = vadd.f32 0.0, %v1968
      %1970 = vmatprep.mubr.f32.mxu0 0.0
      %1971 = vmatmul.mubr.f32.gmra.mrb[0].mxu0 %v1728
      %v1972 = vpop.f32.mrb[0].mxu0
      %v1973 = vadd.f32 0.0, %v1972
      %v1974 = vpop.f32.mrb[0].mxu0
      %v1975 = vadd.f32 0.0, %v1974
      %1976 = vdwg.mxu0
      %1977 = vmatprep.subr.mxu0 %v1744
      %1978 = vmatpush1.msra.mxu0 %v1742
      %1979 = vmatprep.subr.mxu0 0.0
      %1980 = vmatpush1.msra.mxu0 0.0
      %1981 = vmatprep.subr.mxu0 0.0
      %1982 = vmatpush1.msra.mxu0 0.0
      %1983 = vmatprep.subr.mxu0 0.0
      %1984 = vmatpush1.msra.mxu0 0.0
      %1985 = vmatprep.subr.mxu0 0.0
      %1986 = vmatpush1.msra.mxu0 0.0
      %1987 = vmatprep.subr.mxu0 0.0
      %1988 = vmatpush1.msra.mxu0 0.0
      %1989 = vmatprep.subr.mxu0 0.0
      %1990 = vmatpush1.msra.mxu0 0.0
      %1991 = vmatprep.subr.mxu0 0.0
      %1992 = vmatpush1.msra.mxu0 0.0
      %1993 = vmatprep.subr.mxu0 0.0
      %1994 = vmatpush1.msra.mxu0 0.0
      %1995 = vmatprep.subr.mxu0 0.0
      %1996 = vmatpush1.msra.mxu0 0.0
      %1997 = vmatprep.subr.mxu0 0.0
      %1998 = vmatpush1.msra.mxu0 0.0
      %1999 = vmatprep.subr.mxu0 0.0
      %2000 = vmatpush1.msra.mxu0 0.0
      %2001 = vmatprep.subr.mxu0 0.0
      %2002 = vmatpush1.msra.mxu0 0.0
      %2003 = vmatprep.subr.mxu0 0.0
      %2004 = vmatpush1.msra.mxu0 0.0
      %2005 = vmatprep.subr.mxu0 0.0
      %2006 = vmatpush1.msra.mxu0 0.0
      %2007 = vmatprep.subr.mxu0 0.0
      %2008 = vmatpush1.msra.mxu0 0.0
      %2009 = vmatprep.subr.mxu0 0.0
      %2010 = vmatpush1.msra.mxu0 0.0
      %2011 = vmatprep.subr.mxu0 0.0
      %2012 = vmatpush1.msra.mxu0 0.0
      %2013 = vmatprep.subr.mxu0 0.0
      %2014 = vmatpush1.msra.mxu0 0.0
      %2015 = vmatprep.subr.mxu0 0.0
      %2016 = vmatpush1.msra.mxu0 0.0
      %2017 = vmatprep.subr.mxu0 0.0
      %2018 = vmatpush1.msra.mxu0 0.0
      %2019 = vmatprep.subr.mxu0 0.0
      %2020 = vmatpush1.msra.mxu0 0.0
      %2021 = vmatprep.subr.mxu0 0.0
      %2022 = vmatpush1.msra.mxu0 0.0
      %2023 = vmatprep.subr.mxu0 0.0
      %2024 = vmatpush1.msra.mxu0 0.0
      %2025 = vmatprep.subr.mxu0 0.0
      %2026 = vmatpush1.msra.mxu0 0.0
      %2027 = vmatprep.subr.mxu0 0.0
      %2028 = vmatpush1.msra.mxu0 0.0
      %2029 = vmatprep.subr.mxu0 0.0
      %2030 = vmatpush1.msra.mxu0 0.0
      %2031 = vmatprep.subr.mxu0 0.0
      %2032 = vmatpush1.msra.mxu0 0.0
      %2033 = vmatprep.subr.mxu0 0.0
      %2034 = vmatpush1.msra.mxu0 0.0
      %2035 = vmatprep.subr.mxu0 0.0
      %2036 = vmatpush1.msra.mxu0 0.0
      %2037 = vmatprep.subr.mxu0 0.0
      %2038 = vmatpush1.msra.mxu0 0.0
      %2039 = vmatprep.subr.mxu0 0.0
      %2040 = vmatpush1.msra.mxu0 0.0
      %2041 = vmatprep.mubr.f32.mxu0 0.0
      %2042 = vmatmul.mubr.f32.gmra.mrb[0].mxu0 %v1725
      %v2043 = vpop.f32.mrb[0].mxu0
      %v2044 = vadd.f32 0.0, %v2043
      %v2045 = vpop.f32.mrb[0].mxu0
      %v2046 = vadd.f32 0.0, %v2045
      %2047 = vmatprep.mubr.f32.mxu0 0.0
      %2048 = vmatmul.mubr.f32.gmra.mrb[0].mxu0 %v1728
      %v2049 = vpop.f32.mrb[0].mxu0
      %v2050 = vadd.f32 0.0, %v2049
      %v2051 = vpop.f32.mrb[0].mxu0
      %v2052 = vadd.f32 0.0, %v2051
      %2053 = vdwg.mxu0
      %v2054 = vadd.f32 %v1697, %v1813
      %v2055 = vadd.f32 %v1698, %v1815
      %v2056 = vadd.f32 %v1699, %v1890
      %v2057 = vadd.f32 %v1700, %v1892
      %v2058 = vadd.f32 %v1701, %v1967
      %v2059 = vadd.f32 %v1702, %v1969
      %v2060 = vadd.f32 %v1703, %v2044
      %v2061 = vadd.f32 %v1704, %v2046
      %v2062 = vadd.f32 %v1705, %v1819
      %v2063 = vadd.f32 %v1706, %v1821
      %v2064 = vadd.f32 %v1707, %v1896
      %v2065 = vadd.f32 %v1708, %v1898
      %v2066 = vadd.f32 %v1709, %v1973
      %v2067 = vadd.f32 %v1710, %v1975
      %v2068 = vadd.f32 %v1711, %v2050
      %v2069 = vadd.f32 %v1712, %v2052
      %2070 = vrot.lane.b32.xlu0 %v287, 127
      %v2071 = vpop.permute.xlu0 %2070
      %2072 = vrot.lane.b32.xlu0 %v1363, 127
      %v2073 = vpop.permute.xlu0 %2072
      %2074 = vrot.lane.b32.xlu0 %v288, 127
      %v2075 = vpop.permute.xlu0 %2074
      %2076 = vrot.lane.b32.xlu0 %v1364, 127
      %v2077 = vpop.permute.xlu0 %2076
      %2078 = vrot.lane.b32.xlu0 %v289, 127
      %v2079 = vpop.permute.xlu0 %2078
      %2080 = vrot.lane.b32.xlu0 %v1365, 127
      %v2081 = vpop.permute.xlu0 %2080
      %2082 = vrot.lane.b32.xlu0 %v290, 127
      %v2083 = vpop.permute.xlu0 %2082
      %2084 = vrot.lane.b32.xlu0 %v1366, 127
      %v2085 = vpop.permute.xlu0 %2084
      %v2086 = vsel %vm995, %v2071, %v2073
      %v2087 = vsel %vm995, %v2073, %v2075
      %v2088 = vsel %vm995, %v2075, %v2077
      %v2089 = vsel %vm995, %v2077, %v2079
      %v2090 = vsel %vm995, %v2079, %v2081
      %v2091 = vsel %vm995, %v2081, %v2083
      %v2092 = vsel %vm995, %v2083, %v2085
      %v2095 = vsel %vm995, %v2085, %v2071
      %s2096 = scalar_lea.vmem %s1, 80
      %v2097 = vld [vmem:[%s2096] sm:$0xff]
      %v2098 = vld [vmem:[%s2096 + $0x8] sm:$0x3]
      %v2100 = vsel %vm309, %v2097, 0
      %v2103 = vsel %vm309, %v2098, 0
      %v2105 = vsel %vm316, %v2086, 0
      %v2107 = vsel %vm316, %v2087, 0
      %v2109 = vsel %vm316, %v2088, 0
      %v2111 = vsel %vm316, %v2089, 0
      %v2113 = vsel %vm316, %v2090, 0
      %v2115 = vsel %vm316, %v2091, 0
      %v2117 = vsel %vm316, %v2092, 0
      %v2120 = vsel %vm316, %v2095, 0
      %2122 = vmatprep.subr.mxu0 %v2107
      %2123 = vmatpush1.msra.mxu0 %v2105
      %2124 = vmatprep.subr.mxu0 0.0
      %2125 = vmatpush1.msra.mxu0 0.0
      %2126 = vmatprep.subr.mxu0 0.0
      %2127 = vmatpush1.msra.mxu0 0.0
      %2128 = vmatprep.subr.mxu0 0.0
      %2129 = vmatpush1.msra.mxu0 0.0
      %2130 = vmatprep.subr.mxu0 0.0
      %2131 = vmatpush1.msra.mxu0 0.0
      %2132 = vmatprep.subr.mxu0 0.0
      %2133 = vmatpush1.msra.mxu0 0.0
      %2134 = vmatprep.subr.mxu0 0.0
      %2135 = vmatpush1.msra.mxu0 0.0
      %2136 = vmatprep.subr.mxu0 0.0
      %2137 = vmatpush1.msra.mxu0 0.0
      %2138 = vmatprep.subr.mxu0 0.0
      %2139 = vmatpush1.msra.mxu0 0.0
      %2140 = vmatprep.subr.mxu0 0.0
      %2141 = vmatpush1.msra.mxu0 0.0
      %2142 = vmatprep.subr.mxu0 0.0
      %2143 = vmatpush1.msra.mxu0 0.0
      %2144 = vmatprep.subr.mxu0 0.0
      %2145 = vmatpush1.msra.mxu0 0.0
      %2146 = vmatprep.subr.mxu0 0.0
      %2147 = vmatpush1.msra.mxu0 0.0
      %2148 = vmatprep.subr.mxu0 0.0
      %2149 = vmatpush1.msra.mxu0 0.0
      %2150 = vmatprep.subr.mxu0 0.0
      %2151 = vmatpush1.msra.mxu0 0.0
      %2152 = vmatprep.subr.mxu0 0.0
      %2153 = vmatpush1.msra.mxu0 0.0
      %2154 = vmatprep.subr.mxu0 0.0
      %2155 = vmatpush1.msra.mxu0 0.0
      %2156 = vmatprep.subr.mxu0 0.0
      %2157 = vmatpush1.msra.mxu0 0.0
      %2158 = vmatprep.subr.mxu0 0.0
      %2159 = vmatpush1.msra.mxu0 0.0
      %2160 = vmatprep.subr.mxu0 0.0
      %2161 = vmatpush1.msra.mxu0 0.0
      %2162 = vmatprep.subr.mxu0 0.0
      %2163 = vmatpush1.msra.mxu0 0.0
      %2164 = vmatprep.subr.mxu0 0.0
      %2165 = vmatpush1.msra.mxu0 0.0
      %2166 = vmatprep.subr.mxu0 0.0
      %2167 = vmatpush1.msra.mxu0 0.0
      %2168 = vmatprep.subr.mxu0 0.0
      %2169 = vmatpush1.msra.mxu0 0.0
      %2170 = vmatprep.subr.mxu0 0.0
      %2171 = vmatpush1.msra.mxu0 0.0
      %2172 = vmatprep.subr.mxu0 0.0
      %2173 = vmatpush1.msra.mxu0 0.0
      %2174 = vmatprep.subr.mxu0 0.0
      %2175 = vmatpush1.msra.mxu0 0.0
      %2176 = vmatprep.subr.mxu0 0.0
      %2177 = vmatpush1.msra.mxu0 0.0
      %2178 = vmatprep.subr.mxu0 0.0
      %2179 = vmatpush1.msra.mxu0 0.0
      %2180 = vmatprep.subr.mxu0 0.0
      %2181 = vmatpush1.msra.mxu0 0.0
      %2182 = vmatprep.subr.mxu0 0.0
      %2183 = vmatpush1.msra.mxu0 0.0
      %2184 = vmatprep.subr.mxu0 0.0
      %2185 = vmatpush1.msra.mxu0 0.0
      %2186 = vmatprep.mubr.f32.mxu0 0.0
      %2187 = vmatmul.mubr.f32.gmra.mrb[0].mxu0 %v2100
      %v2188 = vpop.f32.mrb[0].mxu0
      %v2189 = vadd.f32 0.0, %v2188
      %v2190 = vpop.f32.mrb[0].mxu0
      %v2191 = vadd.f32 0.0, %v2190
      %2192 = vmatprep.mubr.f32.mxu0 0.0
      %2193 = vmatmul.mubr.f32.gmra.mrb[0].mxu0 %v2103
      %v2194 = vpop.f32.mrb[0].mxu0
      %v2195 = vadd.f32 0.0, %v2194
      %v2196 = vpop.f32.mrb[0].mxu0
      %v2197 = vadd.f32 0.0, %v2196
      %2198 = vdwg.mxu0
      %2199 = vmatprep.subr.mxu0 %v2111
      %2200 = vmatpush1.msra.mxu0 %v2109
      %2201 = vmatprep.subr.mxu0 0.0
      %2202 = vmatpush1.msra.mxu0 0.0
      %2203 = vmatprep.subr.mxu0 0.0
      %2204 = vmatpush1.msra.mxu0 0.0
      %2205 = vmatprep.subr.mxu0 0.0
      %2206 = vmatpush1.msra.mxu0 0.0
      %2207 = vmatprep.subr.mxu0 0.0
      %2208 = vmatpush1.msra.mxu0 0.0
      %2209 = vmatprep.subr.mxu0 0.0
      %2210 = vmatpush1.msra.mxu0 0.0
      %2211 = vmatprep.subr.mxu0 0.0
      %2212 = vmatpush1.msra.mxu0 0.0
      %2213 = vmatprep.subr.mxu0 0.0
      %2214 = vmatpush1.msra.mxu0 0.0
      %2215 = vmatprep.subr.mxu0 0.0
      %2216 = vmatpush1.msra.mxu0 0.0
      %2217 = vmatprep.subr.mxu0 0.0
      %2218 = vmatpush1.msra.mxu0 0.0
      %2219 = vmatprep.subr.mxu0 0.0
      %2220 = vmatpush1.msra.mxu0 0.0
      %2221 = vmatprep.subr.mxu0 0.0
      %2222 = vmatpush1.msra.mxu0 0.0
      %2223 = vmatprep.subr.mxu0 0.0
      %2224 = vmatpush1.msra.mxu0 0.0
      %2225 = vmatprep.subr.mxu0 0.0
      %2226 = vmatpush1.msra.mxu0 0.0
      %2227 = vmatprep.subr.mxu0 0.0
      %2228 = vmatpush1.msra.mxu0 0.0
      %2229 = vmatprep.subr.mxu0 0.0
      %2230 = vmatpush1.msra.mxu0 0.0
      %2231 = vmatprep.subr.mxu0 0.0
      %2232 = vmatpush1.msra.mxu0 0.0
      %2233 = vmatprep.subr.mxu0 0.0
      %2234 = vmatpush1.msra.mxu0 0.0
      %2235 = vmatprep.subr.mxu0 0.0
      %2236 = vmatpush1.msra.mxu0 0.0
      %2237 = vmatprep.subr.mxu0 0.0
      %2238 = vmatpush1.msra.mxu0 0.0
      %2239 = vmatprep.subr.mxu0 0.0
      %2240 = vmatpush1.msra.mxu0 0.0
      %2241 = vmatprep.subr.mxu0 0.0
      %2242 = vmatpush1.msra.mxu0 0.0
      %2243 = vmatprep.subr.mxu0 0.0
      %2244 = vmatpush1.msra.mxu0 0.0
      %2245 = vmatprep.subr.mxu0 0.0
      %2246 = vmatpush1.msra.mxu0 0.0
      %2247 = vmatprep.subr.mxu0 0.0
      %2248 = vmatpush1.msra.mxu0 0.0
      %2249 = vmatprep.subr.mxu0 0.0
      %2250 = vmatpush1.msra.mxu0 0.0
      %2251 = vmatprep.subr.mxu0 0.0
      %2252 = vmatpush1.msra.mxu0 0.0
      %2253 = vmatprep.subr.mxu0 0.0
      %2254 = vmatpush1.msra.mxu0 0.0
      %2255 = vmatprep.subr.mxu0 0.0
      %2256 = vmatpush1.msra.mxu0 0.0
      %2257 = vmatprep.subr.mxu0 0.0
      %2258 = vmatpush1.msra.mxu0 0.0
      %2259 = vmatprep.subr.mxu0 0.0
      %2260 = vmatpush1.msra.mxu0 0.0
      %2261 = vmatprep.subr.mxu0 0.0
      %2262 = vmatpush1.msra.mxu0 0.0
      %2263 = vmatprep.mubr.f32.mxu0 0.0
      %2264 = vmatmul.mubr.f32.gmra.mrb[0].mxu0 %v2100
      %v2265 = vpop.f32.mrb[0].mxu0
      %v2266 = vadd.f32 0.0, %v2265
      %v2267 = vpop.f32.mrb[0].mxu0
      %v2268 = vadd.f32 0.0, %v2267
      %2269 = vmatprep.mubr.f32.mxu0 0.0
      %2270 = vmatmul.mubr.f32.gmra.mrb[0].mxu0 %v2103
      %v2271 = vpop.f32.mrb[0].mxu0
      %v2272 = vadd.f32 0.0, %v2271
      %v2273 = vpop.f32.mrb[0].mxu0
      %v2274 = vadd.f32 0.0, %v2273
      %2275 = vdwg.mxu0
      %2276 = vmatprep.subr.mxu0 %v2115
      %2277 = vmatpush1.msra.mxu0 %v2113
      %2278 = vmatprep.subr.mxu0 0.0
      %2279 = vmatpush1.msra.mxu0 0.0
      %2280 = vmatprep.subr.mxu0 0.0
      %2281 = vmatpush1.msra.mxu0 0.0
      %2282 = vmatprep.subr.mxu0 0.0
      %2283 = vmatpush1.msra.mxu0 0.0
      %2284 = vmatprep.subr.mxu0 0.0
      %2285 = vmatpush1.msra.mxu0 0.0
      %2286 = vmatprep.subr.mxu0 0.0
      %2287 = vmatpush1.msra.mxu0 0.0
      %2288 = vmatprep.subr.mxu0 0.0
      %2289 = vmatpush1.msra.mxu0 0.0
      %2290 = vmatprep.subr.mxu0 0.0
      %2291 = vmatpush1.msra.mxu0 0.0
      %2292 = vmatprep.subr.mxu0 0.0
      %2293 = vmatpush1.msra.mxu0 0.0
      %2294 = vmatprep.subr.mxu0 0.0
      %2295 = vmatpush1.msra.mxu0 0.0
      %2296 = vmatprep.subr.mxu0 0.0
      %2297 = vmatpush1.msra.mxu0 0.0
      %2298 = vmatprep.subr.mxu0 0.0
      %2299 = vmatpush1.msra.mxu0 0.0
      %2300 = vmatprep.subr.mxu0 0.0
      %2301 = vmatpush1.msra.mxu0 0.0
      %2302 = vmatprep.subr.mxu0 0.0
      %2303 = vmatpush1.msra.mxu0 0.0
      %2304 = vmatprep.subr.mxu0 0.0
      %2305 = vmatpush1.msra.mxu0 0.0
      %2306 = vmatprep.subr.mxu0 0.0
      %2307 = vmatpush1.msra.mxu0 0.0
      %2308 = vmatprep.subr.mxu0 0.0
      %2309 = vmatpush1.msra.mxu0 0.0
      %2310 = vmatprep.subr.mxu0 0.0
      %2311 = vmatpush1.msra.mxu0 0.0
      %2312 = vmatprep.subr.mxu0 0.0
      %2313 = vmatpush1.msra.mxu0 0.0
      %2314 = vmatprep.subr.mxu0 0.0
      %2315 = vmatpush1.msra.mxu0 0.0
      %2316 = vmatprep.subr.mxu0 0.0
      %2317 = vmatpush1.msra.mxu0 0.0
      %2318 = vmatprep.subr.mxu0 0.0
      %2319 = vmatpush1.msra.mxu0 0.0
      %2320 = vmatprep.subr.mxu0 0.0
      %2321 = vmatpush1.msra.mxu0 0.0
      %2322 = vmatprep.subr.mxu0 0.0
      %2323 = vmatpush1.msra.mxu0 0.0
      %2324 = vmatprep.subr.mxu0 0.0
      %2325 = vmatpush1.msra.mxu0 0.0
      %2326 = vmatprep.subr.mxu0 0.0
      %2327 = vmatpush1.msra.mxu0 0.0
      %2328 = vmatprep.subr.mxu0 0.0
      %2329 = vmatpush1.msra.mxu0 0.0
      %2330 = vmatprep.subr.mxu0 0.0
      %2331 = vmatpush1.msra.mxu0 0.0
      %2332 = vmatprep.subr.mxu0 0.0
      %2333 = vmatpush1.msra.mxu0 0.0
      %2334 = vmatprep.subr.mxu0 0.0
      %2335 = vmatpush1.msra.mxu0 0.0
      %2336 = vmatprep.subr.mxu0 0.0
      %2337 = vmatpush1.msra.mxu0 0.0
      %2338 = vmatprep.subr.mxu0 0.0
      %2339 = vmatpush1.msra.mxu0 0.0
      %2340 = vmatprep.mubr.f32.mxu0 0.0
      %2341 = vmatmul.mubr.f32.gmra.mrb[0].mxu0 %v2100
      %v2342 = vpop.f32.mrb[0].mxu0
      %v2343 = vadd.f32 0.0, %v2342
      %v2344 = vpop.f32.mrb[0].mxu0
      %v2345 = vadd.f32 0.0, %v2344
      %2346 = vmatprep.mubr.f32.mxu0 0.0
      %2347 = vmatmul.mubr.f32.gmra.mrb[0].mxu0 %v2103
      %v2348 = vpop.f32.mrb[0].mxu0
      %v2349 = vadd.f32 0.0, %v2348
      %v2350 = vpop.f32.mrb[0].mxu0
      %v2351 = vadd.f32 0.0, %v2350
      %2352 = vdwg.mxu0
      %2353 = vmatprep.subr.mxu0 %v2120
      %2354 = vmatpush1.msra.mxu0 %v2117
      %2355 = vmatprep.subr.mxu0 0.0
      %2356 = vmatpush1.msra.mxu0 0.0
      %2357 = vmatprep.subr.mxu0 0.0
      %2358 = vmatpush1.msra.mxu0 0.0
      %2359 = vmatprep.subr.mxu0 0.0
      %2360 = vmatpush1.msra.mxu0 0.0
      %2361 = vmatprep.subr.mxu0 0.0
      %2362 = vmatpush1.msra.mxu0 0.0
      %2363 = vmatprep.subr.mxu0 0.0
      %2364 = vmatpush1.msra.mxu0 0.0
      %2365 = vmatprep.subr.mxu0 0.0
      %2366 = vmatpush1.msra.mxu0 0.0
      %2367 = vmatprep.subr.mxu0 0.0
      %2368 = vmatpush1.msra.mxu0 0.0
      %2369 = vmatprep.subr.mxu0 0.0
      %2370 = vmatpush1.msra.mxu0 0.0
      %2371 = vmatprep.subr.mxu0 0.0
      %2372 = vmatpush1.msra.mxu0 0.0
      %2373 = vmatprep.subr.mxu0 0.0
      %2374 = vmatpush1.msra.mxu0 0.0
      %2375 = vmatprep.subr.mxu0 0.0
      %2376 = vmatpush1.msra.mxu0 0.0
      %2377 = vmatprep.subr.mxu0 0.0
      %2378 = vmatpush1.msra.mxu0 0.0
      %2379 = vmatprep.subr.mxu0 0.0
      %2380 = vmatpush1.msra.mxu0 0.0
      %2381 = vmatprep.subr.mxu0 0.0
      %2382 = vmatpush1.msra.mxu0 0.0
      %2383 = vmatprep.subr.mxu0 0.0
      %2384 = vmatpush1.msra.mxu0 0.0
      %2385 = vmatprep.subr.mxu0 0.0
      %2386 = vmatpush1.msra.mxu0 0.0
      %2387 = vmatprep.subr.mxu0 0.0
      %2388 = vmatpush1.msra.mxu0 0.0
      %2389 = vmatprep.subr.mxu0 0.0
      %2390 = vmatpush1.msra.mxu0 0.0
      %2391 = vmatprep.subr.mxu0 0.0
      %2392 = vmatpush1.msra.mxu0 0.0
      %2393 = vmatprep.subr.mxu0 0.0
      %2394 = vmatpush1.msra.mxu0 0.0
      %2395 = vmatprep.subr.mxu0 0.0
      %2396 = vmatpush1.msra.mxu0 0.0
      %2397 = vmatprep.subr.mxu0 0.0
      %2398 = vmatpush1.msra.mxu0 0.0
      %2399 = vmatprep.subr.mxu0 0.0
      %2400 = vmatpush1.msra.mxu0 0.0
      %2401 = vmatprep.subr.mxu0 0.0
      %2402 = vmatpush1.msra.mxu0 0.0
      %2403 = vmatprep.subr.mxu0 0.0
      %2404 = vmatpush1.msra.mxu0 0.0
      %2405 = vmatprep.subr.mxu0 0.0
      %2406 = vmatpush1.msra.mxu0 0.0
      %2407 = vmatprep.subr.mxu0 0.0
      %2408 = vmatpush1.msra.mxu0 0.0
      %2409 = vmatprep.subr.mxu0 0.0
      %2410 = vmatpush1.msra.mxu0 0.0
      %2411 = vmatprep.subr.mxu0 0.0
      %2412 = vmatpush1.msra.mxu0 0.0
      %2413 = vmatprep.subr.mxu0 0.0
      %2414 = vmatpush1.msra.mxu0 0.0
      %2415 = vmatprep.subr.mxu0 0.0
      %2416 = vmatpush1.msra.mxu0 0.0
      %2417 = vmatprep.mubr.f32.mxu0 0.0
      %2418 = vmatmul.mubr.f32.gmra.mrb[0].mxu0 %v2100
      %v2419 = vpop.f32.mrb[0].mxu0
      %v2420 = vadd.f32 0.0, %v2419
      %v2421 = vpop.f32.mrb[0].mxu0
      %v2422 = vadd.f32 0.0, %v2421
      %2423 = vmatprep.mubr.f32.mxu0 0.0
      %2424 = vmatmul.mubr.f32.gmra.mrb[0].mxu0 %v2103
      %v2425 = vpop.f32.mrb[0].mxu0
      %v2426 = vadd.f32 0.0, %v2425
      %v2427 = vpop.f32.mrb[0].mxu0
      %v2428 = vadd.f32 0.0, %v2427
      %2429 = vdwg.mxu0
      %v2430 = vadd.f32 %v2054, %v2189
      %v2431 = vadd.f32 %v2055, %v2191
      %v2432 = vadd.f32 %v2056, %v2266
      %v2433 = vadd.f32 %v2057, %v2268
      %v2434 = vadd.f32 %v2058, %v2343
      %v2435 = vadd.f32 %v2059, %v2345
      %v2436 = vadd.f32 %v2060, %v2420
      %v2437 = vadd.f32 %v2061, %v2422
      %v2438 = vadd.f32 %v2062, %v2195
      %v2439 = vadd.f32 %v2063, %v2197
      %v2440 = vadd.f32 %v2064, %v2272
      %v2441 = vadd.f32 %v2065, %v2274
      %v2442 = vadd.f32 %v2066, %v2349
      %v2443 = vadd.f32 %v2067, %v2351
      %v2444 = vadd.f32 %v2068, %v2426
      %v2445 = vadd.f32 %v2069, %v2428
      %2446 = vrot.lane.b32.xlu0 %v277, 96
      %v2447 = vpop.permute.xlu0 %2446
      %2448 = vrot.lane.b32.xlu0 %v645, 96
      %v2449 = vpop.permute.xlu0 %2448
      %2450 = vrot.lane.b32.xlu0 %v278, 96
      %v2451 = vpop.permute.xlu0 %2450
      %2452 = vrot.lane.b32.xlu0 %v646, 96
      %v2453 = vpop.permute.xlu0 %2452
      %2454 = vrot.lane.b32.xlu0 %v279, 96
      %v2455 = vpop.permute.xlu0 %2454
      %2456 = vrot.lane.b32.xlu0 %v647, 96
      %v2457 = vpop.permute.xlu0 %2456
      %2458 = vrot.lane.b32.xlu0 %v280, 96
      %v2459 = vpop.permute.xlu0 %2458
      %2460 = vrot.lane.b32.xlu0 %v648, 96
      %v2461 = vpop.permute.xlu0 %2460
      %vm2462 = vcmask 785408
      %v2463 = vsel %vm2462, %v2447, %v2449
      %v2464 = vsel %vm2462, %v2449, %v2451
      %v2465 = vsel %vm2462, %v2451, %v2453
      %v2466 = vsel %vm2462, %v2453, %v2455
      %v2467 = vsel %vm2462, %v2455, %v2457
      %v2468 = vsel %vm2462, %v2457, %v2459
      %v2469 = vsel %vm2462, %v2459, %v2461
      %v2472 = vsel %vm2462, %v2461, %v2447
      %s2473 = scalar_lea.vmem %s1, 96
      %v2474 = vld [vmem:[%s2473] sm:$0xff]
      %v2475 = vld [vmem:[%s2473 + $0x8] sm:$0x3]
      %v2477 = vsel %vm309, %v2474, 0
      %v2480 = vsel %vm309, %v2475, 0
      %v2482 = vsel %vm316, %v2463, 0
      %v2484 = vsel %vm316, %v2464, 0
      %v2486 = vsel %vm316, %v2465, 0
      %v2488 = vsel %vm316, %v2466, 0
      %v2490 = vsel %vm316, %v2467, 0
      %v2492 = vsel %vm316, %v2468, 0
      %v2494 = vsel %vm316, %v2469, 0
      %v2497 = vsel %vm316, %v2472, 0
      %2499 = vmatprep.subr.mxu0 %v2484
      %2500 = vmatpush1.msra.mxu0 %v2482
      %2501 = vmatprep.subr.mxu0 0.0
      %2502 = vmatpush1.msra.mxu0 0.0
      %2503 = vmatprep.subr.mxu0 0.0
      %2504 = vmatpush1.msra.mxu0 0.0
      %2505 = vmatprep.subr.mxu0 0.0
      %2506 = vmatpush1.msra.mxu0 0.0
      %2507 = vmatprep.subr.mxu0 0.0
      %2508 = vmatpush1.msra.mxu0 0.0
      %2509 = vmatprep.subr.mxu0 0.0
      %2510 = vmatpush1.msra.mxu0 0.0
      %2511 = vmatprep.subr.mxu0 0.0
      %2512 = vmatpush1.msra.mxu0 0.0
      %2513 = vmatprep.subr.mxu0 0.0
      %2514 = vmatpush1.msra.mxu0 0.0
      %2515 = vmatprep.subr.mxu0 0.0
      %2516 = vmatpush1.msra.mxu0 0.0
      %2517 = vmatprep.subr.mxu0 0.0
      %2518 = vmatpush1.msra.mxu0 0.0
      %2519 = vmatprep.subr.mxu0 0.0
      %2520 = vmatpush1.msra.mxu0 0.0
      %2521 = vmatprep.subr.mxu0 0.0
      %2522 = vmatpush1.msra.mxu0 0.0
      %2523 = vmatprep.subr.mxu0 0.0
      %2524 = vmatpush1.msra.mxu0 0.0
      %2525 = vmatprep.subr.mxu0 0.0
      %2526 = vmatpush1.msra.mxu0 0.0
      %2527 = vmatprep.subr.mxu0 0.0
      %2528 = vmatpush1.msra.mxu0 0.0
      %2529 = vmatprep.subr.mxu0 0.0
      %2530 = vmatpush1.msra.mxu0 0.0
      %2531 = vmatprep.subr.mxu0 0.0
      %2532 = vmatpush1.msra.mxu0 0.0
      %2533 = vmatprep.subr.mxu0 0.0
      %2534 = vmatpush1.msra.mxu0 0.0
      %2535 = vmatprep.subr.mxu0 0.0
      %2536 = vmatpush1.msra.mxu0 0.0
      %2537 = vmatprep.subr.mxu0 0.0
      %2538 = vmatpush1.msra.mxu0 0.0
      %2539 = vmatprep.subr.mxu0 0.0
      %2540 = vmatpush1.msra.mxu0 0.0
      %2541 = vmatprep.subr.mxu0 0.0
      %2542 = vmatpush1.msra.mxu0 0.0
      %2543 = vmatprep.subr.mxu0 0.0
      %2544 = vmatpush1.msra.mxu0 0.0
      %2545 = vmatprep.subr.mxu0 0.0
      %2546 = vmatpush1.msra.mxu0 0.0
      %2547 = vmatprep.subr.mxu0 0.0
      %2548 = vmatpush1.msra.mxu0 0.0
      %2549 = vmatprep.subr.mxu0 0.0
      %2550 = vmatpush1.msra.mxu0 0.0
      %2551 = vmatprep.subr.mxu0 0.0
      %2552 = vmatpush1.msra.mxu0 0.0
      %2553 = vmatprep.subr.mxu0 0.0
      %2554 = vmatpush1.msra.mxu0 0.0
      %2555 = vmatprep.subr.mxu0 0.0
      %2556 = vmatpush1.msra.mxu0 0.0
      %2557 = vmatprep.subr.mxu0 0.0
      %2558 = vmatpush1.msra.mxu0 0.0
      %2559 = vmatprep.subr.mxu0 0.0
      %2560 = vmatpush1.msra.mxu0 0.0
      %2561 = vmatprep.subr.mxu0 0.0
      %2562 = vmatpush1.msra.mxu0 0.0
      %2563 = vmatprep.mubr.f32.mxu0 0.0
      %2564 = vmatmul.mubr.f32.gmra.mrb[0].mxu0 %v2477
      %v2565 = vpop.f32.mrb[0].mxu0
      %v2566 = vadd.f32 0.0, %v2565
      %v2567 = vpop.f32.mrb[0].mxu0
      %v2568 = vadd.f32 0.0, %v2567
      %2569 = vmatprep.mubr.f32.mxu0 0.0
      %2570 = vmatmul.mubr.f32.gmra.mrb[0].mxu0 %v2480
      %v2571 = vpop.f32.mrb[0].mxu0
      %v2572 = vadd.f32 0.0, %v2571
      %v2573 = vpop.f32.mrb[0].mxu0
      %v2574 = vadd.f32 0.0, %v2573
      %2575 = vdwg.mxu0
      %2576 = vmatprep.subr.mxu0 %v2488
      %2577 = vmatpush1.msra.mxu0 %v2486
      %2578 = vmatprep.subr.mxu0 0.0
      %2579 = vmatpush1.msra.mxu0 0.0
      %2580 = vmatprep.subr.mxu0 0.0
      %2581 = vmatpush1.msra.mxu0 0.0
      %2582 = vmatprep.subr.mxu0 0.0
      %2583 = vmatpush1.msra.mxu0 0.0
      %2584 = vmatprep.subr.mxu0 0.0
      %2585 = vmatpush1.msra.mxu0 0.0
      %2586 = vmatprep.subr.mxu0 0.0
      %2587 = vmatpush1.msra.mxu0 0.0
      %2588 = vmatprep.subr.mxu0 0.0
      %2589 = vmatpush1.msra.mxu0 0.0
      %2590 = vmatprep.subr.mxu0 0.0
      %2591 = vmatpush1.msra.mxu0 0.0
      %2592 = vmatprep.subr.mxu0 0.0
      %2593 = vmatpush1.msra.mxu0 0.0
      %2594 = vmatprep.subr.mxu0 0.0
      %2595 = vmatpush1.msra.mxu0 0.0
      %2596 = vmatprep.subr.mxu0 0.0
      %2597 = vmatpush1.msra.mxu0 0.0
      %2598 = vmatprep.subr.mxu0 0.0
      %2599 = vmatpush1.msra.mxu0 0.0
      %2600 = vmatprep.subr.mxu0 0.0
      %2601 = vmatpush1.msra.mxu0 0.0
      %2602 = vmatprep.subr.mxu0 0.0
      %2603 = vmatpush1.msra.mxu0 0.0
      %2604 = vmatprep.subr.mxu0 0.0
      %2605 = vmatpush1.msra.mxu0 0.0
      %2606 = vmatprep.subr.mxu0 0.0
      %2607 = vmatpush1.msra.mxu0 0.0
      %2608 = vmatprep.subr.mxu0 0.0
      %2609 = vmatpush1.msra.mxu0 0.0
      %2610 = vmatprep.subr.mxu0 0.0
      %2611 = vmatpush1.msra.mxu0 0.0
      %2612 = vmatprep.subr.mxu0 0.0
      %2613 = vmatpush1.msra.mxu0 0.0
      %2614 = vmatprep.subr.mxu0 0.0
      %2615 = vmatpush1.msra.mxu0 0.0
      %2616 = vmatprep.subr.mxu0 0.0
      %2617 = vmatpush1.msra.mxu0 0.0
      %2618 = vmatprep.subr.mxu0 0.0
      %2619 = vmatpush1.msra.mxu0 0.0
      %2620 = vmatprep.subr.mxu0 0.0
      %2621 = vmatpush1.msra.mxu0 0.0
      %2622 = vmatprep.subr.mxu0 0.0
      %2623 = vmatpush1.msra.mxu0 0.0
      %2624 = vmatprep.subr.mxu0 0.0
      %2625 = vmatpush1.msra.mxu0 0.0
      %2626 = vmatprep.subr.mxu0 0.0
      %2627 = vmatpush1.msra.mxu0 0.0
      %2628 = vmatprep.subr.mxu0 0.0
      %2629 = vmatpush1.msra.mxu0 0.0
      %2630 = vmatprep.subr.mxu0 0.0
      %2631 = vmatpush1.msra.mxu0 0.0
      %2632 = vmatprep.subr.mxu0 0.0
      %2633 = vmatpush1.msra.mxu0 0.0
      %2634 = vmatprep.subr.mxu0 0.0
      %2635 = vmatpush1.msra.mxu0 0.0
      %2636 = vmatprep.subr.mxu0 0.0
      %2637 = vmatpush1.msra.mxu0 0.0
      %2638 = vmatprep.subr.mxu0 0.0
      %2639 = vmatpush1.msra.mxu0 0.0
      %2640 = vmatprep.mubr.f32.mxu0 0.0
      %2641 = vmatmul.mubr.f32.gmra.mrb[0].mxu0 %v2477
      %v2642 = vpop.f32.mrb[0].mxu0
      %v2643 = vadd.f32 0.0, %v2642
      %v2644 = vpop.f32.mrb[0].mxu0
      %v2645 = vadd.f32 0.0, %v2644
      %2646 = vmatprep.mubr.f32.mxu0 0.0
      %2647 = vmatmul.mubr.f32.gmra.mrb[0].mxu0 %v2480
      %v2648 = vpop.f32.mrb[0].mxu0
      %v2649 = vadd.f32 0.0, %v2648
      %v2650 = vpop.f32.mrb[0].mxu0
      %v2651 = vadd.f32 0.0, %v2650
      %2652 = vdwg.mxu0
      %2653 = vmatprep.subr.mxu0 %v2492
      %2654 = vmatpush1.msra.mxu0 %v2490
      %2655 = vmatprep.subr.mxu0 0.0
      %2656 = vmatpush1.msra.mxu0 0.0
      %2657 = vmatprep.subr.mxu0 0.0
      %2658 = vmatpush1.msra.mxu0 0.0
      %2659 = vmatprep.subr.mxu0 0.0
      %2660 = vmatpush1.msra.mxu0 0.0
      %2661 = vmatprep.subr.mxu0 0.0
      %2662 = vmatpush1.msra.mxu0 0.0
      %2663 = vmatprep.subr.mxu0 0.0
      %2664 = vmatpush1.msra.mxu0 0.0
      %2665 = vmatprep.subr.mxu0 0.0
      %2666 = vmatpush1.msra.mxu0 0.0
      %2667 = vmatprep.subr.mxu0 0.0
      %2668 = vmatpush1.msra.mxu0 0.0
      %2669 = vmatprep.subr.mxu0 0.0
      %2670 = vmatpush1.msra.mxu0 0.0
      %2671 = vmatprep.subr.mxu0 0.0
      %2672 = vmatpush1.msra.mxu0 0.0
      %2673 = vmatprep.subr.mxu0 0.0
      %2674 = vmatpush1.msra.mxu0 0.0
      %2675 = vmatprep.subr.mxu0 0.0
      %2676 = vmatpush1.msra.mxu0 0.0
      %2677 = vmatprep.subr.mxu0 0.0
      %2678 = vmatpush1.msra.mxu0 0.0
      %2679 = vmatprep.subr.mxu0 0.0
      %2680 = vmatpush1.msra.mxu0 0.0
      %2681 = vmatprep.subr.mxu0 0.0
      %2682 = vmatpush1.msra.mxu0 0.0
      %2683 = vmatprep.subr.mxu0 0.0
      %2684 = vmatpush1.msra.mxu0 0.0
      %2685 = vmatprep.subr.mxu0 0.0
      %2686 = vmatpush1.msra.mxu0 0.0
      %2687 = vmatprep.subr.mxu0 0.0
      %2688 = vmatpush1.msra.mxu0 0.0
      %2689 = vmatprep.subr.mxu0 0.0
      %2690 = vmatpush1.msra.mxu0 0.0
      %2691 = vmatprep.subr.mxu0 0.0
      %2692 = vmatpush1.msra.mxu0 0.0
      %2693 = vmatprep.subr.mxu0 0.0
      %2694 = vmatpush1.msra.mxu0 0.0
      %2695 = vmatprep.subr.mxu0 0.0
      %2696 = vmatpush1.msra.mxu0 0.0
      %2697 = vmatprep.subr.mxu0 0.0
      %2698 = vmatpush1.msra.mxu0 0.0
      %2699 = vmatprep.subr.mxu0 0.0
      %2700 = vmatpush1.msra.mxu0 0.0
      %2701 = vmatprep.subr.mxu0 0.0
      %2702 = vmatpush1.msra.mxu0 0.0
      %2703 = vmatprep.subr.mxu0 0.0
      %2704 = vmatpush1.msra.mxu0 0.0
      %2705 = vmatprep.subr.mxu0 0.0
      %2706 = vmatpush1.msra.mxu0 0.0
      %2707 = vmatprep.subr.mxu0 0.0
      %2708 = vmatpush1.msra.mxu0 0.0
      %2709 = vmatprep.subr.mxu0 0.0
      %2710 = vmatpush1.msra.mxu0 0.0
      %2711 = vmatprep.subr.mxu0 0.0
      %2712 = vmatpush1.msra.mxu0 0.0
      %2713 = vmatprep.subr.mxu0 0.0
      %2714 = vmatpush1.msra.mxu0 0.0
      %2715 = vmatprep.subr.mxu0 0.0
      %2716 = vmatpush1.msra.mxu0 0.0
      %2717 = vmatprep.mubr.f32.mxu0 0.0
      %2718 = vmatmul.mubr.f32.gmra.mrb[0].mxu0 %v2477
      %v2719 = vpop.f32.mrb[0].mxu0
      %v2720 = vadd.f32 0.0, %v2719
      %v2721 = vpop.f32.mrb[0].mxu0
      %v2722 = vadd.f32 0.0, %v2721
      %2723 = vmatprep.mubr.f32.mxu0 0.0
      %2724 = vmatmul.mubr.f32.gmra.mrb[0].mxu0 %v2480
      %v2725 = vpop.f32.mrb[0].mxu0
      %v2726 = vadd.f32 0.0, %v2725
      %v2727 = vpop.f32.mrb[0].mxu0
      %v2728 = vadd.f32 0.0, %v2727
      %2729 = vdwg.mxu0
      %2730 = vmatprep.subr.mxu0 %v2497
      %2731 = vmatpush1.msra.mxu0 %v2494
      %2732 = vmatprep.subr.mxu0 0.0
      %2733 = vmatpush1.msra.mxu0 0.0
      %2734 = vmatprep.subr.mxu0 0.0
      %2735 = vmatpush1.msra.mxu0 0.0
      %2736 = vmatprep.subr.mxu0 0.0
      %2737 = vmatpush1.msra.mxu0 0.0
      %2738 = vmatprep.subr.mxu0 0.0
      %2739 = vmatpush1.msra.mxu0 0.0
      %2740 = vmatprep.subr.mxu0 0.0
      %2741 = vmatpush1.msra.mxu0 0.0
      %2742 = vmatprep.subr.mxu0 0.0
      %2743 = vmatpush1.msra.mxu0 0.0
      %2744 = vmatprep.subr.mxu0 0.0
      %2745 = vmatpush1.msra.mxu0 0.0
      %2746 = vmatprep.subr.mxu0 0.0
      %2747 = vmatpush1.msra.mxu0 0.0
      %2748 = vmatprep.subr.mxu0 0.0
      %2749 = vmatpush1.msra.mxu0 0.0
      %2750 = vmatprep.subr.mxu0 0.0
      %2751 = vmatpush1.msra.mxu0 0.0
      %2752 = vmatprep.subr.mxu0 0.0
      %2753 = vmatpush1.msra.mxu0 0.0
      %2754 = vmatprep.subr.mxu0 0.0
      %2755 = vmatpush1.msra.mxu0 0.0
      %2756 = vmatprep.subr.mxu0 0.0
      %2757 = vmatpush1.msra.mxu0 0.0
      %2758 = vmatprep.subr.mxu0 0.0
      %2759 = vmatpush1.msra.mxu0 0.0
      %2760 = vmatprep.subr.mxu0 0.0
      %2761 = vmatpush1.msra.mxu0 0.0
      %2762 = vmatprep.subr.mxu0 0.0
      %2763 = vmatpush1.msra.mxu0 0.0
      %2764 = vmatprep.subr.mxu0 0.0
      %2765 = vmatpush1.msra.mxu0 0.0
      %2766 = vmatprep.subr.mxu0 0.0
      %2767 = vmatpush1.msra.mxu0 0.0
      %2768 = vmatprep.subr.mxu0 0.0
      %2769 = vmatpush1.msra.mxu0 0.0
      %2770 = vmatprep.subr.mxu0 0.0
      %2771 = vmatpush1.msra.mxu0 0.0
      %2772 = vmatprep.subr.mxu0 0.0
      %2773 = vmatpush1.msra.mxu0 0.0
      %2774 = vmatprep.subr.mxu0 0.0
      %2775 = vmatpush1.msra.mxu0 0.0
      %2776 = vmatprep.subr.mxu0 0.0
      %2777 = vmatpush1.msra.mxu0 0.0
      %2778 = vmatprep.subr.mxu0 0.0
      %2779 = vmatpush1.msra.mxu0 0.0
      %2780 = vmatprep.subr.mxu0 0.0
      %2781 = vmatpush1.msra.mxu0 0.0
      %2782 = vmatprep.subr.mxu0 0.0
      %2783 = vmatpush1.msra.mxu0 0.0
      %2784 = vmatprep.subr.mxu0 0.0
      %2785 = vmatpush1.msra.mxu0 0.0
      %2786 = vmatprep.subr.mxu0 0.0
      %2787 = vmatpush1.msra.mxu0 0.0
      %2788 = vmatprep.subr.mxu0 0.0
      %2789 = vmatpush1.msra.mxu0 0.0
      %2790 = vmatprep.subr.mxu0 0.0
      %2791 = vmatpush1.msra.mxu0 0.0
      %2792 = vmatprep.subr.mxu0 0.0
      %2793 = vmatpush1.msra.mxu0 0.0
      %2794 = vmatprep.mubr.f32.mxu0 0.0
      %2795 = vmatmul.mubr.f32.gmra.mrb[0].mxu0 %v2477
      %v2796 = vpop.f32.mrb[0].mxu0
      %v2797 = vadd.f32 0.0, %v2796
      %v2798 = vpop.f32.mrb[0].mxu0
      %v2799 = vadd.f32 0.0, %v2798
      %2800 = vmatprep.mubr.f32.mxu0 0.0
      %2801 = vmatmul.mubr.f32.gmra.mrb[0].mxu0 %v2480
      %v2802 = vpop.f32.mrb[0].mxu0
      %v2803 = vadd.f32 0.0, %v2802
      %v2804 = vpop.f32.mrb[0].mxu0
      %v2805 = vadd.f32 0.0, %v2804
      %2806 = vdwg.mxu0
      %v2807 = vadd.f32 %v2430, %v2566
      %v2808 = vadd.f32 %v2431, %v2568
      %v2809 = vadd.f32 %v2432, %v2643
      %v2810 = vadd.f32 %v2433, %v2645
      %v2811 = vadd.f32 %v2434, %v2720
      %v2812 = vadd.f32 %v2435, %v2722
      %v2813 = vadd.f32 %v2436, %v2797
      %v2814 = vadd.f32 %v2437, %v2799
      %v2815 = vadd.f32 %v2438, %v2572
      %v2816 = vadd.f32 %v2439, %v2574
      %v2817 = vadd.f32 %v2440, %v2649
      %v2818 = vadd.f32 %v2441, %v2651
      %v2819 = vadd.f32 %v2442, %v2726
      %v2820 = vadd.f32 %v2443, %v2728
      %v2821 = vadd.f32 %v2444, %v2803
      %v2822 = vadd.f32 %v2445, %v2805
      %2823 = vrot.lane.b32.xlu0 %v282, 96
      %v2824 = vpop.permute.xlu0 %2823
      %2825 = vrot.lane.b32.xlu0 %v305, 96
      %v2826 = vpop.permute.xlu0 %2825
      %2827 = vrot.lane.b32.xlu0 %v283, 96
      %v2828 = vpop.permute.xlu0 %2827
      %2829 = vrot.lane.b32.xlu0 %v306, 96
      %v2830 = vpop.permute.xlu0 %2829
      %2831 = vrot.lane.b32.xlu0 %v284, 96
      %v2832 = vpop.permute.xlu0 %2831
      %2833 = vrot.lane.b32.xlu0 %v307, 96
      %v2834 = vpop.permute.xlu0 %2833
      %2835 = vrot.lane.b32.xlu0 %v285, 96
      %v2836 = vpop.permute.xlu0 %2835
      %2837 = vrot.lane.b32.xlu0 %v308, 96
      %v2838 = vpop.permute.xlu0 %2837
      %v2839 = vsel %vm2462, %v2824, %v2826
      %v2840 = vsel %vm2462, %v2826, %v2828
      %v2841 = vsel %vm2462, %v2828, %v2830
      %v2842 = vsel %vm2462, %v2830, %v2832
      %v2843 = vsel %vm2462, %v2832, %v2834
      %v2844 = vsel %vm2462, %v2834, %v2836
      %v2845 = vsel %vm2462, %v2836, %v2838
      %v2848 = vsel %vm2462, %v2838, %v2824
      %s2849 = scalar_lea.vmem %s1, 112
      %v2850 = vld [vmem:[%s2849] sm:$0xff]
      %v2851 = vld [vmem:[%s2849 + $0x8] sm:$0x3]
      %v2853 = vsel %vm309, %v2850, 0
      %v2856 = vsel %vm309, %v2851, 0
      %v2858 = vsel %vm316, %v2839, 0
      %v2860 = vsel %vm316, %v2840, 0
      %v2862 = vsel %vm316, %v2841, 0
      %v2864 = vsel %vm316, %v2842, 0
      %v2866 = vsel %vm316, %v2843, 0
      %v2868 = vsel %vm316, %v2844, 0
      %v2870 = vsel %vm316, %v2845, 0
      %v2873 = vsel %vm316, %v2848, 0
      %2875 = vmatprep.subr.mxu0 %v2860
      %2876 = vmatpush1.msra.mxu0 %v2858
      %2877 = vmatprep.subr.mxu0 0.0
      %2878 = vmatpush1.msra.mxu0 0.0
      %2879 = vmatprep.subr.mxu0 0.0
      %2880 = vmatpush1.msra.mxu0 0.0
      %2881 = vmatprep.subr.mxu0 0.0
      %2882 = vmatpush1.msra.mxu0 0.0
      %2883 = vmatprep.subr.mxu0 0.0
      %2884 = vmatpush1.msra.mxu0 0.0
      %2885 = vmatprep.subr.mxu0 0.0
      %2886 = vmatpush1.msra.mxu0 0.0
      %2887 = vmatprep.subr.mxu0 0.0
      %2888 = vmatpush1.msra.mxu0 0.0
      %2889 = vmatprep.subr.mxu0 0.0
      %2890 = vmatpush1.msra.mxu0 0.0
      %2891 = vmatprep.subr.mxu0 0.0
      %2892 = vmatpush1.msra.mxu0 0.0
      %2893 = vmatprep.subr.mxu0 0.0
      %2894 = vmatpush1.msra.mxu0 0.0
      %2895 = vmatprep.subr.mxu0 0.0
      %2896 = vmatpush1.msra.mxu0 0.0
      %2897 = vmatprep.subr.mxu0 0.0
      %2898 = vmatpush1.msra.mxu0 0.0
      %2899 = vmatprep.subr.mxu0 0.0
      %2900 = vmatpush1.msra.mxu0 0.0
      %2901 = vmatprep.subr.mxu0 0.0
      %2902 = vmatpush1.msra.mxu0 0.0
      %2903 = vmatprep.subr.mxu0 0.0
      %2904 = vmatpush1.msra.mxu0 0.0
      %2905 = vmatprep.subr.mxu0 0.0
      %2906 = vmatpush1.msra.mxu0 0.0
      %2907 = vmatprep.subr.mxu0 0.0
      %2908 = vmatpush1.msra.mxu0 0.0
      %2909 = vmatprep.subr.mxu0 0.0
      %2910 = vmatpush1.msra.mxu0 0.0
      %2911 = vmatprep.subr.mxu0 0.0
      %2912 = vmatpush1.msra.mxu0 0.0
      %2913 = vmatprep.subr.mxu0 0.0
      %2914 = vmatpush1.msra.mxu0 0.0
      %2915 = vmatprep.subr.mxu0 0.0
      %2916 = vmatpush1.msra.mxu0 0.0
      %2917 = vmatprep.subr.mxu0 0.0
      %2918 = vmatpush1.msra.mxu0 0.0
      %2919 = vmatprep.subr.mxu0 0.0
      %2920 = vmatpush1.msra.mxu0 0.0
      %2921 = vmatprep.subr.mxu0 0.0
      %2922 = vmatpush1.msra.mxu0 0.0
      %2923 = vmatprep.subr.mxu0 0.0
      %2924 = vmatpush1.msra.mxu0 0.0
      %2925 = vmatprep.subr.mxu0 0.0
      %2926 = vmatpush1.msra.mxu0 0.0
      %2927 = vmatprep.subr.mxu0 0.0
      %2928 = vmatpush1.msra.mxu0 0.0
      %2929 = vmatprep.subr.mxu0 0.0
      %2930 = vmatpush1.msra.mxu0 0.0
      %2931 = vmatprep.subr.mxu0 0.0
      %2932 = vmatpush1.msra.mxu0 0.0
      %2933 = vmatprep.subr.mxu0 0.0
      %2934 = vmatpush1.msra.mxu0 0.0
      %2935 = vmatprep.subr.mxu0 0.0
      %2936 = vmatpush1.msra.mxu0 0.0
      %2937 = vmatprep.subr.mxu0 0.0
      %2938 = vmatpush1.msra.mxu0 0.0
      %2939 = vmatprep.mubr.f32.mxu0 0.0
      %2940 = vmatmul.mubr.f32.gmra.mrb[0].mxu0 %v2853
      %v2941 = vpop.f32.mrb[0].mxu0
      %v2942 = vadd.f32 0.0, %v2941
      %v2943 = vpop.f32.mrb[0].mxu0
      %v2944 = vadd.f32 0.0, %v2943
      %2945 = vmatprep.mubr.f32.mxu0 0.0
      %2946 = vmatmul.mubr.f32.gmra.mrb[0].mxu0 %v2856
      %v2947 = vpop.f32.mrb[0].mxu0
      %v2948 = vadd.f32 0.0, %v2947
      %v2949 = vpop.f32.mrb[0].mxu0
      %v2950 = vadd.f32 0.0, %v2949
      %2951 = vdwg.mxu0
      %2952 = vmatprep.subr.mxu0 %v2864
      %2953 = vmatpush1.msra.mxu0 %v2862
      %2954 = vmatprep.subr.mxu0 0.0
      %2955 = vmatpush1.msra.mxu0 0.0
      %2956 = vmatprep.subr.mxu0 0.0
      %2957 = vmatpush1.msra.mxu0 0.0
      %2958 = vmatprep.subr.mxu0 0.0
      %2959 = vmatpush1.msra.mxu0 0.0
      %2960 = vmatprep.subr.mxu0 0.0
      %2961 = vmatpush1.msra.mxu0 0.0
      %2962 = vmatprep.subr.mxu0 0.0
      %2963 = vmatpush1.msra.mxu0 0.0
      %2964 = vmatprep.subr.mxu0 0.0
      %2965 = vmatpush1.msra.mxu0 0.0
      %2966 = vmatprep.subr.mxu0 0.0
      %2967 = vmatpush1.msra.mxu0 0.0
      %2968 = vmatprep.subr.mxu0 0.0
      %2969 = vmatpush1.msra.mxu0 0.0
      %2970 = vmatprep.subr.mxu0 0.0
      %2971 = vmatpush1.msra.mxu0 0.0
      %2972 = vmatprep.subr.mxu0 0.0
      %2973 = vmatpush1.msra.mxu0 0.0
      %2974 = vmatprep.subr.mxu0 0.0
      %2975 = vmatpush1.msra.mxu0 0.0
      %2976 = vmatprep.subr.mxu0 0.0
      %2977 = vmatpush1.msra.mxu0 0.0
      %2978 = vmatprep.subr.mxu0 0.0
      %2979 = vmatpush1.msra.mxu0 0.0
      %2980 = vmatprep.subr.mxu0 0.0
      %2981 = vmatpush1.msra.mxu0 0.0
      %2982 = vmatprep.subr.mxu0 0.0
      %2983 = vmatpush1.msra.mxu0 0.0
      %2984 = vmatprep.subr.mxu0 0.0
      %2985 = vmatpush1.msra.mxu0 0.0
      %2986 = vmatprep.subr.mxu0 0.0
      %2987 = vmatpush1.msra.mxu0 0.0
      %2988 = vmatprep.subr.mxu0 0.0
      %2989 = vmatpush1.msra.mxu0 0.0
      %2990 = vmatprep.subr.mxu0 0.0
      %2991 = vmatpush1.msra.mxu0 0.0
      %2992 = vmatprep.subr.mxu0 0.0
      %2993 = vmatpush1.msra.mxu0 0.0
      %2994 = vmatprep.subr.mxu0 0.0
      %2995 = vmatpush1.msra.mxu0 0.0
      %2996 = vmatprep.subr.mxu0 0.0
      %2997 = vmatpush1.msra.mxu0 0.0
      %2998 = vmatprep.subr.mxu0 0.0
      %2999 = vmatpush1.msra.mxu0 0.0
      %3000 = vmatprep.subr.mxu0 0.0
      %3001 = vmatpush1.msra.mxu0 0.0
      %3002 = vmatprep.subr.mxu0 0.0
      %3003 = vmatpush1.msra.mxu0 0.0
      %3004 = vmatprep.subr.mxu0 0.0
      %3005 = vmatpush1.msra.mxu0 0.0
      %3006 = vmatprep.subr.mxu0 0.0
      %3007 = vmatpush1.msra.mxu0 0.0
      %3008 = vmatprep.subr.mxu0 0.0
      %3009 = vmatpush1.msra.mxu0 0.0
      %3010 = vmatprep.subr.mxu0 0.0
      %3011 = vmatpush1.msra.mxu0 0.0
      %3012 = vmatprep.subr.mxu0 0.0
      %3013 = vmatpush1.msra.mxu0 0.0
      %3014 = vmatprep.subr.mxu0 0.0
      %3015 = vmatpush1.msra.mxu0 0.0
      %3016 = vmatprep.mubr.f32.mxu0 0.0
      %3017 = vmatmul.mubr.f32.gmra.mrb[0].mxu0 %v2853
      %v3018 = vpop.f32.mrb[0].mxu0
      %v3019 = vadd.f32 0.0, %v3018
      %v3020 = vpop.f32.mrb[0].mxu0
      %v3021 = vadd.f32 0.0, %v3020
      %3022 = vmatprep.mubr.f32.mxu0 0.0
      %3023 = vmatmul.mubr.f32.gmra.mrb[0].mxu0 %v2856
      %v3024 = vpop.f32.mrb[0].mxu0
      %v3025 = vadd.f32 0.0, %v3024
      %v3026 = vpop.f32.mrb[0].mxu0
      %v3027 = vadd.f32 0.0, %v3026
      %3028 = vdwg.mxu0
      %3029 = vmatprep.subr.mxu0 %v2868
      %3030 = vmatpush1.msra.mxu0 %v2866
      %3031 = vmatprep.subr.mxu0 0.0
      %3032 = vmatpush1.msra.mxu0 0.0
      %3033 = vmatprep.subr.mxu0 0.0
      %3034 = vmatpush1.msra.mxu0 0.0
      %3035 = vmatprep.subr.mxu0 0.0
      %3036 = vmatpush1.msra.mxu0 0.0
      %3037 = vmatprep.subr.mxu0 0.0
      %3038 = vmatpush1.msra.mxu0 0.0
      %3039 = vmatprep.subr.mxu0 0.0
      %3040 = vmatpush1.msra.mxu0 0.0
      %3041 = vmatprep.subr.mxu0 0.0
      %3042 = vmatpush1.msra.mxu0 0.0
      %3043 = vmatprep.subr.mxu0 0.0
      %3044 = vmatpush1.msra.mxu0 0.0
      %3045 = vmatprep.subr.mxu0 0.0
      %3046 = vmatpush1.msra.mxu0 0.0
      %3047 = vmatprep.subr.mxu0 0.0
      %3048 = vmatpush1.msra.mxu0 0.0
      %3049 = vmatprep.subr.mxu0 0.0
      %3050 = vmatpush1.msra.mxu0 0.0
      %3051 = vmatprep.subr.mxu0 0.0
      %3052 = vmatpush1.msra.mxu0 0.0
      %3053 = vmatprep.subr.mxu0 0.0
      %3054 = vmatpush1.msra.mxu0 0.0
      %3055 = vmatprep.subr.mxu0 0.0
      %3056 = vmatpush1.msra.mxu0 0.0
      %3057 = vmatprep.subr.mxu0 0.0
      %3058 = vmatpush1.msra.mxu0 0.0
      %3059 = vmatprep.subr.mxu0 0.0
      %3060 = vmatpush1.msra.mxu0 0.0
      %3061 = vmatprep.subr.mxu0 0.0
      %3062 = vmatpush1.msra.mxu0 0.0
      %3063 = vmatprep.subr.mxu0 0.0
      %3064 = vmatpush1.msra.mxu0 0.0
      %3065 = vmatprep.subr.mxu0 0.0
      %3066 = vmatpush1.msra.mxu0 0.0
      %3067 = vmatprep.subr.mxu0 0.0
      %3068 = vmatpush1.msra.mxu0 0.0
      %3069 = vmatprep.subr.mxu0 0.0
      %3070 = vmatpush1.msra.mxu0 0.0
      %3071 = vmatprep.subr.mxu0 0.0
      %3072 = vmatpush1.msra.mxu0 0.0
      %3073 = vmatprep.subr.mxu0 0.0
      %3074 = vmatpush1.msra.mxu0 0.0
      %3075 = vmatprep.subr.mxu0 0.0
      %3076 = vmatpush1.msra.mxu0 0.0
      %3077 = vmatprep.subr.mxu0 0.0
      %3078 = vmatpush1.msra.mxu0 0.0
      %3079 = vmatprep.subr.mxu0 0.0
      %3080 = vmatpush1.msra.mxu0 0.0
      %3081 = vmatprep.subr.mxu0 0.0
      %3082 = vmatpush1.msra.mxu0 0.0
      %3083 = vmatprep.subr.mxu0 0.0
      %3084 = vmatpush1.msra.mxu0 0.0
      %3085 = vmatprep.subr.mxu0 0.0
      %3086 = vmatpush1.msra.mxu0 0.0
      %3087 = vmatprep.subr.mxu0 0.0
      %3088 = vmatpush1.msra.mxu0 0.0
      %3089 = vmatprep.subr.mxu0 0.0
      %3090 = vmatpush1.msra.mxu0 0.0
      %3091 = vmatprep.subr.mxu0 0.0
      %3092 = vmatpush1.msra.mxu0 0.0
      %3093 = vmatprep.mubr.f32.mxu0 0.0
      %3094 = vmatmul.mubr.f32.gmra.mrb[0].mxu0 %v2853
      %v3095 = vpop.f32.mrb[0].mxu0
      %v3096 = vadd.f32 0.0, %v3095
      %v3097 = vpop.f32.mrb[0].mxu0
      %v3098 = vadd.f32 0.0, %v3097
      %3099 = vmatprep.mubr.f32.mxu0 0.0
      %3100 = vmatmul.mubr.f32.gmra.mrb[0].mxu0 %v2856
      %v3101 = vpop.f32.mrb[0].mxu0
      %v3102 = vadd.f32 0.0, %v3101
      %v3103 = vpop.f32.mrb[0].mxu0
      %v3104 = vadd.f32 0.0, %v3103
      %3105 = vdwg.mxu0
      %3106 = vmatprep.subr.mxu0 %v2873
      %3107 = vmatpush1.msra.mxu0 %v2870
      %3108 = vmatprep.subr.mxu0 0.0
      %3109 = vmatpush1.msra.mxu0 0.0
      %3110 = vmatprep.subr.mxu0 0.0
      %3111 = vmatpush1.msra.mxu0 0.0
      %3112 = vmatprep.subr.mxu0 0.0
      %3113 = vmatpush1.msra.mxu0 0.0
      %3114 = vmatprep.subr.mxu0 0.0
      %3115 = vmatpush1.msra.mxu0 0.0
      %3116 = vmatprep.subr.mxu0 0.0
      %3117 = vmatpush1.msra.mxu0 0.0
      %3118 = vmatprep.subr.mxu0 0.0
      %3119 = vmatpush1.msra.mxu0 0.0
      %3120 = vmatprep.subr.mxu0 0.0
      %3121 = vmatpush1.msra.mxu0 0.0
      %3122 = vmatprep.subr.mxu0 0.0
      %3123 = vmatpush1.msra.mxu0 0.0
      %3124 = vmatprep.subr.mxu0 0.0
      %3125 = vmatpush1.msra.mxu0 0.0
      %3126 = vmatprep.subr.mxu0 0.0
      %3127 = vmatpush1.msra.mxu0 0.0
      %3128 = vmatprep.subr.mxu0 0.0
      %3129 = vmatpush1.msra.mxu0 0.0
      %3130 = vmatprep.subr.mxu0 0.0
      %3131 = vmatpush1.msra.mxu0 0.0
      %3132 = vmatprep.subr.mxu0 0.0
      %3133 = vmatpush1.msra.mxu0 0.0
      %3134 = vmatprep.subr.mxu0 0.0
      %3135 = vmatpush1.msra.mxu0 0.0
      %3136 = vmatprep.subr.mxu0 0.0
      %3137 = vmatpush1.msra.mxu0 0.0
      %3138 = vmatprep.subr.mxu0 0.0
      %3139 = vmatpush1.msra.mxu0 0.0
      %3140 = vmatprep.subr.mxu0 0.0
      %3141 = vmatpush1.msra.mxu0 0.0
      %3142 = vmatprep.subr.mxu0 0.0
      %3143 = vmatpush1.msra.mxu0 0.0
      %3144 = vmatprep.subr.mxu0 0.0
      %3145 = vmatpush1.msra.mxu0 0.0
      %3146 = vmatprep.subr.mxu0 0.0
      %3147 = vmatpush1.msra.mxu0 0.0
      %3148 = vmatprep.subr.mxu0 0.0
      %3149 = vmatpush1.msra.mxu0 0.0
      %3150 = vmatprep.subr.mxu0 0.0
      %3151 = vmatpush1.msra.mxu0 0.0
      %3152 = vmatprep.subr.mxu0 0.0
      %3153 = vmatpush1.msra.mxu0 0.0
      %3154 = vmatprep.subr.mxu0 0.0
      %3155 = vmatpush1.msra.mxu0 0.0
      %3156 = vmatprep.subr.mxu0 0.0
      %3157 = vmatpush1.msra.mxu0 0.0
      %3158 = vmatprep.subr.mxu0 0.0
      %3159 = vmatpush1.msra.mxu0 0.0
      %3160 = vmatprep.subr.mxu0 0.0
      %3161 = vmatpush1.msra.mxu0 0.0
      %3162 = vmatprep.subr.mxu0 0.0
      %3163 = vmatpush1.msra.mxu0 0.0
      %3164 = vmatprep.subr.mxu0 0.0
      %3165 = vmatpush1.msra.mxu0 0.0
      %3166 = vmatprep.subr.mxu0 0.0
      %3167 = vmatpush1.msra.mxu0 0.0
      %3168 = vmatprep.subr.mxu0 0.0
      %3169 = vmatpush1.msra.mxu0 0.0
      %3170 = vmatprep.mubr.f32.mxu0 0.0
      %3171 = vmatmul.mubr.f32.gmra.mrb[0].mxu0 %v2853
      %v3172 = vpop.f32.mrb[0].mxu0
      %v3173 = vadd.f32 0.0, %v3172
      %v3174 = vpop.f32.mrb[0].mxu0
      %v3175 = vadd.f32 0.0, %v3174
      %3176 = vmatprep.mubr.f32.mxu0 0.0
      %3177 = vmatmul.mubr.f32.gmra.mrb[0].mxu0 %v2856
      %v3178 = vpop.f32.mrb[0].mxu0
      %v3179 = vadd.f32 0.0, %v3178
      %v3180 = vpop.f32.mrb[0].mxu0
      %v3181 = vadd.f32 0.0, %v3180
      %3182 = vdwg.mxu0
      %v3183 = vadd.f32 %v2807, %v2942
      %v3184 = vadd.f32 %v2808, %v2944
      %v3185 = vadd.f32 %v2809, %v3019
      %v3186 = vadd.f32 %v2810, %v3021
      %v3187 = vadd.f32 %v2811, %v3096
      %v3188 = vadd.f32 %v2812, %v3098
      %v3189 = vadd.f32 %v2813, %v3173
      %v3190 = vadd.f32 %v2814, %v3175
      %v3191 = vadd.f32 %v2815, %v2948
      %v3192 = vadd.f32 %v2816, %v2950
      %v3193 = vadd.f32 %v2817, %v3025
      %v3194 = vadd.f32 %v2818, %v3027
      %v3195 = vadd.f32 %v2819, %v3102
      %v3196 = vadd.f32 %v2820, %v3104
      %v3197 = vadd.f32 %v2821, %v3179
      %v3198 = vadd.f32 %v2822, %v3181
      %3199 = vrot.lane.b32.xlu0 %v277, 95
      %v3200 = vpop.permute.xlu0 %3199
      %3201 = vrot.lane.b32.xlu0 %v645, 95
      %v3202 = vpop.permute.xlu0 %3201
      %3203 = vrot.lane.b32.xlu0 %v278, 95
      %v3204 = vpop.permute.xlu0 %3203
      %3205 = vrot.lane.b32.xlu0 %v646, 95
      %v3206 = vpop.permute.xlu0 %3205
      %3207 = vrot.lane.b32.xlu0 %v279, 95
      %v3208 = vpop.permute.xlu0 %3207
      %3209 = vrot.lane.b32.xlu0 %v647, 95
      %v3210 = vpop.permute.xlu0 %3209
      %3211 = vrot.lane.b32.xlu0 %v280, 95
      %v3212 = vpop.permute.xlu0 %3211
      %3213 = vrot.lane.b32.xlu0 %v648, 95
      %v3214 = vpop.permute.xlu0 %3213
      %vm3215 = vcmask 777216
      %v3216 = vsel %vm3215, %v3200, %v3202
      %v3217 = vsel %vm3215, %v3202, %v3204
      %v3218 = vsel %vm3215, %v3204, %v3206
      %v3219 = vsel %vm3215, %v3206, %v3208
      %v3220 = vsel %vm3215, %v3208, %v3210
      %v3221 = vsel %vm3215, %v3210, %v3212
      %v3222 = vsel %vm3215, %v3212, %v3214
      %v3225 = vsel %vm3215, %v3214, %v3200
      %s3226 = scalar_lea.vmem %s1, 128
      %v3227 = vld [vmem:[%s3226] sm:$0xff]
      %v3228 = vld [vmem:[%s3226 + $0x8] sm:$0x3]
      %v3230 = vsel %vm309, %v3227, 0
      %v3233 = vsel %vm309, %v3228, 0
      %v3235 = vsel %vm316, %v3216, 0
      %v3237 = vsel %vm316, %v3217, 0
      %v3239 = vsel %vm316, %v3218, 0
      %v3241 = vsel %vm316, %v3219, 0
      %v3243 = vsel %vm316, %v3220, 0
      %v3245 = vsel %vm316, %v3221, 0
      %v3247 = vsel %vm316, %v3222, 0
      %v3250 = vsel %vm316, %v3225, 0
      %3252 = vmatprep.subr.mxu0 %v3237
      %3253 = vmatpush1.msra.mxu0 %v3235
      %3254 = vmatprep.subr.mxu0 0.0
      %3255 = vmatpush1.msra.mxu0 0.0
      %3256 = vmatprep.subr.mxu0 0.0
      %3257 = vmatpush1.msra.mxu0 0.0
      %3258 = vmatprep.subr.mxu0 0.0
      %3259 = vmatpush1.msra.mxu0 0.0
      %3260 = vmatprep.subr.mxu0 0.0
      %3261 = vmatpush1.msra.mxu0 0.0
      %3262 = vmatprep.subr.mxu0 0.0
      %3263 = vmatpush1.msra.mxu0 0.0
      %3264 = vmatprep.subr.mxu0 0.0
      %3265 = vmatpush1.msra.mxu0 0.0
      %3266 = vmatprep.subr.mxu0 0.0
      %3267 = vmatpush1.msra.mxu0 0.0
      %3268 = vmatprep.subr.mxu0 0.0
      %3269 = vmatpush1.msra.mxu0 0.0
      %3270 = vmatprep.subr.mxu0 0.0
      %3271 = vmatpush1.msra.mxu0 0.0
      %3272 = vmatprep.subr.mxu0 0.0
      %3273 = vmatpush1.msra.mxu0 0.0
      %3274 = vmatprep.subr.mxu0 0.0
      %3275 = vmatpush1.msra.mxu0 0.0
      %3276 = vmatprep.subr.mxu0 0.0
      %3277 = vmatpush1.msra.mxu0 0.0
      %3278 = vmatprep.subr.mxu0 0.0
      %3279 = vmatpush1.msra.mxu0 0.0
      %3280 = vmatprep.subr.mxu0 0.0
      %3281 = vmatpush1.msra.mxu0 0.0
      %3282 = vmatprep.subr.mxu0 0.0
      %3283 = vmatpush1.msra.mxu0 0.0
      %3284 = vmatprep.subr.mxu0 0.0
      %3285 = vmatpush1.msra.mxu0 0.0
      %3286 = vmatprep.subr.mxu0 0.0
      %3287 = vmatpush1.msra.mxu0 0.0
      %3288 = vmatprep.subr.mxu0 0.0
      %3289 = vmatpush1.msra.mxu0 0.0
      %3290 = vmatprep.subr.mxu0 0.0
      %3291 = vmatpush1.msra.mxu0 0.0
      %3292 = vmatprep.subr.mxu0 0.0
      %3293 = vmatpush1.msra.mxu0 0.0
      %3294 = vmatprep.subr.mxu0 0.0
      %3295 = vmatpush1.msra.mxu0 0.0
      %3296 = vmatprep.subr.mxu0 0.0
      %3297 = vmatpush1.msra.mxu0 0.0
      %3298 = vmatprep.subr.mxu0 0.0
      %3299 = vmatpush1.msra.mxu0 0.0
      %3300 = vmatprep.subr.mxu0 0.0
      %3301 = vmatpush1.msra.mxu0 0.0
      %3302 = vmatprep.subr.mxu0 0.0
      %3303 = vmatpush1.msra.mxu0 0.0
      %3304 = vmatprep.subr.mxu0 0.0
      %3305 = vmatpush1.msra.mxu0 0.0
      %3306 = vmatprep.subr.mxu0 0.0
      %3307 = vmatpush1.msra.mxu0 0.0
      %3308 = vmatprep.subr.mxu0 0.0
      %3309 = vmatpush1.msra.mxu0 0.0
      %3310 = vmatprep.subr.mxu0 0.0
      %3311 = vmatpush1.msra.mxu0 0.0
      %3312 = vmatprep.subr.mxu0 0.0
      %3313 = vmatpush1.msra.mxu0 0.0
      %3314 = vmatprep.subr.mxu0 0.0
      %3315 = vmatpush1.msra.mxu0 0.0
      %3316 = vmatprep.mubr.f32.mxu0 0.0
      %3317 = vmatmul.mubr.f32.gmra.mrb[0].mxu0 %v3230
      %v3318 = vpop.f32.mrb[0].mxu0
      %v3319 = vadd.f32 0.0, %v3318
      %v3320 = vpop.f32.mrb[0].mxu0
      %v3321 = vadd.f32 0.0, %v3320
      %3322 = vmatprep.mubr.f32.mxu0 0.0
      %3323 = vmatmul.mubr.f32.gmra.mrb[0].mxu0 %v3233
      %v3324 = vpop.f32.mrb[0].mxu0
      %v3325 = vadd.f32 0.0, %v3324
      %v3326 = vpop.f32.mrb[0].mxu0
      %v3327 = vadd.f32 0.0, %v3326
      %3328 = vdwg.mxu0
      %3329 = vmatprep.subr.mxu0 %v3241
      %3330 = vmatpush1.msra.mxu0 %v3239
      %3331 = vmatprep.subr.mxu0 0.0
      %3332 = vmatpush1.msra.mxu0 0.0
      %3333 = vmatprep.subr.mxu0 0.0
      %3334 = vmatpush1.msra.mxu0 0.0
      %3335 = vmatprep.subr.mxu0 0.0
      %3336 = vmatpush1.msra.mxu0 0.0
      %3337 = vmatprep.subr.mxu0 0.0
      %3338 = vmatpush1.msra.mxu0 0.0
      %3339 = vmatprep.subr.mxu0 0.0
      %3340 = vmatpush1.msra.mxu0 0.0
      %3341 = vmatprep.subr.mxu0 0.0
      %3342 = vmatpush1.msra.mxu0 0.0
      %3343 = vmatprep.subr.mxu0 0.0
      %3344 = vmatpush1.msra.mxu0 0.0
      %3345 = vmatprep.subr.mxu0 0.0
      %3346 = vmatpush1.msra.mxu0 0.0
      %3347 = vmatprep.subr.mxu0 0.0
      %3348 = vmatpush1.msra.mxu0 0.0
      %3349 = vmatprep.subr.mxu0 0.0
      %3350 = vmatpush1.msra.mxu0 0.0
      %3351 = vmatprep.subr.mxu0 0.0
      %3352 = vmatpush1.msra.mxu0 0.0
      %3353 = vmatprep.subr.mxu0 0.0
      %3354 = vmatpush1.msra.mxu0 0.0
      %3355 = vmatprep.subr.mxu0 0.0
      %3356 = vmatpush1.msra.mxu0 0.0
      %3357 = vmatprep.subr.mxu0 0.0
      %3358 = vmatpush1.msra.mxu0 0.0
      %3359 = vmatprep.subr.mxu0 0.0
      %3360 = vmatpush1.msra.mxu0 0.0
      %3361 = vmatprep.subr.mxu0 0.0
      %3362 = vmatpush1.msra.mxu0 0.0
      %3363 = vmatprep.subr.mxu0 0.0
      %3364 = vmatpush1.msra.mxu0 0.0
      %3365 = vmatprep.subr.mxu0 0.0
      %3366 = vmatpush1.msra.mxu0 0.0
      %3367 = vmatprep.subr.mxu0 0.0
      %3368 = vmatpush1.msra.mxu0 0.0
      %3369 = vmatprep.subr.mxu0 0.0
      %3370 = vmatpush1.msra.mxu0 0.0
      %3371 = vmatprep.subr.mxu0 0.0
      %3372 = vmatpush1.msra.mxu0 0.0
      %3373 = vmatprep.subr.mxu0 0.0
      %3374 = vmatpush1.msra.mxu0 0.0
      %3375 = vmatprep.subr.mxu0 0.0
      %3376 = vmatpush1.msra.mxu0 0.0
      %3377 = vmatprep.subr.mxu0 0.0
      %3378 = vmatpush1.msra.mxu0 0.0
      %3379 = vmatprep.subr.mxu0 0.0
      %3380 = vmatpush1.msra.mxu0 0.0
      %3381 = vmatprep.subr.mxu0 0.0
      %3382 = vmatpush1.msra.mxu0 0.0
      %3383 = vmatprep.subr.mxu0 0.0
      %3384 = vmatpush1.msra.mxu0 0.0
      %3385 = vmatprep.subr.mxu0 0.0
      %3386 = vmatpush1.msra.mxu0 0.0
      %3387 = vmatprep.subr.mxu0 0.0
      %3388 = vmatpush1.msra.mxu0 0.0
      %3389 = vmatprep.subr.mxu0 0.0
      %3390 = vmatpush1.msra.mxu0 0.0
      %3391 = vmatprep.subr.mxu0 0.0
      %3392 = vmatpush1.msra.mxu0 0.0
      %3393 = vmatprep.mubr.f32.mxu0 0.0
      %3394 = vmatmul.mubr.f32.gmra.mrb[0].mxu0 %v3230
      %v3395 = vpop.f32.mrb[0].mxu0
      %v3396 = vadd.f32 0.0, %v3395
      %v3397 = vpop.f32.mrb[0].mxu0
      %v3398 = vadd.f32 0.0, %v3397
      %3399 = vmatprep.mubr.f32.mxu0 0.0
      %3400 = vmatmul.mubr.f32.gmra.mrb[0].mxu0 %v3233
      %v3401 = vpop.f32.mrb[0].mxu0
      %v3402 = vadd.f32 0.0, %v3401
      %v3403 = vpop.f32.mrb[0].mxu0
      %v3404 = vadd.f32 0.0, %v3403
      %3405 = vdwg.mxu0
      %3406 = vmatprep.subr.mxu0 %v3245
      %3407 = vmatpush1.msra.mxu0 %v3243
      %3408 = vmatprep.subr.mxu0 0.0
      %3409 = vmatpush1.msra.mxu0 0.0
      %3410 = vmatprep.subr.mxu0 0.0
      %3411 = vmatpush1.msra.mxu0 0.0
      %3412 = vmatprep.subr.mxu0 0.0
      %3413 = vmatpush1.msra.mxu0 0.0
      %3414 = vmatprep.subr.mxu0 0.0
      %3415 = vmatpush1.msra.mxu0 0.0
      %3416 = vmatprep.subr.mxu0 0.0
      %3417 = vmatpush1.msra.mxu0 0.0
      %3418 = vmatprep.subr.mxu0 0.0
      %3419 = vmatpush1.msra.mxu0 0.0
      %3420 = vmatprep.subr.mxu0 0.0
      %3421 = vmatpush1.msra.mxu0 0.0
      %3422 = vmatprep.subr.mxu0 0.0
      %3423 = vmatpush1.msra.mxu0 0.0
      %3424 = vmatprep.subr.mxu0 0.0
      %3425 = vmatpush1.msra.mxu0 0.0
      %3426 = vmatprep.subr.mxu0 0.0
      %3427 = vmatpush1.msra.mxu0 0.0
      %3428 = vmatprep.subr.mxu0 0.0
      %3429 = vmatpush1.msra.mxu0 0.0
      %3430 = vmatprep.subr.mxu0 0.0
      %3431 = vmatpush1.msra.mxu0 0.0
      %3432 = vmatprep.subr.mxu0 0.0
      %3433 = vmatpush1.msra.mxu0 0.0
      %3434 = vmatprep.subr.mxu0 0.0
      %3435 = vmatpush1.msra.mxu0 0.0
      %3436 = vmatprep.subr.mxu0 0.0
      %3437 = vmatpush1.msra.mxu0 0.0
      %3438 = vmatprep.subr.mxu0 0.0
      %3439 = vmatpush1.msra.mxu0 0.0
      %3440 = vmatprep.subr.mxu0 0.0
      %3441 = vmatpush1.msra.mxu0 0.0
      %3442 = vmatprep.subr.mxu0 0.0
      %3443 = vmatpush1.msra.mxu0 0.0
      %3444 = vmatprep.subr.mxu0 0.0
      %3445 = vmatpush1.msra.mxu0 0.0
      %3446 = vmatprep.subr.mxu0 0.0
      %3447 = vmatpush1.msra.mxu0 0.0
      %3448 = vmatprep.subr.mxu0 0.0
      %3449 = vmatpush1.msra.mxu0 0.0
      %3450 = vmatprep.subr.mxu0 0.0
      %3451 = vmatpush1.msra.mxu0 0.0
      %3452 = vmatprep.subr.mxu0 0.0
      %3453 = vmatpush1.msra.mxu0 0.0
      %3454 = vmatprep.subr.mxu0 0.0
      %3455 = vmatpush1.msra.mxu0 0.0
      %3456 = vmatprep.subr.mxu0 0.0
      %3457 = vmatpush1.msra.mxu0 0.0
      %3458 = vmatprep.subr.mxu0 0.0
      %3459 = vmatpush1.msra.mxu0 0.0
      %3460 = vmatprep.subr.mxu0 0.0
      %3461 = vmatpush1.msra.mxu0 0.0
      %3462 = vmatprep.subr.mxu0 0.0
      %3463 = vmatpush1.msra.mxu0 0.0
      %3464 = vmatprep.subr.mxu0 0.0
      %3465 = vmatpush1.msra.mxu0 0.0
      %3466 = vmatprep.subr.mxu0 0.0
      %3467 = vmatpush1.msra.mxu0 0.0
      %3468 = vmatprep.subr.mxu0 0.0
      %3469 = vmatpush1.msra.mxu0 0.0
      %3470 = vmatprep.mubr.f32.mxu0 0.0
      %3471 = vmatmul.mubr.f32.gmra.mrb[0].mxu0 %v3230
      %v3472 = vpop.f32.mrb[0].mxu0
      %v3473 = vadd.f32 0.0, %v3472
      %v3474 = vpop.f32.mrb[0].mxu0
      %v3475 = vadd.f32 0.0, %v3474
      %3476 = vmatprep.mubr.f32.mxu0 0.0
      %3477 = vmatmul.mubr.f32.gmra.mrb[0].mxu0 %v3233
      %v3478 = vpop.f32.mrb[0].mxu0
      %v3479 = vadd.f32 0.0, %v3478
      %v3480 = vpop.f32.mrb[0].mxu0
      %v3481 = vadd.f32 0.0, %v3480
      %3482 = vdwg.mxu0
      %3483 = vmatprep.subr.mxu0 %v3250
      %3484 = vmatpush1.msra.mxu0 %v3247
      %3485 = vmatprep.subr.mxu0 0.0
      %3486 = vmatpush1.msra.mxu0 0.0
      %3487 = vmatprep.subr.mxu0 0.0
      %3488 = vmatpush1.msra.mxu0 0.0
      %3489 = vmatprep.subr.mxu0 0.0
      %3490 = vmatpush1.msra.mxu0 0.0
      %3491 = vmatprep.subr.mxu0 0.0
      %3492 = vmatpush1.msra.mxu0 0.0
      %3493 = vmatprep.subr.mxu0 0.0
      %3494 = vmatpush1.msra.mxu0 0.0
      %3495 = vmatprep.subr.mxu0 0.0
      %3496 = vmatpush1.msra.mxu0 0.0
      %3497 = vmatprep.subr.mxu0 0.0
      %3498 = vmatpush1.msra.mxu0 0.0
      %3499 = vmatprep.subr.mxu0 0.0
      %3500 = vmatpush1.msra.mxu0 0.0
      %3501 = vmatprep.subr.mxu0 0.0
      %3502 = vmatpush1.msra.mxu0 0.0
      %3503 = vmatprep.subr.mxu0 0.0
      %3504 = vmatpush1.msra.mxu0 0.0
      %3505 = vmatprep.subr.mxu0 0.0
      %3506 = vmatpush1.msra.mxu0 0.0
      %3507 = vmatprep.subr.mxu0 0.0
      %3508 = vmatpush1.msra.mxu0 0.0
      %3509 = vmatprep.subr.mxu0 0.0
      %3510 = vmatpush1.msra.mxu0 0.0
      %3511 = vmatprep.subr.mxu0 0.0
      %3512 = vmatpush1.msra.mxu0 0.0
      %3513 = vmatprep.subr.mxu0 0.0
      %3514 = vmatpush1.msra.mxu0 0.0
      %3515 = vmatprep.subr.mxu0 0.0
      %3516 = vmatpush1.msra.mxu0 0.0
      %3517 = vmatprep.subr.mxu0 0.0
      %3518 = vmatpush1.msra.mxu0 0.0
      %3519 = vmatprep.subr.mxu0 0.0
      %3520 = vmatpush1.msra.mxu0 0.0
      %3521 = vmatprep.subr.mxu0 0.0
      %3522 = vmatpush1.msra.mxu0 0.0
      %3523 = vmatprep.subr.mxu0 0.0
      %3524 = vmatpush1.msra.mxu0 0.0
      %3525 = vmatprep.subr.mxu0 0.0
      %3526 = vmatpush1.msra.mxu0 0.0
      %3527 = vmatprep.subr.mxu0 0.0
      %3528 = vmatpush1.msra.mxu0 0.0
      %3529 = vmatprep.subr.mxu0 0.0
      %3530 = vmatpush1.msra.mxu0 0.0
      %3531 = vmatprep.subr.mxu0 0.0
      %3532 = vmatpush1.msra.mxu0 0.0
      %3533 = vmatprep.subr.mxu0 0.0
      %3534 = vmatpush1.msra.mxu0 0.0
      %3535 = vmatprep.subr.mxu0 0.0
      %3536 = vmatpush1.msra.mxu0 0.0
      %3537 = vmatprep.subr.mxu0 0.0
      %3538 = vmatpush1.msra.mxu0 0.0
      %3539 = vmatprep.subr.mxu0 0.0
      %3540 = vmatpush1.msra.mxu0 0.0
      %3541 = vmatprep.subr.mxu0 0.0
      %3542 = vmatpush1.msra.mxu0 0.0
      %3543 = vmatprep.subr.mxu0 0.0
      %3544 = vmatpush1.msra.mxu0 0.0
      %3545 = vmatprep.subr.mxu0 0.0
      %3546 = vmatpush1.msra.mxu0 0.0
      %3547 = vmatprep.mubr.f32.mxu0 0.0
      %3548 = vmatmul.mubr.f32.gmra.mrb[0].mxu0 %v3230
      %v3549 = vpop.f32.mrb[0].mxu0
      %v3550 = vadd.f32 0.0, %v3549
      %v3551 = vpop.f32.mrb[0].mxu0
      %v3552 = vadd.f32 0.0, %v3551
      %3553 = vmatprep.mubr.f32.mxu0 0.0
      %3554 = vmatmul.mubr.f32.gmra.mrb[0].mxu0 %v3233
      %v3555 = vpop.f32.mrb[0].mxu0
      %v3556 = vadd.f32 0.0, %v3555
      %v3557 = vpop.f32.mrb[0].mxu0
      %v3558 = vadd.f32 0.0, %v3557
      %3559 = vdwg.mxu0
      %v3560 = vadd.f32 %v3183, %v3319
      %v3561 = vadd.f32 %v3184, %v3321
      %v3562 = vadd.f32 %v3185, %v3396
      %v3563 = vadd.f32 %v3186, %v3398
      %v3564 = vadd.f32 %v3187, %v3473
      %v3565 = vadd.f32 %v3188, %v3475
      %v3566 = vadd.f32 %v3189, %v3550
      %v3567 = vadd.f32 %v3190, %v3552
      %v3568 = vadd.f32 %v3191, %v3325
      %v3569 = vadd.f32 %v3192, %v3327
      %v3570 = vadd.f32 %v3193, %v3402
      %v3571 = vadd.f32 %v3194, %v3404
      %v3572 = vadd.f32 %v3195, %v3479
      %v3573 = vadd.f32 %v3196, %v3481
      %v3574 = vadd.f32 %v3197, %v3556
      %v3575 = vadd.f32 %v3198, %v3558
      %v3576 = vld [vmem:[%s2] sm:$0xff]
      %v3577 = vld [vmem:[%s2 + $0x8] sm:$0x3]
      %3579 = vset.pattern.permute.xlu0 0
      %3580 = vperm.xlu0 %3579, %v3576
      %v3581 = vpop.permute.xlu0 %3580
      %3584 = vset.pattern.permute.xlu0 0
      %3585 = vperm.xlu0 %3584, %v3577
      %v3586 = vpop.permute.xlu0 %3585
      %v3588 = vadd.f32 %v3560, %v3581
      %v3589 = vadd.f32 %v3561, %v3581
      %v3590 = vadd.f32 %v3562, %v3581
      %v3591 = vadd.f32 %v3563, %v3581
      %v3592 = vadd.f32 %v3564, %v3581
      %v3593 = vadd.f32 %v3565, %v3581
      %v3594 = vadd.f32 %v3566, %v3581
      %v3595 = vadd.f32 %v3567, %v3581
      %v3596 = vadd.f32 %v3568, %v3586
      %v3597 = vadd.f32 %v3569, %v3586
      %v3598 = vadd.f32 %v3570, %v3586
      %v3599 = vadd.f32 %v3571, %v3586
      %v3600 = vadd.f32 %v3572, %v3586
      %v3601 = vadd.f32 %v3573, %v3586
      %v3602 = vadd.f32 %v3574, %v3586
      %v3603 = vadd.f32 %v3575, %v3586
      %v3604 = vmax.f32 %v3588, 0.0
      %v3605 = vmax.f32 %v3589, 0.0
      %v3606 = vmax.f32 %v3590, 0.0
      %v3607 = vmax.f32 %v3591, 0.0
      %v3608 = vmax.f32 %v3592, 0.0
      %v3609 = vmax.f32 %v3593, 0.0
      %v3610 = vmax.f32 %v3594, 0.0
      %v3611 = vmax.f32 %v3595, 0.0
      %v3612 = vmax.f32 %v3596, 0.0
      %v3613 = vmax.f32 %v3597, 0.0
      %v3614 = vmax.f32 %v3598, 0.0
      %v3615 = vmax.f32 %v3599, 0.0
      %v3616 = vmax.f32 %v3600, 0.0
      %v3617 = vmax.f32 %v3601, 0.0
      %v3618 = vmax.f32 %v3602, 0.0
      %v3619 = vmax.f32 %v3603, 0.0
      %3636 = vrot.lane.b32.xlu0 %v3604, 96
      %v3637 = vpop.permute.xlu0 %3636
      %3638 = vrot.lane.b32.xlu0 %v3605, 96
      %v3639 = vpop.permute.xlu0 %3638
      %3640 = vrot.lane.b32.xlu0 %v3606, 96
      %v3641 = vpop.permute.xlu0 %3640
      %3642 = vrot.lane.b32.xlu0 %v3607, 96
      %v3643 = vpop.permute.xlu0 %3642
      %3644 = vrot.lane.b32.xlu0 %v3608, 96
      %v3645 = vpop.permute.xlu0 %3644
      %3646 = vrot.lane.b32.xlu0 %v3609, 96
      %v3647 = vpop.permute.xlu0 %3646
      %3648 = vrot.lane.b32.xlu0 %v3610, 96
      %v3649 = vpop.permute.xlu0 %3648
      %3650 = vrot.lane.b32.xlu0 %v3611, 96
      %v3651 = vpop.permute.xlu0 %3650
      %3652 = vrot.lane.b32.xlu0 %v3612, 96
      %v3653 = vpop.permute.xlu0 %3652
      %3654 = vrot.lane.b32.xlu0 %v3613, 96
      %v3655 = vpop.permute.xlu0 %3654
      %3656 = vrot.lane.b32.xlu0 %v3614, 96
      %v3657 = vpop.permute.xlu0 %3656
      %3658 = vrot.lane.b32.xlu0 %v3615, 96
      %v3659 = vpop.permute.xlu0 %3658
      %3660 = vrot.lane.b32.xlu0 %v3616, 96
      %v3661 = vpop.permute.xlu0 %3660
      %3662 = vrot.lane.b32.xlu0 %v3617, 96
      %v3663 = vpop.permute.xlu0 %3662
      %3664 = vrot.lane.b32.xlu0 %v3618, 96
      %v3665 = vpop.permute.xlu0 %3664
      %3666 = vrot.lane.b32.xlu0 %v3619, 96
      %v3667 = vpop.permute.xlu0 %3666
      %v3668 = vsel %vm2462, %v3637, %v3639
      %v3669 = vsel %vm2462, %v3639, %v3641
      %v3670 = vsel %vm2462, %v3641, %v3643
      %v3671 = vsel %vm2462, %v3643, %v3645
      %v3672 = vsel %vm2462, %v3645, %v3647
      %v3673 = vsel %vm2462, %v3647, %v3649
      %v3674 = vsel %vm2462, %v3649, %v3651
      %v3675 = vsel %vm2462, %v3653, %v3655
      %v3676 = vsel %vm2462, %v3655, %v3657
      %v3677 = vsel %vm2462, %v3657, %v3659
      %v3678 = vsel %vm2462, %v3659, %v3661
      %v3679 = vsel %vm2462, %v3661, %v3663
      %v3680 = vsel %vm2462, %v3663, %v3665
      %v3681 = vsel %vm2462, %v3665, %v3667
      %v3700 = vsel %vm2462, %v3651, %v3637
      %v3701 = vsel %vm2462, %v3667, %v3653
      %v3702 = vmax.f32 %v3604, %v3668
      %v3703 = vmax.f32 %v3605, %v3669
      %v3704 = vmax.f32 %v3606, %v3670
      %v3705 = vmax.f32 %v3607, %v3671
      %v3706 = vmax.f32 %v3608, %v3672
      %v3707 = vmax.f32 %v3609, %v3673
      %v3708 = vmax.f32 %v3610, %v3674
      %v3709 = vmax.f32 %v3611, %v3700
      %v3710 = vmax.f32 %v3612, %v3675
      %v3711 = vmax.f32 %v3613, %v3676
      %v3712 = vmax.f32 %v3614, %v3677
      %v3713 = vmax.f32 %v3615, %v3678
      %v3714 = vmax.f32 %v3616, %v3679
      %v3715 = vmax.f32 %v3617, %v3680
      %v3716 = vmax.f32 %v3618, %v3681
      %v3717 = vmax.f32 %v3619, %v3701
      %3734 = vrot.lane.b32.xlu0 %v3702, 127
      %v3735 = vpop.permute.xlu0 %3734
      %3736 = vrot.lane.b32.xlu0 %v3703, 127
      %v3737 = vpop.permute.xlu0 %3736
      %3738 = vrot.lane.b32.xlu0 %v3704, 127
      %v3739 = vpop.permute.xlu0 %3738
      %3740 = vrot.lane.b32.xlu0 %v3705, 127
      %v3741 = vpop.permute.xlu0 %3740
      %3742 = vrot.lane.b32.xlu0 %v3706, 127
      %v3743 = vpop.permute.xlu0 %3742
      %3744 = vrot.lane.b32.xlu0 %v3707, 127
      %v3745 = vpop.permute.xlu0 %3744
      %3746 = vrot.lane.b32.xlu0 %v3708, 127
      %v3747 = vpop.permute.xlu0 %3746
      %3748 = vrot.lane.b32.xlu0 %v3709, 127
      %v3749 = vpop.permute.xlu0 %3748
      %3750 = vrot.lane.b32.xlu0 %v3710, 127
      %v3751 = vpop.permute.xlu0 %3750
      %3752 = vrot.lane.b32.xlu0 %v3711, 127
      %v3753 = vpop.permute.xlu0 %3752
      %3754 = vrot.lane.b32.xlu0 %v3712, 127
      %v3755 = vpop.permute.xlu0 %3754
      %3756 = vrot.lane.b32.xlu0 %v3713, 127
      %v3757 = vpop.permute.xlu0 %3756
      %3758 = vrot.lane.b32.xlu0 %v3714, 127
      %v3759 = vpop.permute.xlu0 %3758
      %3760 = vrot.lane.b32.xlu0 %v3715, 127
      %v3761 = vpop.permute.xlu0 %3760
      %3762 = vrot.lane.b32.xlu0 %v3716, 127
      %v3763 = vpop.permute.xlu0 %3762
      %3764 = vrot.lane.b32.xlu0 %v3717, 127
      %v3765 = vpop.permute.xlu0 %3764
      %v3766 = vsel %vm995, %v3735, %v3737
      %v3767 = vsel %vm995, %v3737, %v3739
      %v3768 = vsel %vm995, %v3739, %v3741
      %v3769 = vsel %vm995, %v3741, %v3743
      %v3770 = vsel %vm995, %v3743, %v3745
      %v3771 = vsel %vm995, %v3745, %v3747
      %v3772 = vsel %vm995, %v3747, %v3749
      %v3773 = vsel %vm995, %v3751, %v3753
      %v3774 = vsel %vm995, %v3753, %v3755
      %v3775 = vsel %vm995, %v3755, %v3757
      %v3776 = vsel %vm995, %v3757, %v3759
      %v3777 = vsel %vm995, %v3759, %v3761
      %v3778 = vsel %vm995, %v3761, %v3763
      %v3779 = vsel %vm995, %v3763, %v3765
      %v3798 = vsel %vm995, %v3749, %v3735
      %v3799 = vsel %vm995, %v3765, %v3751
      %v3800 = vmax.f32 %v3702, %v3766
      %v3801 = vmax.f32 %v3703, %v3767
      %v3802 = vmax.f32 %v3704, %v3768
      %v3803 = vmax.f32 %v3705, %v3769
      %v3804 = vmax.f32 %v3706, %v3770
      %v3805 = vmax.f32 %v3707, %v3771
      %v3806 = vmax.f32 %v3708, %v3772
      %v3807 = vmax.f32 %v3709, %v3798
      %v3808 = vmax.f32 %v3710, %v3773
      %v3809 = vmax.f32 %v3711, %v3774
      %v3810 = vmax.f32 %v3712, %v3775
      %v3811 = vmax.f32 %v3713, %v3776
      %v3812 = vmax.f32 %v3714, %v3777
      %v3813 = vmax.f32 %v3715, %v3778
      %v3814 = vmax.f32 %v3716, %v3779
      %v3815 = vmax.f32 %v3717, %v3799
      %v3816 = vld [vmem:[%s3] sm:$0xff]
      %v3817 = vld [vmem:[%s3 + $0x8] sm:$0x3]
      %s3818 = scalar_lea.vmem %s3, 16
      %v3819 = vld [vmem:[%s3818] sm:$0xff]
      %v3820 = vld [vmem:[%s3818 + $0x8] sm:$0x3]
      %3837 = vrot.lane.b32.xlu0 %v3800, 126
      %v3838 = vpop.permute.xlu0 %3837
      %3839 = vrot.lane.b32.xlu0 %v3801, 126
      %v3840 = vpop.permute.xlu0 %3839
      %3841 = vrot.lane.b32.xlu0 %v3802, 126
      %v3842 = vpop.permute.xlu0 %3841
      %3843 = vrot.lane.b32.xlu0 %v3803, 126
      %v3844 = vpop.permute.xlu0 %3843
      %3845 = vrot.lane.b32.xlu0 %v3804, 126
      %v3846 = vpop.permute.xlu0 %3845
      %3847 = vrot.lane.b32.xlu0 %v3805, 126
      %v3848 = vpop.permute.xlu0 %3847
      %3849 = vrot.lane.b32.xlu0 %v3806, 126
      %v3850 = vpop.permute.xlu0 %3849
      %3851 = vrot.lane.b32.xlu0 %v3807, 126
      %v3852 = vpop.permute.xlu0 %3851
      %3853 = vrot.lane.b32.xlu0 %v3808, 126
      %v3854 = vpop.permute.xlu0 %3853
      %3855 = vrot.lane.b32.xlu0 %v3809, 126
      %v3856 = vpop.permute.xlu0 %3855
      %3857 = vrot.lane.b32.xlu0 %v3810, 126
      %v3858 = vpop.permute.xlu0 %3857
      %3859 = vrot.lane.b32.xlu0 %v3811, 126
      %v3860 = vpop.permute.xlu0 %3859
      %3861 = vrot.lane.b32.xlu0 %v3812, 126
      %v3862 = vpop.permute.xlu0 %3861
      %3863 = vrot.lane.b32.xlu0 %v3813, 126
      %v3864 = vpop.permute.xlu0 %3863
      %3865 = vrot.lane.b32.xlu0 %v3814, 126
      %v3866 = vpop.permute.xlu0 %3865
      %3867 = vrot.lane.b32.xlu0 %v3815, 126
      %v3868 = vpop.permute.xlu0 %3867
      %vm3869 = vcmask 1031168
      %v3870 = vsel %vm3869, %v3838, %v3840
      %v3871 = vsel %vm3869, %v3840, %v3842
      %v3872 = vsel %vm3869, %v3842, %v3844
      %v3873 = vsel %vm3869, %v3844, %v3846
      %v3874 = vsel %vm3869, %v3846, %v3848
      %v3875 = vsel %vm3869, %v3848, %v3850
      %v3876 = vsel %vm3869, %v3850, %v3852
      %v3877 = vsel %vm3869, %v3854, %v3856
      %v3878 = vsel %vm3869, %v3856, %v3858
      %v3879 = vsel %vm3869, %v3858, %v3860
      %v3880 = vsel %vm3869, %v3860, %v3862
      %v3881 = vsel %vm3869, %v3862, %v3864
      %v3882 = vsel %vm3869, %v3864, %v3866
      %v3883 = vsel %vm3869, %v3866, %v3868
      %v3895 = vsel %vm3869, %v3852, %v3838
      %v3896 = vsel %vm3869, %v3868, %v3854
      %vm3897 = vcmask 80896
      %v3899 = vsel %vm3897, %v3819, 0
      %v3902 = vsel %vm3897, %v3820, 0
      %vm3904 = vcmask 1041408
      %v3905 = vsel %vm3904, %v3877, 0
      %v3907 = vsel %vm3904, %v3878, 0
      %v3909 = vsel %vm3904, %v3879, 0
      %v3911 = vsel %vm3904, %v3880, 0
      %v3913 = vsel %vm3904, %v3881, 0
      %v3915 = vsel %vm3904, %v3882, 0
      %v3917 = vsel %vm3904, %v3883, 0
      %v3920 = vsel %vm3904, %v3896, 0
      %3922 = vmatprep.subr.mxu0 %v3871
      %3923 = vmatpush1.msra.mxu0 %v3870
      %3924 = vmatprep.subr.mxu0 %v3907
      %3925 = vmatpush1.msra.mxu0 %v3905
      %3926 = vmatprep.subr.mxu0 0.0
      %3927 = vmatpush1.msra.mxu0 0.0
      %3928 = vmatprep.subr.mxu0 0.0
      %3929 = vmatpush1.msra.mxu0 0.0
      %3930 = vmatprep.subr.mxu0 0.0
      %3931 = vmatpush1.msra.mxu0 0.0
      %3932 = vmatprep.subr.mxu0 0.0
      %3933 = vmatpush1.msra.mxu0 0.0
      %3934 = vmatprep.subr.mxu0 0.0
      %3935 = vmatpush1.msra.mxu0 0.0
      %3936 = vmatprep.subr.mxu0 0.0
      %3937 = vmatpush1.msra.mxu0 0.0
      %3938 = vmatprep.subr.mxu0 0.0
      %3939 = vmatpush1.msra.mxu0 0.0
      %3940 = vmatprep.subr.mxu0 0.0
      %3941 = vmatpush1.msra.mxu0 0.0
      %3942 = vmatprep.subr.mxu0 0.0
      %3943 = vmatpush1.msra.mxu0 0.0
      %3944 = vmatprep.subr.mxu0 0.0
      %3945 = vmatpush1.msra.mxu0 0.0
      %3946 = vmatprep.subr.mxu0 0.0
      %3947 = vmatpush1.msra.mxu0 0.0
      %3948 = vmatprep.subr.mxu0 0.0
      %3949 = vmatpush1.msra.mxu0 0.0
      %3950 = vmatprep.subr.mxu0 0.0
      %3951 = vmatpush1.msra.mxu0 0.0
      %3952 = vmatprep.subr.mxu0 0.0
      %3953 = vmatpush1.msra.mxu0 0.0
      %3954 = vmatprep.subr.mxu0 0.0
      %3955 = vmatpush1.msra.mxu0 0.0
      %3956 = vmatprep.subr.mxu0 0.0
      %3957 = vmatpush1.msra.mxu0 0.0
      %3958 = vmatprep.subr.mxu0 0.0
      %3959 = vmatpush1.msra.mxu0 0.0
      %3960 = vmatprep.subr.mxu0 0.0
      %3961 = vmatpush1.msra.mxu0 0.0
      %3962 = vmatprep.subr.mxu0 0.0
      %3963 = vmatpush1.msra.mxu0 0.0
      %3964 = vmatprep.subr.mxu0 0.0
      %3965 = vmatpush1.msra.mxu0 0.0
      %3966 = vmatprep.subr.mxu0 0.0
      %3967 = vmatpush1.msra.mxu0 0.0
      %3968 = vmatprep.subr.mxu0 0.0
      %3969 = vmatpush1.msra.mxu0 0.0
      %3970 = vmatprep.subr.mxu0 0.0
      %3971 = vmatpush1.msra.mxu0 0.0
      %3972 = vmatprep.subr.mxu0 0.0
      %3973 = vmatpush1.msra.mxu0 0.0
      %3974 = vmatprep.subr.mxu0 0.0
      %3975 = vmatpush1.msra.mxu0 0.0
      %3976 = vmatprep.subr.mxu0 0.0
      %3977 = vmatpush1.msra.mxu0 0.0
      %3978 = vmatprep.subr.mxu0 0.0
      %3979 = vmatpush1.msra.mxu0 0.0
      %3980 = vmatprep.subr.mxu0 0.0
      %3981 = vmatpush1.msra.mxu0 0.0
      %3982 = vmatprep.subr.mxu0 0.0
      %3983 = vmatpush1.msra.mxu0 0.0
      %3984 = vmatprep.subr.mxu0 0.0
      %3985 = vmatpush1.msra.mxu0 0.0
      %3986 = vmatprep.mubr.f32.mxu0 0.0
      %3987 = vmatmul.mubr.f32.gmra.mrb[0].mxu0 %v3899
      %v3988 = vpop.f32.mrb[0].mxu0
      %v3989 = vadd.f32 0.0, %v3988
      %v3990 = vpop.f32.mrb[0].mxu0
      %v3991 = vadd.f32 0.0, %v3990
      %3992 = vmatprep.mubr.f32.mxu0 0.0
      %3993 = vmatmul.mubr.f32.gmra.mrb[0].mxu0 %v3902
      %v3994 = vpop.f32.mrb[0].mxu0
      %v3995 = vadd.f32 0.0, %v3994
      %v3996 = vpop.f32.mrb[0].mxu0
      %v3997 = vadd.f32 0.0, %v3996
      %3998 = vdwg.mxu0
      %3999 = vmatprep.subr.mxu0 %v3873
      %4000 = vmatpush1.msra.mxu0 %v3872
      %4001 = vmatprep.subr.mxu0 %v3911
      %4002 = vmatpush1.msra.mxu0 %v3909
      %4003 = vmatprep.subr.mxu0 0.0
      %4004 = vmatpush1.msra.mxu0 0.0
      %4005 = vmatprep.subr.mxu0 0.0
      %4006 = vmatpush1.msra.mxu0 0.0
      %4007 = vmatprep.subr.mxu0 0.0
      %4008 = vmatpush1.msra.mxu0 0.0
      %4009 = vmatprep.subr.mxu0 0.0
      %4010 = vmatpush1.msra.mxu0 0.0
      %4011 = vmatprep.subr.mxu0 0.0
      %4012 = vmatpush1.msra.mxu0 0.0
      %4013 = vmatprep.subr.mxu0 0.0
      %4014 = vmatpush1.msra.mxu0 0.0
      %4015 = vmatprep.subr.mxu0 0.0
      %4016 = vmatpush1.msra.mxu0 0.0
      %4017 = vmatprep.subr.mxu0 0.0
      %4018 = vmatpush1.msra.mxu0 0.0
      %4019 = vmatprep.subr.mxu0 0.0
      %4020 = vmatpush1.msra.mxu0 0.0
      %4021 = vmatprep.subr.mxu0 0.0
      %4022 = vmatpush1.msra.mxu0 0.0
      %4023 = vmatprep.subr.mxu0 0.0
      %4024 = vmatpush1.msra.mxu0 0.0
      %4025 = vmatprep.subr.mxu0 0.0
      %4026 = vmatpush1.msra.mxu0 0.0
      %4027 = vmatprep.subr.mxu0 0.0
      %4028 = vmatpush1.msra.mxu0 0.0
      %4029 = vmatprep.subr.mxu0 0.0
      %4030 = vmatpush1.msra.mxu0 0.0
      %4031 = vmatprep.subr.mxu0 0.0
      %4032 = vmatpush1.msra.mxu0 0.0
      %4033 = vmatprep.subr.mxu0 0.0
      %4034 = vmatpush1.msra.mxu0 0.0
      %4035 = vmatprep.subr.mxu0 0.0
      %4036 = vmatpush1.msra.mxu0 0.0
      %4037 = vmatprep.subr.mxu0 0.0
      %4038 = vmatpush1.msra.mxu0 0.0
      %4039 = vmatprep.subr.mxu0 0.0
      %4040 = vmatpush1.msra.mxu0 0.0
      %4041 = vmatprep.subr.mxu0 0.0
      %4042 = vmatpush1.msra.mxu0 0.0
      %4043 = vmatprep.subr.mxu0 0.0
      %4044 = vmatpush1.msra.mxu0 0.0
      %4045 = vmatprep.subr.mxu0 0.0
      %4046 = vmatpush1.msra.mxu0 0.0
      %4047 = vmatprep.subr.mxu0 0.0
      %4048 = vmatpush1.msra.mxu0 0.0
      %4049 = vmatprep.subr.mxu0 0.0
      %4050 = vmatpush1.msra.mxu0 0.0
      %4051 = vmatprep.subr.mxu0 0.0
      %4052 = vmatpush1.msra.mxu0 0.0
      %4053 = vmatprep.subr.mxu0 0.0
      %4054 = vmatpush1.msra.mxu0 0.0
      %4055 = vmatprep.subr.mxu0 0.0
      %4056 = vmatpush1.msra.mxu0 0.0
      %4057 = vmatprep.subr.mxu0 0.0
      %4058 = vmatpush1.msra.mxu0 0.0
      %4059 = vmatprep.subr.mxu0 0.0
      %4060 = vmatpush1.msra.mxu0 0.0
      %4061 = vmatprep.subr.mxu0 0.0
      %4062 = vmatpush1.msra.mxu0 0.0
      %4063 = vmatprep.mubr.f32.mxu0 0.0
      %4064 = vmatmul.mubr.f32.gmra.mrb[0].mxu0 %v3899
      %v4065 = vpop.f32.mrb[0].mxu0
      %v4066 = vadd.f32 0.0, %v4065
      %v4067 = vpop.f32.mrb[0].mxu0
      %v4068 = vadd.f32 0.0, %v4067
      %4069 = vmatprep.mubr.f32.mxu0 0.0
      %4070 = vmatmul.mubr.f32.gmra.mrb[0].mxu0 %v3902
      %v4071 = vpop.f32.mrb[0].mxu0
      %v4072 = vadd.f32 0.0, %v4071
      %v4073 = vpop.f32.mrb[0].mxu0
      %v4074 = vadd.f32 0.0, %v4073
      %4075 = vdwg.mxu0
      %4076 = vmatprep.subr.mxu0 %v3875
      %4077 = vmatpush1.msra.mxu0 %v3874
      %4078 = vmatprep.subr.mxu0 %v3915
      %4079 = vmatpush1.msra.mxu0 %v3913
      %4080 = vmatprep.subr.mxu0 0.0
      %4081 = vmatpush1.msra.mxu0 0.0
      %4082 = vmatprep.subr.mxu0 0.0
      %4083 = vmatpush1.msra.mxu0 0.0
      %4084 = vmatprep.subr.mxu0 0.0
      %4085 = vmatpush1.msra.mxu0 0.0
      %4086 = vmatprep.subr.mxu0 0.0
      %4087 = vmatpush1.msra.mxu0 0.0
      %4088 = vmatprep.subr.mxu0 0.0
      %4089 = vmatpush1.msra.mxu0 0.0
      %4090 = vmatprep.subr.mxu0 0.0
      %4091 = vmatpush1.msra.mxu0 0.0
      %4092 = vmatprep.subr.mxu0 0.0
      %4093 = vmatpush1.msra.mxu0 0.0
      %4094 = vmatprep.subr.mxu0 0.0
      %4095 = vmatpush1.msra.mxu0 0.0
      %4096 = vmatprep.subr.mxu0 0.0
      %4097 = vmatpush1.msra.mxu0 0.0
      %4098 = vmatprep.subr.mxu0 0.0
      %4099 = vmatpush1.msra.mxu0 0.0
      %4100 = vmatprep.subr.mxu0 0.0
      %4101 = vmatpush1.msra.mxu0 0.0
      %4102 = vmatprep.subr.mxu0 0.0
      %4103 = vmatpush1.msra.mxu0 0.0
      %4104 = vmatprep.subr.mxu0 0.0
      %4105 = vmatpush1.msra.mxu0 0.0
      %4106 = vmatprep.subr.mxu0 0.0
      %4107 = vmatpush1.msra.mxu0 0.0
      %4108 = vmatprep.subr.mxu0 0.0
      %4109 = vmatpush1.msra.mxu0 0.0
      %4110 = vmatprep.subr.mxu0 0.0
      %4111 = vmatpush1.msra.mxu0 0.0
      %4112 = vmatprep.subr.mxu0 0.0
      %4113 = vmatpush1.msra.mxu0 0.0
      %4114 = vmatprep.subr.mxu0 0.0
      %4115 = vmatpush1.msra.mxu0 0.0
      %4116 = vmatprep.subr.mxu0 0.0
      %4117 = vmatpush1.msra.mxu0 0.0
      %4118 = vmatprep.subr.mxu0 0.0
      %4119 = vmatpush1.msra.mxu0 0.0
      %4120 = vmatprep.subr.mxu0 0.0
      %4121 = vmatpush1.msra.mxu0 0.0
      %4122 = vmatprep.subr.mxu0 0.0
      %4123 = vmatpush1.msra.mxu0 0.0
      %4124 = vmatprep.subr.mxu0 0.0
      %4125 = vmatpush1.msra.mxu0 0.0
      %4126 = vmatprep.subr.mxu0 0.0
      %4127 = vmatpush1.msra.mxu0 0.0
      %4128 = vmatprep.subr.mxu0 0.0
      %4129 = vmatpush1.msra.mxu0 0.0
      %4130 = vmatprep.subr.mxu0 0.0
      %4131 = vmatpush1.msra.mxu0 0.0
      %4132 = vmatprep.subr.mxu0 0.0
      %4133 = vmatpush1.msra.mxu0 0.0
      %4134 = vmatprep.subr.mxu0 0.0
      %4135 = vmatpush1.msra.mxu0 0.0
      %4136 = vmatprep.subr.mxu0 0.0
      %4137 = vmatpush1.msra.mxu0 0.0
      %4138 = vmatprep.subr.mxu0 0.0
      %4139 = vmatpush1.msra.mxu0 0.0
      %4140 = vmatprep.mubr.f32.mxu0 0.0
      %4141 = vmatmul.mubr.f32.gmra.mrb[0].mxu0 %v3899
      %v4142 = vpop.f32.mrb[0].mxu0
      %v4143 = vadd.f32 0.0, %v4142
      %v4144 = vpop.f32.mrb[0].mxu0
      %v4145 = vadd.f32 0.0, %v4144
      %4146 = vmatprep.mubr.f32.mxu0 0.0
      %4147 = vmatmul.mubr.f32.gmra.mrb[0].mxu0 %v3902
      %v4148 = vpop.f32.mrb[0].mxu0
      %v4149 = vadd.f32 0.0, %v4148
      %v4150 = vpop.f32.mrb[0].mxu0
      %v4151 = vadd.f32 0.0, %v4150
      %4152 = vdwg.mxu0
      %4153 = vmatprep.subr.mxu0 %v3895
      %4154 = vmatpush1.msra.mxu0 %v3876
      %4155 = vmatprep.subr.mxu0 %v3920
      %4156 = vmatpush1.msra.mxu0 %v3917
      %4157 = vmatprep.subr.mxu0 0.0
      %4158 = vmatpush1.msra.mxu0 0.0
      %4159 = vmatprep.subr.mxu0 0.0
      %4160 = vmatpush1.msra.mxu0 0.0
      %4161 = vmatprep.subr.mxu0 0.0
      %4162 = vmatpush1.msra.mxu0 0.0
      %4163 = vmatprep.subr.mxu0 0.0
      %4164 = vmatpush1.msra.mxu0 0.0
      %4165 = vmatprep.subr.mxu0 0.0
      %4166 = vmatpush1.msra.mxu0 0.0
      %4167 = vmatprep.subr.mxu0 0.0
      %4168 = vmatpush1.msra.mxu0 0.0
      %4169 = vmatprep.subr.mxu0 0.0
      %4170 = vmatpush1.msra.mxu0 0.0
      %4171 = vmatprep.subr.mxu0 0.0
      %4172 = vmatpush1.msra.mxu0 0.0
      %4173 = vmatprep.subr.mxu0 0.0
      %4174 = vmatpush1.msra.mxu0 0.0
      %4175 = vmatprep.subr.mxu0 0.0
      %4176 = vmatpush1.msra.mxu0 0.0
      %4177 = vmatprep.subr.mxu0 0.0
      %4178 = vmatpush1.msra.mxu0 0.0
      %4179 = vmatprep.subr.mxu0 0.0
      %4180 = vmatpush1.msra.mxu0 0.0
      %4181 = vmatprep.subr.mxu0 0.0
      %4182 = vmatpush1.msra.mxu0 0.0
      %4183 = vmatprep.subr.mxu0 0.0
      %4184 = vmatpush1.msra.mxu0 0.0
      %4185 = vmatprep.subr.mxu0 0.0
      %4186 = vmatpush1.msra.mxu0 0.0
      %4187 = vmatprep.subr.mxu0 0.0
      %4188 = vmatpush1.msra.mxu0 0.0
      %4189 = vmatprep.subr.mxu0 0.0
      %4190 = vmatpush1.msra.mxu0 0.0
      %4191 = vmatprep.subr.mxu0 0.0
      %4192 = vmatpush1.msra.mxu0 0.0
      %4193 = vmatprep.subr.mxu0 0.0
      %4194 = vmatpush1.msra.mxu0 0.0
      %4195 = vmatprep.subr.mxu0 0.0
      %4196 = vmatpush1.msra.mxu0 0.0
      %4197 = vmatprep.subr.mxu0 0.0
      %4198 = vmatpush1.msra.mxu0 0.0
      %4199 = vmatprep.subr.mxu0 0.0
      %4200 = vmatpush1.msra.mxu0 0.0
      %4201 = vmatprep.subr.mxu0 0.0
      %4202 = vmatpush1.msra.mxu0 0.0
      %4203 = vmatprep.subr.mxu0 0.0
      %4204 = vmatpush1.msra.mxu0 0.0
      %4205 = vmatprep.subr.mxu0 0.0
      %4206 = vmatpush1.msra.mxu0 0.0
      %4207 = vmatprep.subr.mxu0 0.0
      %4208 = vmatpush1.msra.mxu0 0.0
      %4209 = vmatprep.subr.mxu0 0.0
      %4210 = vmatpush1.msra.mxu0 0.0
      %4211 = vmatprep.subr.mxu0 0.0
      %4212 = vmatpush1.msra.mxu0 0.0
      %4213 = vmatprep.subr.mxu0 0.0
      %4214 = vmatpush1.msra.mxu0 0.0
      %4215 = vmatprep.subr.mxu0 0.0
      %4216 = vmatpush1.msra.mxu0 0.0
      %4217 = vmatprep.mubr.f32.mxu0 0.0
      %4218 = vmatmul.mubr.f32.gmra.mrb[0].mxu0 %v3899
      %v4219 = vpop.f32.mrb[0].mxu0
      %v4220 = vadd.f32 0.0, %v4219
      %v4221 = vpop.f32.mrb[0].mxu0
      %v4222 = vadd.f32 0.0, %v4221
      %4223 = vmatprep.mubr.f32.mxu0 0.0
      %4224 = vmatmul.mubr.f32.gmra.mrb[0].mxu0 %v3902
      %v4225 = vpop.f32.mrb[0].mxu0
      %v4226 = vadd.f32 0.0, %v4225
      %v4227 = vpop.f32.mrb[0].mxu0
      %v4228 = vadd.f32 0.0, %v4227
      %4229 = vdwg.mxu0
      %v4231 = vsel %vm3897, %v3816, 0
      %v4234 = vsel %vm3897, %v3817, 0
      %v4236 = vsel %vm3904, %v3808, 0
      %v4238 = vsel %vm3904, %v3809, 0
      %v4240 = vsel %vm3904, %v3810, 0
      %v4242 = vsel %vm3904, %v3811, 0
      %v4244 = vsel %vm3904, %v3812, 0
      %v4246 = vsel %vm3904, %v3813, 0
      %v4248 = vsel %vm3904, %v3814, 0
      %v4250 = vsel %vm3904, %v3815, 0
      %4252 = vmatprep.subr.mxu0 %v3801
      %4253 = vmatpush1.msra.mxu0 %v3800
      %4254 = vmatprep.subr.mxu0 %v4238
      %4255 = vmatpush1.msra.mxu0 %v4236
      %4256 = vmatprep.subr.mxu0 0.0
      %4257 = vmatpush1.msra.mxu0 0.0
      %4258 = vmatprep.subr.mxu0 0.0
      %4259 = vmatpush1.msra.mxu0 0.0
      %4260 = vmatprep.subr.mxu0 0.0
      %4261 = vmatpush1.msra.mxu0 0.0
      %4262 = vmatprep.subr.mxu0 0.0
      %4263 = vmatpush1.msra.mxu0 0.0
      %4264 = vmatprep.subr.mxu0 0.0
      %4265 = vmatpush1.msra.mxu0 0.0
      %4266 = vmatprep.subr.mxu0 0.0
      %4267 = vmatpush1.msra.mxu0 0.0
      %4268 = vmatprep.subr.mxu0 0.0
      %4269 = vmatpush1.msra.mxu0 0.0
      %4270 = vmatprep.subr.mxu0 0.0
      %4271 = vmatpush1.msra.mxu0 0.0
      %4272 = vmatprep.subr.mxu0 0.0
      %4273 = vmatpush1.msra.mxu0 0.0
      %4274 = vmatprep.subr.mxu0 0.0
      %4275 = vmatpush1.msra.mxu0 0.0
      %4276 = vmatprep.subr.mxu0 0.0
      %4277 = vmatpush1.msra.mxu0 0.0
      %4278 = vmatprep.subr.mxu0 0.0
      %4279 = vmatpush1.msra.mxu0 0.0
      %4280 = vmatprep.subr.mxu0 0.0
      %4281 = vmatpush1.msra.mxu0 0.0
      %4282 = vmatprep.subr.mxu0 0.0
      %4283 = vmatpush1.msra.mxu0 0.0
      %4284 = vmatprep.subr.mxu0 0.0
      %4285 = vmatpush1.msra.mxu0 0.0
      %4286 = vmatprep.subr.mxu0 0.0
      %4287 = vmatpush1.msra.mxu0 0.0
      %4288 = vmatprep.subr.mxu0 0.0
      %4289 = vmatpush1.msra.mxu0 0.0
      %4290 = vmatprep.subr.mxu0 0.0
      %4291 = vmatpush1.msra.mxu0 0.0
      %4292 = vmatprep.subr.mxu0 0.0
      %4293 = vmatpush1.msra.mxu0 0.0
      %4294 = vmatprep.subr.mxu0 0.0
      %4295 = vmatpush1.msra.mxu0 0.0
      %4296 = vmatprep.subr.mxu0 0.0
      %4297 = vmatpush1.msra.mxu0 0.0
      %4298 = vmatprep.subr.mxu0 0.0
      %4299 = vmatpush1.msra.mxu0 0.0
      %4300 = vmatprep.subr.mxu0 0.0
      %4301 = vmatpush1.msra.mxu0 0.0
      %4302 = vmatprep.subr.mxu0 0.0
      %4303 = vmatpush1.msra.mxu0 0.0
      %4304 = vmatprep.subr.mxu0 0.0
      %4305 = vmatpush1.msra.mxu0 0.0
      %4306 = vmatprep.subr.mxu0 0.0
      %4307 = vmatpush1.msra.mxu0 0.0
      %4308 = vmatprep.subr.mxu0 0.0
      %4309 = vmatpush1.msra.mxu0 0.0
      %4310 = vmatprep.subr.mxu0 0.0
      %4311 = vmatpush1.msra.mxu0 0.0
      %4312 = vmatprep.subr.mxu0 0.0
      %4313 = vmatpush1.msra.mxu0 0.0
      %4314 = vmatprep.subr.mxu0 0.0
      %4315 = vmatpush1.msra.mxu0 0.0
      %4316 = vmatprep.mubr.f32.mxu0 0.0
      %4317 = vmatmul.mubr.f32.gmra.mrb[0].mxu0 %v4231
      %v4318 = vpop.f32.mrb[0].mxu0
      %v4319 = vadd.f32 %v3989, %v4318
      %v4320 = vpop.f32.mrb[0].mxu0
      %v4321 = vadd.f32 %v3991, %v4320
      %4322 = vmatprep.mubr.f32.mxu0 0.0
      %4323 = vmatmul.mubr.f32.gmra.mrb[0].mxu0 %v4234
      %v4324 = vpop.f32.mrb[0].mxu0
      %v4325 = vadd.f32 %v3995, %v4324
      %v4326 = vpop.f32.mrb[0].mxu0
      %v4327 = vadd.f32 %v3997, %v4326
      %4328 = vdwg.mxu0
      %4329 = vmatprep.subr.mxu0 %v3803
      %4330 = vmatpush1.msra.mxu0 %v3802
      %4331 = vmatprep.subr.mxu0 %v4242
      %4332 = vmatpush1.msra.mxu0 %v4240
      %4333 = vmatprep.subr.mxu0 0.0
      %4334 = vmatpush1.msra.mxu0 0.0
      %4335 = vmatprep.subr.mxu0 0.0
      %4336 = vmatpush1.msra.mxu0 0.0
      %4337 = vmatprep.subr.mxu0 0.0
      %4338 = vmatpush1.msra.mxu0 0.0
      %4339 = vmatprep.subr.mxu0 0.0
      %4340 = vmatpush1.msra.mxu0 0.0
      %4341 = vmatprep.subr.mxu0 0.0
      %4342 = vmatpush1.msra.mxu0 0.0
      %4343 = vmatprep.subr.mxu0 0.0
      %4344 = vmatpush1.msra.mxu0 0.0
      %4345 = vmatprep.subr.mxu0 0.0
      %4346 = vmatpush1.msra.mxu0 0.0
      %4347 = vmatprep.subr.mxu0 0.0
      %4348 = vmatpush1.msra.mxu0 0.0
      %4349 = vmatprep.subr.mxu0 0.0
      %4350 = vmatpush1.msra.mxu0 0.0
      %4351 = vmatprep.subr.mxu0 0.0
      %4352 = vmatpush1.msra.mxu0 0.0
      %4353 = vmatprep.subr.mxu0 0.0
      %4354 = vmatpush1.msra.mxu0 0.0
      %4355 = vmatprep.subr.mxu0 0.0
      %4356 = vmatpush1.msra.mxu0 0.0
      %4357 = vmatprep.subr.mxu0 0.0
      %4358 = vmatpush1.msra.mxu0 0.0
      %4359 = vmatprep.subr.mxu0 0.0
      %4360 = vmatpush1.msra.mxu0 0.0
      %4361 = vmatprep.subr.mxu0 0.0
      %4362 = vmatpush1.msra.mxu0 0.0
      %4363 = vmatprep.subr.mxu0 0.0
      %4364 = vmatpush1.msra.mxu0 0.0
      %4365 = vmatprep.subr.mxu0 0.0
      %4366 = vmatpush1.msra.mxu0 0.0
      %4367 = vmatprep.subr.mxu0 0.0
      %4368 = vmatpush1.msra.mxu0 0.0
      %4369 = vmatprep.subr.mxu0 0.0
      %4370 = vmatpush1.msra.mxu0 0.0
      %4371 = vmatprep.subr.mxu0 0.0
      %4372 = vmatpush1.msra.mxu0 0.0
      %4373 = vmatprep.subr.mxu0 0.0
      %4374 = vmatpush1.msra.mxu0 0.0
      %4375 = vmatprep.subr.mxu0 0.0
      %4376 = vmatpush1.msra.mxu0 0.0
      %4377 = vmatprep.subr.mxu0 0.0
      %4378 = vmatpush1.msra.mxu0 0.0
      %4379 = vmatprep.subr.mxu0 0.0
      %4380 = vmatpush1.msra.mxu0 0.0
      %4381 = vmatprep.subr.mxu0 0.0
      %4382 = vmatpush1.msra.mxu0 0.0
      %4383 = vmatprep.subr.mxu0 0.0
      %4384 = vmatpush1.msra.mxu0 0.0
      %4385 = vmatprep.subr.mxu0 0.0
      %4386 = vmatpush1.msra.mxu0 0.0
      %4387 = vmatprep.subr.mxu0 0.0
      %4388 = vmatpush1.msra.mxu0 0.0
      %4389 = vmatprep.subr.mxu0 0.0
      %4390 = vmatpush1.msra.mxu0 0.0
      %4391 = vmatprep.subr.mxu0 0.0
      %4392 = vmatpush1.msra.mxu0 0.0
      %4393 = vmatprep.mubr.f32.mxu0 0.0
      %4394 = vmatmul.mubr.f32.gmra.mrb[0].mxu0 %v4231
      %v4395 = vpop.f32.mrb[0].mxu0
      %v4396 = vadd.f32 %v4066, %v4395
      %v4397 = vpop.f32.mrb[0].mxu0
      %v4398 = vadd.f32 %v4068, %v4397
      %4399 = vmatprep.mubr.f32.mxu0 0.0
      %4400 = vmatmul.mubr.f32.gmra.mrb[0].mxu0 %v4234
      %v4401 = vpop.f32.mrb[0].mxu0
      %v4402 = vadd.f32 %v4072, %v4401
      %v4403 = vpop.f32.mrb[0].mxu0
      %v4404 = vadd.f32 %v4074, %v4403
      %4405 = vdwg.mxu0
      %4406 = vmatprep.subr.mxu0 %v3805
      %4407 = vmatpush1.msra.mxu0 %v3804
      %4408 = vmatprep.subr.mxu0 %v4246
      %4409 = vmatpush1.msra.mxu0 %v4244
      %4410 = vmatprep.subr.mxu0 0.0
      %4411 = vmatpush1.msra.mxu0 0.0
      %4412 = vmatprep.subr.mxu0 0.0
      %4413 = vmatpush1.msra.mxu0 0.0
      %4414 = vmatprep.subr.mxu0 0.0
      %4415 = vmatpush1.msra.mxu0 0.0
      %4416 = vmatprep.subr.mxu0 0.0
      %4417 = vmatpush1.msra.mxu0 0.0
      %4418 = vmatprep.subr.mxu0 0.0
      %4419 = vmatpush1.msra.mxu0 0.0
      %4420 = vmatprep.subr.mxu0 0.0
      %4421 = vmatpush1.msra.mxu0 0.0
      %4422 = vmatprep.subr.mxu0 0.0
      %4423 = vmatpush1.msra.mxu0 0.0
      %4424 = vmatprep.subr.mxu0 0.0
      %4425 = vmatpush1.msra.mxu0 0.0
      %4426 = vmatprep.subr.mxu0 0.0
      %4427 = vmatpush1.msra.mxu0 0.0
      %4428 = vmatprep.subr.mxu0 0.0
      %4429 = vmatpush1.msra.mxu0 0.0
      %4430 = vmatprep.subr.mxu0 0.0
      %4431 = vmatpush1.msra.mxu0 0.0
      %4432 = vmatprep.subr.mxu0 0.0
      %4433 = vmatpush1.msra.mxu0 0.0
      %4434 = vmatprep.subr.mxu0 0.0
      %4435 = vmatpush1.msra.mxu0 0.0
      %4436 = vmatprep.subr.mxu0 0.0
      %4437 = vmatpush1.msra.mxu0 0.0
      %4438 = vmatprep.subr.mxu0 0.0
      %4439 = vmatpush1.msra.mxu0 0.0
      %4440 = vmatprep.subr.mxu0 0.0
      %4441 = vmatpush1.msra.mxu0 0.0
      %4442 = vmatprep.subr.mxu0 0.0
      %4443 = vmatpush1.msra.mxu0 0.0
      %4444 = vmatprep.subr.mxu0 0.0
      %4445 = vmatpush1.msra.mxu0 0.0
      %4446 = vmatprep.subr.mxu0 0.0
      %4447 = vmatpush1.msra.mxu0 0.0
      %4448 = vmatprep.subr.mxu0 0.0
      %4449 = vmatpush1.msra.mxu0 0.0
      %4450 = vmatprep.subr.mxu0 0.0
      %4451 = vmatpush1.msra.mxu0 0.0
      %4452 = vmatprep.subr.mxu0 0.0
      %4453 = vmatpush1.msra.mxu0 0.0
      %4454 = vmatprep.subr.mxu0 0.0
      %4455 = vmatpush1.msra.mxu0 0.0
      %4456 = vmatprep.subr.mxu0 0.0
      %4457 = vmatpush1.msra.mxu0 0.0
      %4458 = vmatprep.subr.mxu0 0.0
      %4459 = vmatpush1.msra.mxu0 0.0
      %4460 = vmatprep.subr.mxu0 0.0
      %4461 = vmatpush1.msra.mxu0 0.0
      %4462 = vmatprep.subr.mxu0 0.0
      %4463 = vmatpush1.msra.mxu0 0.0
      %4464 = vmatprep.subr.mxu0 0.0
      %4465 = vmatpush1.msra.mxu0 0.0
      %4466 = vmatprep.subr.mxu0 0.0
      %4467 = vmatpush1.msra.mxu0 0.0
      %4468 = vmatprep.subr.mxu0 0.0
      %4469 = vmatpush1.msra.mxu0 0.0
      %4470 = vmatprep.mubr.f32.mxu0 0.0
      %4471 = vmatmul.mubr.f32.gmra.mrb[0].mxu0 %v4231
      %v4472 = vpop.f32.mrb[0].mxu0
      %v4473 = vadd.f32 %v4143, %v4472
      %v4474 = vpop.f32.mrb[0].mxu0
      %v4475 = vadd.f32 %v4145, %v4474
      %4476 = vmatprep.mubr.f32.mxu0 0.0
      %4477 = vmatmul.mubr.f32.gmra.mrb[0].mxu0 %v4234
      %v4478 = vpop.f32.mrb[0].mxu0
      %v4479 = vadd.f32 %v4149, %v4478
      %v4480 = vpop.f32.mrb[0].mxu0
      %v4481 = vadd.f32 %v4151, %v4480
      %4482 = vdwg.mxu0
      %4483 = vmatprep.subr.mxu0 %v3807
      %4484 = vmatpush1.msra.mxu0 %v3806
      %4485 = vmatprep.subr.mxu0 %v4250
      %4486 = vmatpush1.msra.mxu0 %v4248
      %4487 = vmatprep.subr.mxu0 0.0
      %4488 = vmatpush1.msra.mxu0 0.0
      %4489 = vmatprep.subr.mxu0 0.0
      %4490 = vmatpush1.msra.mxu0 0.0
      %4491 = vmatprep.subr.mxu0 0.0
      %4492 = vmatpush1.msra.mxu0 0.0
      %4493 = vmatprep.subr.mxu0 0.0
      %4494 = vmatpush1.msra.mxu0 0.0
      %4495 = vmatprep.subr.mxu0 0.0
      %4496 = vmatpush1.msra.mxu0 0.0
      %4497 = vmatprep.subr.mxu0 0.0
      %4498 = vmatpush1.msra.mxu0 0.0
      %4499 = vmatprep.subr.mxu0 0.0
      %4500 = vmatpush1.msra.mxu0 0.0
      %4501 = vmatprep.subr.mxu0 0.0
      %4502 = vmatpush1.msra.mxu0 0.0
      %4503 = vmatprep.subr.mxu0 0.0
      %4504 = vmatpush1.msra.mxu0 0.0
      %4505 = vmatprep.subr.mxu0 0.0
      %4506 = vmatpush1.msra.mxu0 0.0
      %4507 = vmatprep.subr.mxu0 0.0
      %4508 = vmatpush1.msra.mxu0 0.0
      %4509 = vmatprep.subr.mxu0 0.0
      %4510 = vmatpush1.msra.mxu0 0.0
      %4511 = vmatprep.subr.mxu0 0.0
      %4512 = vmatpush1.msra.mxu0 0.0
      %4513 = vmatprep.subr.mxu0 0.0
      %4514 = vmatpush1.msra.mxu0 0.0
      %4515 = vmatprep.subr.mxu0 0.0
      %4516 = vmatpush1.msra.mxu0 0.0
      %4517 = vmatprep.subr.mxu0 0.0
      %4518 = vmatpush1.msra.mxu0 0.0
      %4519 = vmatprep.subr.mxu0 0.0
      %4520 = vmatpush1.msra.mxu0 0.0
      %4521 = vmatprep.subr.mxu0 0.0
      %4522 = vmatpush1.msra.mxu0 0.0
      %4523 = vmatprep.subr.mxu0 0.0
      %4524 = vmatpush1.msra.mxu0 0.0
      %4525 = vmatprep.subr.mxu0 0.0
      %4526 = vmatpush1.msra.mxu0 0.0
      %4527 = vmatprep.subr.mxu0 0.0
      %4528 = vmatpush1.msra.mxu0 0.0
      %4529 = vmatprep.subr.mxu0 0.0
      %4530 = vmatpush1.msra.mxu0 0.0
      %4531 = vmatprep.subr.mxu0 0.0
      %4532 = vmatpush1.msra.mxu0 0.0
      %4533 = vmatprep.subr.mxu0 0.0
      %4534 = vmatpush1.msra.mxu0 0.0
      %4535 = vmatprep.subr.mxu0 0.0
      %4536 = vmatpush1.msra.mxu0 0.0
      %4537 = vmatprep.subr.mxu0 0.0
      %4538 = vmatpush1.msra.mxu0 0.0
      %4539 = vmatprep.subr.mxu0 0.0
      %4540 = vmatpush1.msra.mxu0 0.0
      %4541 = vmatprep.subr.mxu0 0.0
      %4542 = vmatpush1.msra.mxu0 0.0
      %4543 = vmatprep.subr.mxu0 0.0
      %4544 = vmatpush1.msra.mxu0 0.0
      %4545 = vmatprep.subr.mxu0 0.0
      %4546 = vmatpush1.msra.mxu0 0.0
      %4547 = vmatprep.mubr.f32.mxu0 0.0
      %4548 = vmatmul.mubr.f32.gmra.mrb[0].mxu0 %v4231
      %v4549 = vpop.f32.mrb[0].mxu0
      %v4550 = vadd.f32 %v4220, %v4549
      %v4551 = vpop.f32.mrb[0].mxu0
      %v4552 = vadd.f32 %v4222, %v4551
      %4553 = vmatprep.mubr.f32.mxu0 0.0
      %4554 = vmatmul.mubr.f32.gmra.mrb[0].mxu0 %v4234
      %v4555 = vpop.f32.mrb[0].mxu0
      %v4556 = vadd.f32 %v4226, %v4555
      %v4557 = vpop.f32.mrb[0].mxu0
      %v4558 = vadd.f32 %v4228, %v4557
      %4559 = vdwg.mxu0
      %s4560 = scalar_lea.vmem %s3, 32
      %v4561 = vld [vmem:[%s4560] sm:$0xff]
      %v4562 = vld [vmem:[%s4560 + $0x8] sm:$0x3]
      %4563 = vrot.lane.b32.xlu0 %v3800, 124
      %v4564 = vpop.permute.xlu0 %4563
      %4565 = vrot.lane.b32.xlu0 %v3801, 124
      %v4566 = vpop.permute.xlu0 %4565
      %4567 = vrot.lane.b32.xlu0 %v3802, 124
      %v4568 = vpop.permute.xlu0 %4567
      %4569 = vrot.lane.b32.xlu0 %v3803, 124
      %v4570 = vpop.permute.xlu0 %4569
      %4571 = vrot.lane.b32.xlu0 %v3804, 124
      %v4572 = vpop.permute.xlu0 %4571
      %4573 = vrot.lane.b32.xlu0 %v3805, 124
      %v4574 = vpop.permute.xlu0 %4573
      %4575 = vrot.lane.b32.xlu0 %v3806, 124
      %v4576 = vpop.permute.xlu0 %4575
      %4577 = vrot.lane.b32.xlu0 %v3807, 124
      %v4578 = vpop.permute.xlu0 %4577
      %4579 = vrot.lane.b32.xlu0 %v3808, 124
      %v4580 = vpop.permute.xlu0 %4579
      %4581 = vrot.lane.b32.xlu0 %v3809, 124
      %v4582 = vpop.permute.xlu0 %4581
      %4583 = vrot.lane.b32.xlu0 %v3810, 124
      %v4584 = vpop.permute.xlu0 %4583
      %4585 = vrot.lane.b32.xlu0 %v3811, 124
      %v4586 = vpop.permute.xlu0 %4585
      %4587 = vrot.lane.b32.xlu0 %v3812, 124
      %v4588 = vpop.permute.xlu0 %4587
      %4589 = vrot.lane.b32.xlu0 %v3813, 124
      %v4590 = vpop.permute.xlu0 %4589
      %4591 = vrot.lane.b32.xlu0 %v3814, 124
      %v4592 = vpop.permute.xlu0 %4591
      %4593 = vrot.lane.b32.xlu0 %v3815, 124
      %v4594 = vpop.permute.xlu0 %4593
      %vm4595 = vcmask 1014784
      %v4596 = vsel %vm4595, %v4564, %v4566
      %v4597 = vsel %vm4595, %v4566, %v4568
      %v4598 = vsel %vm4595, %v4568, %v4570
      %v4599 = vsel %vm4595, %v4570, %v4572
      %v4600 = vsel %vm4595, %v4572, %v4574
      %v4601 = vsel %vm4595, %v4574, %v4576
      %v4602 = vsel %vm4595, %v4576, %v4578
      %v4603 = vsel %vm4595, %v4580, %v4582
      %v4604 = vsel %vm4595, %v4582, %v4584
      %v4605 = vsel %vm4595, %v4584, %v4586
      %v4606 = vsel %vm4595, %v4586, %v4588
      %v4607 = vsel %vm4595, %v4588, %v4590
      %v4608 = vsel %vm4595, %v4590, %v4592
      %v4609 = vsel %vm4595, %v4592, %v4594
      %v4621 = vsel %vm4595, %v4578, %v4564
      %v4622 = vsel %vm4595, %v4594, %v4580
      %v4624 = vsel %vm3897, %v4561, 0
      %v4627 = vsel %vm3897, %v4562, 0
      %v4629 = vsel %vm3904, %v4603, 0
      %v4631 = vsel %vm3904, %v4604, 0
      %v4633 = vsel %vm3904, %v4605, 0
      %v4635 = vsel %vm3904, %v4606, 0
      %v4637 = vsel %vm3904, %v4607, 0
      %v4639 = vsel %vm3904, %v4608, 0
      %v4641 = vsel %vm3904, %v4609, 0
      %v4644 = vsel %vm3904, %v4622, 0
      %4646 = vmatprep.subr.mxu0 %v4597
      %4647 = vmatpush1.msra.mxu0 %v4596
      %4648 = vmatprep.subr.mxu0 %v4631
      %4649 = vmatpush1.msra.mxu0 %v4629
      %4650 = vmatprep.subr.mxu0 0.0
      %4651 = vmatpush1.msra.mxu0 0.0
      %4652 = vmatprep.subr.mxu0 0.0
      %4653 = vmatpush1.msra.mxu0 0.0
      %4654 = vmatprep.subr.mxu0 0.0
      %4655 = vmatpush1.msra.mxu0 0.0
      %4656 = vmatprep.subr.mxu0 0.0
      %4657 = vmatpush1.msra.mxu0 0.0
      %4658 = vmatprep.subr.mxu0 0.0
      %4659 = vmatpush1.msra.mxu0 0.0
      %4660 = vmatprep.subr.mxu0 0.0
      %4661 = vmatpush1.msra.mxu0 0.0
      %4662 = vmatprep.subr.mxu0 0.0
      %4663 = vmatpush1.msra.mxu0 0.0
      %4664 = vmatprep.subr.mxu0 0.0
      %4665 = vmatpush1.msra.mxu0 0.0
      %4666 = vmatprep.subr.mxu0 0.0
      %4667 = vmatpush1.msra.mxu0 0.0
      %4668 = vmatprep.subr.mxu0 0.0
      %4669 = vmatpush1.msra.mxu0 0.0
      %4670 = vmatprep.subr.mxu0 0.0
      %4671 = vmatpush1.msra.mxu0 0.0
      %4672 = vmatprep.subr.mxu0 0.0
      %4673 = vmatpush1.msra.mxu0 0.0
      %4674 = vmatprep.subr.mxu0 0.0
      %4675 = vmatpush1.msra.mxu0 0.0
      %4676 = vmatprep.subr.mxu0 0.0
      %4677 = vmatpush1.msra.mxu0 0.0
      %4678 = vmatprep.subr.mxu0 0.0
      %4679 = vmatpush1.msra.mxu0 0.0
      %4680 = vmatprep.subr.mxu0 0.0
      %4681 = vmatpush1.msra.mxu0 0.0
      %4682 = vmatprep.subr.mxu0 0.0
      %4683 = vmatpush1.msra.mxu0 0.0
      %4684 = vmatprep.subr.mxu0 0.0
      %4685 = vmatpush1.msra.mxu0 0.0
      %4686 = vmatprep.subr.mxu0 0.0
      %4687 = vmatpush1.msra.mxu0 0.0
      %4688 = vmatprep.subr.mxu0 0.0
      %4689 = vmatpush1.msra.mxu0 0.0
      %4690 = vmatprep.subr.mxu0 0.0
      %4691 = vmatpush1.msra.mxu0 0.0
      %4692 = vmatprep.subr.mxu0 0.0
      %4693 = vmatpush1.msra.mxu0 0.0
      %4694 = vmatprep.subr.mxu0 0.0
      %4695 = vmatpush1.msra.mxu0 0.0
      %4696 = vmatprep.subr.mxu0 0.0
      %4697 = vmatpush1.msra.mxu0 0.0
      %4698 = vmatprep.subr.mxu0 0.0
      %4699 = vmatpush1.msra.mxu0 0.0
      %4700 = vmatprep.subr.mxu0 0.0
      %4701 = vmatpush1.msra.mxu0 0.0
      %4702 = vmatprep.subr.mxu0 0.0
      %4703 = vmatpush1.msra.mxu0 0.0
      %4704 = vmatprep.subr.mxu0 0.0
      %4705 = vmatpush1.msra.mxu0 0.0
      %4706 = vmatprep.subr.mxu0 0.0
      %4707 = vmatpush1.msra.mxu0 0.0
      %4708 = vmatprep.subr.mxu0 0.0
      %4709 = vmatpush1.msra.mxu0 0.0
      %4710 = vmatprep.mubr.f32.mxu0 0.0
      %4711 = vmatmul.mubr.f32.gmra.mrb[0].mxu0 %v4624
      %v4712 = vpop.f32.mrb[0].mxu0
      %v4713 = vadd.f32 0.0, %v4712
      %v4714 = vpop.f32.mrb[0].mxu0
      %v4715 = vadd.f32 0.0, %v4714
      %4716 = vmatprep.mubr.f32.mxu0 0.0
      %4717 = vmatmul.mubr.f32.gmra.mrb[0].mxu0 %v4627
      %v4718 = vpop.f32.mrb[0].mxu0
      %v4719 = vadd.f32 0.0, %v4718
      %v4720 = vpop.f32.mrb[0].mxu0
      %v4721 = vadd.f32 0.0, %v4720
      %4722 = vdwg.mxu0
      %4723 = vmatprep.subr.mxu0 %v4599
      %4724 = vmatpush1.msra.mxu0 %v4598
      %4725 = vmatprep.subr.mxu0 %v4635
      %4726 = vmatpush1.msra.mxu0 %v4633
      %4727 = vmatprep.subr.mxu0 0.0
      %4728 = vmatpush1.msra.mxu0 0.0
      %4729 = vmatprep.subr.mxu0 0.0
      %4730 = vmatpush1.msra.mxu0 0.0
      %4731 = vmatprep.subr.mxu0 0.0
      %4732 = vmatpush1.msra.mxu0 0.0
      %4733 = vmatprep.subr.mxu0 0.0
      %4734 = vmatpush1.msra.mxu0 0.0
      %4735 = vmatprep.subr.mxu0 0.0
      %4736 = vmatpush1.msra.mxu0 0.0
      %4737 = vmatprep.subr.mxu0 0.0
      %4738 = vmatpush1.msra.mxu0 0.0
      %4739 = vmatprep.subr.mxu0 0.0
      %4740 = vmatpush1.msra.mxu0 0.0
      %4741 = vmatprep.subr.mxu0 0.0
      %4742 = vmatpush1.msra.mxu0 0.0
      %4743 = vmatprep.subr.mxu0 0.0
      %4744 = vmatpush1.msra.mxu0 0.0
      %4745 = vmatprep.subr.mxu0 0.0
      %4746 = vmatpush1.msra.mxu0 0.0
      %4747 = vmatprep.subr.mxu0 0.0
      %4748 = vmatpush1.msra.mxu0 0.0
      %4749 = vmatprep.subr.mxu0 0.0
      %4750 = vmatpush1.msra.mxu0 0.0
      %4751 = vmatprep.subr.mxu0 0.0
      %4752 = vmatpush1.msra.mxu0 0.0
      %4753 = vmatprep.subr.mxu0 0.0
      %4754 = vmatpush1.msra.mxu0 0.0
      %4755 = vmatprep.subr.mxu0 0.0
      %4756 = vmatpush1.msra.mxu0 0.0
      %4757 = vmatprep.subr.mxu0 0.0
      %4758 = vmatpush1.msra.mxu0 0.0
      %4759 = vmatprep.subr.mxu0 0.0
      %4760 = vmatpush1.msra.mxu0 0.0
      %4761 = vmatprep.subr.mxu0 0.0
      %4762 = vmatpush1.msra.mxu0 0.0
      %4763 = vmatprep.subr.mxu0 0.0
      %4764 = vmatpush1.msra.mxu0 0.0
      %4765 = vmatprep.subr.mxu0 0.0
      %4766 = vmatpush1.msra.mxu0 0.0
      %4767 = vmatprep.subr.mxu0 0.0
      %4768 = vmatpush1.msra.mxu0 0.0
      %4769 = vmatprep.subr.mxu0 0.0
      %4770 = vmatpush1.msra.mxu0 0.0
      %4771 = vmatprep.subr.mxu0 0.0
      %4772 = vmatpush1.msra.mxu0 0.0
      %4773 = vmatprep.subr.mxu0 0.0
      %4774 = vmatpush1.msra.mxu0 0.0
      %4775 = vmatprep.subr.mxu0 0.0
      %4776 = vmatpush1.msra.mxu0 0.0
      %4777 = vmatprep.subr.mxu0 0.0
      %4778 = vmatpush1.msra.mxu0 0.0
      %4779 = vmatprep.subr.mxu0 0.0
      %4780 = vmatpush1.msra.mxu0 0.0
      %4781 = vmatprep.subr.mxu0 0.0
      %4782 = vmatpush1.msra.mxu0 0.0
      %4783 = vmatprep.subr.mxu0 0.0
      %4784 = vmatpush1.msra.mxu0 0.0
      %4785 = vmatprep.subr.mxu0 0.0
      %4786 = vmatpush1.msra.mxu0 0.0
      %4787 = vmatprep.mubr.f32.mxu0 0.0
      %4788 = vmatmul.mubr.f32.gmra.mrb[0].mxu0 %v4624
      %v4789 = vpop.f32.mrb[0].mxu0
      %v4790 = vadd.f32 0.0, %v4789
      %v4791 = vpop.f32.mrb[0].mxu0
      %v4792 = vadd.f32 0.0, %v4791
      %4793 = vmatprep.mubr.f32.mxu0 0.0
      %4794 = vmatmul.mubr.f32.gmra.mrb[0].mxu0 %v4627
      %v4795 = vpop.f32.mrb[0].mxu0
      %v4796 = vadd.f32 0.0, %v4795
      %v4797 = vpop.f32.mrb[0].mxu0
      %v4798 = vadd.f32 0.0, %v4797
      %4799 = vdwg.mxu0
      %4800 = vmatprep.subr.mxu0 %v4601
      %4801 = vmatpush1.msra.mxu0 %v4600
      %4802 = vmatprep.subr.mxu0 %v4639
      %4803 = vmatpush1.msra.mxu0 %v4637
      %4804 = vmatprep.subr.mxu0 0.0
      %4805 = vmatpush1.msra.mxu0 0.0
      %4806 = vmatprep.subr.mxu0 0.0
      %4807 = vmatpush1.msra.mxu0 0.0
      %4808 = vmatprep.subr.mxu0 0.0
      %4809 = vmatpush1.msra.mxu0 0.0
      %4810 = vmatprep.subr.mxu0 0.0
      %4811 = vmatpush1.msra.mxu0 0.0
      %4812 = vmatprep.subr.mxu0 0.0
      %4813 = vmatpush1.msra.mxu0 0.0
      %4814 = vmatprep.subr.mxu0 0.0
      %4815 = vmatpush1.msra.mxu0 0.0
      %4816 = vmatprep.subr.mxu0 0.0
      %4817 = vmatpush1.msra.mxu0 0.0
      %4818 = vmatprep.subr.mxu0 0.0
      %4819 = vmatpush1.msra.mxu0 0.0
      %4820 = vmatprep.subr.mxu0 0.0
      %4821 = vmatpush1.msra.mxu0 0.0
      %4822 = vmatprep.subr.mxu0 0.0
      %4823 = vmatpush1.msra.mxu0 0.0
      %4824 = vmatprep.subr.mxu0 0.0
      %4825 = vmatpush1.msra.mxu0 0.0
      %4826 = vmatprep.subr.mxu0 0.0
      %4827 = vmatpush1.msra.mxu0 0.0
      %4828 = vmatprep.subr.mxu0 0.0
      %4829 = vmatpush1.msra.mxu0 0.0
      %4830 = vmatprep.subr.mxu0 0.0
      %4831 = vmatpush1.msra.mxu0 0.0
      %4832 = vmatprep.subr.mxu0 0.0
      %4833 = vmatpush1.msra.mxu0 0.0
      %4834 = vmatprep.subr.mxu0 0.0
      %4835 = vmatpush1.msra.mxu0 0.0
      %4836 = vmatprep.subr.mxu0 0.0
      %4837 = vmatpush1.msra.mxu0 0.0
      %4838 = vmatprep.subr.mxu0 0.0
      %4839 = vmatpush1.msra.mxu0 0.0
      %4840 = vmatprep.subr.mxu0 0.0
      %4841 = vmatpush1.msra.mxu0 0.0
      %4842 = vmatprep.subr.mxu0 0.0
      %4843 = vmatpush1.msra.mxu0 0.0
      %4844 = vmatprep.subr.mxu0 0.0
      %4845 = vmatpush1.msra.mxu0 0.0
      %4846 = vmatprep.subr.mxu0 0.0
      %4847 = vmatpush1.msra.mxu0 0.0
      %4848 = vmatprep.subr.mxu0 0.0
      %4849 = vmatpush1.msra.mxu0 0.0
      %4850 = vmatprep.subr.mxu0 0.0
      %4851 = vmatpush1.msra.mxu0 0.0
      %4852 = vmatprep.subr.mxu0 0.0
      %4853 = vmatpush1.msra.mxu0 0.0
      %4854 = vmatprep.subr.mxu0 0.0
      %4855 = vmatpush1.msra.mxu0 0.0
      %4856 = vmatprep.subr.mxu0 0.0
      %4857 = vmatpush1.msra.mxu0 0.0
      %4858 = vmatprep.subr.mxu0 0.0
      %4859 = vmatpush1.msra.mxu0 0.0
      %4860 = vmatprep.subr.mxu0 0.0
      %4861 = vmatpush1.msra.mxu0 0.0
      %4862 = vmatprep.subr.mxu0 0.0
      %4863 = vmatpush1.msra.mxu0 0.0
      %4864 = vmatprep.mubr.f32.mxu0 0.0
      %4865 = vmatmul.mubr.f32.gmra.mrb[0].mxu0 %v4624
      %v4866 = vpop.f32.mrb[0].mxu0
      %v4867 = vadd.f32 0.0, %v4866
      %v4868 = vpop.f32.mrb[0].mxu0
      %v4869 = vadd.f32 0.0, %v4868
      %4870 = vmatprep.mubr.f32.mxu0 0.0
      %4871 = vmatmul.mubr.f32.gmra.mrb[0].mxu0 %v4627
      %v4872 = vpop.f32.mrb[0].mxu0
      %v4873 = vadd.f32 0.0, %v4872
      %v4874 = vpop.f32.mrb[0].mxu0
      %v4875 = vadd.f32 0.0, %v4874
      %4876 = vdwg.mxu0
      %4877 = vmatprep.subr.mxu0 %v4621
      %4878 = vmatpush1.msra.mxu0 %v4602
      %4879 = vmatprep.subr.mxu0 %v4644
      %4880 = vmatpush1.msra.mxu0 %v4641
      %4881 = vmatprep.subr.mxu0 0.0
      %4882 = vmatpush1.msra.mxu0 0.0
      %4883 = vmatprep.subr.mxu0 0.0
      %4884 = vmatpush1.msra.mxu0 0.0
      %4885 = vmatprep.subr.mxu0 0.0
      %4886 = vmatpush1.msra.mxu0 0.0
      %4887 = vmatprep.subr.mxu0 0.0
      %4888 = vmatpush1.msra.mxu0 0.0
      %4889 = vmatprep.subr.mxu0 0.0
      %4890 = vmatpush1.msra.mxu0 0.0
      %4891 = vmatprep.subr.mxu0 0.0
      %4892 = vmatpush1.msra.mxu0 0.0
      %4893 = vmatprep.subr.mxu0 0.0
      %4894 = vmatpush1.msra.mxu0 0.0
      %4895 = vmatprep.subr.mxu0 0.0
      %4896 = vmatpush1.msra.mxu0 0.0
      %4897 = vmatprep.subr.mxu0 0.0
      %4898 = vmatpush1.msra.mxu0 0.0
      %4899 = vmatprep.subr.mxu0 0.0
      %4900 = vmatpush1.msra.mxu0 0.0
      %4901 = vmatprep.subr.mxu0 0.0
      %4902 = vmatpush1.msra.mxu0 0.0
      %4903 = vmatprep.subr.mxu0 0.0
      %4904 = vmatpush1.msra.mxu0 0.0
      %4905 = vmatprep.subr.mxu0 0.0
      %4906 = vmatpush1.msra.mxu0 0.0
      %4907 = vmatprep.subr.mxu0 0.0
      %4908 = vmatpush1.msra.mxu0 0.0
      %4909 = vmatprep.subr.mxu0 0.0
      %4910 = vmatpush1.msra.mxu0 0.0
      %4911 = vmatprep.subr.mxu0 0.0
      %4912 = vmatpush1.msra.mxu0 0.0
      %4913 = vmatprep.subr.mxu0 0.0
      %4914 = vmatpush1.msra.mxu0 0.0
      %4915 = vmatprep.subr.mxu0 0.0
      %4916 = vmatpush1.msra.mxu0 0.0
      %4917 = vmatprep.subr.mxu0 0.0
      %4918 = vmatpush1.msra.mxu0 0.0
      %4919 = vmatprep.subr.mxu0 0.0
      %4920 = vmatpush1.msra.mxu0 0.0
      %4921 = vmatprep.subr.mxu0 0.0
      %4922 = vmatpush1.msra.mxu0 0.0
      %4923 = vmatprep.subr.mxu0 0.0
      %4924 = vmatpush1.msra.mxu0 0.0
      %4925 = vmatprep.subr.mxu0 0.0
      %4926 = vmatpush1.msra.mxu0 0.0
      %4927 = vmatprep.subr.mxu0 0.0
      %4928 = vmatpush1.msra.mxu0 0.0
      %4929 = vmatprep.subr.mxu0 0.0
      %4930 = vmatpush1.msra.mxu0 0.0
      %4931 = vmatprep.subr.mxu0 0.0
      %4932 = vmatpush1.msra.mxu0 0.0
      %4933 = vmatprep.subr.mxu0 0.0
      %4934 = vmatpush1.msra.mxu0 0.0
      %4935 = vmatprep.subr.mxu0 0.0
      %4936 = vmatpush1.msra.mxu0 0.0
      %4937 = vmatprep.subr.mxu0 0.0
      %4938 = vmatpush1.msra.mxu0 0.0
      %4939 = vmatprep.subr.mxu0 0.0
      %4940 = vmatpush1.msra.mxu0 0.0
      %4941 = vmatprep.mubr.f32.mxu0 0.0
      %4942 = vmatmul.mubr.f32.gmra.mrb[0].mxu0 %v4624
      %v4943 = vpop.f32.mrb[0].mxu0
      %v4944 = vadd.f32 0.0, %v4943
      %v4945 = vpop.f32.mrb[0].mxu0
      %v4946 = vadd.f32 0.0, %v4945
      %4947 = vmatprep.mubr.f32.mxu0 0.0
      %4948 = vmatmul.mubr.f32.gmra.mrb[0].mxu0 %v4627
      %v4949 = vpop.f32.mrb[0].mxu0
      %v4950 = vadd.f32 0.0, %v4949
      %v4951 = vpop.f32.mrb[0].mxu0
      %v4952 = vadd.f32 0.0, %v4951
      %4953 = vdwg.mxu0
      %v4954 = vadd.f32 %v4319, %v4713
      %v4955 = vadd.f32 %v4321, %v4715
      %v4956 = vadd.f32 %v4396, %v4790
      %v4957 = vadd.f32 %v4398, %v4792
      %v4958 = vadd.f32 %v4473, %v4867
      %v4959 = vadd.f32 %v4475, %v4869
      %v4960 = vadd.f32 %v4550, %v4944
      %v4961 = vadd.f32 %v4552, %v4946
      %v4962 = vadd.f32 %v4325, %v4719
      %v4963 = vadd.f32 %v4327, %v4721
      %v4964 = vadd.f32 %v4402, %v4796
      %v4965 = vadd.f32 %v4404, %v4798
      %v4966 = vadd.f32 %v4479, %v4873
      %v4967 = vadd.f32 %v4481, %v4875
      %v4968 = vadd.f32 %v4556, %v4950
      %v4969 = vadd.f32 %v4558, %v4952
      %s4970 = scalar_lea.vmem %s3, 48
      %v4971 = vld [vmem:[%s4970] sm:$0xff]
      %v4972 = vld [vmem:[%s4970 + $0x8] sm:$0x3]
      %4973 = vrot.lane.b32.xlu0 %v3800, 64
      %v4974 = vpop.permute.xlu0 %4973
      %4975 = vrot.lane.b32.xlu0 %v3801, 64
      %v4976 = vpop.permute.xlu0 %4975
      %4977 = vrot.lane.b32.xlu0 %v3802, 64
      %v4978 = vpop.permute.xlu0 %4977
      %4979 = vrot.lane.b32.xlu0 %v3803, 64
      %v4980 = vpop.permute.xlu0 %4979
      %4981 = vrot.lane.b32.xlu0 %v3804, 64
      %v4982 = vpop.permute.xlu0 %4981
      %4983 = vrot.lane.b32.xlu0 %v3805, 64
      %v4984 = vpop.permute.xlu0 %4983
      %4985 = vrot.lane.b32.xlu0 %v3806, 64
      %v4986 = vpop.permute.xlu0 %4985
      %4987 = vrot.lane.b32.xlu0 %v3807, 64
      %v4988 = vpop.permute.xlu0 %4987
      %4989 = vrot.lane.b32.xlu0 %v3808, 64
      %v4990 = vpop.permute.xlu0 %4989
      %4991 = vrot.lane.b32.xlu0 %v3809, 64
      %v4992 = vpop.permute.xlu0 %4991
      %4993 = vrot.lane.b32.xlu0 %v3810, 64
      %v4994 = vpop.permute.xlu0 %4993
      %4995 = vrot.lane.b32.xlu0 %v3811, 64
      %v4996 = vpop.permute.xlu0 %4995
      %4997 = vrot.lane.b32.xlu0 %v3812, 64
      %v4998 = vpop.permute.xlu0 %4997
      %4999 = vrot.lane.b32.xlu0 %v3813, 64
      %v5000 = vpop.permute.xlu0 %4999
      %5001 = vrot.lane.b32.xlu0 %v3814, 64
      %v5002 = vpop.permute.xlu0 %5001
      %5003 = vrot.lane.b32.xlu0 %v3815, 64
      %v5004 = vpop.permute.xlu0 %5003
      %vm5005 = vcmask 523264
      %v5006 = vsel %vm5005, %v4974, %v4976
      %v5007 = vsel %vm5005, %v4976, %v4978
      %v5008 = vsel %vm5005, %v4978, %v4980
      %v5009 = vsel %vm5005, %v4980, %v4982
      %v5010 = vsel %vm5005, %v4982, %v4984
      %v5011 = vsel %vm5005, %v4984, %v4986
      %v5012 = vsel %vm5005, %v4986, %v4988
      %v5013 = vsel %vm5005, %v4990, %v4992
      %v5014 = vsel %vm5005, %v4992, %v4994
      %v5015 = vsel %vm5005, %v4994, %v4996
      %v5016 = vsel %vm5005, %v4996, %v4998
      %v5017 = vsel %vm5005, %v4998, %v5000
      %v5018 = vsel %vm5005, %v5000, %v5002
      %v5019 = vsel %vm5005, %v5002, %v5004
      %v5031 = vsel %vm5005, %v4988, %v4974
      %v5032 = vsel %vm5005, %v5004, %v4990
      %v5034 = vsel %vm3897, %v4971, 0
      %v5037 = vsel %vm3897, %v4972, 0
      %v5039 = vsel %vm3904, %v5013, 0
      %v5041 = vsel %vm3904, %v5014, 0
      %v5043 = vsel %vm3904, %v5015, 0
      %v5045 = vsel %vm3904, %v5016, 0
      %v5047 = vsel %vm3904, %v5017, 0
      %v5049 = vsel %vm3904, %v5018, 0
      %v5051 = vsel %vm3904, %v5019, 0
      %v5054 = vsel %vm3904, %v5032, 0
      %5056 = vmatprep.subr.mxu0 %v5007
      %5057 = vmatpush1.msra.mxu0 %v5006
      %5058 = vmatprep.subr.mxu0 %v5041
      %5059 = vmatpush1.msra.mxu0 %v5039
      %5060 = vmatprep.subr.mxu0 0.0
      %5061 = vmatpush1.msra.mxu0 0.0
      %5062 = vmatprep.subr.mxu0 0.0
      %5063 = vmatpush1.msra.mxu0 0.0
      %5064 = vmatprep.subr.mxu0 0.0
      %5065 = vmatpush1.msra.mxu0 0.0
      %5066 = vmatprep.subr.mxu0 0.0
      %5067 = vmatpush1.msra.mxu0 0.0
      %5068 = vmatprep.subr.mxu0 0.0
      %5069 = vmatpush1.msra.mxu0 0.0
      %5070 = vmatprep.subr.mxu0 0.0
      %5071 = vmatpush1.msra.mxu0 0.0
      %5072 = vmatprep.subr.mxu0 0.0
      %5073 = vmatpush1.msra.mxu0 0.0
      %5074 = vmatprep.subr.mxu0 0.0
      %5075 = vmatpush1.msra.mxu0 0.0
      %5076 = vmatprep.subr.mxu0 0.0
      %5077 = vmatpush1.msra.mxu0 0.0
      %5078 = vmatprep.subr.mxu0 0.0
      %5079 = vmatpush1.msra.mxu0 0.0
      %5080 = vmatprep.subr.mxu0 0.0
      %5081 = vmatpush1.msra.mxu0 0.0
      %5082 = vmatprep.subr.mxu0 0.0
      %5083 = vmatpush1.msra.mxu0 0.0
      %5084 = vmatprep.subr.mxu0 0.0
      %5085 = vmatpush1.msra.mxu0 0.0
      %5086 = vmatprep.subr.mxu0 0.0
      %5087 = vmatpush1.msra.mxu0 0.0
      %5088 = vmatprep.subr.mxu0 0.0
      %5089 = vmatpush1.msra.mxu0 0.0
      %5090 = vmatprep.subr.mxu0 0.0
      %5091 = vmatpush1.msra.mxu0 0.0
      %5092 = vmatprep.subr.mxu0 0.0
      %5093 = vmatpush1.msra.mxu0 0.0
      %5094 = vmatprep.subr.mxu0 0.0
      %5095 = vmatpush1.msra.mxu0 0.0
      %5096 = vmatprep.subr.mxu0 0.0
      %5097 = vmatpush1.msra.mxu0 0.0
      %5098 = vmatprep.subr.mxu0 0.0
      %5099 = vmatpush1.msra.mxu0 0.0
      %5100 = vmatprep.subr.mxu0 0.0
      %5101 = vmatpush1.msra.mxu0 0.0
      %5102 = vmatprep.subr.mxu0 0.0
      %5103 = vmatpush1.msra.mxu0 0.0
      %5104 = vmatprep.subr.mxu0 0.0
      %5105 = vmatpush1.msra.mxu0 0.0
      %5106 = vmatprep.subr.mxu0 0.0
      %5107 = vmatpush1.msra.mxu0 0.0
      %5108 = vmatprep.subr.mxu0 0.0
      %5109 = vmatpush1.msra.mxu0 0.0
      %5110 = vmatprep.subr.mxu0 0.0
      %5111 = vmatpush1.msra.mxu0 0.0
      %5112 = vmatprep.subr.mxu0 0.0
      %5113 = vmatpush1.msra.mxu0 0.0
      %5114 = vmatprep.subr.mxu0 0.0
      %5115 = vmatpush1.msra.mxu0 0.0
      %5116 = vmatprep.subr.mxu0 0.0
      %5117 = vmatpush1.msra.mxu0 0.0
      %5118 = vmatprep.subr.mxu0 0.0
      %5119 = vmatpush1.msra.mxu0 0.0
      %5120 = vmatprep.mubr.f32.mxu0 0.0
      %5121 = vmatmul.mubr.f32.gmra.mrb[0].mxu0 %v5034
      %v5122 = vpop.f32.mrb[0].mxu0
      %v5123 = vadd.f32 0.0, %v5122
      %v5124 = vpop.f32.mrb[0].mxu0
      %v5125 = vadd.f32 0.0, %v5124
      %5126 = vmatprep.mubr.f32.mxu0 0.0
      %5127 = vmatmul.mubr.f32.gmra.mrb[0].mxu0 %v5037
      %v5128 = vpop.f32.mrb[0].mxu0
      %v5129 = vadd.f32 0.0, %v5128
      %v5130 = vpop.f32.mrb[0].mxu0
      %v5131 = vadd.f32 0.0, %v5130
      %5132 = vdwg.mxu0
      %5133 = vmatprep.subr.mxu0 %v5009
      %5134 = vmatpush1.msra.mxu0 %v5008
      %5135 = vmatprep.subr.mxu0 %v5045
      %5136 = vmatpush1.msra.mxu0 %v5043
      %5137 = vmatprep.subr.mxu0 0.0
      %5138 = vmatpush1.msra.mxu0 0.0
      %5139 = vmatprep.subr.mxu0 0.0
      %5140 = vmatpush1.msra.mxu0 0.0
      %5141 = vmatprep.subr.mxu0 0.0
      %5142 = vmatpush1.msra.mxu0 0.0
      %5143 = vmatprep.subr.mxu0 0.0
      %5144 = vmatpush1.msra.mxu0 0.0
      %5145 = vmatprep.subr.mxu0 0.0
      %5146 = vmatpush1.msra.mxu0 0.0
      %5147 = vmatprep.subr.mxu0 0.0
      %5148 = vmatpush1.msra.mxu0 0.0
      %5149 = vmatprep.subr.mxu0 0.0
      %5150 = vmatpush1.msra.mxu0 0.0
      %5151 = vmatprep.subr.mxu0 0.0
      %5152 = vmatpush1.msra.mxu0 0.0
      %5153 = vmatprep.subr.mxu0 0.0
      %5154 = vmatpush1.msra.mxu0 0.0
      %5155 = vmatprep.subr.mxu0 0.0
      %5156 = vmatpush1.msra.mxu0 0.0
      %5157 = vmatprep.subr.mxu0 0.0
      %5158 = vmatpush1.msra.mxu0 0.0
      %5159 = vmatprep.subr.mxu0 0.0
      %5160 = vmatpush1.msra.mxu0 0.0
      %5161 = vmatprep.subr.mxu0 0.0
      %5162 = vmatpush1.msra.mxu0 0.0
      %5163 = vmatprep.subr.mxu0 0.0
      %5164 = vmatpush1.msra.mxu0 0.0
      %5165 = vmatprep.subr.mxu0 0.0
      %5166 = vmatpush1.msra.mxu0 0.0
      %5167 = vmatprep.subr.mxu0 0.0
      %5168 = vmatpush1.msra.mxu0 0.0
      %5169 = vmatprep.subr.mxu0 0.0
      %5170 = vmatpush1.msra.mxu0 0.0
      %5171 = vmatprep.subr.mxu0 0.0
      %5172 = vmatpush1.msra.mxu0 0.0
      %5173 = vmatprep.subr.mxu0 0.0
      %5174 = vmatpush1.msra.mxu0 0.0
      %5175 = vmatprep.subr.mxu0 0.0
      %5176 = vmatpush1.msra.mxu0 0.0
      %5177 = vmatprep.subr.mxu0 0.0
      %5178 = vmatpush1.msra.mxu0 0.0
      %5179 = vmatprep.subr.mxu0 0.0
      %5180 = vmatpush1.msra.mxu0 0.0
      %5181 = vmatprep.subr.mxu0 0.0
      %5182 = vmatpush1.msra.mxu0 0.0
      %5183 = vmatprep.subr.mxu0 0.0
      %5184 = vmatpush1.msra.mxu0 0.0
      %5185 = vmatprep.subr.mxu0 0.0
      %5186 = vmatpush1.msra.mxu0 0.0
      %5187 = vmatprep.subr.mxu0 0.0
      %5188 = vmatpush1.msra.mxu0 0.0
      %5189 = vmatprep.subr.mxu0 0.0
      %5190 = vmatpush1.msra.mxu0 0.0
      %5191 = vmatprep.subr.mxu0 0.0
      %5192 = vmatpush1.msra.mxu0 0.0
      %5193 = vmatprep.subr.mxu0 0.0
      %5194 = vmatpush1.msra.mxu0 0.0
      %5195 = vmatprep.subr.mxu0 0.0
      %5196 = vmatpush1.msra.mxu0 0.0
      %5197 = vmatprep.mubr.f32.mxu0 0.0
      %5198 = vmatmul.mubr.f32.gmra.mrb[0].mxu0 %v5034
      %v5199 = vpop.f32.mrb[0].mxu0
      %v5200 = vadd.f32 0.0, %v5199
      %v5201 = vpop.f32.mrb[0].mxu0
      %v5202 = vadd.f32 0.0, %v5201
      %5203 = vmatprep.mubr.f32.mxu0 0.0
      %5204 = vmatmul.mubr.f32.gmra.mrb[0].mxu0 %v5037
      %v5205 = vpop.f32.mrb[0].mxu0
      %v5206 = vadd.f32 0.0, %v5205
      %v5207 = vpop.f32.mrb[0].mxu0
      %v5208 = vadd.f32 0.0, %v5207
      %5209 = vdwg.mxu0
      %5210 = vmatprep.subr.mxu0 %v5011
      %5211 = vmatpush1.msra.mxu0 %v5010
      %5212 = vmatprep.subr.mxu0 %v5049
      %5213 = vmatpush1.msra.mxu0 %v5047
      %5214 = vmatprep.subr.mxu0 0.0
      %5215 = vmatpush1.msra.mxu0 0.0
      %5216 = vmatprep.subr.mxu0 0.0
      %5217 = vmatpush1.msra.mxu0 0.0
      %5218 = vmatprep.subr.mxu0 0.0
      %5219 = vmatpush1.msra.mxu0 0.0
      %5220 = vmatprep.subr.mxu0 0.0
      %5221 = vmatpush1.msra.mxu0 0.0
      %5222 = vmatprep.subr.mxu0 0.0
      %5223 = vmatpush1.msra.mxu0 0.0
      %5224 = vmatprep.subr.mxu0 0.0
      %5225 = vmatpush1.msra.mxu0 0.0
      %5226 = vmatprep.subr.mxu0 0.0
      %5227 = vmatpush1.msra.mxu0 0.0
      %5228 = vmatprep.subr.mxu0 0.0
      %5229 = vmatpush1.msra.mxu0 0.0
      %5230 = vmatprep.subr.mxu0 0.0
      %5231 = vmatpush1.msra.mxu0 0.0
      %5232 = vmatprep.subr.mxu0 0.0
      %5233 = vmatpush1.msra.mxu0 0.0
      %5234 = vmatprep.subr.mxu0 0.0
      %5235 = vmatpush1.msra.mxu0 0.0
      %5236 = vmatprep.subr.mxu0 0.0
      %5237 = vmatpush1.msra.mxu0 0.0
      %5238 = vmatprep.subr.mxu0 0.0
      %5239 = vmatpush1.msra.mxu0 0.0
      %5240 = vmatprep.subr.mxu0 0.0
      %5241 = vmatpush1.msra.mxu0 0.0
      %5242 = vmatprep.subr.mxu0 0.0
      %5243 = vmatpush1.msra.mxu0 0.0
      %5244 = vmatprep.subr.mxu0 0.0
      %5245 = vmatpush1.msra.mxu0 0.0
      %5246 = vmatprep.subr.mxu0 0.0
      %5247 = vmatpush1.msra.mxu0 0.0
      %5248 = vmatprep.subr.mxu0 0.0
      %5249 = vmatpush1.msra.mxu0 0.0
      %5250 = vmatprep.subr.mxu0 0.0
      %5251 = vmatpush1.msra.mxu0 0.0
      %5252 = vmatprep.subr.mxu0 0.0
      %5253 = vmatpush1.msra.mxu0 0.0
      %5254 = vmatprep.subr.mxu0 0.0
      %5255 = vmatpush1.msra.mxu0 0.0
      %5256 = vmatprep.subr.mxu0 0.0
      %5257 = vmatpush1.msra.mxu0 0.0
      %5258 = vmatprep.subr.mxu0 0.0
      %5259 = vmatpush1.msra.mxu0 0.0
      %5260 = vmatprep.subr.mxu0 0.0
      %5261 = vmatpush1.msra.mxu0 0.0
      %5262 = vmatprep.subr.mxu0 0.0
      %5263 = vmatpush1.msra.mxu0 0.0
      %5264 = vmatprep.subr.mxu0 0.0
      %5265 = vmatpush1.msra.mxu0 0.0
      %5266 = vmatprep.subr.mxu0 0.0
      %5267 = vmatpush1.msra.mxu0 0.0
      %5268 = vmatprep.subr.mxu0 0.0
      %5269 = vmatpush1.msra.mxu0 0.0
      %5270 = vmatprep.subr.mxu0 0.0
      %5271 = vmatpush1.msra.mxu0 0.0
      %5272 = vmatprep.subr.mxu0 0.0
      %5273 = vmatpush1.msra.mxu0 0.0
      %5274 = vmatprep.mubr.f32.mxu0 0.0
      %5275 = vmatmul.mubr.f32.gmra.mrb[0].mxu0 %v5034
      %v5276 = vpop.f32.mrb[0].mxu0
      %v5277 = vadd.f32 0.0, %v5276
      %v5278 = vpop.f32.mrb[0].mxu0
      %v5279 = vadd.f32 0.0, %v5278
      %5280 = vmatprep.mubr.f32.mxu0 0.0
      %5281 = vmatmul.mubr.f32.gmra.mrb[0].mxu0 %v5037
      %v5282 = vpop.f32.mrb[0].mxu0
      %v5283 = vadd.f32 0.0, %v5282
      %v5284 = vpop.f32.mrb[0].mxu0
      %v5285 = vadd.f32 0.0, %v5284
      %5286 = vdwg.mxu0
      %5287 = vmatprep.subr.mxu0 %v5031
      %5288 = vmatpush1.msra.mxu0 %v5012
      %5289 = vmatprep.subr.mxu0 %v5054
      %5290 = vmatpush1.msra.mxu0 %v5051
      %5291 = vmatprep.subr.mxu0 0.0
      %5292 = vmatpush1.msra.mxu0 0.0
      %5293 = vmatprep.subr.mxu0 0.0
      %5294 = vmatpush1.msra.mxu0 0.0
      %5295 = vmatprep.subr.mxu0 0.0
      %5296 = vmatpush1.msra.mxu0 0.0
      %5297 = vmatprep.subr.mxu0 0.0
      %5298 = vmatpush1.msra.mxu0 0.0
      %5299 = vmatprep.subr.mxu0 0.0
      %5300 = vmatpush1.msra.mxu0 0.0
      %5301 = vmatprep.subr.mxu0 0.0
      %5302 = vmatpush1.msra.mxu0 0.0
      %5303 = vmatprep.subr.mxu0 0.0
      %5304 = vmatpush1.msra.mxu0 0.0
      %5305 = vmatprep.subr.mxu0 0.0
      %5306 = vmatpush1.msra.mxu0 0.0
      %5307 = vmatprep.subr.mxu0 0.0
      %5308 = vmatpush1.msra.mxu0 0.0
      %5309 = vmatprep.subr.mxu0 0.0
      %5310 = vmatpush1.msra.mxu0 0.0
      %5311 = vmatprep.subr.mxu0 0.0
      %5312 = vmatpush1.msra.mxu0 0.0
      %5313 = vmatprep.subr.mxu0 0.0
      %5314 = vmatpush1.msra.mxu0 0.0
      %5315 = vmatprep.subr.mxu0 0.0
      %5316 = vmatpush1.msra.mxu0 0.0
      %5317 = vmatprep.subr.mxu0 0.0
      %5318 = vmatpush1.msra.mxu0 0.0
      %5319 = vmatprep.subr.mxu0 0.0
      %5320 = vmatpush1.msra.mxu0 0.0
      %5321 = vmatprep.subr.mxu0 0.0
      %5322 = vmatpush1.msra.mxu0 0.0
      %5323 = vmatprep.subr.mxu0 0.0
      %5324 = vmatpush1.msra.mxu0 0.0
      %5325 = vmatprep.subr.mxu0 0.0
      %5326 = vmatpush1.msra.mxu0 0.0
      %5327 = vmatprep.subr.mxu0 0.0
      %5328 = vmatpush1.msra.mxu0 0.0
      %5329 = vmatprep.subr.mxu0 0.0
      %5330 = vmatpush1.msra.mxu0 0.0
      %5331 = vmatprep.subr.mxu0 0.0
      %5332 = vmatpush1.msra.mxu0 0.0
      %5333 = vmatprep.subr.mxu0 0.0
      %5334 = vmatpush1.msra.mxu0 0.0
      %5335 = vmatprep.subr.mxu0 0.0
      %5336 = vmatpush1.msra.mxu0 0.0
      %5337 = vmatprep.subr.mxu0 0.0
      %5338 = vmatpush1.msra.mxu0 0.0
      %5339 = vmatprep.subr.mxu0 0.0
      %5340 = vmatpush1.msra.mxu0 0.0
      %5341 = vmatprep.subr.mxu0 0.0
      %5342 = vmatpush1.msra.mxu0 0.0
      %5343 = vmatprep.subr.mxu0 0.0
      %5344 = vmatpush1.msra.mxu0 0.0
      %5345 = vmatprep.subr.mxu0 0.0
      %5346 = vmatpush1.msra.mxu0 0.0
      %5347 = vmatprep.subr.mxu0 0.0
      %5348 = vmatpush1.msra.mxu0 0.0
      %5349 = vmatprep.subr.mxu0 0.0
      %5350 = vmatpush1.msra.mxu0 0.0
      %5351 = vmatprep.mubr.f32.mxu0 0.0
      %5352 = vmatmul.mubr.f32.gmra.mrb[0].mxu0 %v5034
      %v5353 = vpop.f32.mrb[0].mxu0
      %v5354 = vadd.f32 0.0, %v5353
      %v5355 = vpop.f32.mrb[0].mxu0
      %v5356 = vadd.f32 0.0, %v5355
      %5357 = vmatprep.mubr.f32.mxu0 0.0
      %5358 = vmatmul.mubr.f32.gmra.mrb[0].mxu0 %v5037
      %v5359 = vpop.f32.mrb[0].mxu0
      %v5360 = vadd.f32 0.0, %v5359
      %v5361 = vpop.f32.mrb[0].mxu0
      %v5362 = vadd.f32 0.0, %v5361
      %5363 = vdwg.mxu0
      %v5364 = vadd.f32 %v4954, %v5123
      %v5365 = vadd.f32 %v4955, %v5125
      %v5366 = vadd.f32 %v4956, %v5200
      %v5367 = vadd.f32 %v4957, %v5202
      %v5368 = vadd.f32 %v4958, %v5277
      %v5369 = vadd.f32 %v4959, %v5279
      %v5370 = vadd.f32 %v4960, %v5354
      %v5371 = vadd.f32 %v4961, %v5356
      %v5372 = vadd.f32 %v4962, %v5129
      %v5373 = vadd.f32 %v4963, %v5131
      %v5374 = vadd.f32 %v4964, %v5206
      %v5375 = vadd.f32 %v4965, %v5208
      %v5376 = vadd.f32 %v4966, %v5283
      %v5377 = vadd.f32 %v4967, %v5285
      %v5378 = vadd.f32 %v4968, %v5360
      %v5379 = vadd.f32 %v4969, %v5362
      %s5380 = scalar_lea.vmem %s3, 64
      %v5381 = vld [vmem:[%s5380] sm:$0xff]
      %v5382 = vld [vmem:[%s5380 + $0x8] sm:$0x3]
      %5383 = vrot.lane.b32.xlu0 %v3800, 62
      %v5384 = vpop.permute.xlu0 %5383
      %5385 = vrot.lane.b32.xlu0 %v3801, 62
      %v5386 = vpop.permute.xlu0 %5385
      %5387 = vrot.lane.b32.xlu0 %v3802, 62
      %v5388 = vpop.permute.xlu0 %5387
      %5389 = vrot.lane.b32.xlu0 %v3803, 62
      %v5390 = vpop.permute.xlu0 %5389
      %5391 = vrot.lane.b32.xlu0 %v3804, 62
      %v5392 = vpop.permute.xlu0 %5391
      %5393 = vrot.lane.b32.xlu0 %v3805, 62
      %v5394 = vpop.permute.xlu0 %5393
      %5395 = vrot.lane.b32.xlu0 %v3806, 62
      %v5396 = vpop.permute.xlu0 %5395
      %5397 = vrot.lane.b32.xlu0 %v3807, 62
      %v5398 = vpop.permute.xlu0 %5397
      %5399 = vrot.lane.b32.xlu0 %v3808, 62
      %v5400 = vpop.permute.xlu0 %5399
      %5401 = vrot.lane.b32.xlu0 %v3809, 62
      %v5402 = vpop.permute.xlu0 %5401
      %5403 = vrot.lane.b32.xlu0 %v3810, 62
      %v5404 = vpop.permute.xlu0 %5403
      %5405 = vrot.lane.b32.xlu0 %v3811, 62
      %v5406 = vpop.permute.xlu0 %5405
      %5407 = vrot.lane.b32.xlu0 %v3812, 62
      %v5408 = vpop.permute.xlu0 %5407
      %5409 = vrot.lane.b32.xlu0 %v3813, 62
      %v5410 = vpop.permute.xlu0 %5409
      %5411 = vrot.lane.b32.xlu0 %v3814, 62
      %v5412 = vpop.permute.xlu0 %5411
      %5413 = vrot.lane.b32.xlu0 %v3815, 62
      %v5414 = vpop.permute.xlu0 %5413
      %vm5415 = vcmask 506880
      %v5416 = vsel %vm5415, %v5384, %v5386
      %v5417 = vsel %vm5415, %v5386, %v5388
      %v5418 = vsel %vm5415, %v5388, %v5390
      %v5419 = vsel %vm5415, %v5390, %v5392
      %v5420 = vsel %vm5415, %v5392, %v5394
      %v5421 = vsel %vm5415, %v5394, %v5396
      %v5422 = vsel %vm5415, %v5396, %v5398
      %v5423 = vsel %vm5415, %v5400, %v5402
      %v5424 = vsel %vm5415, %v5402, %v5404
      %v5425 = vsel %vm5415, %v5404, %v5406
      %v5426 = vsel %vm5415, %v5406, %v5408
      %v5427 = vsel %vm5415, %v5408, %v5410
      %v5428 = vsel %vm5415, %v5410, %v5412
      %v5429 = vsel %vm5415, %v5412, %v5414
      %v5441 = vsel %vm5415, %v5398, %v5384
      %v5442 = vsel %vm5415, %v5414, %v5400
      %v5444 = vsel %vm3897, %v5381, 0
      %v5447 = vsel %vm3897, %v5382, 0
      %v5449 = vsel %vm3904, %v5423, 0
      %v5451 = vsel %vm3904, %v5424, 0
      %v5453 = vsel %vm3904, %v5425, 0
      %v5455 = vsel %vm3904, %v5426, 0
      %v5457 = vsel %vm3904, %v5427, 0
      %v5459 = vsel %vm3904, %v5428, 0
      %v5461 = vsel %vm3904, %v5429, 0
      %v5464 = vsel %vm3904, %v5442, 0
      %5466 = vmatprep.subr.mxu0 %v5417
      %5467 = vmatpush1.msra.mxu0 %v5416
      %5468 = vmatprep.subr.mxu0 %v5451
      %5469 = vmatpush1.msra.mxu0 %v5449
      %5470 = vmatprep.subr.mxu0 0.0
      %5471 = vmatpush1.msra.mxu0 0.0
      %5472 = vmatprep.subr.mxu0 0.0
      %5473 = vmatpush1.msra.mxu0 0.0
      %5474 = vmatprep.subr.mxu0 0.0
      %5475 = vmatpush1.msra.mxu0 0.0
      %5476 = vmatprep.subr.mxu0 0.0
      %5477 = vmatpush1.msra.mxu0 0.0
      %5478 = vmatprep.subr.mxu0 0.0
      %5479 = vmatpush1.msra.mxu0 0.0
      %5480 = vmatprep.subr.mxu0 0.0
      %5481 = vmatpush1.msra.mxu0 0.0
      %5482 = vmatprep.subr.mxu0 0.0
      %5483 = vmatpush1.msra.mxu0 0.0
      %5484 = vmatprep.subr.mxu0 0.0
      %5485 = vmatpush1.msra.mxu0 0.0
      %5486 = vmatprep.subr.mxu0 0.0
      %5487 = vmatpush1.msra.mxu0 0.0
      %5488 = vmatprep.subr.mxu0 0.0
      %5489 = vmatpush1.msra.mxu0 0.0
      %5490 = vmatprep.subr.mxu0 0.0
      %5491 = vmatpush1.msra.mxu0 0.0
      %5492 = vmatprep.subr.mxu0 0.0
      %5493 = vmatpush1.msra.mxu0 0.0
      %5494 = vmatprep.subr.mxu0 0.0
      %5495 = vmatpush1.msra.mxu0 0.0
      %5496 = vmatprep.subr.mxu0 0.0
      %5497 = vmatpush1.msra.mxu0 0.0
      %5498 = vmatprep.subr.mxu0 0.0
      %5499 = vmatpush1.msra.mxu0 0.0
      %5500 = vmatprep.subr.mxu0 0.0
      %5501 = vmatpush1.msra.mxu0 0.0
      %5502 = vmatprep.subr.mxu0 0.0
      %5503 = vmatpush1.msra.mxu0 0.0
      %5504 = vmatprep.subr.mxu0 0.0
      %5505 = vmatpush1.msra.mxu0 0.0
      %5506 = vmatprep.subr.mxu0 0.0
      %5507 = vmatpush1.msra.mxu0 0.0
      %5508 = vmatprep.subr.mxu0 0.0
      %5509 = vmatpush1.msra.mxu0 0.0
      %5510 = vmatprep.subr.mxu0 0.0
      %5511 = vmatpush1.msra.mxu0 0.0
      %5512 = vmatprep.subr.mxu0 0.0
      %5513 = vmatpush1.msra.mxu0 0.0
      %5514 = vmatprep.subr.mxu0 0.0
      %5515 = vmatpush1.msra.mxu0 0.0
      %5516 = vmatprep.subr.mxu0 0.0
      %5517 = vmatpush1.msra.mxu0 0.0
      %5518 = vmatprep.subr.mxu0 0.0
      %5519 = vmatpush1.msra.mxu0 0.0
      %5520 = vmatprep.subr.mxu0 0.0
      %5521 = vmatpush1.msra.mxu0 0.0
      %5522 = vmatprep.subr.mxu0 0.0
      %5523 = vmatpush1.msra.mxu0 0.0
      %5524 = vmatprep.subr.mxu0 0.0
      %5525 = vmatpush1.msra.mxu0 0.0
      %5526 = vmatprep.subr.mxu0 0.0
      %5527 = vmatpush1.msra.mxu0 0.0
      %5528 = vmatprep.subr.mxu0 0.0
      %5529 = vmatpush1.msra.mxu0 0.0
      %5530 = vmatprep.mubr.f32.mxu0 0.0
      %5531 = vmatmul.mubr.f32.gmra.mrb[0].mxu0 %v5444
      %v5532 = vpop.f32.mrb[0].mxu0
      %v5533 = vadd.f32 0.0, %v5532
      %v5534 = vpop.f32.mrb[0].mxu0
      %v5535 = vadd.f32 0.0, %v5534
      %5536 = vmatprep.mubr.f32.mxu0 0.0
      %5537 = vmatmul.mubr.f32.gmra.mrb[0].mxu0 %v5447
      %v5538 = vpop.f32.mrb[0].mxu0
      %v5539 = vadd.f32 0.0, %v5538
      %v5540 = vpop.f32.mrb[0].mxu0
      %v5541 = vadd.f32 0.0, %v5540
      %5542 = vdwg.mxu0
      %5543 = vmatprep.subr.mxu0 %v5419
      %5544 = vmatpush1.msra.mxu0 %v5418
      %5545 = vmatprep.subr.mxu0 %v5455
      %5546 = vmatpush1.msra.mxu0 %v5453
      %5547 = vmatprep.subr.mxu0 0.0
      %5548 = vmatpush1.msra.mxu0 0.0
      %5549 = vmatprep.subr.mxu0 0.0
      %5550 = vmatpush1.msra.mxu0 0.0
      %5551 = vmatprep.subr.mxu0 0.0
      %5552 = vmatpush1.msra.mxu0 0.0
      %5553 = vmatprep.subr.mxu0 0.0
      %5554 = vmatpush1.msra.mxu0 0.0
      %5555 = vmatprep.subr.mxu0 0.0
      %5556 = vmatpush1.msra.mxu0 0.0
      %5557 = vmatprep.subr.mxu0 0.0
      %5558 = vmatpush1.msra.mxu0 0.0
      %5559 = vmatprep.subr.mxu0 0.0
      %5560 = vmatpush1.msra.mxu0 0.0
      %5561 = vmatprep.subr.mxu0 0.0
      %5562 = vmatpush1.msra.mxu0 0.0
      %5563 = vmatprep.subr.mxu0 0.0
      %5564 = vmatpush1.msra.mxu0 0.0
      %5565 = vmatprep.subr.mxu0 0.0
      %5566 = vmatpush1.msra.mxu0 0.0
      %5567 = vmatprep.subr.mxu0 0.0
      %5568 = vmatpush1.msra.mxu0 0.0
      %5569 = vmatprep.subr.mxu0 0.0
      %5570 = vmatpush1.msra.mxu0 0.0
      %5571 = vmatprep.subr.mxu0 0.0
      %5572 = vmatpush1.msra.mxu0 0.0
      %5573 = vmatprep.subr.mxu0 0.0
      %5574 = vmatpush1.msra.mxu0 0.0
      %5575 = vmatprep.subr.mxu0 0.0
      %5576 = vmatpush1.msra.mxu0 0.0
      %5577 = vmatprep.subr.mxu0 0.0
      %5578 = vmatpush1.msra.mxu0 0.0
      %5579 = vmatprep.subr.mxu0 0.0
      %5580 = vmatpush1.msra.mxu0 0.0
      %5581 = vmatprep.subr.mxu0 0.0
      %5582 = vmatpush1.msra.mxu0 0.0
      %5583 = vmatprep.subr.mxu0 0.0
      %5584 = vmatpush1.msra.mxu0 0.0
      %5585 = vmatprep.subr.mxu0 0.0
      %5586 = vmatpush1.msra.mxu0 0.0
      %5587 = vmatprep.subr.mxu0 0.0
      %5588 = vmatpush1.msra.mxu0 0.0
      %5589 = vmatprep.subr.mxu0 0.0
      %5590 = vmatpush1.msra.mxu0 0.0
      %5591 = vmatprep.subr.mxu0 0.0
      %5592 = vmatpush1.msra.mxu0 0.0
      %5593 = vmatprep.subr.mxu0 0.0
      %5594 = vmatpush1.msra.mxu0 0.0
      %5595 = vmatprep.subr.mxu0 0.0
      %5596 = vmatpush1.msra.mxu0 0.0
      %5597 = vmatprep.subr.mxu0 0.0
      %5598 = vmatpush1.msra.mxu0 0.0
      %5599 = vmatprep.subr.mxu0 0.0
      %5600 = vmatpush1.msra.mxu0 0.0
      %5601 = vmatprep.subr.mxu0 0.0
      %5602 = vmatpush1.msra.mxu0 0.0
      %5603 = vmatprep.subr.mxu0 0.0
      %5604 = vmatpush1.msra.mxu0 0.0
      %5605 = vmatprep.subr.mxu0 0.0
      %5606 = vmatpush1.msra.mxu0 0.0
      %5607 = vmatprep.mubr.f32.mxu0 0.0
      %5608 = vmatmul.mubr.f32.gmra.mrb[0].mxu0 %v5444
      %v5609 = vpop.f32.mrb[0].mxu0
      %v5610 = vadd.f32 0.0, %v5609
      %v5611 = vpop.f32.mrb[0].mxu0
      %v5612 = vadd.f32 0.0, %v5611
      %5613 = vmatprep.mubr.f32.mxu0 0.0
      %5614 = vmatmul.mubr.f32.gmra.mrb[0].mxu0 %v5447
      %v5615 = vpop.f32.mrb[0].mxu0
      %v5616 = vadd.f32 0.0, %v5615
      %v5617 = vpop.f32.mrb[0].mxu0
      %v5618 = vadd.f32 0.0, %v5617
      %5619 = vdwg.mxu0
      %5620 = vmatprep.subr.mxu0 %v5421
      %5621 = vmatpush1.msra.mxu0 %v5420
      %5622 = vmatprep.subr.mxu0 %v5459
      %5623 = vmatpush1.msra.mxu0 %v5457
      %5624 = vmatprep.subr.mxu0 0.0
      %5625 = vmatpush1.msra.mxu0 0.0
      %5626 = vmatprep.subr.mxu0 0.0
      %5627 = vmatpush1.msra.mxu0 0.0
      %5628 = vmatprep.subr.mxu0 0.0
      %5629 = vmatpush1.msra.mxu0 0.0
      %5630 = vmatprep.subr.mxu0 0.0
      %5631 = vmatpush1.msra.mxu0 0.0
      %5632 = vmatprep.subr.mxu0 0.0
      %5633 = vmatpush1.msra.mxu0 0.0
      %5634 = vmatprep.subr.mxu0 0.0
      %5635 = vmatpush1.msra.mxu0 0.0
      %5636 = vmatprep.subr.mxu0 0.0
      %5637 = vmatpush1.msra.mxu0 0.0
      %5638 = vmatprep.subr.mxu0 0.0
      %5639 = vmatpush1.msra.mxu0 0.0
      %5640 = vmatprep.subr.mxu0 0.0
      %5641 = vmatpush1.msra.mxu0 0.0
      %5642 = vmatprep.subr.mxu0 0.0
      %5643 = vmatpush1.msra.mxu0 0.0
      %5644 = vmatprep.subr.mxu0 0.0
      %5645 = vmatpush1.msra.mxu0 0.0
      %5646 = vmatprep.subr.mxu0 0.0
      %5647 = vmatpush1.msra.mxu0 0.0
      %5648 = vmatprep.subr.mxu0 0.0
      %5649 = vmatpush1.msra.mxu0 0.0
      %5650 = vmatprep.subr.mxu0 0.0
      %5651 = vmatpush1.msra.mxu0 0.0
      %5652 = vmatprep.subr.mxu0 0.0
      %5653 = vmatpush1.msra.mxu0 0.0
      %5654 = vmatprep.subr.mxu0 0.0
      %5655 = vmatpush1.msra.mxu0 0.0
      %5656 = vmatprep.subr.mxu0 0.0
      %5657 = vmatpush1.msra.mxu0 0.0
      %5658 = vmatprep.subr.mxu0 0.0
      %5659 = vmatpush1.msra.mxu0 0.0
      %5660 = vmatprep.subr.mxu0 0.0
      %5661 = vmatpush1.msra.mxu0 0.0
      %5662 = vmatprep.subr.mxu0 0.0
      %5663 = vmatpush1.msra.mxu0 0.0
      %5664 = vmatprep.subr.mxu0 0.0
      %5665 = vmatpush1.msra.mxu0 0.0
      %5666 = vmatprep.subr.mxu0 0.0
      %5667 = vmatpush1.msra.mxu0 0.0
      %5668 = vmatprep.subr.mxu0 0.0
      %5669 = vmatpush1.msra.mxu0 0.0
      %5670 = vmatprep.subr.mxu0 0.0
      %5671 = vmatpush1.msra.mxu0 0.0
      %5672 = vmatprep.subr.mxu0 0.0
      %5673 = vmatpush1.msra.mxu0 0.0
      %5674 = vmatprep.subr.mxu0 0.0
      %5675 = vmatpush1.msra.mxu0 0.0
      %5676 = vmatprep.subr.mxu0 0.0
      %5677 = vmatpush1.msra.mxu0 0.0
      %5678 = vmatprep.subr.mxu0 0.0
      %5679 = vmatpush1.msra.mxu0 0.0
      %5680 = vmatprep.subr.mxu0 0.0
      %5681 = vmatpush1.msra.mxu0 0.0
      %5682 = vmatprep.subr.mxu0 0.0
      %5683 = vmatpush1.msra.mxu0 0.0
      %5684 = vmatprep.mubr.f32.mxu0 0.0
      %5685 = vmatmul.mubr.f32.gmra.mrb[0].mxu0 %v5444
      %v5686 = vpop.f32.mrb[0].mxu0
      %v5687 = vadd.f32 0.0, %v5686
      %v5688 = vpop.f32.mrb[0].mxu0
      %v5689 = vadd.f32 0.0, %v5688
      %5690 = vmatprep.mubr.f32.mxu0 0.0
      %5691 = vmatmul.mubr.f32.gmra.mrb[0].mxu0 %v5447
      %v5692 = vpop.f32.mrb[0].mxu0
      %v5693 = vadd.f32 0.0, %v5692
      %v5694 = vpop.f32.mrb[0].mxu0
      %v5695 = vadd.f32 0.0, %v5694
      %5696 = vdwg.mxu0
      %5697 = vmatprep.subr.mxu0 %v5441
      %5698 = vmatpush1.msra.mxu0 %v5422
      %5699 = vmatprep.subr.mxu0 %v5464
      %5700 = vmatpush1.msra.mxu0 %v5461
      %5701 = vmatprep.subr.mxu0 0.0
      %5702 = vmatpush1.msra.mxu0 0.0
      %5703 = vmatprep.subr.mxu0 0.0
      %5704 = vmatpush1.msra.mxu0 0.0
      %5705 = vmatprep.subr.mxu0 0.0
      %5706 = vmatpush1.msra.mxu0 0.0
      %5707 = vmatprep.subr.mxu0 0.0
      %5708 = vmatpush1.msra.mxu0 0.0
      %5709 = vmatprep.subr.mxu0 0.0
      %5710 = vmatpush1.msra.mxu0 0.0
      %5711 = vmatprep.subr.mxu0 0.0
      %5712 = vmatpush1.msra.mxu0 0.0
      %5713 = vmatprep.subr.mxu0 0.0
      %5714 = vmatpush1.msra.mxu0 0.0
      %5715 = vmatprep.subr.mxu0 0.0
      %5716 = vmatpush1.msra.mxu0 0.0
      %5717 = vmatprep.subr.mxu0 0.0
      %5718 = vmatpush1.msra.mxu0 0.0
      %5719 = vmatprep.subr.mxu0 0.0
      %5720 = vmatpush1.msra.mxu0 0.0
      %5721 = vmatprep.subr.mxu0 0.0
      %5722 = vmatpush1.msra.mxu0 0.0
      %5723 = vmatprep.subr.mxu0 0.0
      %5724 = vmatpush1.msra.mxu0 0.0
      %5725 = vmatprep.subr.mxu0 0.0
      %5726 = vmatpush1.msra.mxu0 0.0
      %5727 = vmatprep.subr.mxu0 0.0
      %5728 = vmatpush1.msra.mxu0 0.0
      %5729 = vmatprep.subr.mxu0 0.0
      %5730 = vmatpush1.msra.mxu0 0.0
      %5731 = vmatprep.subr.mxu0 0.0
      %5732 = vmatpush1.msra.mxu0 0.0
      %5733 = vmatprep.subr.mxu0 0.0
      %5734 = vmatpush1.msra.mxu0 0.0
      %5735 = vmatprep.subr.mxu0 0.0
      %5736 = vmatpush1.msra.mxu0 0.0
      %5737 = vmatprep.subr.mxu0 0.0
      %5738 = vmatpush1.msra.mxu0 0.0
      %5739 = vmatprep.subr.mxu0 0.0
      %5740 = vmatpush1.msra.mxu0 0.0
      %5741 = vmatprep.subr.mxu0 0.0
      %5742 = vmatpush1.msra.mxu0 0.0
      %5743 = vmatprep.subr.mxu0 0.0
      %5744 = vmatpush1.msra.mxu0 0.0
      %5745 = vmatprep.subr.mxu0 0.0
      %5746 = vmatpush1.msra.mxu0 0.0
      %5747 = vmatprep.subr.mxu0 0.0
      %5748 = vmatpush1.msra.mxu0 0.0
      %5749 = vmatprep.subr.mxu0 0.0
      %5750 = vmatpush1.msra.mxu0 0.0
      %5751 = vmatprep.subr.mxu0 0.0
      %5752 = vmatpush1.msra.mxu0 0.0
      %5753 = vmatprep.subr.mxu0 0.0
      %5754 = vmatpush1.msra.mxu0 0.0
      %5755 = vmatprep.subr.mxu0 0.0
      %5756 = vmatpush1.msra.mxu0 0.0
      %5757 = vmatprep.subr.mxu0 0.0
      %5758 = vmatpush1.msra.mxu0 0.0
      %5759 = vmatprep.subr.mxu0 0.0
      %5760 = vmatpush1.msra.mxu0 0.0
      %5761 = vmatprep.mubr.f32.mxu0 0.0
      %5762 = vmatmul.mubr.f32.gmra.mrb[0].mxu0 %v5444
      %v5763 = vpop.f32.mrb[0].mxu0
      %v5764 = vadd.f32 0.0, %v5763
      %v5765 = vpop.f32.mrb[0].mxu0
      %v5766 = vadd.f32 0.0, %v5765
      %5767 = vmatprep.mubr.f32.mxu0 0.0
      %5768 = vmatmul.mubr.f32.gmra.mrb[0].mxu0 %v5447
      %v5769 = vpop.f32.mrb[0].mxu0
      %v5770 = vadd.f32 0.0, %v5769
      %v5771 = vpop.f32.mrb[0].mxu0
      %v5772 = vadd.f32 0.0, %v5771
      %5773 = vdwg.mxu0
      %v5774 = vadd.f32 %v5364, %v5533
      %v5775 = vadd.f32 %v5365, %v5535
      %v5776 = vadd.f32 %v5366, %v5610
      %v5777 = vadd.f32 %v5367, %v5612
      %v5778 = vadd.f32 %v5368, %v5687
      %v5779 = vadd.f32 %v5369, %v5689
      %v5780 = vadd.f32 %v5370, %v5764
      %v5781 = vadd.f32 %v5371, %v5766
      %v5782 = vadd.f32 %v5372, %v5539
      %v5783 = vadd.f32 %v5373, %v5541
      %v5784 = vadd.f32 %v5374, %v5616
      %v5785 = vadd.f32 %v5375, %v5618
      %v5786 = vadd.f32 %v5376, %v5693
      %v5787 = vadd.f32 %v5377, %v5695
      %v5788 = vadd.f32 %v5378, %v5770
      %v5789 = vadd.f32 %v5379, %v5772
      %s5790 = scalar_lea.vmem %s3, 80
      %v5791 = vld [vmem:[%s5790] sm:$0xff]
      %v5792 = vld [vmem:[%s5790 + $0x8] sm:$0x3]
      %5793 = vrot.lane.b32.xlu0 %v3800, 60
      %v5794 = vpop.permute.xlu0 %5793
      %5795 = vrot.lane.b32.xlu0 %v3801, 60
      %v5796 = vpop.permute.xlu0 %5795
      %5797 = vrot.lane.b32.xlu0 %v3802, 60
      %v5798 = vpop.permute.xlu0 %5797
      %5799 = vrot.lane.b32.xlu0 %v3803, 60
      %v5800 = vpop.permute.xlu0 %5799
      %5801 = vrot.lane.b32.xlu0 %v3804, 60
      %v5802 = vpop.permute.xlu0 %5801
      %5803 = vrot.lane.b32.xlu0 %v3805, 60
      %v5804 = vpop.permute.xlu0 %5803
      %5805 = vrot.lane.b32.xlu0 %v3806, 60
      %v5806 = vpop.permute.xlu0 %5805
      %5807 = vrot.lane.b32.xlu0 %v3807, 60
      %v5808 = vpop.permute.xlu0 %5807
      %5809 = vrot.lane.b32.xlu0 %v3808, 60
      %v5810 = vpop.permute.xlu0 %5809
      %5811 = vrot.lane.b32.xlu0 %v3809, 60
      %v5812 = vpop.permute.xlu0 %5811
      %5813 = vrot.lane.b32.xlu0 %v3810, 60
      %v5814 = vpop.permute.xlu0 %5813
      %5815 = vrot.lane.b32.xlu0 %v3811, 60
      %v5816 = vpop.permute.xlu0 %5815
      %5817 = vrot.lane.b32.xlu0 %v3812, 60
      %v5818 = vpop.permute.xlu0 %5817
      %5819 = vrot.lane.b32.xlu0 %v3813, 60
      %v5820 = vpop.permute.xlu0 %5819
      %5821 = vrot.lane.b32.xlu0 %v3814, 60
      %v5822 = vpop.permute.xlu0 %5821
      %5823 = vrot.lane.b32.xlu0 %v3815, 60
      %v5824 = vpop.permute.xlu0 %5823
      %vm5825 = vcmask 490496
      %v5826 = vsel %vm5825, %v5794, %v5796
      %v5827 = vsel %vm5825, %v5796, %v5798
      %v5828 = vsel %vm5825, %v5798, %v5800
      %v5829 = vsel %vm5825, %v5800, %v5802
      %v5830 = vsel %vm5825, %v5802, %v5804
      %v5831 = vsel %vm5825, %v5804, %v5806
      %v5832 = vsel %vm5825, %v5806, %v5808
      %v5833 = vsel %vm5825, %v5810, %v5812
      %v5834 = vsel %vm5825, %v5812, %v5814
      %v5835 = vsel %vm5825, %v5814, %v5816
      %v5836 = vsel %vm5825, %v5816, %v5818
      %v5837 = vsel %vm5825, %v5818, %v5820
      %v5838 = vsel %vm5825, %v5820, %v5822
      %v5839 = vsel %vm5825, %v5822, %v5824
      %v5851 = vsel %vm5825, %v5808, %v5794
      %v5852 = vsel %vm5825, %v5824, %v5810
      %v5854 = vsel %vm3897, %v5791, 0
      %v5857 = vsel %vm3897, %v5792, 0
      %v5859 = vsel %vm3904, %v5833, 0
      %v5861 = vsel %vm3904, %v5834, 0
      %v5863 = vsel %vm3904, %v5835, 0
      %v5865 = vsel %vm3904, %v5836, 0
      %v5867 = vsel %vm3904, %v5837, 0
      %v5869 = vsel %vm3904, %v5838, 0
      %v5871 = vsel %vm3904, %v5839, 0
      %v5874 = vsel %vm3904, %v5852, 0
      %5876 = vmatprep.subr.mxu0 %v5827
      %5877 = vmatpush1.msra.mxu0 %v5826
      %5878 = vmatprep.subr.mxu0 %v5861
      %5879 = vmatpush1.msra.mxu0 %v5859
      %5880 = vmatprep.subr.mxu0 0.0
      %5881 = vmatpush1.msra.mxu0 0.0
      %5882 = vmatprep.subr.mxu0 0.0
      %5883 = vmatpush1.msra.mxu0 0.0
      %5884 = vmatprep.subr.mxu0 0.0
      %5885 = vmatpush1.msra.mxu0 0.0
      %5886 = vmatprep.subr.mxu0 0.0
      %5887 = vmatpush1.msra.mxu0 0.0
      %5888 = vmatprep.subr.mxu0 0.0
      %5889 = vmatpush1.msra.mxu0 0.0
      %5890 = vmatprep.subr.mxu0 0.0
      %5891 = vmatpush1.msra.mxu0 0.0
      %5892 = vmatprep.subr.mxu0 0.0
      %5893 = vmatpush1.msra.mxu0 0.0
      %5894 = vmatprep.subr.mxu0 0.0
      %5895 = vmatpush1.msra.mxu0 0.0
      %5896 = vmatprep.subr.mxu0 0.0
      %5897 = vmatpush1.msra.mxu0 0.0
      %5898 = vmatprep.subr.mxu0 0.0
      %5899 = vmatpush1.msra.mxu0 0.0
      %5900 = vmatprep.subr.mxu0 0.0
      %5901 = vmatpush1.msra.mxu0 0.0
      %5902 = vmatprep.subr.mxu0 0.0
      %5903 = vmatpush1.msra.mxu0 0.0
      %5904 = vmatprep.subr.mxu0 0.0
      %5905 = vmatpush1.msra.mxu0 0.0
      %5906 = vmatprep.subr.mxu0 0.0
      %5907 = vmatpush1.msra.mxu0 0.0
      %5908 = vmatprep.subr.mxu0 0.0
      %5909 = vmatpush1.msra.mxu0 0.0
      %5910 = vmatprep.subr.mxu0 0.0
      %5911 = vmatpush1.msra.mxu0 0.0
      %5912 = vmatprep.subr.mxu0 0.0
      %5913 = vmatpush1.msra.mxu0 0.0
      %5914 = vmatprep.subr.mxu0 0.0
      %5915 = vmatpush1.msra.mxu0 0.0
      %5916 = vmatprep.subr.mxu0 0.0
      %5917 = vmatpush1.msra.mxu0 0.0
      %5918 = vmatprep.subr.mxu0 0.0
      %5919 = vmatpush1.msra.mxu0 0.0
      %5920 = vmatprep.subr.mxu0 0.0
      %5921 = vmatpush1.msra.mxu0 0.0
      %5922 = vmatprep.subr.mxu0 0.0
      %5923 = vmatpush1.msra.mxu0 0.0
      %5924 = vmatprep.subr.mxu0 0.0
      %5925 = vmatpush1.msra.mxu0 0.0
      %5926 = vmatprep.subr.mxu0 0.0
      %5927 = vmatpush1.msra.mxu0 0.0
      %5928 = vmatprep.subr.mxu0 0.0
      %5929 = vmatpush1.msra.mxu0 0.0
      %5930 = vmatprep.subr.mxu0 0.0
      %5931 = vmatpush1.msra.mxu0 0.0
      %5932 = vmatprep.subr.mxu0 0.0
      %5933 = vmatpush1.msra.mxu0 0.0
      %5934 = vmatprep.subr.mxu0 0.0
      %5935 = vmatpush1.msra.mxu0 0.0
      %5936 = vmatprep.subr.mxu0 0.0
      %5937 = vmatpush1.msra.mxu0 0.0
      %5938 = vmatprep.subr.mxu0 0.0
      %5939 = vmatpush1.msra.mxu0 0.0
      %5940 = vmatprep.mubr.f32.mxu0 0.0
      %5941 = vmatmul.mubr.f32.gmra.mrb[0].mxu0 %v5854
      %v5942 = vpop.f32.mrb[0].mxu0
      %v5943 = vadd.f32 0.0, %v5942
      %v5944 = vpop.f32.mrb[0].mxu0
      %v5945 = vadd.f32 0.0, %v5944
      %5946 = vmatprep.mubr.f32.mxu0 0.0
      %5947 = vmatmul.mubr.f32.gmra.mrb[0].mxu0 %v5857
      %v5948 = vpop.f32.mrb[0].mxu0
      %v5949 = vadd.f32 0.0, %v5948
      %v5950 = vpop.f32.mrb[0].mxu0
      %v5951 = vadd.f32 0.0, %v5950
      %5952 = vdwg.mxu0
      %5953 = vmatprep.subr.mxu0 %v5829
      %5954 = vmatpush1.msra.mxu0 %v5828
      %5955 = vmatprep.subr.mxu0 %v5865
      %5956 = vmatpush1.msra.mxu0 %v5863
      %5957 = vmatprep.subr.mxu0 0.0
      %5958 = vmatpush1.msra.mxu0 0.0
      %5959 = vmatprep.subr.mxu0 0.0
      %5960 = vmatpush1.msra.mxu0 0.0
      %5961 = vmatprep.subr.mxu0 0.0
      %5962 = vmatpush1.msra.mxu0 0.0
      %5963 = vmatprep.subr.mxu0 0.0
      %5964 = vmatpush1.msra.mxu0 0.0
      %5965 = vmatprep.subr.mxu0 0.0
      %5966 = vmatpush1.msra.mxu0 0.0
      %5967 = vmatprep.subr.mxu0 0.0
      %5968 = vmatpush1.msra.mxu0 0.0
      %5969 = vmatprep.subr.mxu0 0.0
      %5970 = vmatpush1.msra.mxu0 0.0
      %5971 = vmatprep.subr.mxu0 0.0
      %5972 = vmatpush1.msra.mxu0 0.0
      %5973 = vmatprep.subr.mxu0 0.0
      %5974 = vmatpush1.msra.mxu0 0.0
      %5975 = vmatprep.subr.mxu0 0.0
      %5976 = vmatpush1.msra.mxu0 0.0
      %5977 = vmatprep.subr.mxu0 0.0
      %5978 = vmatpush1.msra.mxu0 0.0
      %5979 = vmatprep.subr.mxu0 0.0
      %5980 = vmatpush1.msra.mxu0 0.0
      %5981 = vmatprep.subr.mxu0 0.0
      %5982 = vmatpush1.msra.mxu0 0.0
      %5983 = vmatprep.subr.mxu0 0.0
      %5984 = vmatpush1.msra.mxu0 0.0
      %5985 = vmatprep.subr.mxu0 0.0
      %5986 = vmatpush1.msra.mxu0 0.0
      %5987 = vmatprep.subr.mxu0 0.0
      %5988 = vmatpush1.msra.mxu0 0.0
      %5989 = vmatprep.subr.mxu0 0.0
      %5990 = vmatpush1.msra.mxu0 0.0
      %5991 = vmatprep.subr.mxu0 0.0
      %5992 = vmatpush1.msra.mxu0 0.0
      %5993 = vmatprep.subr.mxu0 0.0
      %5994 = vmatpush1.msra.mxu0 0.0
      %5995 = vmatprep.subr.mxu0 0.0
      %5996 = vmatpush1.msra.mxu0 0.0
      %5997 = vmatprep.subr.mxu0 0.0
      %5998 = vmatpush1.msra.mxu0 0.0
      %5999 = vmatprep.subr.mxu0 0.0
      %6000 = vmatpush1.msra.mxu0 0.0
      %6001 = vmatprep.subr.mxu0 0.0
      %6002 = vmatpush1.msra.mxu0 0.0
      %6003 = vmatprep.subr.mxu0 0.0
      %6004 = vmatpush1.msra.mxu0 0.0
      %6005 = vmatprep.subr.mxu0 0.0
      %6006 = vmatpush1.msra.mxu0 0.0
      %6007 = vmatprep.subr.mxu0 0.0
      %6008 = vmatpush1.msra.mxu0 0.0
      %6009 = vmatprep.subr.mxu0 0.0
      %6010 = vmatpush1.msra.mxu0 0.0
      %6011 = vmatprep.subr.mxu0 0.0
      %6012 = vmatpush1.msra.mxu0 0.0
      %6013 = vmatprep.subr.mxu0 0.0
      %6014 = vmatpush1.msra.mxu0 0.0
      %6015 = vmatprep.subr.mxu0 0.0
      %6016 = vmatpush1.msra.mxu0 0.0
      %6017 = vmatprep.mubr.f32.mxu0 0.0
      %6018 = vmatmul.mubr.f32.gmra.mrb[0].mxu0 %v5854
      %v6019 = vpop.f32.mrb[0].mxu0
      %v6020 = vadd.f32 0.0, %v6019
      %v6021 = vpop.f32.mrb[0].mxu0
      %v6022 = vadd.f32 0.0, %v6021
      %6023 = vmatprep.mubr.f32.mxu0 0.0
      %6024 = vmatmul.mubr.f32.gmra.mrb[0].mxu0 %v5857
      %v6025 = vpop.f32.mrb[0].mxu0
      %v6026 = vadd.f32 0.0, %v6025
      %v6027 = vpop.f32.mrb[0].mxu0
      %v6028 = vadd.f32 0.0, %v6027
      %6029 = vdwg.mxu0
      %6030 = vmatprep.subr.mxu0 %v5831
      %6031 = vmatpush1.msra.mxu0 %v5830
      %6032 = vmatprep.subr.mxu0 %v5869
      %6033 = vmatpush1.msra.mxu0 %v5867
      %6034 = vmatprep.subr.mxu0 0.0
      %6035 = vmatpush1.msra.mxu0 0.0
      %6036 = vmatprep.subr.mxu0 0.0
      %6037 = vmatpush1.msra.mxu0 0.0
      %6038 = vmatprep.subr.mxu0 0.0
      %6039 = vmatpush1.msra.mxu0 0.0
      %6040 = vmatprep.subr.mxu0 0.0
      %6041 = vmatpush1.msra.mxu0 0.0
      %6042 = vmatprep.subr.mxu0 0.0
      %6043 = vmatpush1.msra.mxu0 0.0
      %6044 = vmatprep.subr.mxu0 0.0
      %6045 = vmatpush1.msra.mxu0 0.0
      %6046 = vmatprep.subr.mxu0 0.0
      %6047 = vmatpush1.msra.mxu0 0.0
      %6048 = vmatprep.subr.mxu0 0.0
      %6049 = vmatpush1.msra.mxu0 0.0
      %6050 = vmatprep.subr.mxu0 0.0
      %6051 = vmatpush1.msra.mxu0 0.0
      %6052 = vmatprep.subr.mxu0 0.0
      %6053 = vmatpush1.msra.mxu0 0.0
      %6054 = vmatprep.subr.mxu0 0.0
      %6055 = vmatpush1.msra.mxu0 0.0
      %6056 = vmatprep.subr.mxu0 0.0
      %6057 = vmatpush1.msra.mxu0 0.0
      %6058 = vmatprep.subr.mxu0 0.0
      %6059 = vmatpush1.msra.mxu0 0.0
      %6060 = vmatprep.subr.mxu0 0.0
      %6061 = vmatpush1.msra.mxu0 0.0
      %6062 = vmatprep.subr.mxu0 0.0
      %6063 = vmatpush1.msra.mxu0 0.0
      %6064 = vmatprep.subr.mxu0 0.0
      %6065 = vmatpush1.msra.mxu0 0.0
      %6066 = vmatprep.subr.mxu0 0.0
      %6067 = vmatpush1.msra.mxu0 0.0
      %6068 = vmatprep.subr.mxu0 0.0
      %6069 = vmatpush1.msra.mxu0 0.0
      %6070 = vmatprep.subr.mxu0 0.0
      %6071 = vmatpush1.msra.mxu0 0.0
      %6072 = vmatprep.subr.mxu0 0.0
      %6073 = vmatpush1.msra.mxu0 0.0
      %6074 = vmatprep.subr.mxu0 0.0
      %6075 = vmatpush1.msra.mxu0 0.0
      %6076 = vmatprep.subr.mxu0 0.0
      %6077 = vmatpush1.msra.mxu0 0.0
      %6078 = vmatprep.subr.mxu0 0.0
      %6079 = vmatpush1.msra.mxu0 0.0
      %6080 = vmatprep.subr.mxu0 0.0
      %6081 = vmatpush1.msra.mxu0 0.0
      %6082 = vmatprep.subr.mxu0 0.0
      %6083 = vmatpush1.msra.mxu0 0.0
      %6084 = vmatprep.subr.mxu0 0.0
      %6085 = vmatpush1.msra.mxu0 0.0
      %6086 = vmatprep.subr.mxu0 0.0
      %6087 = vmatpush1.msra.mxu0 0.0
      %6088 = vmatprep.subr.mxu0 0.0
      %6089 = vmatpush1.msra.mxu0 0.0
      %6090 = vmatprep.subr.mxu0 0.0
      %6091 = vmatpush1.msra.mxu0 0.0
      %6092 = vmatprep.subr.mxu0 0.0
      %6093 = vmatpush1.msra.mxu0 0.0
      %6094 = vmatprep.mubr.f32.mxu0 0.0
      %6095 = vmatmul.mubr.f32.gmra.mrb[0].mxu0 %v5854
      %v6096 = vpop.f32.mrb[0].mxu0
      %v6097 = vadd.f32 0.0, %v6096
      %v6098 = vpop.f32.mrb[0].mxu0
      %v6099 = vadd.f32 0.0, %v6098
      %6100 = vmatprep.mubr.f32.mxu0 0.0
      %6101 = vmatmul.mubr.f32.gmra.mrb[0].mxu0 %v5857
      %v6102 = vpop.f32.mrb[0].mxu0
      %v6103 = vadd.f32 0.0, %v6102
      %v6104 = vpop.f32.mrb[0].mxu0
      %v6105 = vadd.f32 0.0, %v6104
      %6106 = vdwg.mxu0
      %6107 = vmatprep.subr.mxu0 %v5851
      %6108 = vmatpush1.msra.mxu0 %v5832
      %6109 = vmatprep.subr.mxu0 %v5874
      %6110 = vmatpush1.msra.mxu0 %v5871
      %6111 = vmatprep.subr.mxu0 0.0
      %6112 = vmatpush1.msra.mxu0 0.0
      %6113 = vmatprep.subr.mxu0 0.0
      %6114 = vmatpush1.msra.mxu0 0.0
      %6115 = vmatprep.subr.mxu0 0.0
      %6116 = vmatpush1.msra.mxu0 0.0
      %6117 = vmatprep.subr.mxu0 0.0
      %6118 = vmatpush1.msra.mxu0 0.0
      %6119 = vmatprep.subr.mxu0 0.0
      %6120 = vmatpush1.msra.mxu0 0.0
      %6121 = vmatprep.subr.mxu0 0.0
      %6122 = vmatpush1.msra.mxu0 0.0
      %6123 = vmatprep.subr.mxu0 0.0
      %6124 = vmatpush1.msra.mxu0 0.0
      %6125 = vmatprep.subr.mxu0 0.0
      %6126 = vmatpush1.msra.mxu0 0.0
      %6127 = vmatprep.subr.mxu0 0.0
      %6128 = vmatpush1.msra.mxu0 0.0
      %6129 = vmatprep.subr.mxu0 0.0
      %6130 = vmatpush1.msra.mxu0 0.0
      %6131 = vmatprep.subr.mxu0 0.0
      %6132 = vmatpush1.msra.mxu0 0.0
      %6133 = vmatprep.subr.mxu0 0.0
      %6134 = vmatpush1.msra.mxu0 0.0
      %6135 = vmatprep.subr.mxu0 0.0
      %6136 = vmatpush1.msra.mxu0 0.0
      %6137 = vmatprep.subr.mxu0 0.0
      %6138 = vmatpush1.msra.mxu0 0.0
      %6139 = vmatprep.subr.mxu0 0.0
      %6140 = vmatpush1.msra.mxu0 0.0
      %6141 = vmatprep.subr.mxu0 0.0
      %6142 = vmatpush1.msra.mxu0 0.0
      %6143 = vmatprep.subr.mxu0 0.0
      %6144 = vmatpush1.msra.mxu0 0.0
      %6145 = vmatprep.subr.mxu0 0.0
      %6146 = vmatpush1.msra.mxu0 0.0
      %6147 = vmatprep.subr.mxu0 0.0
      %6148 = vmatpush1.msra.mxu0 0.0
      %6149 = vmatprep.subr.mxu0 0.0
      %6150 = vmatpush1.msra.mxu0 0.0
      %6151 = vmatprep.subr.mxu0 0.0
      %6152 = vmatpush1.msra.mxu0 0.0
      %6153 = vmatprep.subr.mxu0 0.0
      %6154 = vmatpush1.msra.mxu0 0.0
      %6155 = vmatprep.subr.mxu0 0.0
      %6156 = vmatpush1.msra.mxu0 0.0
      %6157 = vmatprep.subr.mxu0 0.0
      %6158 = vmatpush1.msra.mxu0 0.0
      %6159 = vmatprep.subr.mxu0 0.0
      %6160 = vmatpush1.msra.mxu0 0.0
      %6161 = vmatprep.subr.mxu0 0.0
      %6162 = vmatpush1.msra.mxu0 0.0
      %6163 = vmatprep.subr.mxu0 0.0
      %6164 = vmatpush1.msra.mxu0 0.0
      %6165 = vmatprep.subr.mxu0 0.0
      %6166 = vmatpush1.msra.mxu0 0.0
      %6167 = vmatprep.subr.mxu0 0.0
      %6168 = vmatpush1.msra.mxu0 0.0
      %6169 = vmatprep.subr.mxu0 0.0
      %6170 = vmatpush1.msra.mxu0 0.0
      %6171 = vmatprep.mubr.f32.mxu0 0.0
      %6172 = vmatmul.mubr.f32.gmra.mrb[0].mxu0 %v5854
      %v6173 = vpop.f32.mrb[0].mxu0
      %v6174 = vadd.f32 0.0, %v6173
      %v6175 = vpop.f32.mrb[0].mxu0
      %v6176 = vadd.f32 0.0, %v6175
      %6177 = vmatprep.mubr.f32.mxu0 0.0
      %6178 = vmatmul.mubr.f32.gmra.mrb[0].mxu0 %v5857
      %v6179 = vpop.f32.mrb[0].mxu0
      %v6180 = vadd.f32 0.0, %v6179
      %v6181 = vpop.f32.mrb[0].mxu0
      %v6182 = vadd.f32 0.0, %v6181
      %6183 = vdwg.mxu0
      %v6184 = vadd.f32 %v5774, %v5943
      %v6185 = vadd.f32 %v5775, %v5945
      %v6186 = vadd.f32 %v5776, %v6020
      %v6187 = vadd.f32 %v5777, %v6022
      %v6188 = vadd.f32 %v5778, %v6097
      %v6189 = vadd.f32 %v5779, %v6099
      %v6190 = vadd.f32 %v5780, %v6174
      %v6191 = vadd.f32 %v5781, %v6176
      %v6192 = vadd.f32 %v5782, %v5949
      %v6193 = vadd.f32 %v5783, %v5951
      %v6194 = vadd.f32 %v5784, %v6026
      %v6195 = vadd.f32 %v5785, %v6028
      %v6196 = vadd.f32 %v5786, %v6103
      %v6197 = vadd.f32 %v5787, %v6105
      %v6198 = vadd.f32 %v5788, %v6180
      %v6199 = vadd.f32 %v5789, %v6182
      %s6200 = scalar_lea.vmem %s3, 96
      %v6201 = vld [vmem:[%s6200] sm:$0xff]
      %v6202 = vld [vmem:[%s6200 + $0x8] sm:$0x3]
      %v6204 = vsel %vm3897, %v6201, 0
      %v6207 = vsel %vm3897, %v6202, 0
      %6209 = vmatprep.subr.mxu0 %v3802
      %6210 = vmatpush1.msra.mxu0 %v3801
      %6211 = vmatprep.subr.mxu0 %v4240
      %6212 = vmatpush1.msra.mxu0 %v4238
      %6213 = vmatprep.subr.mxu0 0.0
      %6214 = vmatpush1.msra.mxu0 0.0
      %6215 = vmatprep.subr.mxu0 0.0
      %6216 = vmatpush1.msra.mxu0 0.0
      %6217 = vmatprep.subr.mxu0 0.0
      %6218 = vmatpush1.msra.mxu0 0.0
      %6219 = vmatprep.subr.mxu0 0.0
      %6220 = vmatpush1.msra.mxu0 0.0
      %6221 = vmatprep.subr.mxu0 0.0
      %6222 = vmatpush1.msra.mxu0 0.0
      %6223 = vmatprep.subr.mxu0 0.0
      %6224 = vmatpush1.msra.mxu0 0.0
      %6225 = vmatprep.subr.mxu0 0.0
      %6226 = vmatpush1.msra.mxu0 0.0
      %6227 = vmatprep.subr.mxu0 0.0
      %6228 = vmatpush1.msra.mxu0 0.0
      %6229 = vmatprep.subr.mxu0 0.0
      %6230 = vmatpush1.msra.mxu0 0.0
      %6231 = vmatprep.subr.mxu0 0.0
      %6232 = vmatpush1.msra.mxu0 0.0
      %6233 = vmatprep.subr.mxu0 0.0
      %6234 = vmatpush1.msra.mxu0 0.0
      %6235 = vmatprep.subr.mxu0 0.0
      %6236 = vmatpush1.msra.mxu0 0.0
      %6237 = vmatprep.subr.mxu0 0.0
      %6238 = vmatpush1.msra.mxu0 0.0
      %6239 = vmatprep.subr.mxu0 0.0
      %6240 = vmatpush1.msra.mxu0 0.0
      %6241 = vmatprep.subr.mxu0 0.0
      %6242 = vmatpush1.msra.mxu0 0.0
      %6243 = vmatprep.subr.mxu0 0.0
      %6244 = vmatpush1.msra.mxu0 0.0
      %6245 = vmatprep.subr.mxu0 0.0
      %6246 = vmatpush1.msra.mxu0 0.0
      %6247 = vmatprep.subr.mxu0 0.0
      %6248 = vmatpush1.msra.mxu0 0.0
      %6249 = vmatprep.subr.mxu0 0.0
      %6250 = vmatpush1.msra.mxu0 0.0
      %6251 = vmatprep.subr.mxu0 0.0
      %6252 = vmatpush1.msra.mxu0 0.0
      %6253 = vmatprep.subr.mxu0 0.0
      %6254 = vmatpush1.msra.mxu0 0.0
      %6255 = vmatprep.subr.mxu0 0.0
      %6256 = vmatpush1.msra.mxu0 0.0
      %6257 = vmatprep.subr.mxu0 0.0
      %6258 = vmatpush1.msra.mxu0 0.0
      %6259 = vmatprep.subr.mxu0 0.0
      %6260 = vmatpush1.msra.mxu0 0.0
      %6261 = vmatprep.subr.mxu0 0.0
      %6262 = vmatpush1.msra.mxu0 0.0
      %6263 = vmatprep.subr.mxu0 0.0
      %6264 = vmatpush1.msra.mxu0 0.0
      %6265 = vmatprep.subr.mxu0 0.0
      %6266 = vmatpush1.msra.mxu0 0.0
      %6267 = vmatprep.subr.mxu0 0.0
      %6268 = vmatpush1.msra.mxu0 0.0
      %6269 = vmatprep.subr.mxu0 0.0
      %6270 = vmatpush1.msra.mxu0 0.0
      %6271 = vmatprep.subr.mxu0 0.0
      %6272 = vmatpush1.msra.mxu0 0.0
      %6273 = vmatprep.mubr.f32.mxu0 0.0
      %6274 = vmatmul.mubr.f32.gmra.mrb[0].mxu0 %v6204
      %v6275 = vpop.f32.mrb[0].mxu0
      %v6276 = vadd.f32 0.0, %v6275
      %v6277 = vpop.f32.mrb[0].mxu0
      %v6278 = vadd.f32 0.0, %v6277
      %6279 = vmatprep.mubr.f32.mxu0 0.0
      %6280 = vmatmul.mubr.f32.gmra.mrb[0].mxu0 %v6207
      %v6281 = vpop.f32.mrb[0].mxu0
      %v6282 = vadd.f32 0.0, %v6281
      %v6283 = vpop.f32.mrb[0].mxu0
      %v6284 = vadd.f32 0.0, %v6283
      %6285 = vdwg.mxu0
      %6286 = vmatprep.subr.mxu0 %v3804
      %6287 = vmatpush1.msra.mxu0 %v3803
      %6288 = vmatprep.subr.mxu0 %v4244
      %6289 = vmatpush1.msra.mxu0 %v4242
      %6290 = vmatprep.subr.mxu0 0.0
      %6291 = vmatpush1.msra.mxu0 0.0
      %6292 = vmatprep.subr.mxu0 0.0
      %6293 = vmatpush1.msra.mxu0 0.0
      %6294 = vmatprep.subr.mxu0 0.0
      %6295 = vmatpush1.msra.mxu0 0.0
      %6296 = vmatprep.subr.mxu0 0.0
      %6297 = vmatpush1.msra.mxu0 0.0
      %6298 = vmatprep.subr.mxu0 0.0
      %6299 = vmatpush1.msra.mxu0 0.0
      %6300 = vmatprep.subr.mxu0 0.0
      %6301 = vmatpush1.msra.mxu0 0.0
      %6302 = vmatprep.subr.mxu0 0.0
      %6303 = vmatpush1.msra.mxu0 0.0
      %6304 = vmatprep.subr.mxu0 0.0
      %6305 = vmatpush1.msra.mxu0 0.0
      %6306 = vmatprep.subr.mxu0 0.0
      %6307 = vmatpush1.msra.mxu0 0.0
      %6308 = vmatprep.subr.mxu0 0.0
      %6309 = vmatpush1.msra.mxu0 0.0
      %6310 = vmatprep.subr.mxu0 0.0
      %6311 = vmatpush1.msra.mxu0 0.0
      %6312 = vmatprep.subr.mxu0 0.0
      %6313 = vmatpush1.msra.mxu0 0.0
      %6314 = vmatprep.subr.mxu0 0.0
      %6315 = vmatpush1.msra.mxu0 0.0
      %6316 = vmatprep.subr.mxu0 0.0
      %6317 = vmatpush1.msra.mxu0 0.0
      %6318 = vmatprep.subr.mxu0 0.0
      %6319 = vmatpush1.msra.mxu0 0.0
      %6320 = vmatprep.subr.mxu0 0.0
      %6321 = vmatpush1.msra.mxu0 0.0
      %6322 = vmatprep.subr.mxu0 0.0
      %6323 = vmatpush1.msra.mxu0 0.0
      %6324 = vmatprep.subr.mxu0 0.0
      %6325 = vmatpush1.msra.mxu0 0.0
      %6326 = vmatprep.subr.mxu0 0.0
      %6327 = vmatpush1.msra.mxu0 0.0
      %6328 = vmatprep.subr.mxu0 0.0
      %6329 = vmatpush1.msra.mxu0 0.0
      %6330 = vmatprep.subr.mxu0 0.0
      %6331 = vmatpush1.msra.mxu0 0.0
      %6332 = vmatprep.subr.mxu0 0.0
      %6333 = vmatpush1.msra.mxu0 0.0
      %6334 = vmatprep.subr.mxu0 0.0
      %6335 = vmatpush1.msra.mxu0 0.0
      %6336 = vmatprep.subr.mxu0 0.0
      %6337 = vmatpush1.msra.mxu0 0.0
      %6338 = vmatprep.subr.mxu0 0.0
      %6339 = vmatpush1.msra.mxu0 0.0
      %6340 = vmatprep.subr.mxu0 0.0
      %6341 = vmatpush1.msra.mxu0 0.0
      %6342 = vmatprep.subr.mxu0 0.0
      %6343 = vmatpush1.msra.mxu0 0.0
      %6344 = vmatprep.subr.mxu0 0.0
      %6345 = vmatpush1.msra.mxu0 0.0
      %6346 = vmatprep.subr.mxu0 0.0
      %6347 = vmatpush1.msra.mxu0 0.0
      %6348 = vmatprep.subr.mxu0 0.0
      %6349 = vmatpush1.msra.mxu0 0.0
      %6350 = vmatprep.mubr.f32.mxu0 0.0
      %6351 = vmatmul.mubr.f32.gmra.mrb[0].mxu0 %v6204
      %v6352 = vpop.f32.mrb[0].mxu0
      %v6353 = vadd.f32 0.0, %v6352
      %v6354 = vpop.f32.mrb[0].mxu0
      %v6355 = vadd.f32 0.0, %v6354
      %6356 = vmatprep.mubr.f32.mxu0 0.0
      %6357 = vmatmul.mubr.f32.gmra.mrb[0].mxu0 %v6207
      %v6358 = vpop.f32.mrb[0].mxu0
      %v6359 = vadd.f32 0.0, %v6358
      %v6360 = vpop.f32.mrb[0].mxu0
      %v6361 = vadd.f32 0.0, %v6360
      %6362 = vdwg.mxu0
      %6363 = vmatprep.subr.mxu0 %v3806
      %6364 = vmatpush1.msra.mxu0 %v3805
      %6365 = vmatprep.subr.mxu0 %v4248
      %6366 = vmatpush1.msra.mxu0 %v4246
      %6367 = vmatprep.subr.mxu0 0.0
      %6368 = vmatpush1.msra.mxu0 0.0
      %6369 = vmatprep.subr.mxu0 0.0
      %6370 = vmatpush1.msra.mxu0 0.0
      %6371 = vmatprep.subr.mxu0 0.0
      %6372 = vmatpush1.msra.mxu0 0.0
      %6373 = vmatprep.subr.mxu0 0.0
      %6374 = vmatpush1.msra.mxu0 0.0
      %6375 = vmatprep.subr.mxu0 0.0
      %6376 = vmatpush1.msra.mxu0 0.0
      %6377 = vmatprep.subr.mxu0 0.0
      %6378 = vmatpush1.msra.mxu0 0.0
      %6379 = vmatprep.subr.mxu0 0.0
      %6380 = vmatpush1.msra.mxu0 0.0
      %6381 = vmatprep.subr.mxu0 0.0
      %6382 = vmatpush1.msra.mxu0 0.0
      %6383 = vmatprep.subr.mxu0 0.0
      %6384 = vmatpush1.msra.mxu0 0.0
      %6385 = vmatprep.subr.mxu0 0.0
      %6386 = vmatpush1.msra.mxu0 0.0
      %6387 = vmatprep.subr.mxu0 0.0
      %6388 = vmatpush1.msra.mxu0 0.0
      %6389 = vmatprep.subr.mxu0 0.0
      %6390 = vmatpush1.msra.mxu0 0.0
      %6391 = vmatprep.subr.mxu0 0.0
      %6392 = vmatpush1.msra.mxu0 0.0
      %6393 = vmatprep.subr.mxu0 0.0
      %6394 = vmatpush1.msra.mxu0 0.0
      %6395 = vmatprep.subr.mxu0 0.0
      %6396 = vmatpush1.msra.mxu0 0.0
      %6397 = vmatprep.subr.mxu0 0.0
      %6398 = vmatpush1.msra.mxu0 0.0
      %6399 = vmatprep.subr.mxu0 0.0
      %6400 = vmatpush1.msra.mxu0 0.0
      %6401 = vmatprep.subr.mxu0 0.0
      %6402 = vmatpush1.msra.mxu0 0.0
      %6403 = vmatprep.subr.mxu0 0.0
      %6404 = vmatpush1.msra.mxu0 0.0
      %6405 = vmatprep.subr.mxu0 0.0
      %6406 = vmatpush1.msra.mxu0 0.0
      %6407 = vmatprep.subr.mxu0 0.0
      %6408 = vmatpush1.msra.mxu0 0.0
      %6409 = vmatprep.subr.mxu0 0.0
      %6410 = vmatpush1.msra.mxu0 0.0
      %6411 = vmatprep.subr.mxu0 0.0
      %6412 = vmatpush1.msra.mxu0 0.0
      %6413 = vmatprep.subr.mxu0 0.0
      %6414 = vmatpush1.msra.mxu0 0.0
      %6415 = vmatprep.subr.mxu0 0.0
      %6416 = vmatpush1.msra.mxu0 0.0
      %6417 = vmatprep.subr.mxu0 0.0
      %6418 = vmatpush1.msra.mxu0 0.0
      %6419 = vmatprep.subr.mxu0 0.0
      %6420 = vmatpush1.msra.mxu0 0.0
      %6421 = vmatprep.subr.mxu0 0.0
      %6422 = vmatpush1.msra.mxu0 0.0
      %6423 = vmatprep.subr.mxu0 0.0
      %6424 = vmatpush1.msra.mxu0 0.0
      %6425 = vmatprep.subr.mxu0 0.0
      %6426 = vmatpush1.msra.mxu0 0.0
      %6427 = vmatprep.mubr.f32.mxu0 0.0
      %6428 = vmatmul.mubr.f32.gmra.mrb[0].mxu0 %v6204
      %v6429 = vpop.f32.mrb[0].mxu0
      %v6430 = vadd.f32 0.0, %v6429
      %v6431 = vpop.f32.mrb[0].mxu0
      %v6432 = vadd.f32 0.0, %v6431
      %6433 = vmatprep.mubr.f32.mxu0 0.0
      %6434 = vmatmul.mubr.f32.gmra.mrb[0].mxu0 %v6207
      %v6435 = vpop.f32.mrb[0].mxu0
      %v6436 = vadd.f32 0.0, %v6435
      %v6437 = vpop.f32.mrb[0].mxu0
      %v6438 = vadd.f32 0.0, %v6437
      %6439 = vdwg.mxu0
      %6440 = vmatprep.subr.mxu0 %v3800
      %6441 = vmatpush1.msra.mxu0 %v3807
      %6442 = vmatprep.subr.mxu0 %v4236
      %6443 = vmatpush1.msra.mxu0 %v4250
      %6444 = vmatprep.subr.mxu0 0.0
      %6445 = vmatpush1.msra.mxu0 0.0
      %6446 = vmatprep.subr.mxu0 0.0
      %6447 = vmatpush1.msra.mxu0 0.0
      %6448 = vmatprep.subr.mxu0 0.0
      %6449 = vmatpush1.msra.mxu0 0.0
      %6450 = vmatprep.subr.mxu0 0.0
      %6451 = vmatpush1.msra.mxu0 0.0
      %6452 = vmatprep.subr.mxu0 0.0
      %6453 = vmatpush1.msra.mxu0 0.0
      %6454 = vmatprep.subr.mxu0 0.0
      %6455 = vmatpush1.msra.mxu0 0.0
      %6456 = vmatprep.subr.mxu0 0.0
      %6457 = vmatpush1.msra.mxu0 0.0
      %6458 = vmatprep.subr.mxu0 0.0
      %6459 = vmatpush1.msra.mxu0 0.0
      %6460 = vmatprep.subr.mxu0 0.0
      %6461 = vmatpush1.msra.mxu0 0.0
      %6462 = vmatprep.subr.mxu0 0.0
      %6463 = vmatpush1.msra.mxu0 0.0
      %6464 = vmatprep.subr.mxu0 0.0
      %6465 = vmatpush1.msra.mxu0 0.0
      %6466 = vmatprep.subr.mxu0 0.0
      %6467 = vmatpush1.msra.mxu0 0.0
      %6468 = vmatprep.subr.mxu0 0.0
      %6469 = vmatpush1.msra.mxu0 0.0
      %6470 = vmatprep.subr.mxu0 0.0
      %6471 = vmatpush1.msra.mxu0 0.0
      %6472 = vmatprep.subr.mxu0 0.0
      %6473 = vmatpush1.msra.mxu0 0.0
      %6474 = vmatprep.subr.mxu0 0.0
      %6475 = vmatpush1.msra.mxu0 0.0
      %6476 = vmatprep.subr.mxu0 0.0
      %6477 = vmatpush1.msra.mxu0 0.0
      %6478 = vmatprep.subr.mxu0 0.0
      %6479 = vmatpush1.msra.mxu0 0.0
      %6480 = vmatprep.subr.mxu0 0.0
      %6481 = vmatpush1.msra.mxu0 0.0
      %6482 = vmatprep.subr.mxu0 0.0
      %6483 = vmatpush1.msra.mxu0 0.0
      %6484 = vmatprep.subr.mxu0 0.0
      %6485 = vmatpush1.msra.mxu0 0.0
      %6486 = vmatprep.subr.mxu0 0.0
      %6487 = vmatpush1.msra.mxu0 0.0
      %6488 = vmatprep.subr.mxu0 0.0
      %6489 = vmatpush1.msra.mxu0 0.0
      %6490 = vmatprep.subr.mxu0 0.0
      %6491 = vmatpush1.msra.mxu0 0.0
      %6492 = vmatprep.subr.mxu0 0.0
      %6493 = vmatpush1.msra.mxu0 0.0
      %6494 = vmatprep.subr.mxu0 0.0
      %6495 = vmatpush1.msra.mxu0 0.0
      %6496 = vmatprep.subr.mxu0 0.0
      %6497 = vmatpush1.msra.mxu0 0.0
      %6498 = vmatprep.subr.mxu0 0.0
      %6499 = vmatpush1.msra.mxu0 0.0
      %6500 = vmatprep.subr.mxu0 0.0
      %6501 = vmatpush1.msra.mxu0 0.0
      %6502 = vmatprep.subr.mxu0 0.0
      %6503 = vmatpush1.msra.mxu0 0.0
      %6504 = vmatprep.mubr.f32.mxu0 0.0
      %6505 = vmatmul.mubr.f32.gmra.mrb[0].mxu0 %v6204
      %v6506 = vpop.f32.mrb[0].mxu0
      %v6507 = vadd.f32 0.0, %v6506
      %v6508 = vpop.f32.mrb[0].mxu0
      %v6509 = vadd.f32 0.0, %v6508
      %6510 = vmatprep.mubr.f32.mxu0 0.0
      %6511 = vmatmul.mubr.f32.gmra.mrb[0].mxu0 %v6207
      %v6512 = vpop.f32.mrb[0].mxu0
      %v6513 = vadd.f32 0.0, %v6512
      %v6514 = vpop.f32.mrb[0].mxu0
      %v6515 = vadd.f32 0.0, %v6514
      %6516 = vdwg.mxu0
      %v6517 = vadd.f32 %v6184, %v6276
      %v6518 = vadd.f32 %v6185, %v6278
      %v6519 = vadd.f32 %v6186, %v6353
      %v6520 = vadd.f32 %v6187, %v6355
      %v6521 = vadd.f32 %v6188, %v6430
      %v6522 = vadd.f32 %v6189, %v6432
      %v6523 = vadd.f32 %v6190, %v6507
      %v6524 = vadd.f32 %v6191, %v6509
      %v6525 = vadd.f32 %v6192, %v6282
      %v6526 = vadd.f32 %v6193, %v6284
      %v6527 = vadd.f32 %v6194, %v6359
      %v6528 = vadd.f32 %v6195, %v6361
      %v6529 = vadd.f32 %v6196, %v6436
      %v6530 = vadd.f32 %v6197, %v6438
      %v6531 = vadd.f32 %v6198, %v6513
      %v6532 = vadd.f32 %v6199, %v6515
      %s6533 = scalar_lea.vmem %s3, 112
      %v6534 = vld [vmem:[%s6533] sm:$0xff]
      %v6535 = vld [vmem:[%s6533 + $0x8] sm:$0x3]
      %v6537 = vsel %vm3897, %v6534, 0
      %v6540 = vsel %vm3897, %v6535, 0
      %6542 = vmatprep.subr.mxu0 %v3872
      %6543 = vmatpush1.msra.mxu0 %v3871
      %6544 = vmatprep.subr.mxu0 %v3909
      %6545 = vmatpush1.msra.mxu0 %v3907
      %6546 = vmatprep.subr.mxu0 0.0
      %6547 = vmatpush1.msra.mxu0 0.0
      %6548 = vmatprep.subr.mxu0 0.0
      %6549 = vmatpush1.msra.mxu0 0.0
      %6550 = vmatprep.subr.mxu0 0.0
      %6551 = vmatpush1.msra.mxu0 0.0
      %6552 = vmatprep.subr.mxu0 0.0
      %6553 = vmatpush1.msra.mxu0 0.0
      %6554 = vmatprep.subr.mxu0 0.0
      %6555 = vmatpush1.msra.mxu0 0.0
      %6556 = vmatprep.subr.mxu0 0.0
      %6557 = vmatpush1.msra.mxu0 0.0
      %6558 = vmatprep.subr.mxu0 0.0
      %6559 = vmatpush1.msra.mxu0 0.0
      %6560 = vmatprep.subr.mxu0 0.0
      %6561 = vmatpush1.msra.mxu0 0.0
      %6562 = vmatprep.subr.mxu0 0.0
      %6563 = vmatpush1.msra.mxu0 0.0
      %6564 = vmatprep.subr.mxu0 0.0
      %6565 = vmatpush1.msra.mxu0 0.0
      %6566 = vmatprep.subr.mxu0 0.0
      %6567 = vmatpush1.msra.mxu0 0.0
      %6568 = vmatprep.subr.mxu0 0.0
      %6569 = vmatpush1.msra.mxu0 0.0
      %6570 = vmatprep.subr.mxu0 0.0
      %6571 = vmatpush1.msra.mxu0 0.0
      %6572 = vmatprep.subr.mxu0 0.0
      %6573 = vmatpush1.msra.mxu0 0.0
      %6574 = vmatprep.subr.mxu0 0.0
      %6575 = vmatpush1.msra.mxu0 0.0
      %6576 = vmatprep.subr.mxu0 0.0
      %6577 = vmatpush1.msra.mxu0 0.0
      %6578 = vmatprep.subr.mxu0 0.0
      %6579 = vmatpush1.msra.mxu0 0.0
      %6580 = vmatprep.subr.mxu0 0.0
      %6581 = vmatpush1.msra.mxu0 0.0
      %6582 = vmatprep.subr.mxu0 0.0
      %6583 = vmatpush1.msra.mxu0 0.0
      %6584 = vmatprep.subr.mxu0 0.0
      %6585 = vmatpush1.msra.mxu0 0.0
      %6586 = vmatprep.subr.mxu0 0.0
      %6587 = vmatpush1.msra.mxu0 0.0
      %6588 = vmatprep.subr.mxu0 0.0
      %6589 = vmatpush1.msra.mxu0 0.0
      %6590 = vmatprep.subr.mxu0 0.0
      %6591 = vmatpush1.msra.mxu0 0.0
      %6592 = vmatprep.subr.mxu0 0.0
      %6593 = vmatpush1.msra.mxu0 0.0
      %6594 = vmatprep.subr.mxu0 0.0
      %6595 = vmatpush1.msra.mxu0 0.0
      %6596 = vmatprep.subr.mxu0 0.0
      %6597 = vmatpush1.msra.mxu0 0.0
      %6598 = vmatprep.subr.mxu0 0.0
      %6599 = vmatpush1.msra.mxu0 0.0
      %6600 = vmatprep.subr.mxu0 0.0
      %6601 = vmatpush1.msra.mxu0 0.0
      %6602 = vmatprep.subr.mxu0 0.0
      %6603 = vmatpush1.msra.mxu0 0.0
      %6604 = vmatprep.subr.mxu0 0.0
      %6605 = vmatpush1.msra.mxu0 0.0
      %6606 = vmatprep.mubr.f32.mxu0 0.0
      %6607 = vmatmul.mubr.f32.gmra.mrb[0].mxu0 %v6537
      %v6608 = vpop.f32.mrb[0].mxu0
      %v6609 = vadd.f32 0.0, %v6608
      %v6610 = vpop.f32.mrb[0].mxu0
      %v6611 = vadd.f32 0.0, %v6610
      %6612 = vmatprep.mubr.f32.mxu0 0.0
      %6613 = vmatmul.mubr.f32.gmra.mrb[0].mxu0 %v6540
      %v6614 = vpop.f32.mrb[0].mxu0
      %v6615 = vadd.f32 0.0, %v6614
      %v6616 = vpop.f32.mrb[0].mxu0
      %v6617 = vadd.f32 0.0, %v6616
      %6618 = vdwg.mxu0
      %6619 = vmatprep.subr.mxu0 %v3874
      %6620 = vmatpush1.msra.mxu0 %v3873
      %6621 = vmatprep.subr.mxu0 %v3913
      %6622 = vmatpush1.msra.mxu0 %v3911
      %6623 = vmatprep.subr.mxu0 0.0
      %6624 = vmatpush1.msra.mxu0 0.0
      %6625 = vmatprep.subr.mxu0 0.0
      %6626 = vmatpush1.msra.mxu0 0.0
      %6627 = vmatprep.subr.mxu0 0.0
      %6628 = vmatpush1.msra.mxu0 0.0
      %6629 = vmatprep.subr.mxu0 0.0
      %6630 = vmatpush1.msra.mxu0 0.0
      %6631 = vmatprep.subr.mxu0 0.0
      %6632 = vmatpush1.msra.mxu0 0.0
      %6633 = vmatprep.subr.mxu0 0.0
      %6634 = vmatpush1.msra.mxu0 0.0
      %6635 = vmatprep.subr.mxu0 0.0
      %6636 = vmatpush1.msra.mxu0 0.0
      %6637 = vmatprep.subr.mxu0 0.0
      %6638 = vmatpush1.msra.mxu0 0.0
      %6639 = vmatprep.subr.mxu0 0.0
      %6640 = vmatpush1.msra.mxu0 0.0
      %6641 = vmatprep.subr.mxu0 0.0
      %6642 = vmatpush1.msra.mxu0 0.0
      %6643 = vmatprep.subr.mxu0 0.0
      %6644 = vmatpush1.msra.mxu0 0.0
      %6645 = vmatprep.subr.mxu0 0.0
      %6646 = vmatpush1.msra.mxu0 0.0
      %6647 = vmatprep.subr.mxu0 0.0
      %6648 = vmatpush1.msra.mxu0 0.0
      %6649 = vmatprep.subr.mxu0 0.0
      %6650 = vmatpush1.msra.mxu0 0.0
      %6651 = vmatprep.subr.mxu0 0.0
      %6652 = vmatpush1.msra.mxu0 0.0
      %6653 = vmatprep.subr.mxu0 0.0
      %6654 = vmatpush1.msra.mxu0 0.0
      %6655 = vmatprep.subr.mxu0 0.0
      %6656 = vmatpush1.msra.mxu0 0.0
      %6657 = vmatprep.subr.mxu0 0.0
      %6658 = vmatpush1.msra.mxu0 0.0
      %6659 = vmatprep.subr.mxu0 0.0
      %6660 = vmatpush1.msra.mxu0 0.0
      %6661 = vmatprep.subr.mxu0 0.0
      %6662 = vmatpush1.msra.mxu0 0.0
      %6663 = vmatprep.subr.mxu0 0.0
      %6664 = vmatpush1.msra.mxu0 0.0
      %6665 = vmatprep.subr.mxu0 0.0
      %6666 = vmatpush1.msra.mxu0 0.0
      %6667 = vmatprep.subr.mxu0 0.0
      %6668 = vmatpush1.msra.mxu0 0.0
      %6669 = vmatprep.subr.mxu0 0.0
      %6670 = vmatpush1.msra.mxu0 0.0
      %6671 = vmatprep.subr.mxu0 0.0
      %6672 = vmatpush1.msra.mxu0 0.0
      %6673 = vmatprep.subr.mxu0 0.0
      %6674 = vmatpush1.msra.mxu0 0.0
      %6675 = vmatprep.subr.mxu0 0.0
      %6676 = vmatpush1.msra.mxu0 0.0
      %6677 = vmatprep.subr.mxu0 0.0
      %6678 = vmatpush1.msra.mxu0 0.0
      %6679 = vmatprep.subr.mxu0 0.0
      %6680 = vmatpush1.msra.mxu0 0.0
      %6681 = vmatprep.subr.mxu0 0.0
      %6682 = vmatpush1.msra.mxu0 0.0
      %6683 = vmatprep.mubr.f32.mxu0 0.0
      %6684 = vmatmul.mubr.f32.gmra.mrb[0].mxu0 %v6537
      %v6685 = vpop.f32.mrb[0].mxu0
      %v6686 = vadd.f32 0.0, %v6685
      %v6687 = vpop.f32.mrb[0].mxu0
      %v6688 = vadd.f32 0.0, %v6687
      %6689 = vmatprep.mubr.f32.mxu0 0.0
      %6690 = vmatmul.mubr.f32.gmra.mrb[0].mxu0 %v6540
      %v6691 = vpop.f32.mrb[0].mxu0
      %v6692 = vadd.f32 0.0, %v6691
      %v6693 = vpop.f32.mrb[0].mxu0
      %v6694 = vadd.f32 0.0, %v6693
      %6695 = vdwg.mxu0
      %6696 = vmatprep.subr.mxu0 %v3876
      %6697 = vmatpush1.msra.mxu0 %v3875
      %6698 = vmatprep.subr.mxu0 %v3917
      %6699 = vmatpush1.msra.mxu0 %v3915
      %6700 = vmatprep.subr.mxu0 0.0
      %6701 = vmatpush1.msra.mxu0 0.0
      %6702 = vmatprep.subr.mxu0 0.0
      %6703 = vmatpush1.msra.mxu0 0.0
      %6704 = vmatprep.subr.mxu0 0.0
      %6705 = vmatpush1.msra.mxu0 0.0
      %6706 = vmatprep.subr.mxu0 0.0
      %6707 = vmatpush1.msra.mxu0 0.0
      %6708 = vmatprep.subr.mxu0 0.0
      %6709 = vmatpush1.msra.mxu0 0.0
      %6710 = vmatprep.subr.mxu0 0.0
      %6711 = vmatpush1.msra.mxu0 0.0
      %6712 = vmatprep.subr.mxu0 0.0
      %6713 = vmatpush1.msra.mxu0 0.0
      %6714 = vmatprep.subr.mxu0 0.0
      %6715 = vmatpush1.msra.mxu0 0.0
      %6716 = vmatprep.subr.mxu0 0.0
      %6717 = vmatpush1.msra.mxu0 0.0
      %6718 = vmatprep.subr.mxu0 0.0
      %6719 = vmatpush1.msra.mxu0 0.0
      %6720 = vmatprep.subr.mxu0 0.0
      %6721 = vmatpush1.msra.mxu0 0.0
      %6722 = vmatprep.subr.mxu0 0.0
      %6723 = vmatpush1.msra.mxu0 0.0
      %6724 = vmatprep.subr.mxu0 0.0
      %6725 = vmatpush1.msra.mxu0 0.0
      %6726 = vmatprep.subr.mxu0 0.0
      %6727 = vmatpush1.msra.mxu0 0.0
      %6728 = vmatprep.subr.mxu0 0.0
      %6729 = vmatpush1.msra.mxu0 0.0
      %6730 = vmatprep.subr.mxu0 0.0
      %6731 = vmatpush1.msra.mxu0 0.0
      %6732 = vmatprep.subr.mxu0 0.0
      %6733 = vmatpush1.msra.mxu0 0.0
      %6734 = vmatprep.subr.mxu0 0.0
      %6735 = vmatpush1.msra.mxu0 0.0
      %6736 = vmatprep.subr.mxu0 0.0
      %6737 = vmatpush1.msra.mxu0 0.0
      %6738 = vmatprep.subr.mxu0 0.0
      %6739 = vmatpush1.msra.mxu0 0.0
      %6740 = vmatprep.subr.mxu0 0.0
      %6741 = vmatpush1.msra.mxu0 0.0
      %6742 = vmatprep.subr.mxu0 0.0
      %6743 = vmatpush1.msra.mxu0 0.0
      %6744 = vmatprep.subr.mxu0 0.0
      %6745 = vmatpush1.msra.mxu0 0.0
      %6746 = vmatprep.subr.mxu0 0.0
      %6747 = vmatpush1.msra.mxu0 0.0
      %6748 = vmatprep.subr.mxu0 0.0
      %6749 = vmatpush1.msra.mxu0 0.0
      %6750 = vmatprep.subr.mxu0 0.0
      %6751 = vmatpush1.msra.mxu0 0.0
      %6752 = vmatprep.subr.mxu0 0.0
      %6753 = vmatpush1.msra.mxu0 0.0
      %6754 = vmatprep.subr.mxu0 0.0
      %6755 = vmatpush1.msra.mxu0 0.0
      %6756 = vmatprep.subr.mxu0 0.0
      %6757 = vmatpush1.msra.mxu0 0.0
      %6758 = vmatprep.subr.mxu0 0.0
      %6759 = vmatpush1.msra.mxu0 0.0
      %6760 = vmatprep.mubr.f32.mxu0 0.0
      %6761 = vmatmul.mubr.f32.gmra.mrb[0].mxu0 %v6537
      %v6762 = vpop.f32.mrb[0].mxu0
      %v6763 = vadd.f32 0.0, %v6762
      %v6764 = vpop.f32.mrb[0].mxu0
      %v6765 = vadd.f32 0.0, %v6764
      %6766 = vmatprep.mubr.f32.mxu0 0.0
      %6767 = vmatmul.mubr.f32.gmra.mrb[0].mxu0 %v6540
      %v6768 = vpop.f32.mrb[0].mxu0
      %v6769 = vadd.f32 0.0, %v6768
      %v6770 = vpop.f32.mrb[0].mxu0
      %v6771 = vadd.f32 0.0, %v6770
      %6772 = vdwg.mxu0
      %6773 = vmatprep.subr.mxu0 %v3870
      %6774 = vmatpush1.msra.mxu0 %v3895
      %6775 = vmatprep.subr.mxu0 %v3905
      %6776 = vmatpush1.msra.mxu0 %v3920
      %6777 = vmatprep.subr.mxu0 0.0
      %6778 = vmatpush1.msra.mxu0 0.0
      %6779 = vmatprep.subr.mxu0 0.0
      %6780 = vmatpush1.msra.mxu0 0.0
      %6781 = vmatprep.subr.mxu0 0.0
      %6782 = vmatpush1.msra.mxu0 0.0
      %6783 = vmatprep.subr.mxu0 0.0
      %6784 = vmatpush1.msra.mxu0 0.0
      %6785 = vmatprep.subr.mxu0 0.0
      %6786 = vmatpush1.msra.mxu0 0.0
      %6787 = vmatprep.subr.mxu0 0.0
      %6788 = vmatpush1.msra.mxu0 0.0
      %6789 = vmatprep.subr.mxu0 0.0
      %6790 = vmatpush1.msra.mxu0 0.0
      %6791 = vmatprep.subr.mxu0 0.0
      %6792 = vmatpush1.msra.mxu0 0.0
      %6793 = vmatprep.subr.mxu0 0.0
      %6794 = vmatpush1.msra.mxu0 0.0
      %6795 = vmatprep.subr.mxu0 0.0
      %6796 = vmatpush1.msra.mxu0 0.0
      %6797 = vmatprep.subr.mxu0 0.0
      %6798 = vmatpush1.msra.mxu0 0.0
      %6799 = vmatprep.subr.mxu0 0.0
      %6800 = vmatpush1.msra.mxu0 0.0
      %6801 = vmatprep.subr.mxu0 0.0
      %6802 = vmatpush1.msra.mxu0 0.0
      %6803 = vmatprep.subr.mxu0 0.0
      %6804 = vmatpush1.msra.mxu0 0.0
      %6805 = vmatprep.subr.mxu0 0.0
      %6806 = vmatpush1.msra.mxu0 0.0
      %6807 = vmatprep.subr.mxu0 0.0
      %6808 = vmatpush1.msra.mxu0 0.0
      %6809 = vmatprep.subr.mxu0 0.0
      %6810 = vmatpush1.msra.mxu0 0.0
      %6811 = vmatprep.subr.mxu0 0.0
      %6812 = vmatpush1.msra.mxu0 0.0
      %6813 = vmatprep.subr.mxu0 0.0
      %6814 = vmatpush1.msra.mxu0 0.0
      %6815 = vmatprep.subr.mxu0 0.0
      %6816 = vmatpush1.msra.mxu0 0.0
      %6817 = vmatprep.subr.mxu0 0.0
      %6818 = vmatpush1.msra.mxu0 0.0
      %6819 = vmatprep.subr.mxu0 0.0
      %6820 = vmatpush1.msra.mxu0 0.0
      %6821 = vmatprep.subr.mxu0 0.0
      %6822 = vmatpush1.msra.mxu0 0.0
      %6823 = vmatprep.subr.mxu0 0.0
      %6824 = vmatpush1.msra.mxu0 0.0
      %6825 = vmatprep.subr.mxu0 0.0
      %6826 = vmatpush1.msra.mxu0 0.0
      %6827 = vmatprep.subr.mxu0 0.0
      %6828 = vmatpush1.msra.mxu0 0.0
      %6829 = vmatprep.subr.mxu0 0.0
      %6830 = vmatpush1.msra.mxu0 0.0
      %6831 = vmatprep.subr.mxu0 0.0
      %6832 = vmatpush1.msra.mxu0 0.0
      %6833 = vmatprep.subr.mxu0 0.0
      %6834 = vmatpush1.msra.mxu0 0.0
      %6835 = vmatprep.subr.mxu0 0.0
      %6836 = vmatpush1.msra.mxu0 0.0
      %6837 = vmatprep.mubr.f32.mxu0 0.0
      %6838 = vmatmul.mubr.f32.gmra.mrb[0].mxu0 %v6537
      %v6839 = vpop.f32.mrb[0].mxu0
      %v6840 = vadd.f32 0.0, %v6839
      %v6841 = vpop.f32.mrb[0].mxu0
      %v6842 = vadd.f32 0.0, %v6841
      %6843 = vmatprep.mubr.f32.mxu0 0.0
      %6844 = vmatmul.mubr.f32.gmra.mrb[0].mxu0 %v6540
      %v6845 = vpop.f32.mrb[0].mxu0
      %v6846 = vadd.f32 0.0, %v6845
      %v6847 = vpop.f32.mrb[0].mxu0
      %v6848 = vadd.f32 0.0, %v6847
      %6849 = vdwg.mxu0
      %v6850 = vadd.f32 %v6517, %v6609
      %v6851 = vadd.f32 %v6518, %v6611
      %v6852 = vadd.f32 %v6519, %v6686
      %v6853 = vadd.f32 %v6520, %v6688
      %v6854 = vadd.f32 %v6521, %v6763
      %v6855 = vadd.f32 %v6522, %v6765
      %v6856 = vadd.f32 %v6523, %v6840
      %v6857 = vadd.f32 %v6524, %v6842
      %v6858 = vadd.f32 %v6525, %v6615
      %v6859 = vadd.f32 %v6526, %v6617
      %v6860 = vadd.f32 %v6527, %v6692
      %v6861 = vadd.f32 %v6528, %v6694
      %v6862 = vadd.f32 %v6529, %v6769
      %v6863 = vadd.f32 %v6530, %v6771
      %v6864 = vadd.f32 %v6531, %v6846
      %v6865 = vadd.f32 %v6532, %v6848
      %s6866 = scalar_lea.vmem %s3, 128
      %v6867 = vld [vmem:[%s6866] sm:$0xff]
      %v6868 = vld [vmem:[%s6866 + $0x8] sm:$0x3]
      %v6870 = vsel %vm3897, %v6867, 0
      %v6873 = vsel %vm3897, %v6868, 0
      %6875 = vmatprep.subr.mxu0 %v4598
      %6876 = vmatpush1.msra.mxu0 %v4597
      %6877 = vmatprep.subr.mxu0 %v4633
      %6878 = vmatpush1.msra.mxu0 %v4631
      %6879 = vmatprep.subr.mxu0 0.0
      %6880 = vmatpush1.msra.mxu0 0.0
      %6881 = vmatprep.subr.mxu0 0.0
      %6882 = vmatpush1.msra.mxu0 0.0
      %6883 = vmatprep.subr.mxu0 0.0
      %6884 = vmatpush1.msra.mxu0 0.0
      %6885 = vmatprep.subr.mxu0 0.0
      %6886 = vmatpush1.msra.mxu0 0.0
      %6887 = vmatprep.subr.mxu0 0.0
      %6888 = vmatpush1.msra.mxu0 0.0
      %6889 = vmatprep.subr.mxu0 0.0
      %6890 = vmatpush1.msra.mxu0 0.0
      %6891 = vmatprep.subr.mxu0 0.0
      %6892 = vmatpush1.msra.mxu0 0.0
      %6893 = vmatprep.subr.mxu0 0.0
      %6894 = vmatpush1.msra.mxu0 0.0
      %6895 = vmatprep.subr.mxu0 0.0
      %6896 = vmatpush1.msra.mxu0 0.0
      %6897 = vmatprep.subr.mxu0 0.0
      %6898 = vmatpush1.msra.mxu0 0.0
      %6899 = vmatprep.subr.mxu0 0.0
      %6900 = vmatpush1.msra.mxu0 0.0
      %6901 = vmatprep.subr.mxu0 0.0
      %6902 = vmatpush1.msra.mxu0 0.0
      %6903 = vmatprep.subr.mxu0 0.0
      %6904 = vmatpush1.msra.mxu0 0.0
      %6905 = vmatprep.subr.mxu0 0.0
      %6906 = vmatpush1.msra.mxu0 0.0
      %6907 = vmatprep.subr.mxu0 0.0
      %6908 = vmatpush1.msra.mxu0 0.0
      %6909 = vmatprep.subr.mxu0 0.0
      %6910 = vmatpush1.msra.mxu0 0.0
      %6911 = vmatprep.subr.mxu0 0.0
      %6912 = vmatpush1.msra.mxu0 0.0
      %6913 = vmatprep.subr.mxu0 0.0
      %6914 = vmatpush1.msra.mxu0 0.0
      %6915 = vmatprep.subr.mxu0 0.0
      %6916 = vmatpush1.msra.mxu0 0.0
      %6917 = vmatprep.subr.mxu0 0.0
      %6918 = vmatpush1.msra.mxu0 0.0
      %6919 = vmatprep.subr.mxu0 0.0
      %6920 = vmatpush1.msra.mxu0 0.0
      %6921 = vmatprep.subr.mxu0 0.0
      %6922 = vmatpush1.msra.mxu0 0.0
      %6923 = vmatprep.subr.mxu0 0.0
      %6924 = vmatpush1.msra.mxu0 0.0
      %6925 = vmatprep.subr.mxu0 0.0
      %6926 = vmatpush1.msra.mxu0 0.0
      %6927 = vmatprep.subr.mxu0 0.0
      %6928 = vmatpush1.msra.mxu0 0.0
      %6929 = vmatprep.subr.mxu0 0.0
      %6930 = vmatpush1.msra.mxu0 0.0
      %6931 = vmatprep.subr.mxu0 0.0
      %6932 = vmatpush1.msra.mxu0 0.0
      %6933 = vmatprep.subr.mxu0 0.0
      %6934 = vmatpush1.msra.mxu0 0.0
      %6935 = vmatprep.subr.mxu0 0.0
      %6936 = vmatpush1.msra.mxu0 0.0
      %6937 = vmatprep.subr.mxu0 0.0
      %6938 = vmatpush1.msra.mxu0 0.0
      %6939 = vmatprep.mubr.f32.mxu0 0.0
      %6940 = vmatmul.mubr.f32.gmra.mrb[0].mxu0 %v6870
      %v6941 = vpop.f32.mrb[0].mxu0
      %v6942 = vadd.f32 0.0, %v6941
      %v6943 = vpop.f32.mrb[0].mxu0
      %v6944 = vadd.f32 0.0, %v6943
      %6945 = vmatprep.mubr.f32.mxu0 0.0
      %6946 = vmatmul.mubr.f32.gmra.mrb[0].mxu0 %v6873
      %v6947 = vpop.f32.mrb[0].mxu0
      %v6948 = vadd.f32 0.0, %v6947
      %v6949 = vpop.f32.mrb[0].mxu0
      %v6950 = vadd.f32 0.0, %v6949
      %6951 = vdwg.mxu0
      %6952 = vmatprep.subr.mxu0 %v4600
      %6953 = vmatpush1.msra.mxu0 %v4599
      %6954 = vmatprep.subr.mxu0 %v4637
      %6955 = vmatpush1.msra.mxu0 %v4635
      %6956 = vmatprep.subr.mxu0 0.0
      %6957 = vmatpush1.msra.mxu0 0.0
      %6958 = vmatprep.subr.mxu0 0.0
      %6959 = vmatpush1.msra.mxu0 0.0
      %6960 = vmatprep.subr.mxu0 0.0
      %6961 = vmatpush1.msra.mxu0 0.0
      %6962 = vmatprep.subr.mxu0 0.0
      %6963 = vmatpush1.msra.mxu0 0.0
      %6964 = vmatprep.subr.mxu0 0.0
      %6965 = vmatpush1.msra.mxu0 0.0
      %6966 = vmatprep.subr.mxu0 0.0
      %6967 = vmatpush1.msra.mxu0 0.0
      %6968 = vmatprep.subr.mxu0 0.0
      %6969 = vmatpush1.msra.mxu0 0.0
      %6970 = vmatprep.subr.mxu0 0.0
      %6971 = vmatpush1.msra.mxu0 0.0
      %6972 = vmatprep.subr.mxu0 0.0
      %6973 = vmatpush1.msra.mxu0 0.0
      %6974 = vmatprep.subr.mxu0 0.0
      %6975 = vmatpush1.msra.mxu0 0.0
      %6976 = vmatprep.subr.mxu0 0.0
      %6977 = vmatpush1.msra.mxu0 0.0
      %6978 = vmatprep.subr.mxu0 0.0
      %6979 = vmatpush1.msra.mxu0 0.0
      %6980 = vmatprep.subr.mxu0 0.0
      %6981 = vmatpush1.msra.mxu0 0.0
      %6982 = vmatprep.subr.mxu0 0.0
      %6983 = vmatpush1.msra.mxu0 0.0
      %6984 = vmatprep.subr.mxu0 0.0
      %6985 = vmatpush1.msra.mxu0 0.0
      %6986 = vmatprep.subr.mxu0 0.0
      %6987 = vmatpush1.msra.mxu0 0.0
      %6988 = vmatprep.subr.mxu0 0.0
      %6989 = vmatpush1.msra.mxu0 0.0
      %6990 = vmatprep.subr.mxu0 0.0
      %6991 = vmatpush1.msra.mxu0 0.0
      %6992 = vmatprep.subr.mxu0 0.0
      %6993 = vmatpush1.msra.mxu0 0.0
      %6994 = vmatprep.subr.mxu0 0.0
      %6995 = vmatpush1.msra.mxu0 0.0
      %6996 = vmatprep.subr.mxu0 0.0
      %6997 = vmatpush1.msra.mxu0 0.0
      %6998 = vmatprep.subr.mxu0 0.0
      %6999 = vmatpush1.msra.mxu0 0.0
      %7000 = vmatprep.subr.mxu0 0.0
      %7001 = vmatpush1.msra.mxu0 0.0
      %7002 = vmatprep.subr.mxu0 0.0
      %7003 = vmatpush1.msra.mxu0 0.0
      %7004 = vmatprep.subr.mxu0 0.0
      %7005 = vmatpush1.msra.mxu0 0.0
      %7006 = vmatprep.subr.mxu0 0.0
      %7007 = vmatpush1.msra.mxu0 0.0
      %7008 = vmatprep.subr.mxu0 0.0
      %7009 = vmatpush1.msra.mxu0 0.0
      %7010 = vmatprep.subr.mxu0 0.0
      %7011 = vmatpush1.msra.mxu0 0.0
      %7012 = vmatprep.subr.mxu0 0.0
      %7013 = vmatpush1.msra.mxu0 0.0
      %7014 = vmatprep.subr.mxu0 0.0
      %7015 = vmatpush1.msra.mxu0 0.0
      %7016 = vmatprep.mubr.f32.mxu0 0.0
      %7017 = vmatmul.mubr.f32.gmra.mrb[0].mxu0 %v6870
      %v7018 = vpop.f32.mrb[0].mxu0
      %v7019 = vadd.f32 0.0, %v7018
      %v7020 = vpop.f32.mrb[0].mxu0
      %v7021 = vadd.f32 0.0, %v7020
      %7022 = vmatprep.mubr.f32.mxu0 0.0
      %7023 = vmatmul.mubr.f32.gmra.mrb[0].mxu0 %v6873
      %v7024 = vpop.f32.mrb[0].mxu0
      %v7025 = vadd.f32 0.0, %v7024
      %v7026 = vpop.f32.mrb[0].mxu0
      %v7027 = vadd.f32 0.0, %v7026
      %7028 = vdwg.mxu0
      %7029 = vmatprep.subr.mxu0 %v4602
      %7030 = vmatpush1.msra.mxu0 %v4601
      %7031 = vmatprep.subr.mxu0 %v4641
      %7032 = vmatpush1.msra.mxu0 %v4639
      %7033 = vmatprep.subr.mxu0 0.0
      %7034 = vmatpush1.msra.mxu0 0.0
      %7035 = vmatprep.subr.mxu0 0.0
      %7036 = vmatpush1.msra.mxu0 0.0
      %7037 = vmatprep.subr.mxu0 0.0
      %7038 = vmatpush1.msra.mxu0 0.0
      %7039 = vmatprep.subr.mxu0 0.0
      %7040 = vmatpush1.msra.mxu0 0.0
      %7041 = vmatprep.subr.mxu0 0.0
      %7042 = vmatpush1.msra.mxu0 0.0
      %7043 = vmatprep.subr.mxu0 0.0
      %7044 = vmatpush1.msra.mxu0 0.0
      %7045 = vmatprep.subr.mxu0 0.0
      %7046 = vmatpush1.msra.mxu0 0.0
      %7047 = vmatprep.subr.mxu0 0.0
      %7048 = vmatpush1.msra.mxu0 0.0
      %7049 = vmatprep.subr.mxu0 0.0
      %7050 = vmatpush1.msra.mxu0 0.0
      %7051 = vmatprep.subr.mxu0 0.0
      %7052 = vmatpush1.msra.mxu0 0.0
      %7053 = vmatprep.subr.mxu0 0.0
      %7054 = vmatpush1.msra.mxu0 0.0
      %7055 = vmatprep.subr.mxu0 0.0
      %7056 = vmatpush1.msra.mxu0 0.0
      %7057 = vmatprep.subr.mxu0 0.0
      %7058 = vmatpush1.msra.mxu0 0.0
      %7059 = vmatprep.subr.mxu0 0.0
      %7060 = vmatpush1.msra.mxu0 0.0
      %7061 = vmatprep.subr.mxu0 0.0
      %7062 = vmatpush1.msra.mxu0 0.0
      %7063 = vmatprep.subr.mxu0 0.0
      %7064 = vmatpush1.msra.mxu0 0.0
      %7065 = vmatprep.subr.mxu0 0.0
      %7066 = vmatpush1.msra.mxu0 0.0
      %7067 = vmatprep.subr.mxu0 0.0
      %7068 = vmatpush1.msra.mxu0 0.0
      %7069 = vmatprep.subr.mxu0 0.0
      %7070 = vmatpush1.msra.mxu0 0.0
      %7071 = vmatprep.subr.mxu0 0.0
      %7072 = vmatpush1.msra.mxu0 0.0
      %7073 = vmatprep.subr.mxu0 0.0
      %7074 = vmatpush1.msra.mxu0 0.0
      %7075 = vmatprep.subr.mxu0 0.0
      %7076 = vmatpush1.msra.mxu0 0.0
      %7077 = vmatprep.subr.mxu0 0.0
      %7078 = vmatpush1.msra.mxu0 0.0
      %7079 = vmatprep.subr.mxu0 0.0
      %7080 = vmatpush1.msra.mxu0 0.0
      %7081 = vmatprep.subr.mxu0 0.0
      %7082 = vmatpush1.msra.mxu0 0.0
      %7083 = vmatprep.subr.mxu0 0.0
      %7084 = vmatpush1.msra.mxu0 0.0
      %7085 = vmatprep.subr.mxu0 0.0
      %7086 = vmatpush1.msra.mxu0 0.0
      %7087 = vmatprep.subr.mxu0 0.0
      %7088 = vmatpush1.msra.mxu0 0.0
      %7089 = vmatprep.subr.mxu0 0.0
      %7090 = vmatpush1.msra.mxu0 0.0
      %7091 = vmatprep.subr.mxu0 0.0
      %7092 = vmatpush1.msra.mxu0 0.0
      %7093 = vmatprep.mubr.f32.mxu0 0.0
      %7094 = vmatmul.mubr.f32.gmra.mrb[0].mxu0 %v6870
      %v7095 = vpop.f32.mrb[0].mxu0
      %v7096 = vadd.f32 0.0, %v7095
      %v7097 = vpop.f32.mrb[0].mxu0
      %v7098 = vadd.f32 0.0, %v7097
      %7099 = vmatprep.mubr.f32.mxu0 0.0
      %7100 = vmatmul.mubr.f32.gmra.mrb[0].mxu0 %v6873
      %v7101 = vpop.f32.mrb[0].mxu0
      %v7102 = vadd.f32 0.0, %v7101
      %v7103 = vpop.f32.mrb[0].mxu0
      %v7104 = vadd.f32 0.0, %v7103
      %7105 = vdwg.mxu0
      %7106 = vmatprep.subr.mxu0 %v4596
      %7107 = vmatpush1.msra.mxu0 %v4621
      %7108 = vmatprep.subr.mxu0 %v4629
      %7109 = vmatpush1.msra.mxu0 %v4644
      %7110 = vmatprep.subr.mxu0 0.0
      %7111 = vmatpush1.msra.mxu0 0.0
      %7112 = vmatprep.subr.mxu0 0.0
      %7113 = vmatpush1.msra.mxu0 0.0
      %7114 = vmatprep.subr.mxu0 0.0
      %7115 = vmatpush1.msra.mxu0 0.0
      %7116 = vmatprep.subr.mxu0 0.0
      %7117 = vmatpush1.msra.mxu0 0.0
      %7118 = vmatprep.subr.mxu0 0.0
      %7119 = vmatpush1.msra.mxu0 0.0
      %7120 = vmatprep.subr.mxu0 0.0
      %7121 = vmatpush1.msra.mxu0 0.0
      %7122 = vmatprep.subr.mxu0 0.0
      %7123 = vmatpush1.msra.mxu0 0.0
      %7124 = vmatprep.subr.mxu0 0.0
      %7125 = vmatpush1.msra.mxu0 0.0
      %7126 = vmatprep.subr.mxu0 0.0
      %7127 = vmatpush1.msra.mxu0 0.0
      %7128 = vmatprep.subr.mxu0 0.0
      %7129 = vmatpush1.msra.mxu0 0.0
      %7130 = vmatprep.subr.mxu0 0.0
      %7131 = vmatpush1.msra.mxu0 0.0
      %7132 = vmatprep.subr.mxu0 0.0
      %7133 = vmatpush1.msra.mxu0 0.0
      %7134 = vmatprep.subr.mxu0 0.0
      %7135 = vmatpush1.msra.mxu0 0.0
      %7136 = vmatprep.subr.mxu0 0.0
      %7137 = vmatpush1.msra.mxu0 0.0
      %7138 = vmatprep.subr.mxu0 0.0
      %7139 = vmatpush1.msra.mxu0 0.0
      %7140 = vmatprep.subr.mxu0 0.0
      %7141 = vmatpush1.msra.mxu0 0.0
      %7142 = vmatprep.subr.mxu0 0.0
      %7143 = vmatpush1.msra.mxu0 0.0
      %7144 = vmatprep.subr.mxu0 0.0
      %7145 = vmatpush1.msra.mxu0 0.0
      %7146 = vmatprep.subr.mxu0 0.0
      %7147 = vmatpush1.msra.mxu0 0.0
      %7148 = vmatprep.subr.mxu0 0.0
      %7149 = vmatpush1.msra.mxu0 0.0
      %7150 = vmatprep.subr.mxu0 0.0
      %7151 = vmatpush1.msra.mxu0 0.0
      %7152 = vmatprep.subr.mxu0 0.0
      %7153 = vmatpush1.msra.mxu0 0.0
      %7154 = vmatprep.subr.mxu0 0.0
      %7155 = vmatpush1.msra.mxu0 0.0
      %7156 = vmatprep.subr.mxu0 0.0
      %7157 = vmatpush1.msra.mxu0 0.0
      %7158 = vmatprep.subr.mxu0 0.0
      %7159 = vmatpush1.msra.mxu0 0.0
      %7160 = vmatprep.subr.mxu0 0.0
      %7161 = vmatpush1.msra.mxu0 0.0
      %7162 = vmatprep.subr.mxu0 0.0
      %7163 = vmatpush1.msra.mxu0 0.0
      %7164 = vmatprep.subr.mxu0 0.0
      %7165 = vmatpush1.msra.mxu0 0.0
      %7166 = vmatprep.subr.mxu0 0.0
      %7167 = vmatpush1.msra.mxu0 0.0
      %7168 = vmatprep.subr.mxu0 0.0
      %7169 = vmatpush1.msra.mxu0 0.0
      %7170 = vmatprep.mubr.f32.mxu0 0.0
      %7171 = vmatmul.mubr.f32.gmra.mrb[0].mxu0 %v6870
      %v7172 = vpop.f32.mrb[0].mxu0
      %v7173 = vadd.f32 0.0, %v7172
      %v7174 = vpop.f32.mrb[0].mxu0
      %v7175 = vadd.f32 0.0, %v7174
      %7176 = vmatprep.mubr.f32.mxu0 0.0
      %7177 = vmatmul.mubr.f32.gmra.mrb[0].mxu0 %v6873
      %v7178 = vpop.f32.mrb[0].mxu0
      %v7179 = vadd.f32 0.0, %v7178
      %v7180 = vpop.f32.mrb[0].mxu0
      %v7181 = vadd.f32 0.0, %v7180
      %7182 = vdwg.mxu0
      %v7183 = vadd.f32 %v6850, %v6942
      %v7184 = vadd.f32 %v6851, %v6944
      %v7185 = vadd.f32 %v6852, %v7019
      %v7186 = vadd.f32 %v6853, %v7021
      %v7187 = vadd.f32 %v6854, %v7096
      %v7188 = vadd.f32 %v6855, %v7098
      %v7189 = vadd.f32 %v6856, %v7173
      %v7190 = vadd.f32 %v6857, %v7175
      %v7191 = vadd.f32 %v6858, %v6948
      %v7192 = vadd.f32 %v6859, %v6950
      %v7193 = vadd.f32 %v6860, %v7025
      %v7194 = vadd.f32 %v6861, %v7027
      %v7195 = vadd.f32 %v6862, %v7102
      %v7196 = vadd.f32 %v6863, %v7104
      %v7197 = vadd.f32 %v6864, %v7179
      %v7198 = vadd.f32 %v6865, %v7181
      %v7199 = vld [vmem:[%s4] sm:$0xff]
      %v7200 = vld [vmem:[%s4 + $0x8] sm:$0x3]
      %7202 = vset.pattern.permute.xlu0 0
      %7203 = vperm.xlu0 %7202, %v7199
      %v7204 = vpop.permute.xlu0 %7203
      %7207 = vset.pattern.permute.xlu0 0
      %7208 = vperm.xlu0 %7207, %v7200
      %v7209 = vpop.permute.xlu0 %7208
      %v7211 = vadd.f32 %v7183, %v7204
      %v7212 = vadd.f32 %v7184, %v7204
      %v7213 = vadd.f32 %v7185, %v7204
      %v7214 = vadd.f32 %v7186, %v7204
      %v7215 = vadd.f32 %v7187, %v7204
      %v7216 = vadd.f32 %v7188, %v7204
      %v7217 = vadd.f32 %v7189, %v7204
      %v7218 = vadd.f32 %v7190, %v7204
      %v7219 = vadd.f32 %v7191, %v7209
      %v7220 = vadd.f32 %v7192, %v7209
      %v7221 = vadd.f32 %v7193, %v7209
      %v7222 = vadd.f32 %v7194, %v7209
      %v7223 = vadd.f32 %v7195, %v7209
      %v7224 = vadd.f32 %v7196, %v7209
      %v7225 = vadd.f32 %v7197, %v7209
      %v7226 = vadd.f32 %v7198, %v7209
      %v7227 = vmax.f32 %v7211, 0.0
      %v7228 = vmax.f32 %v7212, 0.0
      %v7229 = vmax.f32 %v7213, 0.0
      %v7230 = vmax.f32 %v7214, 0.0
      %v7231 = vmax.f32 %v7215, 0.0
      %v7232 = vmax.f32 %v7216, 0.0
      %v7233 = vmax.f32 %v7217, 0.0
      %v7234 = vmax.f32 %v7218, 0.0
      %v7235 = vmax.f32 %v7219, 0.0
      %v7236 = vmax.f32 %v7220, 0.0
      %v7237 = vmax.f32 %v7221, 0.0
      %v7238 = vmax.f32 %v7222, 0.0
      %v7239 = vmax.f32 %v7223, 0.0
      %v7240 = vmax.f32 %v7224, 0.0
      %v7241 = vmax.f32 %v7225, 0.0
      %v7242 = vmax.f32 %v7226, 0.0
      %v7243 = vmax.f32 %v7227, %v7228
      %v7244 = vmax.f32 %v7228, %v7229
      %v7245 = vmax.f32 %v7229, %v7230
      %v7246 = vmax.f32 %v7230, %v7231
      %v7247 = vmax.f32 %v7231, %v7232
      %v7248 = vmax.f32 %v7232, %v7233
      %v7249 = vmax.f32 %v7233, %v7234
      %v7250 = vmax.f32 %v7234, %v7227
      %v7251 = vmax.f32 %v7235, %v7236
      %v7252 = vmax.f32 %v7236, %v7237
      %v7253 = vmax.f32 %v7237, %v7238
      %v7254 = vmax.f32 %v7238, %v7239
      %v7255 = vmax.f32 %v7239, %v7240
      %v7256 = vmax.f32 %v7240, %v7241
      %v7257 = vmax.f32 %v7241, %v7242
      %v7258 = vmax.f32 %v7242, %v7235
      %7275 = vrot.lane.b32.xlu0 %v7243, 124
      %v7276 = vpop.permute.xlu0 %7275
      %7277 = vrot.lane.b32.xlu0 %v7244, 124
      %v7278 = vpop.permute.xlu0 %7277
      %7279 = vrot.lane.b32.xlu0 %v7245, 124
      %v7280 = vpop.permute.xlu0 %7279
      %7281 = vrot.lane.b32.xlu0 %v7246, 124
      %v7282 = vpop.permute.xlu0 %7281
      %7283 = vrot.lane.b32.xlu0 %v7247, 124
      %v7284 = vpop.permute.xlu0 %7283
      %7285 = vrot.lane.b32.xlu0 %v7248, 124
      %v7286 = vpop.permute.xlu0 %7285
      %7287 = vrot.lane.b32.xlu0 %v7249, 124
      %v7288 = vpop.permute.xlu0 %7287
      %7289 = vrot.lane.b32.xlu0 %v7250, 124
      %v7290 = vpop.permute.xlu0 %7289
      %7291 = vrot.lane.b32.xlu0 %v7251, 124
      %v7292 = vpop.permute.xlu0 %7291
      %7293 = vrot.lane.b32.xlu0 %v7252, 124
      %v7294 = vpop.permute.xlu0 %7293
      %7295 = vrot.lane.b32.xlu0 %v7253, 124
      %v7296 = vpop.permute.xlu0 %7295
      %7297 = vrot.lane.b32.xlu0 %v7254, 124
      %v7298 = vpop.permute.xlu0 %7297
      %7299 = vrot.lane.b32.xlu0 %v7255, 124
      %v7300 = vpop.permute.xlu0 %7299
      %7301 = vrot.lane.b32.xlu0 %v7256, 124
      %v7302 = vpop.permute.xlu0 %7301
      %7303 = vrot.lane.b32.xlu0 %v7257, 124
      %v7304 = vpop.permute.xlu0 %7303
      %7305 = vrot.lane.b32.xlu0 %v7258, 124
      %v7306 = vpop.permute.xlu0 %7305
      %v7307 = vsel %vm4595, %v7276, %v7278
      %v7308 = vsel %vm4595, %v7278, %v7280
      %v7309 = vsel %vm4595, %v7280, %v7282
      %v7310 = vsel %vm4595, %v7282, %v7284
      %v7311 = vsel %vm4595, %v7284, %v7286
      %v7312 = vsel %vm4595, %v7286, %v7288
      %v7313 = vsel %vm4595, %v7288, %v7290
      %v7314 = vsel %vm4595, %v7292, %v7294
      %v7315 = vsel %vm4595, %v7294, %v7296
      %v7316 = vsel %vm4595, %v7296, %v7298
      %v7317 = vsel %vm4595, %v7298, %v7300
      %v7318 = vsel %vm4595, %v7300, %v7302
      %v7319 = vsel %vm4595, %v7302, %v7304
      %v7320 = vsel %vm4595, %v7304, %v7306
      %v7335 = vmax.f32 %v7243, %v7307
      %v7336 = vmax.f32 %v7244, %v7308
      %v7337 = vmax.f32 %v7245, %v7309
      %v7338 = vmax.f32 %v7246, %v7310
      %v7339 = vmax.f32 %v7247, %v7311
      %v7340 = vmax.f32 %v7248, %v7312
      %v7341 = vmax.f32 %v7249, %v7313
      %v7342 = vmax.f32 %v7251, %v7314
      %v7343 = vmax.f32 %v7252, %v7315
      %v7344 = vmax.f32 %v7253, %v7316
      %v7345 = vmax.f32 %v7254, %v7317
      %v7346 = vmax.f32 %v7255, %v7318
      %v7347 = vmax.f32 %v7256, %v7319
      %v7348 = vmax.f32 %v7257, %v7320
      %v7349 = vld [vmem:[%s5] sm:$0x3]
      %s7350 = scalar_lea.vmem %s5, 2
      %v7351 = vld [vmem:[%s7350] sm:$0x3]
      %7358 = vrot.lane.b32.xlu0 %v7335, 120
      %v7359 = vpop.permute.xlu0 %7358
      %7360 = vrot.lane.b32.xlu0 %v7336, 120
      %v7361 = vpop.permute.xlu0 %7360
      %7362 = vrot.lane.b32.xlu0 %v7337, 120
      %v7363 = vpop.permute.xlu0 %7362
      %7364 = vrot.lane.b32.xlu0 %v7342, 120
      %v7365 = vpop.permute.xlu0 %7364
      %7366 = vrot.lane.b32.xlu0 %v7343, 120
      %v7367 = vpop.permute.xlu0 %7366
      %7368 = vrot.lane.b32.xlu0 %v7344, 120
      %v7369 = vpop.permute.xlu0 %7368
      %vm7370 = vcmask 982016
      %v7371 = vsel %vm7370, %v7359, %v7361
      %v7372 = vsel %vm7370, %v7361, %v7363
      %v7373 = vsel %vm7370, %v7365, %v7367
      %v7374 = vsel %vm7370, %v7367, %v7369
      %v7378 = vsel %vm3897, %v7351, 0
      %v7380 = vsel %vm3904, %v7373, 0
      %v7382 = vsel %vm3904, %v7374, 0
      %7384 = vmatprep.subr.mxu0 %v7372
      %7385 = vmatpush1.msra.mxu0 %v7371
      %7386 = vmatprep.subr.mxu0 %v7382
      %7387 = vmatpush1.msra.mxu0 %v7380
      %7388 = vmatprep.subr.mxu0 0.0
      %7389 = vmatpush1.msra.mxu0 0.0
      %7390 = vmatprep.subr.mxu0 0.0
      %7391 = vmatpush1.msra.mxu0 0.0
      %7392 = vmatprep.subr.mxu0 0.0
      %7393 = vmatpush1.msra.mxu0 0.0
      %7394 = vmatprep.subr.mxu0 0.0
      %7395 = vmatpush1.msra.mxu0 0.0
      %7396 = vmatprep.subr.mxu0 0.0
      %7397 = vmatpush1.msra.mxu0 0.0
      %7398 = vmatprep.subr.mxu0 0.0
      %7399 = vmatpush1.msra.mxu0 0.0
      %7400 = vmatprep.subr.mxu0 0.0
      %7401 = vmatpush1.msra.mxu0 0.0
      %7402 = vmatprep.subr.mxu0 0.0
      %7403 = vmatpush1.msra.mxu0 0.0
      %7404 = vmatprep.subr.mxu0 0.0
      %7405 = vmatpush1.msra.mxu0 0.0
      %7406 = vmatprep.subr.mxu0 0.0
      %7407 = vmatpush1.msra.mxu0 0.0
      %7408 = vmatprep.subr.mxu0 0.0
      %7409 = vmatpush1.msra.mxu0 0.0
      %7410 = vmatprep.subr.mxu0 0.0
      %7411 = vmatpush1.msra.mxu0 0.0
      %7412 = vmatprep.subr.mxu0 0.0
      %7413 = vmatpush1.msra.mxu0 0.0
      %7414 = vmatprep.subr.mxu0 0.0
      %7415 = vmatpush1.msra.mxu0 0.0
      %7416 = vmatprep.subr.mxu0 0.0
      %7417 = vmatpush1.msra.mxu0 0.0
      %7418 = vmatprep.subr.mxu0 0.0
      %7419 = vmatpush1.msra.mxu0 0.0
      %7420 = vmatprep.subr.mxu0 0.0
      %7421 = vmatpush1.msra.mxu0 0.0
      %7422 = vmatprep.subr.mxu0 0.0
      %7423 = vmatpush1.msra.mxu0 0.0
      %7424 = vmatprep.subr.mxu0 0.0
      %7425 = vmatpush1.msra.mxu0 0.0
      %7426 = vmatprep.subr.mxu0 0.0
      %7427 = vmatpush1.msra.mxu0 0.0
      %7428 = vmatprep.subr.mxu0 0.0
      %7429 = vmatpush1.msra.mxu0 0.0
      %7430 = vmatprep.subr.mxu0 0.0
      %7431 = vmatpush1.msra.mxu0 0.0
      %7432 = vmatprep.subr.mxu0 0.0
      %7433 = vmatpush1.msra.mxu0 0.0
      %7434 = vmatprep.subr.mxu0 0.0
      %7435 = vmatpush1.msra.mxu0 0.0
      %7436 = vmatprep.subr.mxu0 0.0
      %7437 = vmatpush1.msra.mxu0 0.0
      %7438 = vmatprep.subr.mxu0 0.0
      %7439 = vmatpush1.msra.mxu0 0.0
      %7440 = vmatprep.subr.mxu0 0.0
      %7441 = vmatpush1.msra.mxu0 0.0
      %7442 = vmatprep.subr.mxu0 0.0
      %7443 = vmatpush1.msra.mxu0 0.0
      %7444 = vmatprep.subr.mxu0 0.0
      %7445 = vmatpush1.msra.mxu0 0.0
      %7446 = vmatprep.subr.mxu0 0.0
      %7447 = vmatpush1.msra.mxu0 0.0
      %7448 = vmatprep.mubr.f32.mxu0 0.0
      %7449 = vmatmul.mubr.f32.gmra.mrb[0].mxu0 %v7378
      %v7450 = vpop.f32.mrb[0].mxu0
      %v7451 = vadd.f32 0.0, %v7450
      %v7452 = vpop.f32.mrb[0].mxu0
      %7453 = vdwg.mxu0
      %v7455 = vsel %vm3897, %v7349, 0
      %v7457 = vsel %vm3904, %v7342, 0
      %v7459 = vsel %vm3904, %v7343, 0
      %7461 = vmatprep.subr.mxu0 %v7336
      %7462 = vmatpush1.msra.mxu0 %v7335
      %7463 = vmatprep.subr.mxu0 %v7459
      %7464 = vmatpush1.msra.mxu0 %v7457
      %7465 = vmatprep.subr.mxu0 0.0
      %7466 = vmatpush1.msra.mxu0 0.0
      %7467 = vmatprep.subr.mxu0 0.0
      %7468 = vmatpush1.msra.mxu0 0.0
      %7469 = vmatprep.subr.mxu0 0.0
      %7470 = vmatpush1.msra.mxu0 0.0
      %7471 = vmatprep.subr.mxu0 0.0
      %7472 = vmatpush1.msra.mxu0 0.0
      %7473 = vmatprep.subr.mxu0 0.0
      %7474 = vmatpush1.msra.mxu0 0.0
      %7475 = vmatprep.subr.mxu0 0.0
      %7476 = vmatpush1.msra.mxu0 0.0
      %7477 = vmatprep.subr.mxu0 0.0
      %7478 = vmatpush1.msra.mxu0 0.0
      %7479 = vmatprep.subr.mxu0 0.0
      %7480 = vmatpush1.msra.mxu0 0.0
      %7481 = vmatprep.subr.mxu0 0.0
      %7482 = vmatpush1.msra.mxu0 0.0
      %7483 = vmatprep.subr.mxu0 0.0
      %7484 = vmatpush1.msra.mxu0 0.0
      %7485 = vmatprep.subr.mxu0 0.0
      %7486 = vmatpush1.msra.mxu0 0.0
      %7487 = vmatprep.subr.mxu0 0.0
      %7488 = vmatpush1.msra.mxu0 0.0
      %7489 = vmatprep.subr.mxu0 0.0
      %7490 = vmatpush1.msra.mxu0 0.0
      %7491 = vmatprep.subr.mxu0 0.0
      %7492 = vmatpush1.msra.mxu0 0.0
      %7493 = vmatprep.subr.mxu0 0.0
      %7494 = vmatpush1.msra.mxu0 0.0
      %7495 = vmatprep.subr.mxu0 0.0
      %7496 = vmatpush1.msra.mxu0 0.0
      %7497 = vmatprep.subr.mxu0 0.0
      %7498 = vmatpush1.msra.mxu0 0.0
      %7499 = vmatprep.subr.mxu0 0.0
      %7500 = vmatpush1.msra.mxu0 0.0
      %7501 = vmatprep.subr.mxu0 0.0
      %7502 = vmatpush1.msra.mxu0 0.0
      %7503 = vmatprep.subr.mxu0 0.0
      %7504 = vmatpush1.msra.mxu0 0.0
      %7505 = vmatprep.subr.mxu0 0.0
      %7506 = vmatpush1.msra.mxu0 0.0
      %7507 = vmatprep.subr.mxu0 0.0
      %7508 = vmatpush1.msra.mxu0 0.0
      %7509 = vmatprep.subr.mxu0 0.0
      %7510 = vmatpush1.msra.mxu0 0.0
      %7511 = vmatprep.subr.mxu0 0.0
      %7512 = vmatpush1.msra.mxu0 0.0
      %7513 = vmatprep.subr.mxu0 0.0
      %7514 = vmatpush1.msra.mxu0 0.0
      %7515 = vmatprep.subr.mxu0 0.0
      %7516 = vmatpush1.msra.mxu0 0.0
      %7517 = vmatprep.subr.mxu0 0.0
      %7518 = vmatpush1.msra.mxu0 0.0
      %7519 = vmatprep.subr.mxu0 0.0
      %7520 = vmatpush1.msra.mxu0 0.0
      %7521 = vmatprep.subr.mxu0 0.0
      %7522 = vmatpush1.msra.mxu0 0.0
      %7523 = vmatprep.subr.mxu0 0.0
      %7524 = vmatpush1.msra.mxu0 0.0
      %7525 = vmatprep.mubr.f32.mxu0 0.0
      %7526 = vmatmul.mubr.f32.gmra.mrb[0].mxu0 %v7455
      %v7527 = vpop.f32.mrb[0].mxu0
      %v7528 = vadd.f32 %v7451, %v7527
      %v7529 = vpop.f32.mrb[0].mxu0
      %7530 = vdwg.mxu0
      %s7531 = scalar_lea.vmem %s5, 4
      %v7532 = vld [vmem:[%s7531] sm:$0x3]
      %7533 = vrot.lane.b32.xlu0 %v7335, 112
      %v7534 = vpop.permute.xlu0 %7533
      %7535 = vrot.lane.b32.xlu0 %v7336, 112
      %v7536 = vpop.permute.xlu0 %7535
      %7537 = vrot.lane.b32.xlu0 %v7337, 112
      %v7538 = vpop.permute.xlu0 %7537
      %7539 = vrot.lane.b32.xlu0 %v7342, 112
      %v7540 = vpop.permute.xlu0 %7539
      %7541 = vrot.lane.b32.xlu0 %v7343, 112
      %v7542 = vpop.permute.xlu0 %7541
      %7543 = vrot.lane.b32.xlu0 %v7344, 112
      %v7544 = vpop.permute.xlu0 %7543
      %vm7545 = vcmask 916480
      %v7546 = vsel %vm7545, %v7534, %v7536
      %v7547 = vsel %vm7545, %v7536, %v7538
      %v7548 = vsel %vm7545, %v7540, %v7542
      %v7549 = vsel %vm7545, %v7542, %v7544
      %v7553 = vsel %vm3897, %v7532, 0
      %v7555 = vsel %vm3904, %v7548, 0
      %v7557 = vsel %vm3904, %v7549, 0
      %7559 = vmatprep.subr.mxu0 %v7547
      %7560 = vmatpush1.msra.mxu0 %v7546
      %7561 = vmatprep.subr.mxu0 %v7557
      %7562 = vmatpush1.msra.mxu0 %v7555
      %7563 = vmatprep.subr.mxu0 0.0
      %7564 = vmatpush1.msra.mxu0 0.0
      %7565 = vmatprep.subr.mxu0 0.0
      %7566 = vmatpush1.msra.mxu0 0.0
      %7567 = vmatprep.subr.mxu0 0.0
      %7568 = vmatpush1.msra.mxu0 0.0
      %7569 = vmatprep.subr.mxu0 0.0
      %7570 = vmatpush1.msra.mxu0 0.0
      %7571 = vmatprep.subr.mxu0 0.0
      %7572 = vmatpush1.msra.mxu0 0.0
      %7573 = vmatprep.subr.mxu0 0.0
      %7574 = vmatpush1.msra.mxu0 0.0
      %7575 = vmatprep.subr.mxu0 0.0
      %7576 = vmatpush1.msra.mxu0 0.0
      %7577 = vmatprep.subr.mxu0 0.0
      %7578 = vmatpush1.msra.mxu0 0.0
      %7579 = vmatprep.subr.mxu0 0.0
      %7580 = vmatpush1.msra.mxu0 0.0
      %7581 = vmatprep.subr.mxu0 0.0
      %7582 = vmatpush1.msra.mxu0 0.0
      %7583 = vmatprep.subr.mxu0 0.0
      %7584 = vmatpush1.msra.mxu0 0.0
      %7585 = vmatprep.subr.mxu0 0.0
      %7586 = vmatpush1.msra.mxu0 0.0
      %7587 = vmatprep.subr.mxu0 0.0
      %7588 = vmatpush1.msra.mxu0 0.0
      %7589 = vmatprep.subr.mxu0 0.0
      %7590 = vmatpush1.msra.mxu0 0.0
      %7591 = vmatprep.subr.mxu0 0.0
      %7592 = vmatpush1.msra.mxu0 0.0
      %7593 = vmatprep.subr.mxu0 0.0
      %7594 = vmatpush1.msra.mxu0 0.0
      %7595 = vmatprep.subr.mxu0 0.0
      %7596 = vmatpush1.msra.mxu0 0.0
      %7597 = vmatprep.subr.mxu0 0.0
      %7598 = vmatpush1.msra.mxu0 0.0
      %7599 = vmatprep.subr.mxu0 0.0
      %7600 = vmatpush1.msra.mxu0 0.0
      %7601 = vmatprep.subr.mxu0 0.0
      %7602 = vmatpush1.msra.mxu0 0.0
      %7603 = vmatprep.subr.mxu0 0.0
      %7604 = vmatpush1.msra.mxu0 0.0
      %7605 = vmatprep.subr.mxu0 0.0
      %7606 = vmatpush1.msra.mxu0 0.0
      %7607 = vmatprep.subr.mxu0 0.0
      %7608 = vmatpush1.msra.mxu0 0.0
      %7609 = vmatprep.subr.mxu0 0.0
      %7610 = vmatpush1.msra.mxu0 0.0
      %7611 = vmatprep.subr.mxu0 0.0
      %7612 = vmatpush1.msra.mxu0 0.0
      %7613 = vmatprep.subr.mxu0 0.0
      %7614 = vmatpush1.msra.mxu0 0.0
      %7615 = vmatprep.subr.mxu0 0.0
      %7616 = vmatpush1.msra.mxu0 0.0
      %7617 = vmatprep.subr.mxu0 0.0
      %7618 = vmatpush1.msra.mxu0 0.0
      %7619 = vmatprep.subr.mxu0 0.0
      %7620 = vmatpush1.msra.mxu0 0.0
      %7621 = vmatprep.subr.mxu0 0.0
      %7622 = vmatpush1.msra.mxu0 0.0
      %7623 = vmatprep.mubr.f32.mxu0 0.0
      %7624 = vmatmul.mubr.f32.gmra.mrb[0].mxu0 %v7553
      %v7625 = vpop.f32.mrb[0].mxu0
      %v7626 = vadd.f32 0.0, %v7625
      %v7627 = vpop.f32.mrb[0].mxu0
      %7628 = vdwg.mxu0
      %v7629 = vadd.f32 %v7528, %v7626
      %s7630 = scalar_lea.vmem %s5, 6
      %v7631 = vld [vmem:[%s7630] sm:$0x3]
      %v7633 = vsel %vm3897, %v7631, 0
      %v7635 = vsel %vm3904, %v7344, 0
      %v7638 = vsel %vm3904, %v7345, 0
      %7640 = vmatprep.subr.mxu0 %v7338
      %7641 = vmatpush1.msra.mxu0 %v7337
      %7642 = vmatprep.subr.mxu0 %v7638
      %7643 = vmatpush1.msra.mxu0 %v7635
      %7644 = vmatprep.subr.mxu0 0.0
      %7645 = vmatpush1.msra.mxu0 0.0
      %7646 = vmatprep.subr.mxu0 0.0
      %7647 = vmatpush1.msra.mxu0 0.0
      %7648 = vmatprep.subr.mxu0 0.0
      %7649 = vmatpush1.msra.mxu0 0.0
      %7650 = vmatprep.subr.mxu0 0.0
      %7651 = vmatpush1.msra.mxu0 0.0
      %7652 = vmatprep.subr.mxu0 0.0
      %7653 = vmatpush1.msra.mxu0 0.0
      %7654 = vmatprep.subr.mxu0 0.0
      %7655 = vmatpush1.msra.mxu0 0.0
      %7656 = vmatprep.subr.mxu0 0.0
      %7657 = vmatpush1.msra.mxu0 0.0
      %7658 = vmatprep.subr.mxu0 0.0
      %7659 = vmatpush1.msra.mxu0 0.0
      %7660 = vmatprep.subr.mxu0 0.0
      %7661 = vmatpush1.msra.mxu0 0.0
      %7662 = vmatprep.subr.mxu0 0.0
      %7663 = vmatpush1.msra.mxu0 0.0
      %7664 = vmatprep.subr.mxu0 0.0
      %7665 = vmatpush1.msra.mxu0 0.0
      %7666 = vmatprep.subr.mxu0 0.0
      %7667 = vmatpush1.msra.mxu0 0.0
      %7668 = vmatprep.subr.mxu0 0.0
      %7669 = vmatpush1.msra.mxu0 0.0
      %7670 = vmatprep.subr.mxu0 0.0
      %7671 = vmatpush1.msra.mxu0 0.0
      %7672 = vmatprep.subr.mxu0 0.0
      %7673 = vmatpush1.msra.mxu0 0.0
      %7674 = vmatprep.subr.mxu0 0.0
      %7675 = vmatpush1.msra.mxu0 0.0
      %7676 = vmatprep.subr.mxu0 0.0
      %7677 = vmatpush1.msra.mxu0 0.0
      %7678 = vmatprep.subr.mxu0 0.0
      %7679 = vmatpush1.msra.mxu0 0.0
      %7680 = vmatprep.subr.mxu0 0.0
      %7681 = vmatpush1.msra.mxu0 0.0
      %7682 = vmatprep.subr.mxu0 0.0
      %7683 = vmatpush1.msra.mxu0 0.0
      %7684 = vmatprep.subr.mxu0 0.0
      %7685 = vmatpush1.msra.mxu0 0.0
      %7686 = vmatprep.subr.mxu0 0.0
      %7687 = vmatpush1.msra.mxu0 0.0
      %7688 = vmatprep.subr.mxu0 0.0
      %7689 = vmatpush1.msra.mxu0 0.0
      %7690 = vmatprep.subr.mxu0 0.0
      %7691 = vmatpush1.msra.mxu0 0.0
      %7692 = vmatprep.subr.mxu0 0.0
      %7693 = vmatpush1.msra.mxu0 0.0
      %7694 = vmatprep.subr.mxu0 0.0
      %7695 = vmatpush1.msra.mxu0 0.0
      %7696 = vmatprep.subr.mxu0 0.0
      %7697 = vmatpush1.msra.mxu0 0.0
      %7698 = vmatprep.subr.mxu0 0.0
      %7699 = vmatpush1.msra.mxu0 0.0
      %7700 = vmatprep.subr.mxu0 0.0
      %7701 = vmatpush1.msra.mxu0 0.0
      %7702 = vmatprep.subr.mxu0 0.0
      %7703 = vmatpush1.msra.mxu0 0.0
      %7704 = vmatprep.mubr.f32.mxu0 0.0
      %7705 = vmatmul.mubr.f32.gmra.mrb[0].mxu0 %v7633
      %v7706 = vpop.f32.mrb[0].mxu0
      %v7707 = vadd.f32 0.0, %v7706
      %v7708 = vpop.f32.mrb[0].mxu0
      %7709 = vdwg.mxu0
      %v7710 = vadd.f32 %v7629, %v7707
      %s7711 = scalar_lea.vmem %s5, 8
      %v7712 = vld [vmem:[%s7711] sm:$0x3]
      %7716 = vrot.lane.b32.xlu0 %v7338, 120
      %v7717 = vpop.permute.xlu0 %7716
      %7718 = vrot.lane.b32.xlu0 %v7339, 120
      %v7719 = vpop.permute.xlu0 %7718
      %7720 = vrot.lane.b32.xlu0 %v7345, 120
      %v7721 = vpop.permute.xlu0 %7720
      %7722 = vrot.lane.b32.xlu0 %v7346, 120
      %v7723 = vpop.permute.xlu0 %7722
      %v7724 = vsel %vm7370, %v7363, %v7717
      %v7725 = vsel %vm7370, %v7717, %v7719
      %v7726 = vsel %vm7370, %v7369, %v7721
      %v7727 = vsel %vm7370, %v7721, %v7723
      %v7731 = vsel %vm3897, %v7712, 0
      %v7733 = vsel %vm3904, %v7726, 0
      %v7735 = vsel %vm3904, %v7727, 0
      %7737 = vmatprep.subr.mxu0 %v7725
      %7738 = vmatpush1.msra.mxu0 %v7724
      %7739 = vmatprep.subr.mxu0 %v7735
      %7740 = vmatpush1.msra.mxu0 %v7733
      %7741 = vmatprep.subr.mxu0 0.0
      %7742 = vmatpush1.msra.mxu0 0.0
      %7743 = vmatprep.subr.mxu0 0.0
      %7744 = vmatpush1.msra.mxu0 0.0
      %7745 = vmatprep.subr.mxu0 0.0
      %7746 = vmatpush1.msra.mxu0 0.0
      %7747 = vmatprep.subr.mxu0 0.0
      %7748 = vmatpush1.msra.mxu0 0.0
      %7749 = vmatprep.subr.mxu0 0.0
      %7750 = vmatpush1.msra.mxu0 0.0
      %7751 = vmatprep.subr.mxu0 0.0
      %7752 = vmatpush1.msra.mxu0 0.0
      %7753 = vmatprep.subr.mxu0 0.0
      %7754 = vmatpush1.msra.mxu0 0.0
      %7755 = vmatprep.subr.mxu0 0.0
      %7756 = vmatpush1.msra.mxu0 0.0
      %7757 = vmatprep.subr.mxu0 0.0
      %7758 = vmatpush1.msra.mxu0 0.0
      %7759 = vmatprep.subr.mxu0 0.0
      %7760 = vmatpush1.msra.mxu0 0.0
      %7761 = vmatprep.subr.mxu0 0.0
      %7762 = vmatpush1.msra.mxu0 0.0
      %7763 = vmatprep.subr.mxu0 0.0
      %7764 = vmatpush1.msra.mxu0 0.0
      %7765 = vmatprep.subr.mxu0 0.0
      %7766 = vmatpush1.msra.mxu0 0.0
      %7767 = vmatprep.subr.mxu0 0.0
      %7768 = vmatpush1.msra.mxu0 0.0
      %7769 = vmatprep.subr.mxu0 0.0
      %7770 = vmatpush1.msra.mxu0 0.0
      %7771 = vmatprep.subr.mxu0 0.0
      %7772 = vmatpush1.msra.mxu0 0.0
      %7773 = vmatprep.subr.mxu0 0.0
      %7774 = vmatpush1.msra.mxu0 0.0
      %7775 = vmatprep.subr.mxu0 0.0
      %7776 = vmatpush1.msra.mxu0 0.0
      %7777 = vmatprep.subr.mxu0 0.0
      %7778 = vmatpush1.msra.mxu0 0.0
      %7779 = vmatprep.subr.mxu0 0.0
      %7780 = vmatpush1.msra.mxu0 0.0
      %7781 = vmatprep.subr.mxu0 0.0
      %7782 = vmatpush1.msra.mxu0 0.0
      %7783 = vmatprep.subr.mxu0 0.0
      %7784 = vmatpush1.msra.mxu0 0.0
      %7785 = vmatprep.subr.mxu0 0.0
      %7786 = vmatpush1.msra.mxu0 0.0
      %7787 = vmatprep.subr.mxu0 0.0
      %7788 = vmatpush1.msra.mxu0 0.0
      %7789 = vmatprep.subr.mxu0 0.0
      %7790 = vmatpush1.msra.mxu0 0.0
      %7791 = vmatprep.subr.mxu0 0.0
      %7792 = vmatpush1.msra.mxu0 0.0
      %7793 = vmatprep.subr.mxu0 0.0
      %7794 = vmatpush1.msra.mxu0 0.0
      %7795 = vmatprep.subr.mxu0 0.0
      %7796 = vmatpush1.msra.mxu0 0.0
      %7797 = vmatprep.subr.mxu0 0.0
      %7798 = vmatpush1.msra.mxu0 0.0
      %7799 = vmatprep.subr.mxu0 0.0
      %7800 = vmatpush1.msra.mxu0 0.0
      %7801 = vmatprep.mubr.f32.mxu0 0.0
      %7802 = vmatmul.mubr.f32.gmra.mrb[0].mxu0 %v7731
      %v7803 = vpop.f32.mrb[0].mxu0
      %v7804 = vadd.f32 0.0, %v7803
      %v7805 = vpop.f32.mrb[0].mxu0
      %7806 = vdwg.mxu0
      %v7807 = vadd.f32 %v7710, %v7804
      %s7808 = scalar_lea.vmem %s5, 10
      %v7809 = vld [vmem:[%s7808] sm:$0x3]
      %7810 = vrot.lane.b32.xlu0 %v7338, 112
      %v7811 = vpop.permute.xlu0 %7810
      %7812 = vrot.lane.b32.xlu0 %v7339, 112
      %v7813 = vpop.permute.xlu0 %7812
      %7814 = vrot.lane.b32.xlu0 %v7345, 112
      %v7815 = vpop.permute.xlu0 %7814
      %7816 = vrot.lane.b32.xlu0 %v7346, 112
      %v7817 = vpop.permute.xlu0 %7816
      %v7818 = vsel %vm7545, %v7538, %v7811
      %v7819 = vsel %vm7545, %v7811, %v7813
      %v7820 = vsel %vm7545, %v7544, %v7815
      %v7821 = vsel %vm7545, %v7815, %v7817
      %v7825 = vsel %vm3897, %v7809, 0
      %v7827 = vsel %vm3904, %v7820, 0
      %v7829 = vsel %vm3904, %v7821, 0
      %7831 = vmatprep.subr.mxu0 %v7819
      %7832 = vmatpush1.msra.mxu0 %v7818
      %7833 = vmatprep.subr.mxu0 %v7829
      %7834 = vmatpush1.msra.mxu0 %v7827
      %7835 = vmatprep.subr.mxu0 0.0
      %7836 = vmatpush1.msra.mxu0 0.0
      %7837 = vmatprep.subr.mxu0 0.0
      %7838 = vmatpush1.msra.mxu0 0.0
      %7839 = vmatprep.subr.mxu0 0.0
      %7840 = vmatpush1.msra.mxu0 0.0
      %7841 = vmatprep.subr.mxu0 0.0
      %7842 = vmatpush1.msra.mxu0 0.0
      %7843 = vmatprep.subr.mxu0 0.0
      %7844 = vmatpush1.msra.mxu0 0.0
      %7845 = vmatprep.subr.mxu0 0.0
      %7846 = vmatpush1.msra.mxu0 0.0
      %7847 = vmatprep.subr.mxu0 0.0
      %7848 = vmatpush1.msra.mxu0 0.0
      %7849 = vmatprep.subr.mxu0 0.0
      %7850 = vmatpush1.msra.mxu0 0.0
      %7851 = vmatprep.subr.mxu0 0.0
      %7852 = vmatpush1.msra.mxu0 0.0
      %7853 = vmatprep.subr.mxu0 0.0
      %7854 = vmatpush1.msra.mxu0 0.0
      %7855 = vmatprep.subr.mxu0 0.0
      %7856 = vmatpush1.msra.mxu0 0.0
      %7857 = vmatprep.subr.mxu0 0.0
      %7858 = vmatpush1.msra.mxu0 0.0
      %7859 = vmatprep.subr.mxu0 0.0
      %7860 = vmatpush1.msra.mxu0 0.0
      %7861 = vmatprep.subr.mxu0 0.0
      %7862 = vmatpush1.msra.mxu0 0.0
      %7863 = vmatprep.subr.mxu0 0.0
      %7864 = vmatpush1.msra.mxu0 0.0
      %7865 = vmatprep.subr.mxu0 0.0
      %7866 = vmatpush1.msra.mxu0 0.0
      %7867 = vmatprep.subr.mxu0 0.0
      %7868 = vmatpush1.msra.mxu0 0.0
      %7869 = vmatprep.subr.mxu0 0.0
      %7870 = vmatpush1.msra.mxu0 0.0
      %7871 = vmatprep.subr.mxu0 0.0
      %7872 = vmatpush1.msra.mxu0 0.0
      %7873 = vmatprep.subr.mxu0 0.0
      %7874 = vmatpush1.msra.mxu0 0.0
      %7875 = vmatprep.subr.mxu0 0.0
      %7876 = vmatpush1.msra.mxu0 0.0
      %7877 = vmatprep.subr.mxu0 0.0
      %7878 = vmatpush1.msra.mxu0 0.0
      %7879 = vmatprep.subr.mxu0 0.0
      %7880 = vmatpush1.msra.mxu0 0.0
      %7881 = vmatprep.subr.mxu0 0.0
      %7882 = vmatpush1.msra.mxu0 0.0
      %7883 = vmatprep.subr.mxu0 0.0
      %7884 = vmatpush1.msra.mxu0 0.0
      %7885 = vmatprep.subr.mxu0 0.0
      %7886 = vmatpush1.msra.mxu0 0.0
      %7887 = vmatprep.subr.mxu0 0.0
      %7888 = vmatpush1.msra.mxu0 0.0
      %7889 = vmatprep.subr.mxu0 0.0
      %7890 = vmatpush1.msra.mxu0 0.0
      %7891 = vmatprep.subr.mxu0 0.0
      %7892 = vmatpush1.msra.mxu0 0.0
      %7893 = vmatprep.subr.mxu0 0.0
      %7894 = vmatpush1.msra.mxu0 0.0
      %7895 = vmatprep.mubr.f32.mxu0 0.0
      %7896 = vmatmul.mubr.f32.gmra.mrb[0].mxu0 %v7825
      %v7897 = vpop.f32.mrb[0].mxu0
      %v7898 = vadd.f32 0.0, %v7897
      %v7899 = vpop.f32.mrb[0].mxu0
      %7900 = vdwg.mxu0
      %v7901 = vadd.f32 %v7807, %v7898
      %s7902 = scalar_lea.vmem %s5, 12
      %v7903 = vld [vmem:[%s7902] sm:$0x3]
      %v7905 = vsel %vm3897, %v7903, 0
      %v7907 = vsel %vm3904, %v7346, 0
      %v7910 = vsel %vm3904, %v7347, 0
      %7912 = vmatprep.subr.mxu0 %v7340
      %7913 = vmatpush1.msra.mxu0 %v7339
      %7914 = vmatprep.subr.mxu0 %v7910
      %7915 = vmatpush1.msra.mxu0 %v7907
      %7916 = vmatprep.subr.mxu0 0.0
      %7917 = vmatpush1.msra.mxu0 0.0
      %7918 = vmatprep.subr.mxu0 0.0
      %7919 = vmatpush1.msra.mxu0 0.0
      %7920 = vmatprep.subr.mxu0 0.0
      %7921 = vmatpush1.msra.mxu0 0.0
      %7922 = vmatprep.subr.mxu0 0.0
      %7923 = vmatpush1.msra.mxu0 0.0
      %7924 = vmatprep.subr.mxu0 0.0
      %7925 = vmatpush1.msra.mxu0 0.0
      %7926 = vmatprep.subr.mxu0 0.0
      %7927 = vmatpush1.msra.mxu0 0.0
      %7928 = vmatprep.subr.mxu0 0.0
      %7929 = vmatpush1.msra.mxu0 0.0
      %7930 = vmatprep.subr.mxu0 0.0
      %7931 = vmatpush1.msra.mxu0 0.0
      %7932 = vmatprep.subr.mxu0 0.0
      %7933 = vmatpush1.msra.mxu0 0.0
      %7934 = vmatprep.subr.mxu0 0.0
      %7935 = vmatpush1.msra.mxu0 0.0
      %7936 = vmatprep.subr.mxu0 0.0
      %7937 = vmatpush1.msra.mxu0 0.0
      %7938 = vmatprep.subr.mxu0 0.0
      %7939 = vmatpush1.msra.mxu0 0.0
      %7940 = vmatprep.subr.mxu0 0.0
      %7941 = vmatpush1.msra.mxu0 0.0
      %7942 = vmatprep.subr.mxu0 0.0
      %7943 = vmatpush1.msra.mxu0 0.0
      %7944 = vmatprep.subr.mxu0 0.0
      %7945 = vmatpush1.msra.mxu0 0.0
      %7946 = vmatprep.subr.mxu0 0.0
      %7947 = vmatpush1.msra.mxu0 0.0
      %7948 = vmatprep.subr.mxu0 0.0
      %7949 = vmatpush1.msra.mxu0 0.0
      %7950 = vmatprep.subr.mxu0 0.0
      %7951 = vmatpush1.msra.mxu0 0.0
      %7952 = vmatprep.subr.mxu0 0.0
      %7953 = vmatpush1.msra.mxu0 0.0
      %7954 = vmatprep.subr.mxu0 0.0
      %7955 = vmatpush1.msra.mxu0 0.0
      %7956 = vmatprep.subr.mxu0 0.0
      %7957 = vmatpush1.msra.mxu0 0.0
      %7958 = vmatprep.subr.mxu0 0.0
      %7959 = vmatpush1.msra.mxu0 0.0
      %7960 = vmatprep.subr.mxu0 0.0
      %7961 = vmatpush1.msra.mxu0 0.0
      %7962 = vmatprep.subr.mxu0 0.0
      %7963 = vmatpush1.msra.mxu0 0.0
      %7964 = vmatprep.subr.mxu0 0.0
      %7965 = vmatpush1.msra.mxu0 0.0
      %7966 = vmatprep.subr.mxu0 0.0
      %7967 = vmatpush1.msra.mxu0 0.0
      %7968 = vmatprep.subr.mxu0 0.0
      %7969 = vmatpush1.msra.mxu0 0.0
      %7970 = vmatprep.subr.mxu0 0.0
      %7971 = vmatpush1.msra.mxu0 0.0
      %7972 = vmatprep.subr.mxu0 0.0
      %7973 = vmatpush1.msra.mxu0 0.0
      %7974 = vmatprep.subr.mxu0 0.0
      %7975 = vmatpush1.msra.mxu0 0.0
      %7976 = vmatprep.mubr.f32.mxu0 0.0
      %7977 = vmatmul.mubr.f32.gmra.mrb[0].mxu0 %v7905
      %v7978 = vpop.f32.mrb[0].mxu0
      %v7979 = vadd.f32 0.0, %v7978
      %v7980 = vpop.f32.mrb[0].mxu0
      %7981 = vdwg.mxu0
      %v7982 = vadd.f32 %v7901, %v7979
      %s7983 = scalar_lea.vmem %s5, 14
      %v7984 = vld [vmem:[%s7983] sm:$0x3]
      %7988 = vrot.lane.b32.xlu0 %v7340, 120
      %v7989 = vpop.permute.xlu0 %7988
      %7990 = vrot.lane.b32.xlu0 %v7341, 120
      %v7991 = vpop.permute.xlu0 %7990
      %7992 = vrot.lane.b32.xlu0 %v7347, 120
      %v7993 = vpop.permute.xlu0 %7992
      %7994 = vrot.lane.b32.xlu0 %v7348, 120
      %v7995 = vpop.permute.xlu0 %7994
      %v7996 = vsel %vm7370, %v7719, %v7989
      %v7997 = vsel %vm7370, %v7989, %v7991
      %v7998 = vsel %vm7370, %v7723, %v7993
      %v7999 = vsel %vm7370, %v7993, %v7995
      %v8003 = vsel %vm3897, %v7984, 0
      %v8005 = vsel %vm3904, %v7998, 0
      %v8007 = vsel %vm3904, %v7999, 0
      %8009 = vmatprep.subr.mxu0 %v7997
      %8010 = vmatpush1.msra.mxu0 %v7996
      %8011 = vmatprep.subr.mxu0 %v8007
      %8012 = vmatpush1.msra.mxu0 %v8005
      %8013 = vmatprep.subr.mxu0 0.0
      %8014 = vmatpush1.msra.mxu0 0.0
      %8015 = vmatprep.subr.mxu0 0.0
      %8016 = vmatpush1.msra.mxu0 0.0
      %8017 = vmatprep.subr.mxu0 0.0
      %8018 = vmatpush1.msra.mxu0 0.0
      %8019 = vmatprep.subr.mxu0 0.0
      %8020 = vmatpush1.msra.mxu0 0.0
      %8021 = vmatprep.subr.mxu0 0.0
      %8022 = vmatpush1.msra.mxu0 0.0
      %8023 = vmatprep.subr.mxu0 0.0
      %8024 = vmatpush1.msra.mxu0 0.0
      %8025 = vmatprep.subr.mxu0 0.0
      %8026 = vmatpush1.msra.mxu0 0.0
      %8027 = vmatprep.subr.mxu0 0.0
      %8028 = vmatpush1.msra.mxu0 0.0
      %8029 = vmatprep.subr.mxu0 0.0
      %8030 = vmatpush1.msra.mxu0 0.0
      %8031 = vmatprep.subr.mxu0 0.0
      %8032 = vmatpush1.msra.mxu0 0.0
      %8033 = vmatprep.subr.mxu0 0.0
      %8034 = vmatpush1.msra.mxu0 0.0
      %8035 = vmatprep.subr.mxu0 0.0
      %8036 = vmatpush1.msra.mxu0 0.0
      %8037 = vmatprep.subr.mxu0 0.0
      %8038 = vmatpush1.msra.mxu0 0.0
      %8039 = vmatprep.subr.mxu0 0.0
      %8040 = vmatpush1.msra.mxu0 0.0
      %8041 = vmatprep.subr.mxu0 0.0
      %8042 = vmatpush1.msra.mxu0 0.0
      %8043 = vmatprep.subr.mxu0 0.0
      %8044 = vmatpush1.msra.mxu0 0.0
      %8045 = vmatprep.subr.mxu0 0.0
      %8046 = vmatpush1.msra.mxu0 0.0
      %8047 = vmatprep.subr.mxu0 0.0
      %8048 = vmatpush1.msra.mxu0 0.0
      %8049 = vmatprep.subr.mxu0 0.0
      %8050 = vmatpush1.msra.mxu0 0.0
      %8051 = vmatprep.subr.mxu0 0.0
      %8052 = vmatpush1.msra.mxu0 0.0
      %8053 = vmatprep.subr.mxu0 0.0
      %8054 = vmatpush1.msra.mxu0 0.0
      %8055 = vmatprep.subr.mxu0 0.0
      %8056 = vmatpush1.msra.mxu0 0.0
      %8057 = vmatprep.subr.mxu0 0.0
      %8058 = vmatpush1.msra.mxu0 0.0
      %8059 = vmatprep.subr.mxu0 0.0
      %8060 = vmatpush1.msra.mxu0 0.0
      %8061 = vmatprep.subr.mxu0 0.0
      %8062 = vmatpush1.msra.mxu0 0.0
      %8063 = vmatprep.subr.mxu0 0.0
      %8064 = vmatpush1.msra.mxu0 0.0
      %8065 = vmatprep.subr.mxu0 0.0
      %8066 = vmatpush1.msra.mxu0 0.0
      %8067 = vmatprep.subr.mxu0 0.0
      %8068 = vmatpush1.msra.mxu0 0.0
      %8069 = vmatprep.subr.mxu0 0.0
      %8070 = vmatpush1.msra.mxu0 0.0
      %8071 = vmatprep.subr.mxu0 0.0
      %8072 = vmatpush1.msra.mxu0 0.0
      %8073 = vmatprep.mubr.f32.mxu0 0.0
      %8074 = vmatmul.mubr.f32.gmra.mrb[0].mxu0 %v8003
      %v8075 = vpop.f32.mrb[0].mxu0
      %v8076 = vadd.f32 0.0, %v8075
      %v8077 = vpop.f32.mrb[0].mxu0
      %8078 = vdwg.mxu0
      %v8079 = vadd.f32 %v7982, %v8076
      %s8080 = scalar_lea.vmem %s5, 16
      %v8081 = vld [vmem:[%s8080] sm:$0x3]
      %8082 = vrot.lane.b32.xlu0 %v7340, 112
      %v8083 = vpop.permute.xlu0 %8082
      %8084 = vrot.lane.b32.xlu0 %v7341, 112
      %v8085 = vpop.permute.xlu0 %8084
      %8086 = vrot.lane.b32.xlu0 %v7347, 112
      %v8087 = vpop.permute.xlu0 %8086
      %8088 = vrot.lane.b32.xlu0 %v7348, 112
      %v8089 = vpop.permute.xlu0 %8088
      %v8090 = vsel %vm7545, %v7813, %v8083
      %v8091 = vsel %vm7545, %v8083, %v8085
      %v8092 = vsel %vm7545, %v7817, %v8087
      %v8093 = vsel %vm7545, %v8087, %v8089
      %v8097 = vsel %vm3897, %v8081, 0
      %v8099 = vsel %vm3904, %v8092, 0
      %v8101 = vsel %vm3904, %v8093, 0
      %8103 = vmatprep.subr.mxu0 %v8091
      %8104 = vmatpush1.msra.mxu0 %v8090
      %8105 = vmatprep.subr.mxu0 %v8101
      %8106 = vmatpush1.msra.mxu0 %v8099
      %8107 = vmatprep.subr.mxu0 0.0
      %8108 = vmatpush1.msra.mxu0 0.0
      %8109 = vmatprep.subr.mxu0 0.0
      %8110 = vmatpush1.msra.mxu0 0.0
      %8111 = vmatprep.subr.mxu0 0.0
      %8112 = vmatpush1.msra.mxu0 0.0
      %8113 = vmatprep.subr.mxu0 0.0
      %8114 = vmatpush1.msra.mxu0 0.0
      %8115 = vmatprep.subr.mxu0 0.0
      %8116 = vmatpush1.msra.mxu0 0.0
      %8117 = vmatprep.subr.mxu0 0.0
      %8118 = vmatpush1.msra.mxu0 0.0
      %8119 = vmatprep.subr.mxu0 0.0
      %8120 = vmatpush1.msra.mxu0 0.0
      %8121 = vmatprep.subr.mxu0 0.0
      %8122 = vmatpush1.msra.mxu0 0.0
      %8123 = vmatprep.subr.mxu0 0.0
      %8124 = vmatpush1.msra.mxu0 0.0
      %8125 = vmatprep.subr.mxu0 0.0
      %8126 = vmatpush1.msra.mxu0 0.0
      %8127 = vmatprep.subr.mxu0 0.0
      %8128 = vmatpush1.msra.mxu0 0.0
      %8129 = vmatprep.subr.mxu0 0.0
      %8130 = vmatpush1.msra.mxu0 0.0
      %8131 = vmatprep.subr.mxu0 0.0
      %8132 = vmatpush1.msra.mxu0 0.0
      %8133 = vmatprep.subr.mxu0 0.0
      %8134 = vmatpush1.msra.mxu0 0.0
      %8135 = vmatprep.subr.mxu0 0.0
      %8136 = vmatpush1.msra.mxu0 0.0
      %8137 = vmatprep.subr.mxu0 0.0
      %8138 = vmatpush1.msra.mxu0 0.0
      %8139 = vmatprep.subr.mxu0 0.0
      %8140 = vmatpush1.msra.mxu0 0.0
      %8141 = vmatprep.subr.mxu0 0.0
      %8142 = vmatpush1.msra.mxu0 0.0
      %8143 = vmatprep.subr.mxu0 0.0
      %8144 = vmatpush1.msra.mxu0 0.0
      %8145 = vmatprep.subr.mxu0 0.0
      %8146 = vmatpush1.msra.mxu0 0.0
      %8147 = vmatprep.subr.mxu0 0.0
      %8148 = vmatpush1.msra.mxu0 0.0
      %8149 = vmatprep.subr.mxu0 0.0
      %8150 = vmatpush1.msra.mxu0 0.0
      %8151 = vmatprep.subr.mxu0 0.0
      %8152 = vmatpush1.msra.mxu0 0.0
      %8153 = vmatprep.subr.mxu0 0.0
      %8154 = vmatpush1.msra.mxu0 0.0
      %8155 = vmatprep.subr.mxu0 0.0
      %8156 = vmatpush1.msra.mxu0 0.0
      %8157 = vmatprep.subr.mxu0 0.0
      %8158 = vmatpush1.msra.mxu0 0.0
      %8159 = vmatprep.subr.mxu0 0.0
      %8160 = vmatpush1.msra.mxu0 0.0
      %8161 = vmatprep.subr.mxu0 0.0
      %8162 = vmatpush1.msra.mxu0 0.0
      %8163 = vmatprep.subr.mxu0 0.0
      %8164 = vmatpush1.msra.mxu0 0.0
      %8165 = vmatprep.subr.mxu0 0.0
      %8166 = vmatpush1.msra.mxu0 0.0
      %8167 = vmatprep.mubr.f32.mxu0 0.0
      %8168 = vmatmul.mubr.f32.gmra.mrb[0].mxu0 %v8097
      %v8169 = vpop.f32.mrb[0].mxu0
      %v8170 = vadd.f32 0.0, %v8169
      %v8171 = vpop.f32.mrb[0].mxu0
      %8172 = vdwg.mxu0
      %v8173 = vadd.f32 %v8079, %v8170
      %v8174 = vld [vmem:[%s6] sm:$0x3]
      %v8175 = vadd.f32 %v8173, %v8174
      %vm8176 = vcmask 1024
      %8177 = vst.msk [vmem:[%s276] sm:$0x3] %vm8176, %v8175
      %p8178 = scmp.lt.s32.totalorder %s18, 1
      %s8179 = scalar_select %p8178, %s18, 1
      %s8180 = smul.addr %s8179, 2
      %s8181 = scalar_lea.vmem %s7, %s8180
      // Predicated region
      $region49: #{net_forward.1} parent=47 // pred_check
        %p8182 = pneg %p188
      $region50: #{net_forward.1} parent=47 // pred_check_branch
        %8184 = sbr.rel (%p8182) target = $region52
      $region51: #{net_forward.1} parent=47 // pred_region
        _
      $region52: #{net_forward.1} parent=47 // pred_fallthru
        _
    $region48: #{net_forward.1} parent=5 // pred_fallthru
      _
    %p8185 = scmp.le.s32.totalorder 2, %s13
    // Predicated region
    $region53: #{net_forward.1} parent=5 // pred_check
      %p8186 = pneg %p8185
    $region54: #{net_forward.1} parent=5 // pred_check_branch
      %8188 = sbr.rel (%p8186) target = $region56
    $region55: #{net_forward.1} parent=5 // pred_region
      %s8189 = ssub.s32 %s13, 2
      // Predicated region
      $region57: #{net_forward.1} parent=55 // pred_check
        %p8190 = pneg %p194
      $region58: #{net_forward.1} parent=55 // pred_check_branch
        %8192 = sbr.rel (%p8190) target = $region60
      $region59: #{net_forward.1} parent=55 // pred_region
        %p8193 = scmp.lt.s32.totalorder %s19, 1
        %s8194 = scalar_select %p8193, %s19, 1
        %s8195 = smul.addr %s8194, 2
        %s8196 = scalar_lea.vmem %s7, %s8195
      $region60: #{net_forward.1} parent=55 // pred_fallthru
        _
    $region56: #{net_forward.1} parent=5 // pred_fallthru
      _
  $region6: #{net_forward.1} parent=0 // loop_footer
    %s17 = sadd.s32 1, %s13
  $region7: #{net_forward.1} parent=0 // loop_footer_branch
    %12 = sbr.rel target = $region3
  $region8: #{net_forward.1} parent=0 // loop_exit
    _

</llo_original>
